<compile_context>
chip_gen: v7x
topology: tpu7x:2x2x1
jax: 0.10.0
libtpu: 0.0.40
codegen_flags: <defaults>
</compile_context>

<pallas_src>
import functools

import numpy as np

import jax
import jax.numpy as jnp
from jax.experimental import pallas as pl
from jax.experimental.pallas import tpu as pltpu


def _round_up(x, m):
    return ((x + m - 1) // m) * m


# -----------------------------------------------------------------------------
# Fused per-stage Pallas kernel (all convs of a ConvBlock + optional sigmoid
# head), one image per grid step, everything resident in VMEM.
# -----------------------------------------------------------------------------
def _stage_kernel(*refs, n_src, taps0_off, n_convs, has_head, ws, ho, wo):
    """refs = (mask, src_0..src_{n_src-1}, [w, p] * n_total, out, act_scratch)

    mask : (1, ls_pad) f32   1.0 on lanes that are real output pixels
    src  : (1, C_i, ls_pad) bf16   flattened zero-ring-padded activation
    w    : (Cout, T*Cin) bf16      tap-folded weight
    p    : (Cout, 3) f32           [bias, gamma, beta]
    out  : (1, Cout_o, ls_pad)     bf16 (stage) / f32 (sigmoid head)
    act  : (C_stage, ls_pad) f32   VMEM scratch for inter-conv activations
    """
    n_total = n_convs + (1 if has_head else 0)
    mask_ref = refs[0]
    src_refs = refs[1:1 + n_src]
    conv_refs = refs[1 + n_src:1 + n_src + 2 * n_total]
    o_ref = refs[1 + n_src + 2 * n_total]
    act_ref = refs[2 + n_src + 2 * n_total]

    ls = (ho + 2) * (wo + 2)
    inv_cnt = 1.0 / float(ho * wo)
    taps33 = tuple(dy * ws + dx for dy in range(3) for dx in range(3))

    mask = mask_ref[...]                                   # (1, ls_pad) f32

    # Zero the scratch once; every conv re-writes the same interior window,
    # so the padding ring / lane tail stay zero for the next conv's taps.
    if n_total > 1:
        act_ref[...] = jnp.zeros_like(act_ref)

    def instance_norm_lrelu(y, lc, gamma, beta):
        # InstanceNorm2d (biased var, eps=1e-5, affine) + LeakyReLU(0.01).
        # Single cross-lane reduction over the stacked [y*m ; (y*m)*y].
        cout = y.shape[0]
        m = mask[:, :lc]
        ym = y * m
        both = jnp.concatenate([ym, ym * y], axis=0)       # (2*cout, lc)
        s = jnp.sum(both, axis=1, keepdims=True) * inv_cnt
        mean = s[:cout]
        var = jnp.maximum(s[cout:] - mean * mean, 0.0)
        yn = (y - mean) * jax.lax.rsqrt(var + 1e-5)
        yn = yn * gamma + beta
        return jnp.where(yn >= 0.0, yn, 0.01 * yn)

    # First conv reads the (already padded-flat) HBM inputs; later convs read
    # the VMEM scratch.  All channel counts are multiples of 8 -> aligned.
    srcs = [r[0].astype(jnp.float32) for r in src_refs]    # (C_i, ls_pad) f32
    offs = taps0_off
    for i in range(n_total):
        w_ref = conv_refs[2 * i]
        p_ref = conv_refs[2 * i + 1]
        lc = ls - max(offs)

        # Tap folding: stack the shifted lane-slices along sublanes and do a
        # single wide-K MXU contraction.
        stacked = jnp.concatenate(
            [s[:, off:off + lc] for off in offs for s in srcs], axis=0)
        stacked = stacked.astype(jnp.bfloat16)

        p = p_ref[...]                                     # (cout, 3) f32
        y = jnp.dot(w_ref[...], stacked,
                    preferred_element_type=jnp.float32)
        y = y + p[:, 0:1]

        if has_head and i == n_total - 1:
            y = jax.nn.sigmoid(y)
        else:
            y = instance_norm_lrelu(y, lc, p[:, 1:2], p[:, 2:3])

        y = y * mask[:, :lc]                               # zero garbage/ring

        if i == n_total - 1:
            # Lane-dense zero of the whole (128-multiple) output block, then a
            # slice-store of the interior window.
            o_ref[...] = jnp.zeros_like(o_ref)
            o_ref[0, :, ws + 1:ws + 1 + lc] = y.astype(o_ref.dtype)
        else:
            act_ref[:, ws + 1:ws + 1 + lc] = y
            srcs = [act_ref]
            offs = taps33


# -----------------------------------------------------------------------------
# Host-side weight folding
# -----------------------------------------------------------------------------
def _fold_w_3x3(w):
    # (Cout, Cin, 3, 3) -> (Cout, 9*Cin); columns ordered (dy, dx) major,
    # input channel minor (matches the in-kernel stacking order).
    cout, cin = w.shape[0], w.shape[1]
    return jnp.transpose(w, (0, 2, 3, 1)).reshape(cout, 9 * cin)


def _fold_w_s2d(w):
    # Stride-2 3x3 conv on the space-to-depth input (pad=2): 4 super taps
    # (qoff, roff), each with a (Cout, 4*Cin) block; sub-block (pr, pc) holds
    # W[:, :, 2*qoff+pr-1, 2*roff+pc-1] (zero when out of the 3x3 range).
    cout, cin = w.shape[0], w.shape[1]
    cols = []
    for qoff in (0, 1):
        for roff in (0, 1):
            for pr in (0, 1):
                for pc in (0, 1):
                    dy = 2 * qoff + pr - 1
                    dx = 2 * roff + pc - 1
                    if 0 <= dy <= 2 and 0 <= dx <= 2:
                        cols.append(w[:, :, dy, dx])
                    else:
                        cols.append(jnp.zeros((cout, cin), w.dtype))
    return jnp.concatenate(cols, axis=1)                   # (Cout, 16*Cin)


# -----------------------------------------------------------------------------
# One pallas_call per ConvBlock stage (optionally with the sigmoid head fused)
# -----------------------------------------------------------------------------
def fused_stage(srcs, layers, *, ho, wo, first_mode, head=None):
    """srcs: list of (N, C_i, ls_pad) padded-flat activations (bf16-castable).
    layers: list of (w, b, gamma, beta).  head: optional (w, b) conv+sigmoid."""
    N = srcs[0].shape[0]
    ws = wo + 2
    ls = (ho + 2) * ws
    ls_pad = _round_up(ls, 128)
    for s in srcs:
        assert s.shape[0] == N and s.shape[2] == ls_pad
        assert s.shape[1] % 8 == 0, "source channels must be padded to 8"

    n_convs = len(layers)
    c_stage = layers[0][0].shape[0]
    has_head = head is not None
    n_total = n_convs + (1 if has_head else 0)

    if first_mode == "3x3":
        taps0_off = tuple(dy * ws + dx for dy in range(3) for dx in range(3))
        w0 = _fold_w_3x3(layers[0][0])
    elif first_mode == "s2d":
        taps0_off = (0, 1, ws, ws + 1)
        w0 = _fold_w_s2d(layers[0][0])
    else:
        raise ValueError(first_mode)
    cin_srcs = sum(s.shape[1] for s in srcs)
    assert w0.shape[1] == len(taps0_off) * cin_srcs

    # Static validity mask over the (128-padded) flat lane axis.
    row = np.arange(ls_pad)
    mask_np = ((row % ws) < wo) & ((row // ws) < ho) & (row < ls)
    mask = jnp.asarray(mask_np.astype(np.float32)).reshape(1, ls_pad)

    inputs = [mask]
    in_specs = [pl.BlockSpec((1, ls_pad), lambda n: (0, 0))]
    for s in srcs:
        c = s.shape[1]
        inputs.append(s.astype(jnp.bfloat16))
        in_specs.append(pl.BlockSpec((1, c, ls_pad), lambda n: (n, 0, 0)))

    def add_conv(w_folded, b, gamma, beta):
        cout = w_folded.shape[0]
        inputs.append(w_folded.astype(jnp.bfloat16))
        in_specs.append(pl.BlockSpec(w_folded.shape, lambda n: (0, 0)))
        p = jnp.stack([b, gamma, beta], axis=1).astype(jnp.float32)  # (cout,3)
        inputs.append(p)
        in_specs.append(pl.BlockSpec((cout, 3), lambda n: (0, 0)))

    add_conv(w0, layers[0][1], layers[0][2], layers[0][3])
    for i in range(1, n_convs):
        wi, bi, gi, bti = layers[i]
        add_conv(_fold_w_3x3(wi), bi, gi, bti)

    if has_head:
        hw, hb = head
        cout_o = hw.shape[0]
        add_conv(_fold_w_3x3(hw), hb,
                 jnp.ones((cout_o,), jnp.float32),
                 jnp.zeros((cout_o,), jnp.float32))
        out_dtype = jnp.float32
    else:
        cout_o = c_stage
        out_dtype = jnp.bfloat16

    kernel = functools.partial(
        _stage_kernel, n_src=len(srcs), taps0_off=taps0_off,
        n_convs=n_convs, has_head=has_head, ws=ws, ho=ho, wo=wo)

    out = pl.pallas_call(
        kernel,
        out_shape=jax.ShapeDtypeStruct((N, cout_o, ls_pad), out_dtype),
        grid_spec=pltpu.PrefetchScalarGridSpec(
            num_scalar_prefetch=0,
            grid=(N,),
            in_specs=in_specs,
            out_specs=pl.BlockSpec((1, cout_o, ls_pad), lambda n: (n, 0, 0)),
            scratch_shapes=[pltpu.VMEM((c_stage, ls_pad), jnp.float32)],
        ),
        compiler_params=pltpu.CompilerParams(
            dimension_semantics=("parallel",),
            vmem_limit_bytes=32 * 1024 * 1024,
        ),
    )(*inputs)
    return out


# -----------------------------------------------------------------------------
# Pure data-movement glue (XLA): pad / space-to-depth / resize
# -----------------------------------------------------------------------------
def _pad1_flatten(x3, ls_pad):
    n, c, h, w = x3.shape
    xp = jnp.pad(x3, ((0, 0), (0, 0), (1, 1), (1, 1)))
    xf = xp.reshape(n, c, (h + 2) * (w + 2))
    pad = ls_pad - xf.shape[-1]
    if pad:
        xf = jnp.pad(xf, ((0, 0), (0, 0), (0, pad)))
    return xf


def _unflatten(xf, h, w):
    n, c, _ = xf.shape
    ls = (h + 2) * (w + 2)
    return xf[:, :, :ls].reshape(n, c, h + 2, w + 2)[:, :, 1:h + 1, 1:w + 1]


def _s2d_from_flat(xf, h, w, ls_pad_out):
    # padded-by-1 flat (h, w) -> space-to-depth flat input for a stride-2 conv
    n, c, _ = xf.shape
    ls_in = (h + 2) * (w + 2)
    x3 = xf[:, :, :ls_in].reshape(n, c, h + 2, w + 2)
    x3 = jnp.pad(x3, ((0, 0), (0, 0), (1, 1), (1, 1)))      # = pad-2 of unpadded
    ho, wo = h // 2, w // 2
    x3 = x3.reshape(n, c, ho + 2, 2, wo + 2, 2)
    x3 = jnp.transpose(x3, (0, 3, 5, 1, 2, 4))               # (n, pr, pc, c, q, r)
    xs = x3.reshape(n, 4 * c, (ho + 2) * (wo + 2))
    pad = ls_pad_out - xs.shape[-1]
    if pad:
        xs = jnp.pad(xs, ((0, 0), (0, 0), (0, pad)))
    return xs, ho, wo


# -----------------------------------------------------------------------------
# Forward pass (UNet encoder / decoder with skip connections)
# -----------------------------------------------------------------------------
def autoencoder_forward(params, x_nchw, *, strides):
    enc, dec, head = params
    enc = [list(stage) for stage in enc]
    N, c_in, H, W = x_nchw.shape

    # Pad input channels to a multiple of 8 (sublane-aligned in-kernel stacking);
    # matching zero weight columns keep the math identical.
    c_pad = _round_up(c_in, 8)
    if c_pad != c_in:
        x_nchw = jnp.pad(x_nchw, ((0, 0), (0, c_pad - c_in), (0, 0), (0, 0)))
        w0, b0, g0, bt0 = enc[0][0]
        w0 = jnp.pad(w0, ((0, 0), (0, c_pad - c_in), (0, 0), (0, 0)))
        enc[0][0] = (w0, b0, g0, bt0)

    h, w = H, W
    ls_pad = _round_up((h + 2) * (w + 2), 128)
    xf = _pad1_flatten(x_nchw.astype(jnp.bfloat16), ls_pad)

    skips = []
    n_stages = len(enc)
    for s, layers in enumerate(enc):
        stride = strides[s]
        if stride == 1:
            ho, wo = h, w
            srcs, mode = [xf], "3x3"
        elif stride == 2:
            assert h % 2 == 0 and w % 2 == 0
            lp = _round_up((h // 2 + 2) * (w // 2 + 2), 128)
            xs, ho, wo = _s2d_from_flat(xf, h, w, lp)
            srcs, mode = [xs], "s2d"
        else:
            raise NotImplementedError("only strides 1 and 2 are supported")
        xf = fused_stage(srcs, layers, ho=ho, wo=wo, first_mode=mode)
        h, w = ho, wo
        if s < n_stages - 1:
            skips.append((xf, h, w))

    n_dec = len(dec)
    for idx, layers in enumerate(dec):
        skf, sh, sw = skips[-1 - idx]
        lp = _round_up((sh + 2) * (sw + 2), 128)
        x3 = _unflatten(xf, h, w).astype(jnp.float32)
        if (h, w) != (sh, sw):
            # F.interpolate(mode='bilinear', align_corners=False)
            x3 = jax.image.resize(x3, (x3.shape[0], x3.shape[1], sh, sw),
                                  method="bilinear")
        xup = _pad1_flatten(x3.astype(jnp.bfloat16), lp)
        is_last = idx == n_dec - 1
        # Skip concat is folded into the kernel (two source refs, split-K);
        # the sigmoid head is fused into the last decoder stage.
        xf = fused_stage([xup, skf], layers, ho=sh, wo=sw, first_mode="3x3",
                         head=head if is_last else None)
        h, w = sh, sw

    return _unflatten(xf, h, w).astype(jnp.float32)          # NCHW, float32


# -----------------------------------------------------------------------------
# Parameter construction (mirrors Autoencoder.__init__ / initialize_weights)
# -----------------------------------------------------------------------------
def _init_conv(key, cin, cout, k=3):
    fan_out = cout * k * k
    std = (2.0 / fan_out) ** 0.5          # kaiming_normal_(fan_out, leaky_relu)
    w = std * jax.random.normal(key, (cout, cin, k, k), jnp.float32)
    b = jnp.zeros((cout,), jnp.float32)
    return w, b


def build_params(key, in_channels, out_channels, features,
                 n_conv_per_stage, n_conv_per_stage_decoder):
    n_stages = len(features)
    keys = iter(jax.random.split(key, 256))

    enc = []
    cur = in_channels
    for s in range(n_stages):
        stage = []
        for i in range(n_conv_per_stage[s]):
            cin = cur if i == 0 else features[s]
            w, b = _init_conv(next(keys), cin, features[s])
            stage.append((w, b,
                          jnp.ones((features[s],), jnp.float32),
                          jnp.zeros((features[s],), jnp.float32)))
        cur = features[s]
        enc.append(stage)

    dec = []
    for idx in range(n_stages - 1):
        d = n_stages - 2 - idx
        in_ch, out_ch = features[d + 1] + features[d], features[d]
        stage = []
        for i in range(n_conv_per_stage_decoder[d]):
            cin = in_ch if i == 0 else out_ch
            w, b = _init_conv(next(keys), cin, out_ch)
            stage.append((w, b,
                          jnp.ones((out_ch,), jnp.float32),
                          jnp.zeros((out_ch,), jnp.float32)))
        dec.append(stage)

    fw, fb = _init_conv(next(keys), features[0], out_channels)
    return enc, dec, (fw, fb)


# -----------------------------------------------------------------------------
# Pure-JAX (XLA) reference for correctness
# -----------------------------------------------------------------------------
def _reference_forward(params, x, *, strides):
    enc, dec, (fw, fb) = params

    def conv(x, w, b, stride):
        y = jax.lax.conv_general_dilated(
            x, w, window_strides=(stride, stride), padding=((1, 1), (1, 1)),
            dimension_numbers=("NCHW", "OIHW", "NCHW"))
        return y + b.reshape(1, -1, 1, 1)

    def inorm_lrelu(y, g, bt):
        mean = jnp.mean(y, axis=(2, 3), keepdims=True)
        var = jnp.mean((y - mean) ** 2, axis=(2, 3), keepdims=True)
        y = (y - mean) * jax.lax.rsqrt(var + 1e-5)
        y = y * g.reshape(1, -1, 1, 1) + bt.reshape(1, -1, 1, 1)
        return jnp.where(y >= 0, y, 0.01 * y)

    skips = []
    for s, layers in enumerate(enc):
        for i, (w, b, g, bt) in enumerate(layers):
            x = inorm_lrelu(conv(x, w, b, strides[s] if i == 0 else 1), g, bt)
        if s < len(enc) - 1:
            skips.append(x)
    for idx, layers in enumerate(dec):
        skip = skips[-1 - idx]
        if x.shape[2:] != skip.shape[2:]:
            x = jax.image.resize(
                x, (x.shape[0], x.shape[1], skip.shape[2], skip.shape[3]),
                method="bilinear")
        x = jnp.concatenate([x, skip], axis=1)
        for (w, b, g, bt) in layers:
            x = inorm_lrelu(conv(x, w, b, 1), g, bt)
    return jax.nn.sigmoid(conv(x, fw, fb, 1))


# -----------------------------------------------------------------------------
if __name__ == "__main__":
    in_channels = 3
    out_channels = 3
    features = [8, 16, 32]
    strides = (1, 2, 2)
    n_conv_per_stage = [2, 2, 2]
    n_conv_per_stage_decoder = [2, 2]

    key = jax.random.PRNGKey(0)
    k_params, k_x = jax.random.split(key)
    params = build_params(k_params, in_channels, out_channels, features,
                          n_conv_per_stage, n_conv_per_stage_decoder)
    x = jax.random.normal(k_x, (2, in_channels, 16, 16), jnp.float32)

    fwd = jax.jit(functools.partial(autoencoder_forward, strides=strides))
    out = fwd(params, x)
    jax.block_until_ready(out)

    assert out.shape == (2, out_channels, 16, 16), out.shape
    assert bool(jnp.all(jnp.isfinite(out)))
    assert bool(jnp.all((out >= 0.0) & (out <= 1.0)))        # sigmoid range

    # Correctness vs a pure-JAX (f32) reference; bf16 data path -> loose tol.
    ref = jax.jit(functools.partial(_reference_forward, strides=strides))(params, x)
    err = float(jnp.max(jnp.abs(out - ref.astype(jnp.float32))))
    assert err < 0.1, f"mismatch vs reference: max |diff| = {err}"

    print("KERNEL_OK")
</pallas_src>

<mosaic_0001>
module attributes {stable_mosaic.version = 11 : i64} {
  func.func @_stage_kernel(%arg0: i32, %arg1: memref<1x384xf32, #tpu.memory_space<vmem>>, %arg2: memref<1x8x384xbf16, #tpu.memory_space<vmem>>, %arg3: memref<8x72xbf16, #tpu.memory_space<vmem>>, %arg4: memref<8x3xf32, #tpu.memory_space<vmem>>, %arg5: memref<8x72xbf16, #tpu.memory_space<vmem>>, %arg6: memref<8x3xf32, #tpu.memory_space<vmem>>, %arg7: memref<1x8x384xbf16, #tpu.memory_space<vmem>>, %arg8: memref<8x384xf32, #tpu.memory_space<vmem>>) attributes {dimension_semantics = [#tpu.dimension_semantics<parallel>], iteration_bounds = array<i64: 2>, scalar_prefetch = 0 : i64, scratch_operands = 1 : i64, tpu.core_type = #tpu.core_type<tc>, window_params = [{pipeline_mode = #tpu.pipeline_mode<synchronous>, transform_indices = @transform_0, window_bounds = array<i64: 1, 384>}, {transform_indices = @transform_1, window_bounds = array<i64: 1, 8, 384>}, {pipeline_mode = #tpu.pipeline_mode<synchronous>, transform_indices = @transform_2, window_bounds = array<i64: 8, 72>}, {pipeline_mode = #tpu.pipeline_mode<synchronous>, transform_indices = @transform_3, window_bounds = array<i64: 8, 3>}, {pipeline_mode = #tpu.pipeline_mode<synchronous>, transform_indices = @transform_4, window_bounds = array<i64: 8, 72>}, {pipeline_mode = #tpu.pipeline_mode<synchronous>, transform_indices = @transform_5, window_bounds = array<i64: 8, 3>}, {transform_indices = @transform_6, window_bounds = array<i64: 1, 8, 384>}]} {
    %c0 = arith.constant 0 : index
    %c0_0 = arith.constant 0 : index
    %0 = vector.load %arg1[%c0, %c0_0] : memref<1x384xf32, #tpu.memory_space<vmem>>, vector<1x384xf32>
    %cst = arith.constant 0.000000e+00 : f32
    %1 = vector.broadcast %cst : f32 to vector<8x384xf32>
    %c0_1 = arith.constant 0 : index
    %c0_2 = arith.constant 0 : index
    %2 = vector.load %arg8[%c0_1, %c0_2] : memref<8x384xf32, #tpu.memory_space<vmem>>, vector<8x384xf32>
    tpu.vector_store %arg8[%c0_1, %c0_2], %1 {strides = array<i32>} : memref<8x384xf32, #tpu.memory_space<vmem>>, vector<8x384xf32>,
    %c0_3 = arith.constant 0 : index
    %c0_4 = arith.constant 0 : index
    %c0_5 = arith.constant 0 : index
    %3 = vector.load %arg2[%c0_3, %c0_4, %c0_5] : memref<1x8x384xbf16, #tpu.memory_space<vmem>>, vector<1x8x384xbf16>
    %4 = vector.shape_cast %3 : vector<1x8x384xbf16> to vector<8x384xbf16>
    %5 = arith.extf %4 : vector<8x384xbf16> to vector<8x384xf32>
    %6 = vector.extract_strided_slice %5 {offsets = [0, 0], sizes = [8, 286], strides = [1, 1]} : vector<8x384xf32> to vector<8x286xf32>
    %7 = vector.extract_strided_slice %5 {offsets = [0, 1], sizes = [8, 286], strides = [1, 1]} : vector<8x384xf32> to vector<8x286xf32>
    %8 = vector.extract_strided_slice %5 {offsets = [0, 2], sizes = [8, 286], strides = [1, 1]} : vector<8x384xf32> to vector<8x286xf32>
    %9 = vector.extract_strided_slice %5 {offsets = [0, 18], sizes = [8, 286], strides = [1, 1]} : vector<8x384xf32> to vector<8x286xf32>
    %10 = vector.extract_strided_slice %5 {offsets = [0, 19], sizes = [8, 286], strides = [1, 1]} : vector<8x384xf32> to vector<8x286xf32>
    %11 = vector.extract_strided_slice %5 {offsets = [0, 20], sizes = [8, 286], strides = [1, 1]} : vector<8x384xf32> to vector<8x286xf32>
    %12 = vector.extract_strided_slice %5 {offsets = [0, 36], sizes = [8, 286], strides = [1, 1]} : vector<8x384xf32> to vector<8x286xf32>
    %13 = vector.extract_strided_slice %5 {offsets = [0, 37], sizes = [8, 286], strides = [1, 1]} : vector<8x384xf32> to vector<8x286xf32>
    %14 = vector.extract_strided_slice %5 {offsets = [0, 38], sizes = [8, 286], strides = [1, 1]} : vector<8x384xf32> to vector<8x286xf32>
    %15 = tpu.concatenate %6, %7, %8, %9, %10, %11, %12, %13, %14 in 0 : vector<8x286xf32>, vector<8x286xf32>, vector<8x286xf32>, vector<8x286xf32>, vector<8x286xf32>, vector<8x286xf32>, vector<8x286xf32>, vector<8x286xf32>, vector<8x286xf32> -> vector<72x286xf32>
    %16 = arith.truncf %15 : vector<72x286xf32> to vector<72x286xbf16>
    %c0_6 = arith.constant 0 : index
    %c0_7 = arith.constant 0 : index
    %17 = vector.load %arg4[%c0_6, %c0_7] : memref<8x3xf32, #tpu.memory_space<vmem>>, vector<8x3xf32>
    %c0_8 = arith.constant 0 : index
    %c0_9 = arith.constant 0 : index
    %18 = vector.load %arg3[%c0_8, %c0_9] : memref<8x72xbf16, #tpu.memory_space<vmem>>, vector<8x72xbf16>
    %cst_10 = arith.constant dense<0.000000e+00> : vector<8x286xf32>
    %19 = tpu.matmul %18, %16, %cst_10 {dimension_numbers = #tpu.dot_dimension_numbers<[1], [0], [0], [1], [0, 0, 1, 1], [], []>} : vector<8x72xbf16>, vector<72x286xbf16>, vector<8x286xf32> -> vector<8x286xf32>
    %20 = vector.extract_strided_slice %17 {offsets = [0, 0], sizes = [8, 1], strides = [1, 1]} : vector<8x3xf32> to vector<8x1xf32>
    %21 = vector.broadcast %20 : vector<8x1xf32> to vector<8x286xf32>
    %22 = arith.addf %19, %21 : vector<8x286xf32>
    %23 = vector.extract_strided_slice %17 {offsets = [0, 1], sizes = [8, 1], strides = [1, 1]} : vector<8x3xf32> to vector<8x1xf32>
    %24 = vector.extract_strided_slice %17 {offsets = [0, 2], sizes = [8, 1], strides = [1, 1]} : vector<8x3xf32> to vector<8x1xf32>
    %25 = vector.extract_strided_slice %0 {offsets = [0, 0], sizes = [1, 286], strides = [1, 1]} : vector<1x384xf32> to vector<1x286xf32>
    %26 = vector.broadcast %25 : vector<1x286xf32> to vector<8x286xf32>
    %27 = arith.mulf %22, %26 : vector<8x286xf32>
    %28 = arith.mulf %27, %22 : vector<8x286xf32>
    %29 = tpu.concatenate %27, %28 in 0 : vector<8x286xf32>, vector<8x286xf32> -> vector<16x286xf32>
    %cst_11 = arith.constant dense<0.000000e+00> : vector<16xf32>
    %30 = vector.multi_reduction <add>, %29, %cst_11 [1] : vector<16x286xf32> to vector<16xf32>
    %31 = vector.shape_cast %30 : vector<16xf32> to vector<16x1xf32>
    %cst_12 = arith.constant 3.906250e-03 : f32
    %32 = vector.broadcast %cst_12 : f32 to vector<16x1xf32>
    %33 = arith.mulf %31, %32 : vector<16x1xf32>
    %34 = vector.extract_strided_slice %33 {offsets = [0, 0], sizes = [8, 1], strides = [1, 1]} : vector<16x1xf32> to vector<8x1xf32>
    %35 = vector.extract_strided_slice %33 {offsets = [8, 0], sizes = [8, 1], strides = [1, 1]} : vector<16x1xf32> to vector<8x1xf32>
    %36 = arith.mulf %34, %34 : vector<8x1xf32>
    %37 = arith.subf %35, %36 : vector<8x1xf32>
    %cst_13 = arith.constant 0.000000e+00 : f32
    %38 = vector.broadcast %cst_13 : f32 to vector<8x1xf32>
    %39 = arith.maximumf %37, %38 : vector<8x1xf32>
    %40 = vector.broadcast %34 : vector<8x1xf32> to vector<8x286xf32>
    %41 = arith.subf %22, %40 : vector<8x286xf32>
    %cst_14 = arith.constant 9.99999974E-6 : f32
    %42 = vector.broadcast %cst_14 : f32 to vector<8x1xf32>
    %43 = arith.addf %39, %42 : vector<8x1xf32>
    %44 = math.rsqrt %43 : vector<8x1xf32>
    %45 = vector.broadcast %44 : vector<8x1xf32> to vector<8x286xf32>
    %46 = arith.mulf %41, %45 : vector<8x286xf32>
    %47 = vector.broadcast %23 : vector<8x1xf32> to vector<8x286xf32>
    %48 = arith.mulf %46, %47 : vector<8x286xf32>
    %49 = vector.broadcast %24 : vector<8x1xf32> to vector<8x286xf32>
    %50 = arith.addf %48, %49 : vector<8x286xf32>
    %cst_15 = arith.constant 0.000000e+00 : f32
    %51 = vector.broadcast %cst_15 : f32 to vector<8x286xf32>
    %52 = arith.cmpf oge, %50, %51 : vector<8x286xf32>
    %cst_16 = arith.constant 0.00999999977 : f32
    %53 = vector.broadcast %cst_16 : f32 to vector<8x286xf32>
    %54 = arith.mulf %53, %50 : vector<8x286xf32>
    %55 = arith.select %52, %50, %54 : vector<8x286xi1>, vector<8x286xf32>
    %56 = vector.extract_strided_slice %0 {offsets = [0, 0], sizes = [1, 286], strides = [1, 1]} : vector<1x384xf32> to vector<1x286xf32>
    %57 = vector.broadcast %56 : vector<1x286xf32> to vector<8x286xf32>
    %58 = arith.mulf %55, %57 : vector<8x286xf32>
    %c0_17 = arith.constant 0 : index
    %c19 = arith.constant 19 : index
    %59 = vector.load %arg8[%c0_17, %c19] : memref<8x384xf32, #tpu.memory_space<vmem>>, vector<8x286xf32>
    tpu.vector_store %arg8[%c0_17, %c19], %58 {strides = array<i32>} : memref<8x384xf32, #tpu.memory_space<vmem>>, vector<8x286xf32>,
    %c0_18 = arith.constant 0 : index
    %c0_19 = arith.constant 0 : index
    %60 = vector.load %arg8[%c0_18, %c0_19] : memref<8x384xf32, #tpu.memory_space<vmem>>, vector<8x286xf32>
    %c0_20 = arith.constant 0 : index
    %c1 = arith.constant 1 : index
    %61 = vector.load %arg8[%c0_20, %c1] : memref<8x384xf32, #tpu.memory_space<vmem>>, vector<8x286xf32>
    %c0_21 = arith.constant 0 : index
    %c2 = arith.constant 2 : index
    %62 = vector.load %arg8[%c0_21, %c2] : memref<8x384xf32, #tpu.memory_space<vmem>>, vector<8x286xf32>
    %c0_22 = arith.constant 0 : index
    %c18 = arith.constant 18 : index
    %63 = vector.load %arg8[%c0_22, %c18] : memref<8x384xf32, #tpu.memory_space<vmem>>, vector<8x286xf32>
    %c0_23 = arith.constant 0 : index
    %c19_24 = arith.constant 19 : index
    %64 = vector.load %arg8[%c0_23, %c19_24] : memref<8x384xf32, #tpu.memory_space<vmem>>, vector<8x286xf32>
    %c0_25 = arith.constant 0 : index
    %c20 = arith.constant 20 : index
    %65 = vector.load %arg8[%c0_25, %c20] : memref<8x384xf32, #tpu.memory_space<vmem>>, vector<8x286xf32>
    %c0_26 = arith.constant 0 : index
    %c36 = arith.constant 36 : index
    %66 = vector.load %arg8[%c0_26, %c36] : memref<8x384xf32, #tpu.memory_space<vmem>>, vector<8x286xf32>
    %c0_27 = arith.constant 0 : index
    %c37 = arith.constant 37 : index
    %67 = vector.load %arg8[%c0_27, %c37] : memref<8x384xf32, #tpu.memory_space<vmem>>, vector<8x286xf32>
    %c0_28 = arith.constant 0 : index
    %c38 = arith.constant 38 : index
    %68 = vector.load %arg8[%c0_28, %c38] : memref<8x384xf32, #tpu.memory_space<vmem>>, vector<8x286xf32>
    %69 = tpu.concatenate %60, %61, %62, %63, %64, %65, %66, %67, %68 in 0 : vector<8x286xf32>, vector<8x286xf32>, vector<8x286xf32>, vector<8x286xf32>, vector<8x286xf32>, vector<8x286xf32>, vector<8x286xf32>, vector<8x286xf32>, vector<8x286xf32> -> vector<72x286xf32>
    %70 = arith.truncf %69 : vector<72x286xf32> to vector<72x286xbf16>
    %c0_29 = arith.constant 0 : index
    %c0_30 = arith.constant 0 : index
    %71 = vector.load %arg6[%c0_29, %c0_30] : memref<8x3xf32, #tpu.memory_space<vmem>>, vector<8x3xf32>
    %c0_31 = arith.constant 0 : index
    %c0_32 = arith.constant 0 : index
    %72 = vector.load %arg5[%c0_31, %c0_32] : memref<8x72xbf16, #tpu.memory_space<vmem>>, vector<8x72xbf16>
    %cst_33 = arith.constant dense<0.000000e+00> : vector<8x286xf32>
    %73 = tpu.matmul %72, %70, %cst_33 {dimension_numbers = #tpu.dot_dimension_numbers<[1], [0], [0], [1], [0, 0, 1, 1], [], []>} : vector<8x72xbf16>, vector<72x286xbf16>, vector<8x286xf32> -> vector<8x286xf32>
    %74 = vector.extract_strided_slice %71 {offsets = [0, 0], sizes = [8, 1], strides = [1, 1]} : vector<8x3xf32> to vector<8x1xf32>
    %75 = vector.broadcast %74 : vector<8x1xf32> to vector<8x286xf32>
    %76 = arith.addf %73, %75 : vector<8x286xf32>
    %77 = vector.extract_strided_slice %71 {offsets = [0, 1], sizes = [8, 1], strides = [1, 1]} : vector<8x3xf32> to vector<8x1xf32>
    %78 = vector.extract_strided_slice %71 {offsets = [0, 2], sizes = [8, 1], strides = [1, 1]} : vector<8x3xf32> to vector<8x1xf32>
    %79 = vector.extract_strided_slice %0 {offsets = [0, 0], sizes = [1, 286], strides = [1, 1]} : vector<1x384xf32> to vector<1x286xf32>
    %80 = vector.broadcast %79 : vector<1x286xf32> to vector<8x286xf32>
    %81 = arith.mulf %76, %80 : vector<8x286xf32>
    %82 = arith.mulf %81, %76 : vector<8x286xf32>
    %83 = tpu.concatenate %81, %82 in 0 : vector<8x286xf32>, vector<8x286xf32> -> vector<16x286xf32>
    %cst_34 = arith.constant dense<0.000000e+00> : vector<16xf32>
    %84 = vector.multi_reduction <add>, %83, %cst_34 [1] : vector<16x286xf32> to vector<16xf32>
    %85 = vector.shape_cast %84 : vector<16xf32> to vector<16x1xf32>
    %cst_35 = arith.constant 3.906250e-03 : f32
    %86 = vector.broadcast %cst_35 : f32 to vector<16x1xf32>
    %87 = arith.mulf %85, %86 : vector<16x1xf32>
    %88 = vector.extract_strided_slice %87 {offsets = [0, 0], sizes = [8, 1], strides = [1, 1]} : vector<16x1xf32> to vector<8x1xf32>
    %89 = vector.extract_strided_slice %87 {offsets = [8, 0], sizes = [8, 1], strides = [1, 1]} : vector<16x1xf32> to vector<8x1xf32>
    %90 = arith.mulf %88, %88 : vector<8x1xf32>
    %91 = arith.subf %89, %90 : vector<8x1xf32>
    %cst_36 = arith.constant 0.000000e+00 : f32
    %92 = vector.broadcast %cst_36 : f32 to vector<8x1xf32>
    %93 = arith.maximumf %91, %92 : vector<8x1xf32>
    %94 = vector.broadcast %88 : vector<8x1xf32> to vector<8x286xf32>
    %95 = arith.subf %76, %94 : vector<8x286xf32>
    %cst_37 = arith.constant 9.99999974E-6 : f32
    %96 = vector.broadcast %cst_37 : f32 to vector<8x1xf32>
    %97 = arith.addf %93, %96 : vector<8x1xf32>
    %98 = math.rsqrt %97 : vector<8x1xf32>
    %99 = vector.broadcast %98 : vector<8x1xf32> to vector<8x286xf32>
    %100 = arith.mulf %95, %99 : vector<8x286xf32>
    %101 = vector.broadcast %77 : vector<8x1xf32> to vector<8x286xf32>
    %102 = arith.mulf %100, %101 : vector<8x286xf32>
    %103 = vector.broadcast %78 : vector<8x1xf32> to vector<8x286xf32>
    %104 = arith.addf %102, %103 : vector<8x286xf32>
    %cst_38 = arith.constant 0.000000e+00 : f32
    %105 = vector.broadcast %cst_38 : f32 to vector<8x286xf32>
    %106 = arith.cmpf oge, %104, %105 : vector<8x286xf32>
    %cst_39 = arith.constant 0.00999999977 : f32
    %107 = vector.broadcast %cst_39 : f32 to vector<8x286xf32>
    %108 = arith.mulf %107, %104 : vector<8x286xf32>
    %109 = arith.select %106, %104, %108 : vector<8x286xi1>, vector<8x286xf32>
    %110 = vector.extract_strided_slice %0 {offsets = [0, 0], sizes = [1, 286], strides = [1, 1]} : vector<1x384xf32> to vector<1x286xf32>
    %111 = vector.broadcast %110 : vector<1x286xf32> to vector<8x286xf32>
    %112 = arith.mulf %109, %111 : vector<8x286xf32>
    %cst_40 = arith.constant 0.000000e+00 : bf16
    %113 = vector.broadcast %cst_40 : bf16 to vector<1x8x384xbf16>
    %c0_41 = arith.constant 0 : index
    %c0_42 = arith.constant 0 : index
    %c0_43 = arith.constant 0 : index
    %114 = vector.load %arg7[%c0_41, %c0_42, %c0_43] : memref<1x8x384xbf16, #tpu.memory_space<vmem>>, vector<1x8x384xbf16>
    tpu.vector_store %arg7[%c0_41, %c0_42, %c0_43], %113 {strides = array<i32>} : memref<1x8x384xbf16, #tpu.memory_space<vmem>>, vector<1x8x384xbf16>,
    %115 = arith.truncf %112 : vector<8x286xf32> to vector<8x286xbf16>
    %c0_44 = arith.constant 0 : index
    %c0_45 = arith.constant 0 : index
    %c19_46 = arith.constant 19 : index
    %116 = vector.load %arg7[%c0_44, %c0_45, %c19_46] : memref<1x8x384xbf16, #tpu.memory_space<vmem>>, vector<1x8x286xbf16>
    %117 = vector.shape_cast %116 : vector<1x8x286xbf16> to vector<8x286xbf16>
    %118 = vector.shape_cast %115 : vector<8x286xbf16> to vector<1x8x286xbf16>
    tpu.vector_store %arg7[%c0_44, %c0_45, %c19_46], %118 {strides = array<i32>} : memref<1x8x384xbf16, #tpu.memory_space<vmem>>, vector<1x8x286xbf16>,
    return
  }
  func.func @transform_0(%arg0: i32) -> (i32, i32) {
    %c0_i32 = arith.constant 0 : i32
    %c0_i32_0 = arith.constant 0 : i32
    %c0_i32_1 = arith.constant 0 : i32
    return %c0_i32, %c0_i32_0 : i32, i32
  }
  func.func @transform_1(%arg0: i32) -> (i32, i32, i32) {
    %c0_i32 = arith.constant 0 : i32
    %c0_i32_0 = arith.constant 0 : i32
    %c0_i32_1 = arith.constant 0 : i32
    return %arg0, %c0_i32, %c0_i32_0 : i32, i32, i32
  }
  func.func @transform_2(%arg0: i32) -> (i32, i32) {
    %c0_i32 = arith.constant 0 : i32
    %c0_i32_0 = arith.constant 0 : i32
    %c0_i32_1 = arith.constant 0 : i32
    return %c0_i32, %c0_i32_0 : i32, i32
  }
  func.func @transform_3(%arg0: i32) -> (i32, i32) {
    %c0_i32 = arith.constant 0 : i32
    %c0_i32_0 = arith.constant 0 : i32
    %c0_i32_1 = arith.constant 0 : i32
    return %c0_i32, %c0_i32_0 : i32, i32
  }
  func.func @transform_4(%arg0: i32) -> (i32, i32) {
    %c0_i32 = arith.constant 0 : i32
    %c0_i32_0 = arith.constant 0 : i32
    %c0_i32_1 = arith.constant 0 : i32
    return %c0_i32, %c0_i32_0 : i32, i32
  }
  func.func @transform_5(%arg0: i32) -> (i32, i32) {
    %c0_i32 = arith.constant 0 : i32
    %c0_i32_0 = arith.constant 0 : i32
    %c0_i32_1 = arith.constant 0 : i32
    return %c0_i32, %c0_i32_0 : i32, i32
  }
  func.func @transform_6(%arg0: i32) -> (i32, i32, i32) {
    %c0_i32 = arith.constant 0 : i32
    %c0_i32_0 = arith.constant 0 : i32
    %c0_i32_1 = arith.constant 0 : i32
    return %arg0, %c0_i32, %c0_i32_0 : i32, i32, i32
  }
}

module attributes {stable_mosaic.version = 11 : i64} {
  func.func @_stage_kernel(%arg0: i32, %arg1: memref<1x128xf32, #tpu.memory_space<vmem>>, %arg2: memref<1x32x128xbf16, #tpu.memory_space<vmem>>, %arg3: memref<16x128xbf16, #tpu.memory_space<vmem>>, %arg4: memref<16x3xf32, #tpu.memory_space<vmem>>, %arg5: memref<16x144xbf16, #tpu.memory_space<vmem>>, %arg6: memref<16x3xf32, #tpu.memory_space<vmem>>, %arg7: memref<1x16x128xbf16, #tpu.memory_space<vmem>>, %arg8: memref<16x128xf32, #tpu.memory_space<vmem>>) attributes {dimension_semantics = [#tpu.dimension_semantics<parallel>], iteration_bounds = array<i64: 2>, scalar_prefetch = 0 : i64, scratch_operands = 1 : i64, tpu.core_type = #tpu.core_type<tc>, window_params = [{pipeline_mode = #tpu.pipeline_mode<synchronous>, transform_indices = @transform_0, window_bounds = array<i64: 1, 128>}, {transform_indices = @transform_1, window_bounds = array<i64: 1, 32, 128>}, {pipeline_mode = #tpu.pipeline_mode<synchronous>, transform_indices = @transform_2, window_bounds = array<i64: 16, 128>}, {pipeline_mode = #tpu.pipeline_mode<synchronous>, transform_indices = @transform_3, window_bounds = array<i64: 16, 3>}, {pipeline_mode = #tpu.pipeline_mode<synchronous>, transform_indices = @transform_4, window_bounds = array<i64: 16, 144>}, {pipeline_mode = #tpu.pipeline_mode<synchronous>, transform_indices = @transform_5, window_bounds = array<i64: 16, 3>}, {transform_indices = @transform_6, window_bounds = array<i64: 1, 16, 128>}]} {
    %c0 = arith.constant 0 : index
    %c0_0 = arith.constant 0 : index
    %0 = vector.load %arg1[%c0, %c0_0] : memref<1x128xf32, #tpu.memory_space<vmem>>, vector<1x128xf32>
    %cst = arith.constant 0.000000e+00 : f32
    %1 = vector.broadcast %cst : f32 to vector<16x128xf32>
    %c0_1 = arith.constant 0 : index
    %c0_2 = arith.constant 0 : index
    %2 = vector.load %arg8[%c0_1, %c0_2] : memref<16x128xf32, #tpu.memory_space<vmem>>, vector<16x128xf32>
    tpu.vector_store %arg8[%c0_1, %c0_2], %1 {strides = array<i32>} : memref<16x128xf32, #tpu.memory_space<vmem>>, vector<16x128xf32>,
    %c0_3 = arith.constant 0 : index
    %c0_4 = arith.constant 0 : index
    %c0_5 = arith.constant 0 : index
    %3 = vector.load %arg2[%c0_3, %c0_4, %c0_5] : memref<1x32x128xbf16, #tpu.memory_space<vmem>>, vector<1x32x128xbf16>
    %4 = vector.shape_cast %3 : vector<1x32x128xbf16> to vector<32x128xbf16>
    %5 = arith.extf %4 : vector<32x128xbf16> to vector<32x128xf32>
    %6 = vector.extract_strided_slice %5 {offsets = [0, 0], sizes = [32, 89], strides = [1, 1]} : vector<32x128xf32> to vector<32x89xf32>
    %7 = vector.extract_strided_slice %5 {offsets = [0, 1], sizes = [32, 89], strides = [1, 1]} : vector<32x128xf32> to vector<32x89xf32>
    %8 = vector.extract_strided_slice %5 {offsets = [0, 10], sizes = [32, 89], strides = [1, 1]} : vector<32x128xf32> to vector<32x89xf32>
    %9 = vector.extract_strided_slice %5 {offsets = [0, 11], sizes = [32, 89], strides = [1, 1]} : vector<32x128xf32> to vector<32x89xf32>
    %10 = tpu.concatenate %6, %7, %8, %9 in 0 : vector<32x89xf32>, vector<32x89xf32>, vector<32x89xf32>, vector<32x89xf32> -> vector<128x89xf32>
    %11 = arith.truncf %10 : vector<128x89xf32> to vector<128x89xbf16>
    %c0_6 = arith.constant 0 : index
    %c0_7 = arith.constant 0 : index
    %12 = vector.load %arg4[%c0_6, %c0_7] : memref<16x3xf32, #tpu.memory_space<vmem>>, vector<16x3xf32>
    %c0_8 = arith.constant 0 : index
    %c0_9 = arith.constant 0 : index
    %13 = vector.load %arg3[%c0_8, %c0_9] : memref<16x128xbf16, #tpu.memory_space<vmem>>, vector<16x128xbf16>
    %cst_10 = arith.constant dense<0.000000e+00> : vector<16x89xf32>
    %14 = tpu.matmul %13, %11, %cst_10 {dimension_numbers = #tpu.dot_dimension_numbers<[1], [0], [0], [1], [0, 0, 1, 1], [], []>} : vector<16x128xbf16>, vector<128x89xbf16>, vector<16x89xf32> -> vector<16x89xf32>
    %15 = vector.extract_strided_slice %12 {offsets = [0, 0], sizes = [16, 1], strides = [1, 1]} : vector<16x3xf32> to vector<16x1xf32>
    %16 = vector.broadcast %15 : vector<16x1xf32> to vector<16x89xf32>
    %17 = arith.addf %14, %16 : vector<16x89xf32>
    %18 = vector.extract_strided_slice %12 {offsets = [0, 1], sizes = [16, 1], strides = [1, 1]} : vector<16x3xf32> to vector<16x1xf32>
    %19 = vector.extract_strided_slice %12 {offsets = [0, 2], sizes = [16, 1], strides = [1, 1]} : vector<16x3xf32> to vector<16x1xf32>
    %20 = vector.extract_strided_slice %0 {offsets = [0, 0], sizes = [1, 89], strides = [1, 1]} : vector<1x128xf32> to vector<1x89xf32>
    %21 = vector.broadcast %20 : vector<1x89xf32> to vector<16x89xf32>
    %22 = arith.mulf %17, %21 : vector<16x89xf32>
    %23 = arith.mulf %22, %17 : vector<16x89xf32>
    %24 = tpu.concatenate %22, %23 in 0 : vector<16x89xf32>, vector<16x89xf32> -> vector<32x89xf32>
    %cst_11 = arith.constant dense<0.000000e+00> : vector<32xf32>
    %25 = vector.multi_reduction <add>, %24, %cst_11 [1] : vector<32x89xf32> to vector<32xf32>
    %26 = vector.shape_cast %25 : vector<32xf32> to vector<32x1xf32>
    %cst_12 = arith.constant 1.562500e-02 : f32
    %27 = vector.broadcast %cst_12 : f32 to vector<32x1xf32>
    %28 = arith.mulf %26, %27 : vector<32x1xf32>
    %29 = vector.extract_strided_slice %28 {offsets = [0, 0], sizes = [16, 1], strides = [1, 1]} : vector<32x1xf32> to vector<16x1xf32>
    %30 = vector.extract_strided_slice %28 {offsets = [16, 0], sizes = [16, 1], strides = [1, 1]} : vector<32x1xf32> to vector<16x1xf32>
    %31 = arith.mulf %29, %29 : vector<16x1xf32>
    %32 = arith.subf %30, %31 : vector<16x1xf32>
    %cst_13 = arith.constant 0.000000e+00 : f32
    %33 = vector.broadcast %cst_13 : f32 to vector<16x1xf32>
    %34 = arith.maximumf %32, %33 : vector<16x1xf32>
    %35 = vector.broadcast %29 : vector<16x1xf32> to vector<16x89xf32>
    %36 = arith.subf %17, %35 : vector<16x89xf32>
    %cst_14 = arith.constant 9.99999974E-6 : f32
    %37 = vector.broadcast %cst_14 : f32 to vector<16x1xf32>
    %38 = arith.addf %34, %37 : vector<16x1xf32>
    %39 = math.rsqrt %38 : vector<16x1xf32>
    %40 = vector.broadcast %39 : vector<16x1xf32> to vector<16x89xf32>
    %41 = arith.mulf %36, %40 : vector<16x89xf32>
    %42 = vector.broadcast %18 : vector<16x1xf32> to vector<16x89xf32>
    %43 = arith.mulf %41, %42 : vector<16x89xf32>
    %44 = vector.broadcast %19 : vector<16x1xf32> to vector<16x89xf32>
    %45 = arith.addf %43, %44 : vector<16x89xf32>
    %cst_15 = arith.constant 0.000000e+00 : f32
    %46 = vector.broadcast %cst_15 : f32 to vector<16x89xf32>
    %47 = arith.cmpf oge, %45, %46 : vector<16x89xf32>
    %cst_16 = arith.constant 0.00999999977 : f32
    %48 = vector.broadcast %cst_16 : f32 to vector<16x89xf32>
    %49 = arith.mulf %48, %45 : vector<16x89xf32>
    %50 = arith.select %47, %45, %49 : vector<16x89xi1>, vector<16x89xf32>
    %51 = vector.extract_strided_slice %0 {offsets = [0, 0], sizes = [1, 89], strides = [1, 1]} : vector<1x128xf32> to vector<1x89xf32>
    %52 = vector.broadcast %51 : vector<1x89xf32> to vector<16x89xf32>
    %53 = arith.mulf %50, %52 : vector<16x89xf32>
    %c0_17 = arith.constant 0 : index
    %c11 = arith.constant 11 : index
    %54 = vector.load %arg8[%c0_17, %c11] : memref<16x128xf32, #tpu.memory_space<vmem>>, vector<16x89xf32>
    tpu.vector_store %arg8[%c0_17, %c11], %53 {strides = array<i32>} : memref<16x128xf32, #tpu.memory_space<vmem>>, vector<16x89xf32>,
    %c0_18 = arith.constant 0 : index
    %c0_19 = arith.constant 0 : index
    %55 = vector.load %arg8[%c0_18, %c0_19] : memref<16x128xf32, #tpu.memory_space<vmem>>, vector<16x78xf32>
    %c0_20 = arith.constant 0 : index
    %c1 = arith.constant 1 : index
    %56 = vector.load %arg8[%c0_20, %c1] : memref<16x128xf32, #tpu.memory_space<vmem>>, vector<16x78xf32>
    %c0_21 = arith.constant 0 : index
    %c2 = arith.constant 2 : index
    %57 = vector.load %arg8[%c0_21, %c2] : memref<16x128xf32, #tpu.memory_space<vmem>>, vector<16x78xf32>
    %c0_22 = arith.constant 0 : index
    %c10 = arith.constant 10 : index
    %58 = vector.load %arg8[%c0_22, %c10] : memref<16x128xf32, #tpu.memory_space<vmem>>, vector<16x78xf32>
    %c0_23 = arith.constant 0 : index
    %c11_24 = arith.constant 11 : index
    %59 = vector.load %arg8[%c0_23, %c11_24] : memref<16x128xf32, #tpu.memory_space<vmem>>, vector<16x78xf32>
    %c0_25 = arith.constant 0 : index
    %c12 = arith.constant 12 : index
    %60 = vector.load %arg8[%c0_25, %c12] : memref<16x128xf32, #tpu.memory_space<vmem>>, vector<16x78xf32>
    %c0_26 = arith.constant 0 : index
    %c20 = arith.constant 20 : index
    %61 = vector.load %arg8[%c0_26, %c20] : memref<16x128xf32, #tpu.memory_space<vmem>>, vector<16x78xf32>
    %c0_27 = arith.constant 0 : index
    %c21 = arith.constant 21 : index
    %62 = vector.load %arg8[%c0_27, %c21] : memref<16x128xf32, #tpu.memory_space<vmem>>, vector<16x78xf32>
    %c0_28 = arith.constant 0 : index
    %c22 = arith.constant 22 : index
    %63 = vector.load %arg8[%c0_28, %c22] : memref<16x128xf32, #tpu.memory_space<vmem>>, vector<16x78xf32>
    %64 = tpu.concatenate %55, %56, %57, %58, %59, %60, %61, %62, %63 in 0 : vector<16x78xf32>, vector<16x78xf32>, vector<16x78xf32>, vector<16x78xf32>, vector<16x78xf32>, vector<16x78xf32>, vector<16x78xf32>, vector<16x78xf32>, vector<16x78xf32> -> vector<144x78xf32>
    %65 = arith.truncf %64 : vector<144x78xf32> to vector<144x78xbf16>
    %c0_29 = arith.constant 0 : index
    %c0_30 = arith.constant 0 : index
    %66 = vector.load %arg6[%c0_29, %c0_30] : memref<16x3xf32, #tpu.memory_space<vmem>>, vector<16x3xf32>
    %c0_31 = arith.constant 0 : index
    %c0_32 = arith.constant 0 : index
    %67 = vector.load %arg5[%c0_31, %c0_32] : memref<16x144xbf16, #tpu.memory_space<vmem>>, vector<16x144xbf16>
    %cst_33 = arith.constant dense<0.000000e+00> : vector<16x78xf32>
    %68 = tpu.matmul %67, %65, %cst_33 {dimension_numbers = #tpu.dot_dimension_numbers<[1], [0], [0], [1], [0, 0, 1, 1], [], []>} : vector<16x144xbf16>, vector<144x78xbf16>, vector<16x78xf32> -> vector<16x78xf32>
    %69 = vector.extract_strided_slice %66 {offsets = [0, 0], sizes = [16, 1], strides = [1, 1]} : vector<16x3xf32> to vector<16x1xf32>
    %70 = vector.broadcast %69 : vector<16x1xf32> to vector<16x78xf32>
    %71 = arith.addf %68, %70 : vector<16x78xf32>
    %72 = vector.extract_strided_slice %66 {offsets = [0, 1], sizes = [16, 1], strides = [1, 1]} : vector<16x3xf32> to vector<16x1xf32>
    %73 = vector.extract_strided_slice %66 {offsets = [0, 2], sizes = [16, 1], strides = [1, 1]} : vector<16x3xf32> to vector<16x1xf32>
    %74 = vector.extract_strided_slice %0 {offsets = [0, 0], sizes = [1, 78], strides = [1, 1]} : vector<1x128xf32> to vector<1x78xf32>
    %75 = vector.broadcast %74 : vector<1x78xf32> to vector<16x78xf32>
    %76 = arith.mulf %71, %75 : vector<16x78xf32>
    %77 = arith.mulf %76, %71 : vector<16x78xf32>
    %78 = tpu.concatenate %76, %77 in 0 : vector<16x78xf32>, vector<16x78xf32> -> vector<32x78xf32>
    %cst_34 = arith.constant dense<0.000000e+00> : vector<32xf32>
    %79 = vector.multi_reduction <add>, %78, %cst_34 [1] : vector<32x78xf32> to vector<32xf32>
    %80 = vector.shape_cast %79 : vector<32xf32> to vector<32x1xf32>
    %cst_35 = arith.constant 1.562500e-02 : f32
    %81 = vector.broadcast %cst_35 : f32 to vector<32x1xf32>
    %82 = arith.mulf %80, %81 : vector<32x1xf32>
    %83 = vector.extract_strided_slice %82 {offsets = [0, 0], sizes = [16, 1], strides = [1, 1]} : vector<32x1xf32> to vector<16x1xf32>
    %84 = vector.extract_strided_slice %82 {offsets = [16, 0], sizes = [16, 1], strides = [1, 1]} : vector<32x1xf32> to vector<16x1xf32>
    %85 = arith.mulf %83, %83 : vector<16x1xf32>
    %86 = arith.subf %84, %85 : vector<16x1xf32>
    %cst_36 = arith.constant 0.000000e+00 : f32
    %87 = vector.broadcast %cst_36 : f32 to vector<16x1xf32>
    %88 = arith.maximumf %86, %87 : vector<16x1xf32>
    %89 = vector.broadcast %83 : vector<16x1xf32> to vector<16x78xf32>
    %90 = arith.subf %71, %89 : vector<16x78xf32>
    %cst_37 = arith.constant 9.99999974E-6 : f32
    %91 = vector.broadcast %cst_37 : f32 to vector<16x1xf32>
    %92 = arith.addf %88, %91 : vector<16x1xf32>
    %93 = math.rsqrt %92 : vector<16x1xf32>
    %94 = vector.broadcast %93 : vector<16x1xf32> to vector<16x78xf32>
    %95 = arith.mulf %90, %94 : vector<16x78xf32>
    %96 = vector.broadcast %72 : vector<16x1xf32> to vector<16x78xf32>
    %97 = arith.mulf %95, %96 : vector<16x78xf32>
    %98 = vector.broadcast %73 : vector<16x1xf32> to vector<16x78xf32>
    %99 = arith.addf %97, %98 : vector<16x78xf32>
    %cst_38 = arith.constant 0.000000e+00 : f32
    %100 = vector.broadcast %cst_38 : f32 to vector<16x78xf32>
    %101 = arith.cmpf oge, %99, %100 : vector<16x78xf32>
    %cst_39 = arith.constant 0.00999999977 : f32
    %102 = vector.broadcast %cst_39 : f32 to vector<16x78xf32>
    %103 = arith.mulf %102, %99 : vector<16x78xf32>
    %104 = arith.select %101, %99, %103 : vector<16x78xi1>, vector<16x78xf32>
    %105 = vector.extract_strided_slice %0 {offsets = [0, 0], sizes = [1, 78], strides = [1, 1]} : vector<1x128xf32> to vector<1x78xf32>
    %106 = vector.broadcast %105 : vector<1x78xf32> to vector<16x78xf32>
    %107 = arith.mulf %104, %106 : vector<16x78xf32>
    %cst_40 = arith.constant 0.000000e+00 : bf16
    %108 = vector.broadcast %cst_40 : bf16 to vector<1x16x128xbf16>
    %c0_41 = arith.constant 0 : index
    %c0_42 = arith.constant 0 : index
    %c0_43 = arith.constant 0 : index
    %109 = vector.load %arg7[%c0_41, %c0_42, %c0_43] : memref<1x16x128xbf16, #tpu.memory_space<vmem>>, vector<1x16x128xbf16>
    tpu.vector_store %arg7[%c0_41, %c0_42, %c0_43], %108 {strides = array<i32>} : memref<1x16x128xbf16, #tpu.memory_space<vmem>>, vector<1x16x128xbf16>,
    %110 = arith.truncf %107 : vector<16x78xf32> to vector<16x78xbf16>
    %c0_44 = arith.constant 0 : index
    %c0_45 = arith.constant 0 : index
    %c11_46 = arith.constant 11 : index
    %111 = vector.load %arg7[%c0_44, %c0_45, %c11_46] : memref<1x16x128xbf16, #tpu.memory_space<vmem>>, vector<1x16x78xbf16>
    %112 = vector.shape_cast %111 : vector<1x16x78xbf16> to vector<16x78xbf16>
    %113 = vector.shape_cast %110 : vector<16x78xbf16> to vector<1x16x78xbf16>
    tpu.vector_store %arg7[%c0_44, %c0_45, %c11_46], %113 {strides = array<i32>} : memref<1x16x128xbf16, #tpu.memory_space<vmem>>, vector<1x16x78xbf16>,
    return
  }
  func.func @transform_0(%arg0: i32) -> (i32, i32) {
    %c0_i32 = arith.constant 0 : i32
    %c0_i32_0 = arith.constant 0 : i32
    %c0_i32_1 = arith.constant 0 : i32
    return %c0_i32, %c0_i32_0 : i32, i32
  }
  func.func @transform_1(%arg0: i32) -> (i32, i32, i32) {
    %c0_i32 = arith.constant 0 : i32
    %c0_i32_0 = arith.constant 0 : i32
    %c0_i32_1 = arith.constant 0 : i32
    return %arg0, %c0_i32, %c0_i32_0 : i32, i32, i32
  }
  func.func @transform_2(%arg0: i32) -> (i32, i32) {
    %c0_i32 = arith.constant 0 : i32
    %c0_i32_0 = arith.constant 0 : i32
    %c0_i32_1 = arith.constant 0 : i32
    return %c0_i32, %c0_i32_0 : i32, i32
  }
  func.func @transform_3(%arg0: i32) -> (i32, i32) {
    %c0_i32 = arith.constant 0 : i32
    %c0_i32_0 = arith.constant 0 : i32
    %c0_i32_1 = arith.constant 0 : i32
    return %c0_i32, %c0_i32_0 : i32, i32
  }
  func.func @transform_4(%arg0: i32) -> (i32, i32) {
    %c0_i32 = arith.constant 0 : i32
    %c0_i32_0 = arith.constant 0 : i32
    %c0_i32_1 = arith.constant 0 : i32
    return %c0_i32, %c0_i32_0 : i32, i32
  }
  func.func @transform_5(%arg0: i32) -> (i32, i32) {
    %c0_i32 = arith.constant 0 : i32
    %c0_i32_0 = arith.constant 0 : i32
    %c0_i32_1 = arith.constant 0 : i32
    return %c0_i32, %c0_i32_0 : i32, i32
  }
  func.func @transform_6(%arg0: i32) -> (i32, i32, i32) {
    %c0_i32 = arith.constant 0 : i32
    %c0_i32_0 = arith.constant 0 : i32
    %c0_i32_1 = arith.constant 0 : i32
    return %arg0, %c0_i32, %c0_i32_0 : i32, i32, i32
  }
}

module attributes {stable_mosaic.version = 11 : i64} {
  func.func @_stage_kernel(%arg0: i32, %arg1: memref<1x128xf32, #tpu.memory_space<vmem>>, %arg2: memref<1x64x128xbf16, #tpu.memory_space<vmem>>, %arg3: memref<32x256xbf16, #tpu.memory_space<vmem>>, %arg4: memref<32x3xf32, #tpu.memory_space<vmem>>, %arg5: memref<32x288xbf16, #tpu.memory_space<vmem>>, %arg6: memref<32x3xf32, #tpu.memory_space<vmem>>, %arg7: memref<1x32x128xbf16, #tpu.memory_space<vmem>>, %arg8: memref<32x128xf32, #tpu.memory_space<vmem>>) attributes {dimension_semantics = [#tpu.dimension_semantics<parallel>], iteration_bounds = array<i64: 2>, scalar_prefetch = 0 : i64, scratch_operands = 1 : i64, tpu.core_type = #tpu.core_type<tc>, window_params = [{pipeline_mode = #tpu.pipeline_mode<synchronous>, transform_indices = @transform_0, window_bounds = array<i64: 1, 128>}, {transform_indices = @transform_1, window_bounds = array<i64: 1, 64, 128>}, {pipeline_mode = #tpu.pipeline_mode<synchronous>, transform_indices = @transform_2, window_bounds = array<i64: 32, 256>}, {pipeline_mode = #tpu.pipeline_mode<synchronous>, transform_indices = @transform_3, window_bounds = array<i64: 32, 3>}, {pipeline_mode = #tpu.pipeline_mode<synchronous>, transform_indices = @transform_4, window_bounds = array<i64: 32, 288>}, {pipeline_mode = #tpu.pipeline_mode<synchronous>, transform_indices = @transform_5, window_bounds = array<i64: 32, 3>}, {transform_indices = @transform_6, window_bounds = array<i64: 1, 32, 128>}]} {
    %c0 = arith.constant 0 : index
    %c0_0 = arith.constant 0 : index
    %0 = vector.load %arg1[%c0, %c0_0] : memref<1x128xf32, #tpu.memory_space<vmem>>, vector<1x128xf32>
    %cst = arith.constant 0.000000e+00 : f32
    %1 = vector.broadcast %cst : f32 to vector<32x128xf32>
    %c0_1 = arith.constant 0 : index
    %c0_2 = arith.constant 0 : index
    %2 = vector.load %arg8[%c0_1, %c0_2] : memref<32x128xf32, #tpu.memory_space<vmem>>, vector<32x128xf32>
    tpu.vector_store %arg8[%c0_1, %c0_2], %1 {strides = array<i32>} : memref<32x128xf32, #tpu.memory_space<vmem>>, vector<32x128xf32>,
    %c0_3 = arith.constant 0 : index
    %c0_4 = arith.constant 0 : index
    %c0_5 = arith.constant 0 : index
    %3 = vector.load %arg2[%c0_3, %c0_4, %c0_5] : memref<1x64x128xbf16, #tpu.memory_space<vmem>>, vector<1x64x128xbf16>
    %4 = vector.shape_cast %3 : vector<1x64x128xbf16> to vector<64x128xbf16>
    %5 = arith.extf %4 : vector<64x128xbf16> to vector<64x128xf32>
    %6 = vector.extract_strided_slice %5 {offsets = [0, 0], sizes = [64, 29], strides = [1, 1]} : vector<64x128xf32> to vector<64x29xf32>
    %7 = vector.extract_strided_slice %5 {offsets = [0, 1], sizes = [64, 29], strides = [1, 1]} : vector<64x128xf32> to vector<64x29xf32>
    %8 = vector.extract_strided_slice %5 {offsets = [0, 6], sizes = [64, 29], strides = [1, 1]} : vector<64x128xf32> to vector<64x29xf32>
    %9 = vector.extract_strided_slice %5 {offsets = [0, 7], sizes = [64, 29], strides = [1, 1]} : vector<64x128xf32> to vector<64x29xf32>
    %10 = tpu.concatenate %6, %7, %8, %9 in 0 : vector<64x29xf32>, vector<64x29xf32>, vector<64x29xf32>, vector<64x29xf32> -> vector<256x29xf32>
    %11 = arith.truncf %10 : vector<256x29xf32> to vector<256x29xbf16>
    %c0_6 = arith.constant 0 : index
    %c0_7 = arith.constant 0 : index
    %12 = vector.load %arg4[%c0_6, %c0_7] : memref<32x3xf32, #tpu.memory_space<vmem>>, vector<32x3xf32>
    %c0_8 = arith.constant 0 : index
    %c0_9 = arith.constant 0 : index
    %13 = vector.load %arg3[%c0_8, %c0_9] : memref<32x256xbf16, #tpu.memory_space<vmem>>, vector<32x256xbf16>
    %cst_10 = arith.constant dense<0.000000e+00> : vector<32x29xf32>
    %14 = tpu.matmul %13, %11, %cst_10 {dimension_numbers = #tpu.dot_dimension_numbers<[1], [0], [0], [1], [0, 0, 1, 1], [], []>} : vector<32x256xbf16>, vector<256x29xbf16>, vector<32x29xf32> -> vector<32x29xf32>
    %15 = vector.extract_strided_slice %12 {offsets = [0, 0], sizes = [32, 1], strides = [1, 1]} : vector<32x3xf32> to vector<32x1xf32>
    %16 = vector.broadcast %15 : vector<32x1xf32> to vector<32x29xf32>
    %17 = arith.addf %14, %16 : vector<32x29xf32>
    %18 = vector.extract_strided_slice %12 {offsets = [0, 1], sizes = [32, 1], strides = [1, 1]} : vector<32x3xf32> to vector<32x1xf32>
    %19 = vector.extract_strided_slice %12 {offsets = [0, 2], sizes = [32, 1], strides = [1, 1]} : vector<32x3xf32> to vector<32x1xf32>
    %20 = vector.extract_strided_slice %0 {offsets = [0, 0], sizes = [1, 29], strides = [1, 1]} : vector<1x128xf32> to vector<1x29xf32>
    %21 = vector.broadcast %20 : vector<1x29xf32> to vector<32x29xf32>
    %22 = arith.mulf %17, %21 : vector<32x29xf32>
    %23 = arith.mulf %22, %17 : vector<32x29xf32>
    %24 = tpu.concatenate %22, %23 in 0 : vector<32x29xf32>, vector<32x29xf32> -> vector<64x29xf32>
    %cst_11 = arith.constant dense<0.000000e+00> : vector<64xf32>
    %25 = vector.multi_reduction <add>, %24, %cst_11 [1] : vector<64x29xf32> to vector<64xf32>
    %26 = vector.shape_cast %25 : vector<64xf32> to vector<64x1xf32>
    %cst_12 = arith.constant 6.250000e-02 : f32
    %27 = vector.broadcast %cst_12 : f32 to vector<64x1xf32>
    %28 = arith.mulf %26, %27 : vector<64x1xf32>
    %29 = vector.extract_strided_slice %28 {offsets = [0, 0], sizes = [32, 1], strides = [1, 1]} : vector<64x1xf32> to vector<32x1xf32>
    %30 = vector.extract_strided_slice %28 {offsets = [32, 0], sizes = [32, 1], strides = [1, 1]} : vector<64x1xf32> to vector<32x1xf32>
    %31 = arith.mulf %29, %29 : vector<32x1xf32>
    %32 = arith.subf %30, %31 : vector<32x1xf32>
    %cst_13 = arith.constant 0.000000e+00 : f32
    %33 = vector.broadcast %cst_13 : f32 to vector<32x1xf32>
    %34 = arith.maximumf %32, %33 : vector<32x1xf32>
    %35 = vector.broadcast %29 : vector<32x1xf32> to vector<32x29xf32>
    %36 = arith.subf %17, %35 : vector<32x29xf32>
    %cst_14 = arith.constant 9.99999974E-6 : f32
    %37 = vector.broadcast %cst_14 : f32 to vector<32x1xf32>
    %38 = arith.addf %34, %37 : vector<32x1xf32>
    %39 = math.rsqrt %38 : vector<32x1xf32>
    %40 = vector.broadcast %39 : vector<32x1xf32> to vector<32x29xf32>
    %41 = arith.mulf %36, %40 : vector<32x29xf32>
    %42 = vector.broadcast %18 : vector<32x1xf32> to vector<32x29xf32>
    %43 = arith.mulf %41, %42 : vector<32x29xf32>
    %44 = vector.broadcast %19 : vector<32x1xf32> to vector<32x29xf32>
    %45 = arith.addf %43, %44 : vector<32x29xf32>
    %cst_15 = arith.constant 0.000000e+00 : f32
    %46 = vector.broadcast %cst_15 : f32 to vector<32x29xf32>
    %47 = arith.cmpf oge, %45, %46 : vector<32x29xf32>
    %cst_16 = arith.constant 0.00999999977 : f32
    %48 = vector.broadcast %cst_16 : f32 to vector<32x29xf32>
    %49 = arith.mulf %48, %45 : vector<32x29xf32>
    %50 = arith.select %47, %45, %49 : vector<32x29xi1>, vector<32x29xf32>
    %51 = vector.extract_strided_slice %0 {offsets = [0, 0], sizes = [1, 29], strides = [1, 1]} : vector<1x128xf32> to vector<1x29xf32>
    %52 = vector.broadcast %51 : vector<1x29xf32> to vector<32x29xf32>
    %53 = arith.mulf %50, %52 : vector<32x29xf32>
    %c0_17 = arith.constant 0 : index
    %c7 = arith.constant 7 : index
    %54 = vector.load %arg8[%c0_17, %c7] : memref<32x128xf32, #tpu.memory_space<vmem>>, vector<32x29xf32>
    tpu.vector_store %arg8[%c0_17, %c7], %53 {strides = array<i32>} : memref<32x128xf32, #tpu.memory_space<vmem>>, vector<32x29xf32>,
    %c0_18 = arith.constant 0 : index
    %c0_19 = arith.constant 0 : index
    %55 = vector.load %arg8[%c0_18, %c0_19] : memref<32x128xf32, #tpu.memory_space<vmem>>, vector<32x22xf32>
    %c0_20 = arith.constant 0 : index
    %c1 = arith.constant 1 : index
    %56 = vector.load %arg8[%c0_20, %c1] : memref<32x128xf32, #tpu.memory_space<vmem>>, vector<32x22xf32>
    %c0_21 = arith.constant 0 : index
    %c2 = arith.constant 2 : index
    %57 = vector.load %arg8[%c0_21, %c2] : memref<32x128xf32, #tpu.memory_space<vmem>>, vector<32x22xf32>
    %c0_22 = arith.constant 0 : index
    %c6 = arith.constant 6 : index
    %58 = vector.load %arg8[%c0_22, %c6] : memref<32x128xf32, #tpu.memory_space<vmem>>, vector<32x22xf32>
    %c0_23 = arith.constant 0 : index
    %c7_24 = arith.constant 7 : index
    %59 = vector.load %arg8[%c0_23, %c7_24] : memref<32x128xf32, #tpu.memory_space<vmem>>, vector<32x22xf32>
    %c0_25 = arith.constant 0 : index
    %c8 = arith.constant 8 : index
    %60 = vector.load %arg8[%c0_25, %c8] : memref<32x128xf32, #tpu.memory_space<vmem>>, vector<32x22xf32>
    %c0_26 = arith.constant 0 : index
    %c12 = arith.constant 12 : index
    %61 = vector.load %arg8[%c0_26, %c12] : memref<32x128xf32, #tpu.memory_space<vmem>>, vector<32x22xf32>
    %c0_27 = arith.constant 0 : index
    %c13 = arith.constant 13 : index
    %62 = vector.load %arg8[%c0_27, %c13] : memref<32x128xf32, #tpu.memory_space<vmem>>, vector<32x22xf32>
    %c0_28 = arith.constant 0 : index
    %c14 = arith.constant 14 : index
    %63 = vector.load %arg8[%c0_28, %c14] : memref<32x128xf32, #tpu.memory_space<vmem>>, vector<32x22xf32>
    %64 = tpu.concatenate %55, %56, %57, %58, %59, %60, %61, %62, %63 in 0 : vector<32x22xf32>, vector<32x22xf32>, vector<32x22xf32>, vector<32x22xf32>, vector<32x22xf32>, vector<32x22xf32>, vector<32x22xf32>, vector<32x22xf32>, vector<32x22xf32> -> vector<288x22xf32>
    %65 = arith.truncf %64 : vector<288x22xf32> to vector<288x22xbf16>
    %c0_29 = arith.constant 0 : index
    %c0_30 = arith.constant 0 : index
    %66 = vector.load %arg6[%c0_29, %c0_30] : memref<32x3xf32, #tpu.memory_space<vmem>>, vector<32x3xf32>
    %c0_31 = arith.constant 0 : index
    %c0_32 = arith.constant 0 : index
    %67 = vector.load %arg5[%c0_31, %c0_32] : memref<32x288xbf16, #tpu.memory_space<vmem>>, vector<32x288xbf16>
    %cst_33 = arith.constant dense<0.000000e+00> : vector<32x22xf32>
    %68 = tpu.matmul %67, %65, %cst_33 {dimension_numbers = #tpu.dot_dimension_numbers<[1], [0], [0], [1], [0, 0, 1, 1], [], []>} : vector<32x288xbf16>, vector<288x22xbf16>, vector<32x22xf32> -> vector<32x22xf32>
    %69 = vector.extract_strided_slice %66 {offsets = [0, 0], sizes = [32, 1], strides = [1, 1]} : vector<32x3xf32> to vector<32x1xf32>
    %70 = vector.broadcast %69 : vector<32x1xf32> to vector<32x22xf32>
    %71 = arith.addf %68, %70 : vector<32x22xf32>
    %72 = vector.extract_strided_slice %66 {offsets = [0, 1], sizes = [32, 1], strides = [1, 1]} : vector<32x3xf32> to vector<32x1xf32>
    %73 = vector.extract_strided_slice %66 {offsets = [0, 2], sizes = [32, 1], strides = [1, 1]} : vector<32x3xf32> to vector<32x1xf32>
    %74 = vector.extract_strided_slice %0 {offsets = [0, 0], sizes = [1, 22], strides = [1, 1]} : vector<1x128xf32> to vector<1x22xf32>
    %75 = vector.broadcast %74 : vector<1x22xf32> to vector<32x22xf32>
    %76 = arith.mulf %71, %75 : vector<32x22xf32>
    %77 = arith.mulf %76, %71 : vector<32x22xf32>
    %78 = tpu.concatenate %76, %77 in 0 : vector<32x22xf32>, vector<32x22xf32> -> vector<64x22xf32>
    %cst_34 = arith.constant dense<0.000000e+00> : vector<64xf32>
    %79 = vector.multi_reduction <add>, %78, %cst_34 [1] : vector<64x22xf32> to vector<64xf32>
    %80 = vector.shape_cast %79 : vector<64xf32> to vector<64x1xf32>
    %cst_35 = arith.constant 6.250000e-02 : f32
    %81 = vector.broadcast %cst_35 : f32 to vector<64x1xf32>
    %82 = arith.mulf %80, %81 : vector<64x1xf32>
    %83 = vector.extract_strided_slice %82 {offsets = [0, 0], sizes = [32, 1], strides = [1, 1]} : vector<64x1xf32> to vector<32x1xf32>
    %84 = vector.extract_strided_slice %82 {offsets = [32, 0], sizes = [32, 1], strides = [1, 1]} : vector<64x1xf32> to vector<32x1xf32>
    %85 = arith.mulf %83, %83 : vector<32x1xf32>
    %86 = arith.subf %84, %85 : vector<32x1xf32>
    %cst_36 = arith.constant 0.000000e+00 : f32
    %87 = vector.broadcast %cst_36 : f32 to vector<32x1xf32>
    %88 = arith.maximumf %86, %87 : vector<32x1xf32>
    %89 = vector.broadcast %83 : vector<32x1xf32> to vector<32x22xf32>
    %90 = arith.subf %71, %89 : vector<32x22xf32>
    %cst_37 = arith.constant 9.99999974E-6 : f32
    %91 = vector.broadcast %cst_37 : f32 to vector<32x1xf32>
    %92 = arith.addf %88, %91 : vector<32x1xf32>
    %93 = math.rsqrt %92 : vector<32x1xf32>
    %94 = vector.broadcast %93 : vector<32x1xf32> to vector<32x22xf32>
    %95 = arith.mulf %90, %94 : vector<32x22xf32>
    %96 = vector.broadcast %72 : vector<32x1xf32> to vector<32x22xf32>
    %97 = arith.mulf %95, %96 : vector<32x22xf32>
    %98 = vector.broadcast %73 : vector<32x1xf32> to vector<32x22xf32>
    %99 = arith.addf %97, %98 : vector<32x22xf32>
    %cst_38 = arith.constant 0.000000e+00 : f32
    %100 = vector.broadcast %cst_38 : f32 to vector<32x22xf32>
    %101 = arith.cmpf oge, %99, %100 : vector<32x22xf32>
    %cst_39 = arith.constant 0.00999999977 : f32
    %102 = vector.broadcast %cst_39 : f32 to vector<32x22xf32>
    %103 = arith.mulf %102, %99 : vector<32x22xf32>
    %104 = arith.select %101, %99, %103 : vector<32x22xi1>, vector<32x22xf32>
    %105 = vector.extract_strided_slice %0 {offsets = [0, 0], sizes = [1, 22], strides = [1, 1]} : vector<1x128xf32> to vector<1x22xf32>
    %106 = vector.broadcast %105 : vector<1x22xf32> to vector<32x22xf32>
    %107 = arith.mulf %104, %106 : vector<32x22xf32>
    %cst_40 = arith.constant 0.000000e+00 : bf16
    %108 = vector.broadcast %cst_40 : bf16 to vector<1x32x128xbf16>
    %c0_41 = arith.constant 0 : index
    %c0_42 = arith.constant 0 : index
    %c0_43 = arith.constant 0 : index
    %109 = vector.load %arg7[%c0_41, %c0_42, %c0_43] : memref<1x32x128xbf16, #tpu.memory_space<vmem>>, vector<1x32x128xbf16>
    tpu.vector_store %arg7[%c0_41, %c0_42, %c0_43], %108 {strides = array<i32>} : memref<1x32x128xbf16, #tpu.memory_space<vmem>>, vector<1x32x128xbf16>,
    %110 = arith.truncf %107 : vector<32x22xf32> to vector<32x22xbf16>
    %c0_44 = arith.constant 0 : index
    %c0_45 = arith.constant 0 : index
    %c7_46 = arith.constant 7 : index
    %111 = vector.load %arg7[%c0_44, %c0_45, %c7_46] : memref<1x32x128xbf16, #tpu.memory_space<vmem>>, vector<1x32x22xbf16>
    %112 = vector.shape_cast %111 : vector<1x32x22xbf16> to vector<32x22xbf16>
    %113 = vector.shape_cast %110 : vector<32x22xbf16> to vector<1x32x22xbf16>
    tpu.vector_store %arg7[%c0_44, %c0_45, %c7_46], %113 {strides = array<i32>} : memref<1x32x128xbf16, #tpu.memory_space<vmem>>, vector<1x32x22xbf16>,
    return
  }
  func.func @transform_0(%arg0: i32) -> (i32, i32) {
    %c0_i32 = arith.constant 0 : i32
    %c0_i32_0 = arith.constant 0 : i32
    %c0_i32_1 = arith.constant 0 : i32
    return %c0_i32, %c0_i32_0 : i32, i32
  }
  func.func @transform_1(%arg0: i32) -> (i32, i32, i32) {
    %c0_i32 = arith.constant 0 : i32
    %c0_i32_0 = arith.constant 0 : i32
    %c0_i32_1 = arith.constant 0 : i32
    return %arg0, %c0_i32, %c0_i32_0 : i32, i32, i32
  }
  func.func @transform_2(%arg0: i32) -> (i32, i32) {
    %c0_i32 = arith.constant 0 : i32
    %c0_i32_0 = arith.constant 0 : i32
    %c0_i32_1 = arith.constant 0 : i32
    return %c0_i32, %c0_i32_0 : i32, i32
  }
  func.func @transform_3(%arg0: i32) -> (i32, i32) {
    %c0_i32 = arith.constant 0 : i32
    %c0_i32_0 = arith.constant 0 : i32
    %c0_i32_1 = arith.constant 0 : i32
    return %c0_i32, %c0_i32_0 : i32, i32
  }
  func.func @transform_4(%arg0: i32) -> (i32, i32) {
    %c0_i32 = arith.constant 0 : i32
    %c0_i32_0 = arith.constant 0 : i32
    %c0_i32_1 = arith.constant 0 : i32
    return %c0_i32, %c0_i32_0 : i32, i32
  }
  func.func @transform_5(%arg0: i32) -> (i32, i32) {
    %c0_i32 = arith.constant 0 : i32
    %c0_i32_0 = arith.constant 0 : i32
    %c0_i32_1 = arith.constant 0 : i32
    return %c0_i32, %c0_i32_0 : i32, i32
  }
  func.func @transform_6(%arg0: i32) -> (i32, i32, i32) {
    %c0_i32 = arith.constant 0 : i32
    %c0_i32_0 = arith.constant 0 : i32
    %c0_i32_1 = arith.constant 0 : i32
    return %arg0, %c0_i32, %c0_i32_0 : i32, i32, i32
  }
}

module attributes {stable_mosaic.version = 11 : i64} {
  func.func @_stage_kernel(%arg0: i32, %arg1: memref<1x128xf32, #tpu.memory_space<vmem>>, %arg2: memref<1x32x128xbf16, #tpu.memory_space<vmem>>, %arg3: memref<1x16x128xbf16, #tpu.memory_space<vmem>>, %arg4: memref<16x432xbf16, #tpu.memory_space<vmem>>, %arg5: memref<16x3xf32, #tpu.memory_space<vmem>>, %arg6: memref<16x144xbf16, #tpu.memory_space<vmem>>, %arg7: memref<16x3xf32, #tpu.memory_space<vmem>>, %arg8: memref<1x16x128xbf16, #tpu.memory_space<vmem>>, %arg9: memref<16x128xf32, #tpu.memory_space<vmem>>) attributes {dimension_semantics = [#tpu.dimension_semantics<parallel>], iteration_bounds = array<i64: 2>, scalar_prefetch = 0 : i64, scratch_operands = 1 : i64, tpu.core_type = #tpu.core_type<tc>, window_params = [{pipeline_mode = #tpu.pipeline_mode<synchronous>, transform_indices = @transform_0, window_bounds = array<i64: 1, 128>}, {transform_indices = @transform_1, window_bounds = array<i64: 1, 32, 128>}, {transform_indices = @transform_2, window_bounds = array<i64: 1, 16, 128>}, {pipeline_mode = #tpu.pipeline_mode<synchronous>, transform_indices = @transform_3, window_bounds = array<i64: 16, 432>}, {pipeline_mode = #tpu.pipeline_mode<synchronous>, transform_indices = @transform_4, window_bounds = array<i64: 16, 3>}, {pipeline_mode = #tpu.pipeline_mode<synchronous>, transform_indices = @transform_5, window_bounds = array<i64: 16, 144>}, {pipeline_mode = #tpu.pipeline_mode<synchronous>, transform_indices = @transform_6, window_bounds = array<i64: 16, 3>}, {transform_indices = @transform_7, window_bounds = array<i64: 1, 16, 128>}]} {
    %c0 = arith.constant 0 : index
    %c0_0 = arith.constant 0 : index
    %0 = vector.load %arg1[%c0, %c0_0] : memref<1x128xf32, #tpu.memory_space<vmem>>, vector<1x128xf32>
    %cst = arith.constant 0.000000e+00 : f32
    %1 = vector.broadcast %cst : f32 to vector<16x128xf32>
    %c0_1 = arith.constant 0 : index
    %c0_2 = arith.constant 0 : index
    %2 = vector.load %arg9[%c0_1, %c0_2] : memref<16x128xf32, #tpu.memory_space<vmem>>, vector<16x128xf32>
    tpu.vector_store %arg9[%c0_1, %c0_2], %1 {strides = array<i32>} : memref<16x128xf32, #tpu.memory_space<vmem>>, vector<16x128xf32>,
    %c0_3 = arith.constant 0 : index
    %c0_4 = arith.constant 0 : index
    %c0_5 = arith.constant 0 : index
    %3 = vector.load %arg2[%c0_3, %c0_4, %c0_5] : memref<1x32x128xbf16, #tpu.memory_space<vmem>>, vector<1x32x128xbf16>
    %4 = vector.shape_cast %3 : vector<1x32x128xbf16> to vector<32x128xbf16>
    %5 = arith.extf %4 : vector<32x128xbf16> to vector<32x128xf32>
    %c0_6 = arith.constant 0 : index
    %c0_7 = arith.constant 0 : index
    %c0_8 = arith.constant 0 : index
    %6 = vector.load %arg3[%c0_6, %c0_7, %c0_8] : memref<1x16x128xbf16, #tpu.memory_space<vmem>>, vector<1x16x128xbf16>
    %7 = vector.shape_cast %6 : vector<1x16x128xbf16> to vector<16x128xbf16>
    %8 = arith.extf %7 : vector<16x128xbf16> to vector<16x128xf32>
    %9 = vector.extract_strided_slice %5 {offsets = [0, 0], sizes = [32, 78], strides = [1, 1]} : vector<32x128xf32> to vector<32x78xf32>
    %10 = vector.extract_strided_slice %8 {offsets = [0, 0], sizes = [16, 78], strides = [1, 1]} : vector<16x128xf32> to vector<16x78xf32>
    %11 = vector.extract_strided_slice %5 {offsets = [0, 1], sizes = [32, 78], strides = [1, 1]} : vector<32x128xf32> to vector<32x78xf32>
    %12 = vector.extract_strided_slice %8 {offsets = [0, 1], sizes = [16, 78], strides = [1, 1]} : vector<16x128xf32> to vector<16x78xf32>
    %13 = vector.extract_strided_slice %5 {offsets = [0, 2], sizes = [32, 78], strides = [1, 1]} : vector<32x128xf32> to vector<32x78xf32>
    %14 = vector.extract_strided_slice %8 {offsets = [0, 2], sizes = [16, 78], strides = [1, 1]} : vector<16x128xf32> to vector<16x78xf32>
    %15 = vector.extract_strided_slice %5 {offsets = [0, 10], sizes = [32, 78], strides = [1, 1]} : vector<32x128xf32> to vector<32x78xf32>
    %16 = vector.extract_strided_slice %8 {offsets = [0, 10], sizes = [16, 78], strides = [1, 1]} : vector<16x128xf32> to vector<16x78xf32>
    %17 = vector.extract_strided_slice %5 {offsets = [0, 11], sizes = [32, 78], strides = [1, 1]} : vector<32x128xf32> to vector<32x78xf32>
    %18 = vector.extract_strided_slice %8 {offsets = [0, 11], sizes = [16, 78], strides = [1, 1]} : vector<16x128xf32> to vector<16x78xf32>
    %19 = vector.extract_strided_slice %5 {offsets = [0, 12], sizes = [32, 78], strides = [1, 1]} : vector<32x128xf32> to vector<32x78xf32>
    %20 = vector.extract_strided_slice %8 {offsets = [0, 12], sizes = [16, 78], strides = [1, 1]} : vector<16x128xf32> to vector<16x78xf32>
    %21 = vector.extract_strided_slice %5 {offsets = [0, 20], sizes = [32, 78], strides = [1, 1]} : vector<32x128xf32> to vector<32x78xf32>
    %22 = vector.extract_strided_slice %8 {offsets = [0, 20], sizes = [16, 78], strides = [1, 1]} : vector<16x128xf32> to vector<16x78xf32>
    %23 = vector.extract_strided_slice %5 {offsets = [0, 21], sizes = [32, 78], strides = [1, 1]} : vector<32x128xf32> to vector<32x78xf32>
    %24 = vector.extract_strided_slice %8 {offsets = [0, 21], sizes = [16, 78], strides = [1, 1]} : vector<16x128xf32> to vector<16x78xf32>
    %25 = vector.extract_strided_slice %5 {offsets = [0, 22], sizes = [32, 78], strides = [1, 1]} : vector<32x128xf32> to vector<32x78xf32>
    %26 = vector.extract_strided_slice %8 {offsets = [0, 22], sizes = [16, 78], strides = [1, 1]} : vector<16x128xf32> to vector<16x78xf32>
    %27 = tpu.concatenate %9, %10, %11, %12, %13, %14, %15, %16, %17, %18, %19, %20, %21, %22, %23, %24 in 0 : vector<32x78xf32>, vector<16x78xf32>, vector<32x78xf32>, vector<16x78xf32>, vector<32x78xf32>, vector<16x78xf32>, vector<32x78xf32>, vector<16x78xf32>, vector<32x78xf32>, vector<16x78xf32>, vector<32x78xf32>, vector<16x78xf32>, vector<32x78xf32>, vector<16x78xf32>, vector<32x78xf32>, vector<16x78xf32> -> vector<384x78xf32>
    %28 = tpu.concatenate %25, %26 in 0 : vector<32x78xf32>, vector<16x78xf32> -> vector<48x78xf32>
    %29 = tpu.concatenate %27, %28 in 0 : vector<384x78xf32>, vector<48x78xf32> -> vector<432x78xf32>
    %30 = arith.truncf %29 : vector<432x78xf32> to vector<432x78xbf16>
    %c0_9 = arith.constant 0 : index
    %c0_10 = arith.constant 0 : index
    %31 = vector.load %arg5[%c0_9, %c0_10] : memref<16x3xf32, #tpu.memory_space<vmem>>, vector<16x3xf32>
    %c0_11 = arith.constant 0 : index
    %c0_12 = arith.constant 0 : index
    %32 = vector.load %arg4[%c0_11, %c0_12] : memref<16x432xbf16, #tpu.memory_space<vmem>>, vector<16x432xbf16>
    %cst_13 = arith.constant dense<0.000000e+00> : vector<16x78xf32>
    %33 = tpu.matmul %32, %30, %cst_13 {dimension_numbers = #tpu.dot_dimension_numbers<[1], [0], [0], [1], [0, 0, 1, 1], [], []>} : vector<16x432xbf16>, vector<432x78xbf16>, vector<16x78xf32> -> vector<16x78xf32>
    %34 = vector.extract_strided_slice %31 {offsets = [0, 0], sizes = [16, 1], strides = [1, 1]} : vector<16x3xf32> to vector<16x1xf32>
    %35 = vector.broadcast %34 : vector<16x1xf32> to vector<16x78xf32>
    %36 = arith.addf %33, %35 : vector<16x78xf32>
    %37 = vector.extract_strided_slice %31 {offsets = [0, 1], sizes = [16, 1], strides = [1, 1]} : vector<16x3xf32> to vector<16x1xf32>
    %38 = vector.extract_strided_slice %31 {offsets = [0, 2], sizes = [16, 1], strides = [1, 1]} : vector<16x3xf32> to vector<16x1xf32>
    %39 = vector.extract_strided_slice %0 {offsets = [0, 0], sizes = [1, 78], strides = [1, 1]} : vector<1x128xf32> to vector<1x78xf32>
    %40 = vector.broadcast %39 : vector<1x78xf32> to vector<16x78xf32>
    %41 = arith.mulf %36, %40 : vector<16x78xf32>
    %42 = arith.mulf %41, %36 : vector<16x78xf32>
    %43 = tpu.concatenate %41, %42 in 0 : vector<16x78xf32>, vector<16x78xf32> -> vector<32x78xf32>
    %cst_14 = arith.constant dense<0.000000e+00> : vector<32xf32>
    %44 = vector.multi_reduction <add>, %43, %cst_14 [1] : vector<32x78xf32> to vector<32xf32>
    %45 = vector.shape_cast %44 : vector<32xf32> to vector<32x1xf32>
    %cst_15 = arith.constant 1.562500e-02 : f32
    %46 = vector.broadcast %cst_15 : f32 to vector<32x1xf32>
    %47 = arith.mulf %45, %46 : vector<32x1xf32>
    %48 = vector.extract_strided_slice %47 {offsets = [0, 0], sizes = [16, 1], strides = [1, 1]} : vector<32x1xf32> to vector<16x1xf32>
    %49 = vector.extract_strided_slice %47 {offsets = [16, 0], sizes = [16, 1], strides = [1, 1]} : vector<32x1xf32> to vector<16x1xf32>
    %50 = arith.mulf %48, %48 : vector<16x1xf32>
    %51 = arith.subf %49, %50 : vector<16x1xf32>
    %cst_16 = arith.constant 0.000000e+00 : f32
    %52 = vector.broadcast %cst_16 : f32 to vector<16x1xf32>
    %53 = arith.maximumf %51, %52 : vector<16x1xf32>
    %54 = vector.broadcast %48 : vector<16x1xf32> to vector<16x78xf32>
    %55 = arith.subf %36, %54 : vector<16x78xf32>
    %cst_17 = arith.constant 9.99999974E-6 : f32
    %56 = vector.broadcast %cst_17 : f32 to vector<16x1xf32>
    %57 = arith.addf %53, %56 : vector<16x1xf32>
    %58 = math.rsqrt %57 : vector<16x1xf32>
    %59 = vector.broadcast %58 : vector<16x1xf32> to vector<16x78xf32>
    %60 = arith.mulf %55, %59 : vector<16x78xf32>
    %61 = vector.broadcast %37 : vector<16x1xf32> to vector<16x78xf32>
    %62 = arith.mulf %60, %61 : vector<16x78xf32>
    %63 = vector.broadcast %38 : vector<16x1xf32> to vector<16x78xf32>
    %64 = arith.addf %62, %63 : vector<16x78xf32>
    %cst_18 = arith.constant 0.000000e+00 : f32
    %65 = vector.broadcast %cst_18 : f32 to vector<16x78xf32>
    %66 = arith.cmpf oge, %64, %65 : vector<16x78xf32>
    %cst_19 = arith.constant 0.00999999977 : f32
    %67 = vector.broadcast %cst_19 : f32 to vector<16x78xf32>
    %68 = arith.mulf %67, %64 : vector<16x78xf32>
    %69 = arith.select %66, %64, %68 : vector<16x78xi1>, vector<16x78xf32>
    %70 = vector.extract_strided_slice %0 {offsets = [0, 0], sizes = [1, 78], strides = [1, 1]} : vector<1x128xf32> to vector<1x78xf32>
    %71 = vector.broadcast %70 : vector<1x78xf32> to vector<16x78xf32>
    %72 = arith.mulf %69, %71 : vector<16x78xf32>
    %c0_20 = arith.constant 0 : index
    %c11 = arith.constant 11 : index
    %73 = vector.load %arg9[%c0_20, %c11] : memref<16x128xf32, #tpu.memory_space<vmem>>, vector<16x78xf32>
    tpu.vector_store %arg9[%c0_20, %c11], %72 {strides = array<i32>} : memref<16x128xf32, #tpu.memory_space<vmem>>, vector<16x78xf32>,
    %c0_21 = arith.constant 0 : index
    %c0_22 = arith.constant 0 : index
    %74 = vector.load %arg9[%c0_21, %c0_22] : memref<16x128xf32, #tpu.memory_space<vmem>>, vector<16x78xf32>
    %c0_23 = arith.constant 0 : index
    %c1 = arith.constant 1 : index
    %75 = vector.load %arg9[%c0_23, %c1] : memref<16x128xf32, #tpu.memory_space<vmem>>, vector<16x78xf32>
    %c0_24 = arith.constant 0 : index
    %c2 = arith.constant 2 : index
    %76 = vector.load %arg9[%c0_24, %c2] : memref<16x128xf32, #tpu.memory_space<vmem>>, vector<16x78xf32>
    %c0_25 = arith.constant 0 : index
    %c10 = arith.constant 10 : index
    %77 = vector.load %arg9[%c0_25, %c10] : memref<16x128xf32, #tpu.memory_space<vmem>>, vector<16x78xf32>
    %c0_26 = arith.constant 0 : index
    %c11_27 = arith.constant 11 : index
    %78 = vector.load %arg9[%c0_26, %c11_27] : memref<16x128xf32, #tpu.memory_space<vmem>>, vector<16x78xf32>
    %c0_28 = arith.constant 0 : index
    %c12 = arith.constant 12 : index
    %79 = vector.load %arg9[%c0_28, %c12] : memref<16x128xf32, #tpu.memory_space<vmem>>, vector<16x78xf32>
    %c0_29 = arith.constant 0 : index
    %c20 = arith.constant 20 : index
    %80 = vector.load %arg9[%c0_29, %c20] : memref<16x128xf32, #tpu.memory_space<vmem>>, vector<16x78xf32>
    %c0_30 = arith.constant 0 : index
    %c21 = arith.constant 21 : index
    %81 = vector.load %arg9[%c0_30, %c21] : memref<16x128xf32, #tpu.memory_space<vmem>>, vector<16x78xf32>
    %c0_31 = arith.constant 0 : index
    %c22 = arith.constant 22 : index
    %82 = vector.load %arg9[%c0_31, %c22] : memref<16x128xf32, #tpu.memory_space<vmem>>, vector<16x78xf32>
    %83 = tpu.concatenate %74, %75, %76, %77, %78, %79, %80, %81, %82 in 0 : vector<16x78xf32>, vector<16x78xf32>, vector<16x78xf32>, vector<16x78xf32>, vector<16x78xf32>, vector<16x78xf32>, vector<16x78xf32>, vector<16x78xf32>, vector<16x78xf32> -> vector<144x78xf32>
    %84 = arith.truncf %83 : vector<144x78xf32> to vector<144x78xbf16>
    %c0_32 = arith.constant 0 : index
    %c0_33 = arith.constant 0 : index
    %85 = vector.load %arg7[%c0_32, %c0_33] : memref<16x3xf32, #tpu.memory_space<vmem>>, vector<16x3xf32>
    %c0_34 = arith.constant 0 : index
    %c0_35 = arith.constant 0 : index
    %86 = vector.load %arg6[%c0_34, %c0_35] : memref<16x144xbf16, #tpu.memory_space<vmem>>, vector<16x144xbf16>
    %cst_36 = arith.constant dense<0.000000e+00> : vector<16x78xf32>
    %87 = tpu.matmul %86, %84, %cst_36 {dimension_numbers = #tpu.dot_dimension_numbers<[1], [0], [0], [1], [0, 0, 1, 1], [], []>} : vector<16x144xbf16>, vector<144x78xbf16>, vector<16x78xf32> -> vector<16x78xf32>
    %88 = vector.extract_strided_slice %85 {offsets = [0, 0], sizes = [16, 1], strides = [1, 1]} : vector<16x3xf32> to vector<16x1xf32>
    %89 = vector.broadcast %88 : vector<16x1xf32> to vector<16x78xf32>
    %90 = arith.addf %87, %89 : vector<16x78xf32>
    %91 = vector.extract_strided_slice %85 {offsets = [0, 1], sizes = [16, 1], strides = [1, 1]} : vector<16x3xf32> to vector<16x1xf32>
    %92 = vector.extract_strided_slice %85 {offsets = [0, 2], sizes = [16, 1], strides = [1, 1]} : vector<16x3xf32> to vector<16x1xf32>
    %93 = vector.extract_strided_slice %0 {offsets = [0, 0], sizes = [1, 78], strides = [1, 1]} : vector<1x128xf32> to vector<1x78xf32>
    %94 = vector.broadcast %93 : vector<1x78xf32> to vector<16x78xf32>
    %95 = arith.mulf %90, %94 : vector<16x78xf32>
    %96 = arith.mulf %95, %90 : vector<16x78xf32>
    %97 = tpu.concatenate %95, %96 in 0 : vector<16x78xf32>, vector<16x78xf32> -> vector<32x78xf32>
    %cst_37 = arith.constant dense<0.000000e+00> : vector<32xf32>
    %98 = vector.multi_reduction <add>, %97, %cst_37 [1] : vector<32x78xf32> to vector<32xf32>
    %99 = vector.shape_cast %98 : vector<32xf32> to vector<32x1xf32>
    %cst_38 = arith.constant 1.562500e-02 : f32
    %100 = vector.broadcast %cst_38 : f32 to vector<32x1xf32>
    %101 = arith.mulf %99, %100 : vector<32x1xf32>
    %102 = vector.extract_strided_slice %101 {offsets = [0, 0], sizes = [16, 1], strides = [1, 1]} : vector<32x1xf32> to vector<16x1xf32>
    %103 = vector.extract_strided_slice %101 {offsets = [16, 0], sizes = [16, 1], strides = [1, 1]} : vector<32x1xf32> to vector<16x1xf32>
    %104 = arith.mulf %102, %102 : vector<16x1xf32>
    %105 = arith.subf %103, %104 : vector<16x1xf32>
    %cst_39 = arith.constant 0.000000e+00 : f32
    %106 = vector.broadcast %cst_39 : f32 to vector<16x1xf32>
    %107 = arith.maximumf %105, %106 : vector<16x1xf32>
    %108 = vector.broadcast %102 : vector<16x1xf32> to vector<16x78xf32>
    %109 = arith.subf %90, %108 : vector<16x78xf32>
    %cst_40 = arith.constant 9.99999974E-6 : f32
    %110 = vector.broadcast %cst_40 : f32 to vector<16x1xf32>
    %111 = arith.addf %107, %110 : vector<16x1xf32>
    %112 = math.rsqrt %111 : vector<16x1xf32>
    %113 = vector.broadcast %112 : vector<16x1xf32> to vector<16x78xf32>
    %114 = arith.mulf %109, %113 : vector<16x78xf32>
    %115 = vector.broadcast %91 : vector<16x1xf32> to vector<16x78xf32>
    %116 = arith.mulf %114, %115 : vector<16x78xf32>
    %117 = vector.broadcast %92 : vector<16x1xf32> to vector<16x78xf32>
    %118 = arith.addf %116, %117 : vector<16x78xf32>
    %cst_41 = arith.constant 0.000000e+00 : f32
    %119 = vector.broadcast %cst_41 : f32 to vector<16x78xf32>
    %120 = arith.cmpf oge, %118, %119 : vector<16x78xf32>
    %cst_42 = arith.constant 0.00999999977 : f32
    %121 = vector.broadcast %cst_42 : f32 to vector<16x78xf32>
    %122 = arith.mulf %121, %118 : vector<16x78xf32>
    %123 = arith.select %120, %118, %122 : vector<16x78xi1>, vector<16x78xf32>
    %124 = vector.extract_strided_slice %0 {offsets = [0, 0], sizes = [1, 78], strides = [1, 1]} : vector<1x128xf32> to vector<1x78xf32>
    %125 = vector.broadcast %124 : vector<1x78xf32> to vector<16x78xf32>
    %126 = arith.mulf %123, %125 : vector<16x78xf32>
    %cst_43 = arith.constant 0.000000e+00 : bf16
    %127 = vector.broadcast %cst_43 : bf16 to vector<1x16x128xbf16>
    %c0_44 = arith.constant 0 : index
    %c0_45 = arith.constant 0 : index
    %c0_46 = arith.constant 0 : index
    %128 = vector.load %arg8[%c0_44, %c0_45, %c0_46] : memref<1x16x128xbf16, #tpu.memory_space<vmem>>, vector<1x16x128xbf16>
    tpu.vector_store %arg8[%c0_44, %c0_45, %c0_46], %127 {strides = array<i32>} : memref<1x16x128xbf16, #tpu.memory_space<vmem>>, vector<1x16x128xbf16>,
    %129 = arith.truncf %126 : vector<16x78xf32> to vector<16x78xbf16>
    %c0_47 = arith.constant 0 : index
    %c0_48 = arith.constant 0 : index
    %c11_49 = arith.constant 11 : index
    %130 = vector.load %arg8[%c0_47, %c0_48, %c11_49] : memref<1x16x128xbf16, #tpu.memory_space<vmem>>, vector<1x16x78xbf16>
    %131 = vector.shape_cast %130 : vector<1x16x78xbf16> to vector<16x78xbf16>
    %132 = vector.shape_cast %129 : vector<16x78xbf16> to vector<1x16x78xbf16>
    tpu.vector_store %arg8[%c0_47, %c0_48, %c11_49], %132 {strides = array<i32>} : memref<1x16x128xbf16, #tpu.memory_space<vmem>>, vector<1x16x78xbf16>,
    return
  }
  func.func @transform_0(%arg0: i32) -> (i32, i32) {
    %c0_i32 = arith.constant 0 : i32
    %c0_i32_0 = arith.constant 0 : i32
    %c0_i32_1 = arith.constant 0 : i32
    return %c0_i32, %c0_i32_0 : i32, i32
  }
  func.func @transform_1(%arg0: i32) -> (i32, i32, i32) {
    %c0_i32 = arith.constant 0 : i32
    %c0_i32_0 = arith.constant 0 : i32
    %c0_i32_1 = arith.constant 0 : i32
    return %arg0, %c0_i32, %c0_i32_0 : i32, i32, i32
  }
  func.func @transform_2(%arg0: i32) -> (i32, i32, i32) {
    %c0_i32 = arith.constant 0 : i32
    %c0_i32_0 = arith.constant 0 : i32
    %c0_i32_1 = arith.constant 0 : i32
    return %arg0, %c0_i32, %c0_i32_0 : i32, i32, i32
  }
  func.func @transform_3(%arg0: i32) -> (i32, i32) {
    %c0_i32 = arith.constant 0 : i32
    %c0_i32_0 = arith.constant 0 : i32
    %c0_i32_1 = arith.constant 0 : i32
    return %c0_i32, %c0_i32_0 : i32, i32
  }
  func.func @transform_4(%arg0: i32) -> (i32, i32) {
    %c0_i32 = arith.constant 0 : i32
    %c0_i32_0 = arith.constant 0 : i32
    %c0_i32_1 = arith.constant 0 : i32
    return %c0_i32, %c0_i32_0 : i32, i32
  }
  func.func @transform_5(%arg0: i32) -> (i32, i32) {
    %c0_i32 = arith.constant 0 : i32
    %c0_i32_0 = arith.constant 0 : i32
    %c0_i32_1 = arith.constant 0 : i32
    return %c0_i32, %c0_i32_0 : i32, i32
  }
  func.func @transform_6(%arg0: i32) -> (i32, i32) {
    %c0_i32 = arith.constant 0 : i32
    %c0_i32_0 = arith.constant 0 : i32
    %c0_i32_1 = arith.constant 0 : i32
    return %c0_i32, %c0_i32_0 : i32, i32
  }
  func.func @transform_7(%arg0: i32) -> (i32, i32, i32) {
    %c0_i32 = arith.constant 0 : i32
    %c0_i32_0 = arith.constant 0 : i32
    %c0_i32_1 = arith.constant 0 : i32
    return %arg0, %c0_i32, %c0_i32_0 : i32, i32, i32
  }
}

module attributes {stable_mosaic.version = 11 : i64} {
  func.func @_stage_kernel(%arg0: i32, %arg1: memref<1x384xf32, #tpu.memory_space<vmem>>, %arg2: memref<1x16x384xbf16, #tpu.memory_space<vmem>>, %arg3: memref<1x8x384xbf16, #tpu.memory_space<vmem>>, %arg4: memref<8x216xbf16, #tpu.memory_space<vmem>>, %arg5: memref<8x3xf32, #tpu.memory_space<vmem>>, %arg6: memref<8x72xbf16, #tpu.memory_space<vmem>>, %arg7: memref<8x3xf32, #tpu.memory_space<vmem>>, %arg8: memref<3x72xbf16, #tpu.memory_space<vmem>>, %arg9: memref<3x3xf32, #tpu.memory_space<vmem>>, %arg10: memref<1x3x384xf32, #tpu.memory_space<vmem>>, %arg11: memref<8x384xf32, #tpu.memory_space<vmem>>) attributes {dimension_semantics = [#tpu.dimension_semantics<parallel>], iteration_bounds = array<i64: 2>, scalar_prefetch = 0 : i64, scratch_operands = 1 : i64, tpu.core_type = #tpu.core_type<tc>, window_params = [{pipeline_mode = #tpu.pipeline_mode<synchronous>, transform_indices = @transform_0, window_bounds = array<i64: 1, 384>}, {transform_indices = @transform_1, window_bounds = array<i64: 1, 16, 384>}, {transform_indices = @transform_2, window_bounds = array<i64: 1, 8, 384>}, {pipeline_mode = #tpu.pipeline_mode<synchronous>, transform_indices = @transform_3, window_bounds = array<i64: 8, 216>}, {pipeline_mode = #tpu.pipeline_mode<synchronous>, transform_indices = @transform_4, window_bounds = array<i64: 8, 3>}, {pipeline_mode = #tpu.pipeline_mode<synchronous>, transform_indices = @transform_5, window_bounds = array<i64: 8, 72>}, {pipeline_mode = #tpu.pipeline_mode<synchronous>, transform_indices = @transform_6, window_bounds = array<i64: 8, 3>}, {pipeline_mode = #tpu.pipeline_mode<synchronous>, transform_indices = @transform_7, window_bounds = array<i64: 3, 72>}, {pipeline_mode = #tpu.pipeline_mode<synchronous>, transform_indices = @transform_8, window_bounds = array<i64: 3, 3>}, {transform_indices = @transform_9, window_bounds = array<i64: 1, 3, 384>}]} {
    %c0 = arith.constant 0 : index
    %c0_0 = arith.constant 0 : index
    %0 = vector.load %arg1[%c0, %c0_0] : memref<1x384xf32, #tpu.memory_space<vmem>>, vector<1x384xf32>
    %cst = arith.constant 0.000000e+00 : f32
    %1 = vector.broadcast %cst : f32 to vector<8x384xf32>
    %c0_1 = arith.constant 0 : index
    %c0_2 = arith.constant 0 : index
    %2 = vector.load %arg11[%c0_1, %c0_2] : memref<8x384xf32, #tpu.memory_space<vmem>>, vector<8x384xf32>
    tpu.vector_store %arg11[%c0_1, %c0_2], %1 {strides = array<i32>} : memref<8x384xf32, #tpu.memory_space<vmem>>, vector<8x384xf32>,
    %c0_3 = arith.constant 0 : index
    %c0_4 = arith.constant 0 : index
    %c0_5 = arith.constant 0 : index
    %3 = vector.load %arg2[%c0_3, %c0_4, %c0_5] : memref<1x16x384xbf16, #tpu.memory_space<vmem>>, vector<1x16x384xbf16>
    %4 = vector.shape_cast %3 : vector<1x16x384xbf16> to vector<16x384xbf16>
    %5 = arith.extf %4 : vector<16x384xbf16> to vector<16x384xf32>
    %c0_6 = arith.constant 0 : index
    %c0_7 = arith.constant 0 : index
    %c0_8 = arith.constant 0 : index
    %6 = vector.load %arg3[%c0_6, %c0_7, %c0_8] : memref<1x8x384xbf16, #tpu.memory_space<vmem>>, vector<1x8x384xbf16>
    %7 = vector.shape_cast %6 : vector<1x8x384xbf16> to vector<8x384xbf16>
    %8 = arith.extf %7 : vector<8x384xbf16> to vector<8x384xf32>
    %9 = vector.extract_strided_slice %5 {offsets = [0, 0], sizes = [16, 286], strides = [1, 1]} : vector<16x384xf32> to vector<16x286xf32>
    %10 = vector.extract_strided_slice %8 {offsets = [0, 0], sizes = [8, 286], strides = [1, 1]} : vector<8x384xf32> to vector<8x286xf32>
    %11 = vector.extract_strided_slice %5 {offsets = [0, 1], sizes = [16, 286], strides = [1, 1]} : vector<16x384xf32> to vector<16x286xf32>
    %12 = vector.extract_strided_slice %8 {offsets = [0, 1], sizes = [8, 286], strides = [1, 1]} : vector<8x384xf32> to vector<8x286xf32>
    %13 = vector.extract_strided_slice %5 {offsets = [0, 2], sizes = [16, 286], strides = [1, 1]} : vector<16x384xf32> to vector<16x286xf32>
    %14 = vector.extract_strided_slice %8 {offsets = [0, 2], sizes = [8, 286], strides = [1, 1]} : vector<8x384xf32> to vector<8x286xf32>
    %15 = vector.extract_strided_slice %5 {offsets = [0, 18], sizes = [16, 286], strides = [1, 1]} : vector<16x384xf32> to vector<16x286xf32>
    %16 = vector.extract_strided_slice %8 {offsets = [0, 18], sizes = [8, 286], strides = [1, 1]} : vector<8x384xf32> to vector<8x286xf32>
    %17 = vector.extract_strided_slice %5 {offsets = [0, 19], sizes = [16, 286], strides = [1, 1]} : vector<16x384xf32> to vector<16x286xf32>
    %18 = vector.extract_strided_slice %8 {offsets = [0, 19], sizes = [8, 286], strides = [1, 1]} : vector<8x384xf32> to vector<8x286xf32>
    %19 = vector.extract_strided_slice %5 {offsets = [0, 20], sizes = [16, 286], strides = [1, 1]} : vector<16x384xf32> to vector<16x286xf32>
    %20 = vector.extract_strided_slice %8 {offsets = [0, 20], sizes = [8, 286], strides = [1, 1]} : vector<8x384xf32> to vector<8x286xf32>
    %21 = vector.extract_strided_slice %5 {offsets = [0, 36], sizes = [16, 286], strides = [1, 1]} : vector<16x384xf32> to vector<16x286xf32>
    %22 = vector.extract_strided_slice %8 {offsets = [0, 36], sizes = [8, 286], strides = [1, 1]} : vector<8x384xf32> to vector<8x286xf32>
    %23 = vector.extract_strided_slice %5 {offsets = [0, 37], sizes = [16, 286], strides = [1, 1]} : vector<16x384xf32> to vector<16x286xf32>
    %24 = vector.extract_strided_slice %8 {offsets = [0, 37], sizes = [8, 286], strides = [1, 1]} : vector<8x384xf32> to vector<8x286xf32>
    %25 = vector.extract_strided_slice %5 {offsets = [0, 38], sizes = [16, 286], strides = [1, 1]} : vector<16x384xf32> to vector<16x286xf32>
    %26 = vector.extract_strided_slice %8 {offsets = [0, 38], sizes = [8, 286], strides = [1, 1]} : vector<8x384xf32> to vector<8x286xf32>
    %27 = tpu.concatenate %9, %10, %11, %12, %13, %14, %15, %16, %17, %18, %19, %20, %21, %22, %23, %24 in 0 : vector<16x286xf32>, vector<8x286xf32>, vector<16x286xf32>, vector<8x286xf32>, vector<16x286xf32>, vector<8x286xf32>, vector<16x286xf32>, vector<8x286xf32>, vector<16x286xf32>, vector<8x286xf32>, vector<16x286xf32>, vector<8x286xf32>, vector<16x286xf32>, vector<8x286xf32>, vector<16x286xf32>, vector<8x286xf32> -> vector<192x286xf32>
    %28 = tpu.concatenate %25, %26 in 0 : vector<16x286xf32>, vector<8x286xf32> -> vector<24x286xf32>
    %29 = tpu.concatenate %27, %28 in 0 : vector<192x286xf32>, vector<24x286xf32> -> vector<216x286xf32>
    %30 = arith.truncf %29 : vector<216x286xf32> to vector<216x286xbf16>
    %c0_9 = arith.constant 0 : index
    %c0_10 = arith.constant 0 : index
    %31 = vector.load %arg5[%c0_9, %c0_10] : memref<8x3xf32, #tpu.memory_space<vmem>>, vector<8x3xf32>
    %c0_11 = arith.constant 0 : index
    %c0_12 = arith.constant 0 : index
    %32 = vector.load %arg4[%c0_11, %c0_12] : memref<8x216xbf16, #tpu.memory_space<vmem>>, vector<8x216xbf16>
    %cst_13 = arith.constant dense<0.000000e+00> : vector<8x286xf32>
    %33 = tpu.matmul %32, %30, %cst_13 {dimension_numbers = #tpu.dot_dimension_numbers<[1], [0], [0], [1], [0, 0, 1, 1], [], []>} : vector<8x216xbf16>, vector<216x286xbf16>, vector<8x286xf32> -> vector<8x286xf32>
    %34 = vector.extract_strided_slice %31 {offsets = [0, 0], sizes = [8, 1], strides = [1, 1]} : vector<8x3xf32> to vector<8x1xf32>
    %35 = vector.broadcast %34 : vector<8x1xf32> to vector<8x286xf32>
    %36 = arith.addf %33, %35 : vector<8x286xf32>
    %37 = vector.extract_strided_slice %31 {offsets = [0, 1], sizes = [8, 1], strides = [1, 1]} : vector<8x3xf32> to vector<8x1xf32>
    %38 = vector.extract_strided_slice %31 {offsets = [0, 2], sizes = [8, 1], strides = [1, 1]} : vector<8x3xf32> to vector<8x1xf32>
    %39 = vector.extract_strided_slice %0 {offsets = [0, 0], sizes = [1, 286], strides = [1, 1]} : vector<1x384xf32> to vector<1x286xf32>
    %40 = vector.broadcast %39 : vector<1x286xf32> to vector<8x286xf32>
    %41 = arith.mulf %36, %40 : vector<8x286xf32>
    %42 = arith.mulf %41, %36 : vector<8x286xf32>
    %43 = tpu.concatenate %41, %42 in 0 : vector<8x286xf32>, vector<8x286xf32> -> vector<16x286xf32>
    %cst_14 = arith.constant dense<0.000000e+00> : vector<16xf32>
    %44 = vector.multi_reduction <add>, %43, %cst_14 [1] : vector<16x286xf32> to vector<16xf32>
    %45 = vector.shape_cast %44 : vector<16xf32> to vector<16x1xf32>
    %cst_15 = arith.constant 3.906250e-03 : f32
    %46 = vector.broadcast %cst_15 : f32 to vector<16x1xf32>
    %47 = arith.mulf %45, %46 : vector<16x1xf32>
    %48 = vector.extract_strided_slice %47 {offsets = [0, 0], sizes = [8, 1], strides = [1, 1]} : vector<16x1xf32> to vector<8x1xf32>
    %49 = vector.extract_strided_slice %47 {offsets = [8, 0], sizes = [8, 1], strides = [1, 1]} : vector<16x1xf32> to vector<8x1xf32>
    %50 = arith.mulf %48, %48 : vector<8x1xf32>
    %51 = arith.subf %49, %50 : vector<8x1xf32>
    %cst_16 = arith.constant 0.000000e+00 : f32
    %52 = vector.broadcast %cst_16 : f32 to vector<8x1xf32>
    %53 = arith.maximumf %51, %52 : vector<8x1xf32>
    %54 = vector.broadcast %48 : vector<8x1xf32> to vector<8x286xf32>
    %55 = arith.subf %36, %54 : vector<8x286xf32>
    %cst_17 = arith.constant 9.99999974E-6 : f32
    %56 = vector.broadcast %cst_17 : f32 to vector<8x1xf32>
    %57 = arith.addf %53, %56 : vector<8x1xf32>
    %58 = math.rsqrt %57 : vector<8x1xf32>
    %59 = vector.broadcast %58 : vector<8x1xf32> to vector<8x286xf32>
    %60 = arith.mulf %55, %59 : vector<8x286xf32>
    %61 = vector.broadcast %37 : vector<8x1xf32> to vector<8x286xf32>
    %62 = arith.mulf %60, %61 : vector<8x286xf32>
    %63 = vector.broadcast %38 : vector<8x1xf32> to vector<8x286xf32>
    %64 = arith.addf %62, %63 : vector<8x286xf32>
    %cst_18 = arith.constant 0.000000e+00 : f32
    %65 = vector.broadcast %cst_18 : f32 to vector<8x286xf32>
    %66 = arith.cmpf oge, %64, %65 : vector<8x286xf32>
    %cst_19 = arith.constant 0.00999999977 : f32
    %67 = vector.broadcast %cst_19 : f32 to vector<8x286xf32>
    %68 = arith.mulf %67, %64 : vector<8x286xf32>
    %69 = arith.select %66, %64, %68 : vector<8x286xi1>, vector<8x286xf32>
    %70 = vector.extract_strided_slice %0 {offsets = [0, 0], sizes = [1, 286], strides = [1, 1]} : vector<1x384xf32> to vector<1x286xf32>
    %71 = vector.broadcast %70 : vector<1x286xf32> to vector<8x286xf32>
    %72 = arith.mulf %69, %71 : vector<8x286xf32>
    %c0_20 = arith.constant 0 : index
    %c19 = arith.constant 19 : index
    %73 = vector.load %arg11[%c0_20, %c19] : memref<8x384xf32, #tpu.memory_space<vmem>>, vector<8x286xf32>
    tpu.vector_store %arg11[%c0_20, %c19], %72 {strides = array<i32>} : memref<8x384xf32, #tpu.memory_space<vmem>>, vector<8x286xf32>,
    %c0_21 = arith.constant 0 : index
    %c0_22 = arith.constant 0 : index
    %74 = vector.load %arg11[%c0_21, %c0_22] : memref<8x384xf32, #tpu.memory_space<vmem>>, vector<8x286xf32>
    %c0_23 = arith.constant 0 : index
    %c1 = arith.constant 1 : index
    %75 = vector.load %arg11[%c0_23, %c1] : memref<8x384xf32, #tpu.memory_space<vmem>>, vector<8x286xf32>
    %c0_24 = arith.constant 0 : index
    %c2 = arith.constant 2 : index
    %76 = vector.load %arg11[%c0_24, %c2] : memref<8x384xf32, #tpu.memory_space<vmem>>, vector<8x286xf32>
    %c0_25 = arith.constant 0 : index
    %c18 = arith.constant 18 : index
    %77 = vector.load %arg11[%c0_25, %c18] : memref<8x384xf32, #tpu.memory_space<vmem>>, vector<8x286xf32>
    %c0_26 = arith.constant 0 : index
    %c19_27 = arith.constant 19 : index
    %78 = vector.load %arg11[%c0_26, %c19_27] : memref<8x384xf32, #tpu.memory_space<vmem>>, vector<8x286xf32>
    %c0_28 = arith.constant 0 : index
    %c20 = arith.constant 20 : index
    %79 = vector.load %arg11[%c0_28, %c20] : memref<8x384xf32, #tpu.memory_space<vmem>>, vector<8x286xf32>
    %c0_29 = arith.constant 0 : index
    %c36 = arith.constant 36 : index
    %80 = vector.load %arg11[%c0_29, %c36] : memref<8x384xf32, #tpu.memory_space<vmem>>, vector<8x286xf32>
    %c0_30 = arith.constant 0 : index
    %c37 = arith.constant 37 : index
    %81 = vector.load %arg11[%c0_30, %c37] : memref<8x384xf32, #tpu.memory_space<vmem>>, vector<8x286xf32>
    %c0_31 = arith.constant 0 : index
    %c38 = arith.constant 38 : index
    %82 = vector.load %arg11[%c0_31, %c38] : memref<8x384xf32, #tpu.memory_space<vmem>>, vector<8x286xf32>
    %83 = tpu.concatenate %74, %75, %76, %77, %78, %79, %80, %81, %82 in 0 : vector<8x286xf32>, vector<8x286xf32>, vector<8x286xf32>, vector<8x286xf32>, vector<8x286xf32>, vector<8x286xf32>, vector<8x286xf32>, vector<8x286xf32>, vector<8x286xf32> -> vector<72x286xf32>
    %84 = arith.truncf %83 : vector<72x286xf32> to vector<72x286xbf16>
    %c0_32 = arith.constant 0 : index
    %c0_33 = arith.constant 0 : index
    %85 = vector.load %arg7[%c0_32, %c0_33] : memref<8x3xf32, #tpu.memory_space<vmem>>, vector<8x3xf32>
    %c0_34 = arith.constant 0 : index
    %c0_35 = arith.constant 0 : index
    %86 = vector.load %arg6[%c0_34, %c0_35] : memref<8x72xbf16, #tpu.memory_space<vmem>>, vector<8x72xbf16>
    %cst_36 = arith.constant dense<0.000000e+00> : vector<8x286xf32>
    %87 = tpu.matmul %86, %84, %cst_36 {dimension_numbers = #tpu.dot_dimension_numbers<[1], [0], [0], [1], [0, 0, 1, 1], [], []>} : vector<8x72xbf16>, vector<72x286xbf16>, vector<8x286xf32> -> vector<8x286xf32>
    %88 = vector.extract_strided_slice %85 {offsets = [0, 0], sizes = [8, 1], strides = [1, 1]} : vector<8x3xf32> to vector<8x1xf32>
    %89 = vector.broadcast %88 : vector<8x1xf32> to vector<8x286xf32>
    %90 = arith.addf %87, %89 : vector<8x286xf32>
    %91 = vector.extract_strided_slice %85 {offsets = [0, 1], sizes = [8, 1], strides = [1, 1]} : vector<8x3xf32> to vector<8x1xf32>
    %92 = vector.extract_strided_slice %85 {offsets = [0, 2], sizes = [8, 1], strides = [1, 1]} : vector<8x3xf32> to vector<8x1xf32>
    %93 = vector.extract_strided_slice %0 {offsets = [0, 0], sizes = [1, 286], strides = [1, 1]} : vector<1x384xf32> to vector<1x286xf32>
    %94 = vector.broadcast %93 : vector<1x286xf32> to vector<8x286xf32>
    %95 = arith.mulf %90, %94 : vector<8x286xf32>
    %96 = arith.mulf %95, %90 : vector<8x286xf32>
    %97 = tpu.concatenate %95, %96 in 0 : vector<8x286xf32>, vector<8x286xf32> -> vector<16x286xf32>
    %cst_37 = arith.constant dense<0.000000e+00> : vector<16xf32>
    %98 = vector.multi_reduction <add>, %97, %cst_37 [1] : vector<16x286xf32> to vector<16xf32>
    %99 = vector.shape_cast %98 : vector<16xf32> to vector<16x1xf32>
    %cst_38 = arith.constant 3.906250e-03 : f32
    %100 = vector.broadcast %cst_38 : f32 to vector<16x1xf32>
    %101 = arith.mulf %99, %100 : vector<16x1xf32>
    %102 = vector.extract_strided_slice %101 {offsets = [0, 0], sizes = [8, 1], strides = [1, 1]} : vector<16x1xf32> to vector<8x1xf32>
    %103 = vector.extract_strided_slice %101 {offsets = [8, 0], sizes = [8, 1], strides = [1, 1]} : vector<16x1xf32> to vector<8x1xf32>
    %104 = arith.mulf %102, %102 : vector<8x1xf32>
    %105 = arith.subf %103, %104 : vector<8x1xf32>
    %cst_39 = arith.constant 0.000000e+00 : f32
    %106 = vector.broadcast %cst_39 : f32 to vector<8x1xf32>
    %107 = arith.maximumf %105, %106 : vector<8x1xf32>
    %108 = vector.broadcast %102 : vector<8x1xf32> to vector<8x286xf32>
    %109 = arith.subf %90, %108 : vector<8x286xf32>
    %cst_40 = arith.constant 9.99999974E-6 : f32
    %110 = vector.broadcast %cst_40 : f32 to vector<8x1xf32>
    %111 = arith.addf %107, %110 : vector<8x1xf32>
    %112 = math.rsqrt %111 : vector<8x1xf32>
    %113 = vector.broadcast %112 : vector<8x1xf32> to vector<8x286xf32>
    %114 = arith.mulf %109, %113 : vector<8x286xf32>
    %115 = vector.broadcast %91 : vector<8x1xf32> to vector<8x286xf32>
    %116 = arith.mulf %114, %115 : vector<8x286xf32>
    %117 = vector.broadcast %92 : vector<8x1xf32> to vector<8x286xf32>
    %118 = arith.addf %116, %117 : vector<8x286xf32>
    %cst_41 = arith.constant 0.000000e+00 : f32
    %119 = vector.broadcast %cst_41 : f32 to vector<8x286xf32>
    %120 = arith.cmpf oge, %118, %119 : vector<8x286xf32>
    %cst_42 = arith.constant 0.00999999977 : f32
    %121 = vector.broadcast %cst_42 : f32 to vector<8x286xf32>
    %122 = arith.mulf %121, %118 : vector<8x286xf32>
    %123 = arith.select %120, %118, %122 : vector<8x286xi1>, vector<8x286xf32>
    %124 = vector.extract_strided_slice %0 {offsets = [0, 0], sizes = [1, 286], strides = [1, 1]} : vector<1x384xf32> to vector<1x286xf32>
    %125 = vector.broadcast %124 : vector<1x286xf32> to vector<8x286xf32>
    %126 = arith.mulf %123, %125 : vector<8x286xf32>
    %c0_43 = arith.constant 0 : index
    %c19_44 = arith.constant 19 : index
    %127 = vector.load %arg11[%c0_43, %c19_44] : memref<8x384xf32, #tpu.memory_space<vmem>>, vector<8x286xf32>
    tpu.vector_store %arg11[%c0_43, %c19_44], %126 {strides = array<i32>} : memref<8x384xf32, #tpu.memory_space<vmem>>, vector<8x286xf32>,
    %c0_45 = arith.constant 0 : index
    %c0_46 = arith.constant 0 : index
    %128 = vector.load %arg11[%c0_45, %c0_46] : memref<8x384xf32, #tpu.memory_space<vmem>>, vector<8x286xf32>
    %c0_47 = arith.constant 0 : index
    %c1_48 = arith.constant 1 : index
    %129 = vector.load %arg11[%c0_47, %c1_48] : memref<8x384xf32, #tpu.memory_space<vmem>>, vector<8x286xf32>
    %c0_49 = arith.constant 0 : index
    %c2_50 = arith.constant 2 : index
    %130 = vector.load %arg11[%c0_49, %c2_50] : memref<8x384xf32, #tpu.memory_space<vmem>>, vector<8x286xf32>
    %c0_51 = arith.constant 0 : index
    %c18_52 = arith.constant 18 : index
    %131 = vector.load %arg11[%c0_51, %c18_52] : memref<8x384xf32, #tpu.memory_space<vmem>>, vector<8x286xf32>
    %c0_53 = arith.constant 0 : index
    %c19_54 = arith.constant 19 : index
    %132 = vector.load %arg11[%c0_53, %c19_54] : memref<8x384xf32, #tpu.memory_space<vmem>>, vector<8x286xf32>
    %c0_55 = arith.constant 0 : index
    %c20_56 = arith.constant 20 : index
    %133 = vector.load %arg11[%c0_55, %c20_56] : memref<8x384xf32, #tpu.memory_space<vmem>>, vector<8x286xf32>
    %c0_57 = arith.constant 0 : index
    %c36_58 = arith.constant 36 : index
    %134 = vector.load %arg11[%c0_57, %c36_58] : memref<8x384xf32, #tpu.memory_space<vmem>>, vector<8x286xf32>
    %c0_59 = arith.constant 0 : index
    %c37_60 = arith.constant 37 : index
    %135 = vector.load %arg11[%c0_59, %c37_60] : memref<8x384xf32, #tpu.memory_space<vmem>>, vector<8x286xf32>
    %c0_61 = arith.constant 0 : index
    %c38_62 = arith.constant 38 : index
    %136 = vector.load %arg11[%c0_61, %c38_62] : memref<8x384xf32, #tpu.memory_space<vmem>>, vector<8x286xf32>
    %137 = tpu.concatenate %128, %129, %130, %131, %132, %133, %134, %135, %136 in 0 : vector<8x286xf32>, vector<8x286xf32>, vector<8x286xf32>, vector<8x286xf32>, vector<8x286xf32>, vector<8x286xf32>, vector<8x286xf32>, vector<8x286xf32>, vector<8x286xf32> -> vector<72x286xf32>
    %138 = arith.truncf %137 : vector<72x286xf32> to vector<72x286xbf16>
    %c0_63 = arith.constant 0 : index
    %c0_64 = arith.constant 0 : index
    %139 = vector.load %arg9[%c0_63, %c0_64] : memref<3x3xf32, #tpu.memory_space<vmem>>, vector<3x3xf32>
    %c0_65 = arith.constant 0 : index
    %c0_66 = arith.constant 0 : index
    %140 = vector.load %arg8[%c0_65, %c0_66] : memref<3x72xbf16, #tpu.memory_space<vmem>>, vector<3x72xbf16>
    %cst_67 = arith.constant dense<0.000000e+00> : vector<3x286xf32>
    %141 = tpu.matmul %140, %138, %cst_67 {dimension_numbers = #tpu.dot_dimension_numbers<[1], [0], [0], [1], [0, 0, 1, 1], [], []>} : vector<3x72xbf16>, vector<72x286xbf16>, vector<3x286xf32> -> vector<3x286xf32>
    %142 = vector.extract_strided_slice %139 {offsets = [0, 0], sizes = [3, 1], strides = [1, 1]} : vector<3x3xf32> to vector<3x1xf32>
    %143 = vector.broadcast %142 : vector<3x1xf32> to vector<3x286xf32>
    %144 = arith.addf %141, %143 : vector<3x286xf32>
    %145 = arith.negf %144 : vector<3x286xf32>
    %146 = math.exp %145 : vector<3x286xf32>
    %cst_68 = arith.constant 1.000000e+00 : f32
    %147 = vector.broadcast %cst_68 : f32 to vector<3x286xf32>
    %148 = arith.addf %147, %146 : vector<3x286xf32>
    %149 = arith.divf %147, %148 : vector<3x286xf32>
    %150 = vector.extract_strided_slice %0 {offsets = [0, 0], sizes = [1, 286], strides = [1, 1]} : vector<1x384xf32> to vector<1x286xf32>
    %151 = vector.broadcast %150 : vector<1x286xf32> to vector<3x286xf32>
    %152 = arith.mulf %149, %151 : vector<3x286xf32>
    %cst_69 = arith.constant 0.000000e+00 : f32
    %153 = vector.broadcast %cst_69 : f32 to vector<1x3x384xf32>
    %c0_70 = arith.constant 0 : index
    %c0_71 = arith.constant 0 : index
    %c0_72 = arith.constant 0 : index
    %154 = vector.load %arg10[%c0_70, %c0_71, %c0_72] : memref<1x3x384xf32, #tpu.memory_space<vmem>>, vector<1x3x384xf32>
    tpu.vector_store %arg10[%c0_70, %c0_71, %c0_72], %153 {strides = array<i32>} : memref<1x3x384xf32, #tpu.memory_space<vmem>>, vector<1x3x384xf32>,
    %c0_73 = arith.constant 0 : index
    %c0_74 = arith.constant 0 : index
    %c19_75 = arith.constant 19 : index
    %155 = vector.load %arg10[%c0_73, %c0_74, %c19_75] : memref<1x3x384xf32, #tpu.memory_space<vmem>>, vector<1x3x286xf32>
    %156 = vector.shape_cast %155 : vector<1x3x286xf32> to vector<3x286xf32>
    %157 = vector.shape_cast %152 : vector<3x286xf32> to vector<1x3x286xf32>
    tpu.vector_store %arg10[%c0_73, %c0_74, %c19_75], %157 {strides = array<i32>} : memref<1x3x384xf32, #tpu.memory_space<vmem>>, vector<1x3x286xf32>,
    return
  }
  func.func @transform_0(%arg0: i32) -> (i32, i32) {
    %c0_i32 = arith.constant 0 : i32
    %c0_i32_0 = arith.constant 0 : i32
    %c0_i32_1 = arith.constant 0 : i32
    return %c0_i32, %c0_i32_0 : i32, i32
  }
  func.func @transform_1(%arg0: i32) -> (i32, i32, i32) {
    %c0_i32 = arith.constant 0 : i32
    %c0_i32_0 = arith.constant 0 : i32
    %c0_i32_1 = arith.constant 0 : i32
    return %arg0, %c0_i32, %c0_i32_0 : i32, i32, i32
  }
  func.func @transform_2(%arg0: i32) -> (i32, i32, i32) {
    %c0_i32 = arith.constant 0 : i32
    %c0_i32_0 = arith.constant 0 : i32
    %c0_i32_1 = arith.constant 0 : i32
    return %arg0, %c0_i32, %c0_i32_0 : i32, i32, i32
  }
  func.func @transform_3(%arg0: i32) -> (i32, i32) {
    %c0_i32 = arith.constant 0 : i32
    %c0_i32_0 = arith.constant 0 : i32
    %c0_i32_1 = arith.constant 0 : i32
    return %c0_i32, %c0_i32_0 : i32, i32
  }
  func.func @transform_4(%arg0: i32) -> (i32, i32) {
    %c0_i32 = arith.constant 0 : i32
    %c0_i32_0 = arith.constant 0 : i32
    %c0_i32_1 = arith.constant 0 : i32
    return %c0_i32, %c0_i32_0 : i32, i32
  }
  func.func @transform_5(%arg0: i32) -> (i32, i32) {
    %c0_i32 = arith.constant 0 : i32
    %c0_i32_0 = arith.constant 0 : i32
    %c0_i32_1 = arith.constant 0 : i32
    return %c0_i32, %c0_i32_0 : i32, i32
  }
  func.func @transform_6(%arg0: i32) -> (i32, i32) {
    %c0_i32 = arith.constant 0 : i32
    %c0_i32_0 = arith.constant 0 : i32
    %c0_i32_1 = arith.constant 0 : i32
    return %c0_i32, %c0_i32_0 : i32, i32
  }
  func.func @transform_7(%arg0: i32) -> (i32, i32) {
    %c0_i32 = arith.constant 0 : i32
    %c0_i32_0 = arith.constant 0 : i32
    %c0_i32_1 = arith.constant 0 : i32
    return %c0_i32, %c0_i32_0 : i32, i32
  }
  func.func @transform_8(%arg0: i32) -> (i32, i32) {
    %c0_i32 = arith.constant 0 : i32
    %c0_i32_0 = arith.constant 0 : i32
    %c0_i32_1 = arith.constant 0 : i32
    return %c0_i32, %c0_i32_0 : i32, i32
  }
  func.func @transform_9(%arg0: i32) -> (i32, i32, i32) {
    %c0_i32 = arith.constant 0 : i32
    %c0_i32_0 = arith.constant 0 : i32
    %c0_i32_1 = arith.constant 0 : i32
    return %arg0, %c0_i32, %c0_i32_0 : i32, i32, i32
  }
}

</mosaic_0001>

<llo_original>
// kernel: autoencoder_forward.5
$region0: #{autoencoder_forward.5}
  #allocation0 [shape = 'u32[]', space=smem, size = 0x4, offset = 0x4, fixed_abs, tag = 'smem constant byte address 0x4 - core index']
  #allocation1 [shape = 'u32[144,128]{1,0:T(1,128)}', space=vmem, size = 0x12000, scoped, tag = 'internal scratch']
  #allocation2 [shape = 'f32[8,384]{1,0:T(8,128)}', space=vmem, size = 0x3000, scoped, tag = 'scratch operand']
  %s0 = inlined_call_operand.vmem [shape: f32[1,384], index: 0, kind: input, shape index: {}]
  %s1 = inlined_call_operand.vmem [shape: bf16[2,8,384], index: 1, kind: input, shape index: {}]
  %s2 = inlined_call_operand.vmem [shape: bf16[8,72], index: 2, kind: input, shape index: {}]
  %s3 = inlined_call_operand.vmem [shape: f32[8,3], index: 3, kind: input, shape index: {}]
  %s4 = inlined_call_operand.vmem [shape: bf16[8,72], index: 4, kind: input, shape index: {}]
  %s5 = inlined_call_operand.vmem [shape: f32[8,3], index: 5, kind: input, shape index: {}]
  %s6 = inlined_call_operand.vmem [shape: bf16[2,8,384], index: 6, kind: output, shape index: {}]
  %s7 = sld [smem:[#allocation0]]
  $region57: #{autoencoder_forward.5} parent=0
    _
  %s9 = ssub.s32 1, %s7
  %s10 = scalar_select 0, %s9, %s7
  loop: start=0, step=1, limit=4
  $region2: #{autoencoder_forward.5} parent=0 // loop_pre_header
    _
  $region3: #{autoencoder_forward.5} parent=0 // loop_header
    %s12 = sphi 0, %s16
    %p13 = scmp.ge.s32.totalorder %s12, 4
    %s20 = sphi 0, %s20
    %s22 = sphi 0, %s20
    %s23 = sphi 0, %s22
    %s37 = sphi 0, %s23
    %s43 = sphi 0, %s45
    %s46 = sphi 0, %s43
    %s47 = sphi 0, %s46
    %s63 = sphi 0, %s47
    %s67 = sphi 0, %s67
    %s69 = sphi 0, %s67
    %s70 = sphi 0, %s69
    %s84 = sphi 0, %s70
    %s88 = sphi 0, %s88
    %s90 = sphi 0, %s88
    %s91 = sphi 0, %s90
    %s105 = sphi 0, %s91
    %s109 = sphi 0, %s109
    %s111 = sphi 0, %s109
    %s112 = sphi 0, %s111
    %s126 = sphi 0, %s112
    %s130 = sphi 0, %s130
    %s132 = sphi 0, %s130
    %s133 = sphi 0, %s132
    %s147 = sphi 0, %s133
    %s153 = sphi 0, %s155
    %s156 = sphi 0, %s153
    %s157 = sphi 0, %s156
    %s173 = sphi 0, %s157
  $region4: #{autoencoder_forward.5} parent=0 // loop_header_branch
    %15 = sbr.rel (%p13) target = $region8
  $region5: #{autoencoder_forward.5} parent=0 // loop_body
    %s17 = ssub.s32 %s12, 1
    %s18 = ssub.s32 %s12, 2
    %s19 = sadd.s32 %s12, 1
    %s21 = sadd.s32 %s20, 1
    %p24 = scmp.eq.s32.totalorder %s12, 1
    %p25 = scmp.ne.s32.totalorder %s20, %s22
    %p26 = scmp.eq.s32.totalorder %s12, 0
    %p27 = por %p25, %p26
    %p28 = scmp.ne.s32.totalorder %s20, %s22
    %p29 = scmp.eq.s32.totalorder %s17, 1
    %p30 = por %p28, %p29
    %p31 = scmp.ne.s32.totalorder %s22, %s23
    %p32 = scmp.eq.s32.totalorder %s17, 0
    %p33 = por %p31, %p32
    %p34 = scmp.ne.s32.totalorder %s22, %s23
    %p35 = scmp.eq.s32.totalorder %s18, 1
    %p36 = por %p34, %p35
    %p38 = scmp.ne.s32.totalorder %s23, %s37
    %p39 = scmp.eq.s32.totalorder %s18, 0
    %p40 = por %p38, %p39
    %s41 = ssub.s32 %s12, %s19
    %p42 = scmp.eq.s32.totalorder %s41, 0
    %s44 = sadd.s32 %s43, 1
    %s45 = scalar_select %p42, %s43, %s44
    %p48 = pneg %p42
    %p49 = scmp.eq.s32.totalorder %s12, 1
    %p50 = por %p48, %p49
    %p51 = scmp.ne.s32.totalorder %s43, %s46
    %p52 = scmp.eq.s32.totalorder %s12, 0
    %p53 = por %p51, %p52
    %p54 = scmp.ne.s32.totalorder %s43, %s46
    %p55 = scmp.eq.s32.totalorder %s17, 1
    %p56 = por %p54, %p55
    %p57 = scmp.ne.s32.totalorder %s46, %s47
    %p58 = scmp.eq.s32.totalorder %s17, 0
    %p59 = por %p57, %p58
    %p60 = scmp.ne.s32.totalorder %s46, %s47
    %p61 = scmp.eq.s32.totalorder %s18, 1
    %p62 = por %p60, %p61
    %p64 = scmp.ne.s32.totalorder %s47, %s63
    %p65 = scmp.eq.s32.totalorder %s18, 0
    %p66 = por %p64, %p65
    %s68 = sadd.s32 %s67, 1
    %p71 = scmp.eq.s32.totalorder %s12, 1
    %p72 = scmp.ne.s32.totalorder %s67, %s69
    %p73 = scmp.eq.s32.totalorder %s12, 0
    %p74 = por %p72, %p73
    %p75 = scmp.ne.s32.totalorder %s67, %s69
    %p76 = scmp.eq.s32.totalorder %s17, 1
    %p77 = por %p75, %p76
    %p78 = scmp.ne.s32.totalorder %s69, %s70
    %p79 = scmp.eq.s32.totalorder %s17, 0
    %p80 = por %p78, %p79
    %p81 = scmp.ne.s32.totalorder %s69, %s70
    %p82 = scmp.eq.s32.totalorder %s18, 1
    %p83 = por %p81, %p82
    %p85 = scmp.ne.s32.totalorder %s70, %s84
    %p86 = scmp.eq.s32.totalorder %s18, 0
    %p87 = por %p85, %p86
    %s89 = sadd.s32 %s88, 1
    %p92 = scmp.eq.s32.totalorder %s12, 1
    %p93 = scmp.ne.s32.totalorder %s88, %s90
    %p94 = scmp.eq.s32.totalorder %s12, 0
    %p95 = por %p93, %p94
    %p96 = scmp.ne.s32.totalorder %s88, %s90
    %p97 = scmp.eq.s32.totalorder %s17, 1
    %p98 = por %p96, %p97
    %p99 = scmp.ne.s32.totalorder %s90, %s91
    %p100 = scmp.eq.s32.totalorder %s17, 0
    %p101 = por %p99, %p100
    %p102 = scmp.ne.s32.totalorder %s90, %s91
    %p103 = scmp.eq.s32.totalorder %s18, 1
    %p104 = por %p102, %p103
    %p106 = scmp.ne.s32.totalorder %s91, %s105
    %p107 = scmp.eq.s32.totalorder %s18, 0
    %p108 = por %p106, %p107
    %s110 = sadd.s32 %s109, 1
    %p113 = scmp.eq.s32.totalorder %s12, 1
    %p114 = scmp.ne.s32.totalorder %s109, %s111
    %p115 = scmp.eq.s32.totalorder %s12, 0
    %p116 = por %p114, %p115
    %p117 = scmp.ne.s32.totalorder %s109, %s111
    %p118 = scmp.eq.s32.totalorder %s17, 1
    %p119 = por %p117, %p118
    %p120 = scmp.ne.s32.totalorder %s111, %s112
    %p121 = scmp.eq.s32.totalorder %s17, 0
    %p122 = por %p120, %p121
    %p123 = scmp.ne.s32.totalorder %s111, %s112
    %p124 = scmp.eq.s32.totalorder %s18, 1
    %p125 = por %p123, %p124
    %p127 = scmp.ne.s32.totalorder %s112, %s126
    %p128 = scmp.eq.s32.totalorder %s18, 0
    %p129 = por %p127, %p128
    %s131 = sadd.s32 %s130, 1
    %p134 = scmp.eq.s32.totalorder %s12, 1
    %p135 = scmp.ne.s32.totalorder %s130, %s132
    %p136 = scmp.eq.s32.totalorder %s12, 0
    %p137 = por %p135, %p136
    %p138 = scmp.ne.s32.totalorder %s130, %s132
    %p139 = scmp.eq.s32.totalorder %s17, 1
    %p140 = por %p138, %p139
    %p141 = scmp.ne.s32.totalorder %s132, %s133
    %p142 = scmp.eq.s32.totalorder %s17, 0
    %p143 = por %p141, %p142
    %p144 = scmp.ne.s32.totalorder %s132, %s133
    %p145 = scmp.eq.s32.totalorder %s18, 1
    %p146 = por %p144, %p145
    %p148 = scmp.ne.s32.totalorder %s133, %s147
    %p149 = scmp.eq.s32.totalorder %s18, 0
    %p150 = por %p148, %p149
    %s151 = ssub.s32 %s12, %s19
    %p152 = scmp.eq.s32.totalorder %s151, 0
    %s154 = sadd.s32 %s153, 1
    %s155 = scalar_select %p152, %s153, %s154
    %p158 = pneg %p152
    %p159 = scmp.eq.s32.totalorder %s12, 1
    %p160 = por %p158, %p159
    %p161 = scmp.ne.s32.totalorder %s153, %s156
    %p162 = scmp.eq.s32.totalorder %s12, 0
    %p163 = por %p161, %p162
    %p164 = scmp.ne.s32.totalorder %s153, %s156
    %p165 = scmp.eq.s32.totalorder %s17, 1
    %p166 = por %p164, %p165
    %p167 = scmp.ne.s32.totalorder %s156, %s157
    %p168 = scmp.eq.s32.totalorder %s17, 0
    %p169 = por %p167, %p168
    %p170 = scmp.ne.s32.totalorder %s156, %s157
    %p171 = scmp.eq.s32.totalorder %s18, 1
    %p172 = por %p170, %p171
    %p174 = scmp.ne.s32.totalorder %s157, %s173
    %p175 = scmp.eq.s32.totalorder %s18, 0
    %p176 = por %p174, %p175
    %p177 = scmp.le.s32.totalorder 1, %s12
    %p178 = scmp.lt.s32.totalorder %s12, 3
    %p179 = pnand %p177, %p178
    %p180 = pneg %p179
    // Predicated region
    $region9: #{autoencoder_forward.5} parent=5 // pred_check
      _
    $region10: #{autoencoder_forward.5} parent=5 // pred_check_branch
      %182 = sbr.rel (%p179) target = $region12
    $region11: #{autoencoder_forward.5} parent=5 // pred_region
      %s183 = ssub.s32 %s12, 1
      // Predicated region
      $region13: #{autoencoder_forward.5} parent=11 // pred_check
        %p184 = pneg %p33
      $region14: #{autoencoder_forward.5} parent=11 // pred_check_branch
        %186 = sbr.rel (%p184) target = $region16
      $region15: #{autoencoder_forward.5} parent=11 // pred_region
        _
      $region16: #{autoencoder_forward.5} parent=11 // pred_fallthru
        _
      // Predicated region
      $region17: #{autoencoder_forward.5} parent=11 // pred_check
        %p187 = pneg %p80
      $region18: #{autoencoder_forward.5} parent=11 // pred_check_branch
        %189 = sbr.rel (%p187) target = $region20
      $region19: #{autoencoder_forward.5} parent=11 // pred_region
        _
      $region20: #{autoencoder_forward.5} parent=11 // pred_fallthru
        _
      // Predicated region
      $region21: #{autoencoder_forward.5} parent=11 // pred_check
        %p190 = pneg %p101
      $region22: #{autoencoder_forward.5} parent=11 // pred_check_branch
        %192 = sbr.rel (%p190) target = $region24
      $region23: #{autoencoder_forward.5} parent=11 // pred_region
        _
      $region24: #{autoencoder_forward.5} parent=11 // pred_fallthru
        _
      // Predicated region
      $region25: #{autoencoder_forward.5} parent=11 // pred_check
        %p193 = pneg %p122
      $region26: #{autoencoder_forward.5} parent=11 // pred_check_branch
        %195 = sbr.rel (%p193) target = $region28
      $region27: #{autoencoder_forward.5} parent=11 // pred_region
        _
      $region28: #{autoencoder_forward.5} parent=11 // pred_fallthru
        _
      // Predicated region
      $region29: #{autoencoder_forward.5} parent=11 // pred_check
        %p196 = pneg %p143
      $region30: #{autoencoder_forward.5} parent=11 // pred_check_branch
        %198 = sbr.rel (%p196) target = $region32
      $region31: #{autoencoder_forward.5} parent=11 // pred_region
        _
      $region32: #{autoencoder_forward.5} parent=11 // pred_fallthru
        _
    $region12: #{autoencoder_forward.5} parent=5 // pred_fallthru
      _
    %p199 = scmp.lt.s32.totalorder %s12, 2
    // Predicated region
    $region33: #{autoencoder_forward.5} parent=5 // pred_check
      %p200 = pneg %p199
    $region34: #{autoencoder_forward.5} parent=5 // pred_check_branch
      %202 = sbr.rel (%p200) target = $region36
    $region35: #{autoencoder_forward.5} parent=5 // pred_region
      // Predicated region
      $region37: #{autoencoder_forward.5} parent=35 // pred_check
        %p203 = pneg %p53
      $region38: #{autoencoder_forward.5} parent=35 // pred_check_branch
        %205 = sbr.rel (%p203) target = $region40
      $region39: #{autoencoder_forward.5} parent=35 // pred_region
        %p206 = scmp.lt.s32.totalorder %s12, 1
        %s207 = scalar_select %p206, %s12, 1
        %s208 = smul.addr %s207, 3
        %s209 = smul.addr %s208, 4
        %s210 = scalar_lea.vmem %s1, %s209
      $region40: #{autoencoder_forward.5} parent=35 // pred_fallthru
        _
    $region36: #{autoencoder_forward.5} parent=5 // pred_fallthru
      _
    %p211 = scmp.le.s32.totalorder 1, %s12
    %p212 = scmp.lt.s32.totalorder %s12, 3
    %p213 = pnand %p211, %p212
    %p214 = pneg %p213
    // Predicated region
    $region41: #{autoencoder_forward.5} parent=5 // pred_check
      _
    $region42: #{autoencoder_forward.5} parent=5 // pred_check_branch
      %216 = sbr.rel (%p213) target = $region44
    $region43: #{autoencoder_forward.5} parent=5 // pred_region
      %s217 = ssub.s32 %s12, 1
      %p218 = pneg %p33
      %p219 = pneg %p30
      %p220 = scmp.lt.s32.totalorder %s17, 1
      %s221 = scalar_select %p220, %s17, 1
      %s222 = smul.addr %s221, 3
      %s223 = smul.addr %s222, 4
      %s224 = scalar_lea.vmem %s1, %s223
      %p225 = pneg %p59
      %p226 = pneg %p56
      %p227 = pneg %p80
      %p228 = pneg %p77
      %p229 = pneg %p101
      %p230 = pneg %p98
      %p231 = pneg %p122
      %p232 = pneg %p119
      %p233 = pneg %p143
      %p234 = pneg %p140
      %p235 = pneg %p169
      %p236 = pneg %p166
      %p237 = scmp.lt.s32.totalorder %s17, 1
      %s238 = scalar_select %p237, %s17, 1
      %s239 = smul.addr %s238, 3
      %s240 = smul.addr %s239, 4
      %s241 = scalar_lea.vmem %s6, %s240
      %p242 = scmp.lt.s32.totalorder %s17, 1
      %s243 = scalar_select %p242, %s17, 1
      %s244 = smul.addr %s243, 3
      %s245 = smul.addr %s244, 4
      %s246 = scalar_lea.vmem %s1, %s245
      %p247 = scmp.lt.s32.totalorder %s17, 1
      %s248 = scalar_select %p247, %s17, 1
      %s249 = smul.addr %s248, 3
      %s250 = smul.addr %s249, 4
      %s251 = scalar_lea.vmem %s6, %s250
      %v253 = vld [vmem:[%s0] sm:$0x7]
      %254 = vst [vmem:[#allocation2] sm:$0xff] 0.0
      %255 = vst [vmem:[#allocation2 + $0x8] sm:$0xff] 0.0
      %256 = vst [vmem:[#allocation2 + $0x10] sm:$0xff] 0.0
      %v257 = vld [vmem:[%s246] sm:$0xff]
      %v258 = vld [vmem:[%s246 + $0x8] sm:$0xf]
      %v259 = vunpack.c.l.bf16 %v257
      %v260 = vunpack.c.h.bf16 %v257
      %v261 = vunpack.c.l.bf16 %v258
      %265 = vrot.lane.b32.xlu0 %v259, 127
      %v266 = vpop.permute.xlu0 %265
      %267 = vrot.lane.b32.xlu0 %v260, 127
      %v268 = vpop.permute.xlu0 %267
      %269 = vrot.lane.b32.xlu0 %v261, 127
      %v270 = vpop.permute.xlu0 %269
      %vm271 = vcmask 1039360
      %v272 = vsel %vm271, %v266, %v268
      %v273 = vsel %vm271, %v268, %v270
      %277 = vrot.lane.b32.xlu0 %v259, 126
      %v278 = vpop.permute.xlu0 %277
      %279 = vrot.lane.b32.xlu0 %v260, 126
      %v280 = vpop.permute.xlu0 %279
      %281 = vrot.lane.b32.xlu0 %v261, 126
      %v282 = vpop.permute.xlu0 %281
      %vm283 = vcmask 1031168
      %v284 = vsel %vm283, %v278, %v280
      %v285 = vsel %vm283, %v280, %v282
      %289 = vrot.lane.b32.xlu0 %v259, 110
      %v290 = vpop.permute.xlu0 %289
      %291 = vrot.lane.b32.xlu0 %v260, 110
      %v292 = vpop.permute.xlu0 %291
      %293 = vrot.lane.b32.xlu0 %v261, 110
      %v294 = vpop.permute.xlu0 %293
      %vm295 = vcmask 900096
      %v296 = vsel %vm295, %v290, %v292
      %v297 = vsel %vm295, %v292, %v294
      %301 = vrot.lane.b32.xlu0 %v259, 109
      %v302 = vpop.permute.xlu0 %301
      %303 = vrot.lane.b32.xlu0 %v260, 109
      %v304 = vpop.permute.xlu0 %303
      %305 = vrot.lane.b32.xlu0 %v261, 109
      %v306 = vpop.permute.xlu0 %305
      %vm307 = vcmask 891904
      %v308 = vsel %vm307, %v302, %v304
      %v309 = vsel %vm307, %v304, %v306
      %313 = vrot.lane.b32.xlu0 %v259, 108
      %v314 = vpop.permute.xlu0 %313
      %315 = vrot.lane.b32.xlu0 %v260, 108
      %v316 = vpop.permute.xlu0 %315
      %317 = vrot.lane.b32.xlu0 %v261, 108
      %v318 = vpop.permute.xlu0 %317
      %vm319 = vcmask 883712
      %v320 = vsel %vm319, %v314, %v316
      %v321 = vsel %vm319, %v316, %v318
      %325 = vrot.lane.b32.xlu0 %v259, 92
      %v326 = vpop.permute.xlu0 %325
      %327 = vrot.lane.b32.xlu0 %v260, 92
      %v328 = vpop.permute.xlu0 %327
      %329 = vrot.lane.b32.xlu0 %v261, 92
      %v330 = vpop.permute.xlu0 %329
      %vm331 = vcmask 752640
      %v332 = vsel %vm331, %v326, %v328
      %v333 = vsel %vm331, %v328, %v330
      %337 = vrot.lane.b32.xlu0 %v259, 91
      %v338 = vpop.permute.xlu0 %337
      %339 = vrot.lane.b32.xlu0 %v260, 91
      %v340 = vpop.permute.xlu0 %339
      %341 = vrot.lane.b32.xlu0 %v261, 91
      %v342 = vpop.permute.xlu0 %341
      %vm343 = vcmask 744448
      %v344 = vsel %vm343, %v338, %v340
      %v345 = vsel %vm343, %v340, %v342
      %349 = vrot.lane.b32.xlu0 %v259, 90
      %v350 = vpop.permute.xlu0 %349
      %351 = vrot.lane.b32.xlu0 %v260, 90
      %v352 = vpop.permute.xlu0 %351
      %353 = vrot.lane.b32.xlu0 %v261, 90
      %v354 = vpop.permute.xlu0 %353
      %vm355 = vcmask 736256
      %v356 = vsel %vm355, %v350, %v352
      %v357 = vsel %vm355, %v352, %v354
      %v361 = vpack.c.bf16 %v272, %v259
      %v362 = vpack.c.bf16 %v273, %v260
      %v363 = vpack.c.bf16 %v270, %v261
      %v364 = vpack.c.bf16 %v296, %v284
      %v365 = vpack.c.bf16 %v297, %v285
      %v366 = vpack.c.bf16 %v294, %v282
      %v367 = vpack.c.bf16 %v320, %v308
      %v368 = vpack.c.bf16 %v321, %v309
      %v369 = vpack.c.bf16 %v318, %v306
      %v370 = vpack.c.bf16 %v344, %v332
      %v371 = vpack.c.bf16 %v345, %v333
      %v372 = vpack.c.bf16 %v342, %v330
      %v373 = vpack.c.bf16 %v356, %v356
      %v374 = vpack.c.bf16 %v357, %v357
      %v375 = vpack.c.bf16 %v354, %v354
      %v376 = vld [vmem:[%s3] sm:$0xff]
      %v377 = vld [vmem:[%s2] sm:$0xf]
      %379 = vset.pattern.permute.xlu0 0
      %380 = vperm.xlu0 %379, %v376
      %v381 = vpop.permute.xlu0 %380
      %vm383 = vcmask 588800
      %v385 = vsel %vm383, %v377, 0
      %vm387 = vcmask 1043456
      %v389 = vsel %vm387, %v373, 0
      %v392 = vsel %vm387, %v374, 0
      %v395 = vsel %vm387, %v375, 0
      %397 = vmatprep.subr.bf16.mxu0 %v362
      %398 = vmatpush1.bf16.msra.mxu0 %v361
      %399 = vmatprep.subr.bf16.mxu0 %v365
      %400 = vmatpush1.bf16.msra.mxu0 %v364
      %401 = vmatprep.subr.bf16.mxu0 %v368
      %402 = vmatpush1.bf16.msra.mxu0 %v367
      %403 = vmatprep.subr.bf16.mxu0 %v371
      %404 = vmatpush1.bf16.msra.mxu0 %v370
      %405 = vmatprep.subr.bf16.mxu0 %v392
      %406 = vmatpush1.bf16.msra.mxu0 %v389
      %407 = vmatprep.subr.bf16.mxu0 0
      %408 = vmatpush1.bf16.msra.mxu0 0
      %409 = vmatprep.subr.bf16.mxu0 0
      %410 = vmatpush1.bf16.msra.mxu0 0
      %411 = vmatprep.subr.bf16.mxu0 0
      %412 = vmatpush1.bf16.msra.mxu0 0
      %413 = vmatprep.subr.bf16.mxu0 0
      %414 = vmatpush1.bf16.msra.mxu0 0
      %415 = vmatprep.subr.bf16.mxu0 0
      %416 = vmatpush1.bf16.msra.mxu0 0
      %417 = vmatprep.subr.bf16.mxu0 0
      %418 = vmatpush1.bf16.msra.mxu0 0
      %419 = vmatprep.subr.bf16.mxu0 0
      %420 = vmatpush1.bf16.msra.mxu0 0
      %421 = vmatprep.subr.bf16.mxu0 0
      %422 = vmatpush1.bf16.msra.mxu0 0
      %423 = vmatprep.subr.bf16.mxu0 0
      %424 = vmatpush1.bf16.msra.mxu0 0
      %425 = vmatprep.subr.bf16.mxu0 0
      %426 = vmatpush1.bf16.msra.mxu0 0
      %427 = vmatprep.subr.bf16.mxu0 0
      %428 = vmatpush1.bf16.msra.mxu0 0
      %429 = vmatprep.mubr.bf16.mxu0 0
      %430 = vmatmul.mubr.bf16.gmra.mrb[0].mxu0 %v385
      %v431 = vpop.f32.mrb[0].mxu0
      %v432 = vadd.f32 %v381, %v431
      %v433 = vpop.f32.mrb[0].mxu0
      %v434 = vadd.f32 %v381, %v433
      %v435 = vpop.f32.mrb[0].mxu0
      %v436 = vpop.f32.mrb[0].mxu0
      %437 = vdwg.mxu0
      %438 = vmatprep.subr.bf16.mxu0 0
      %439 = vmatpush1.bf16.msra.mxu0 %v363
      %440 = vmatprep.subr.bf16.mxu0 0
      %441 = vmatpush1.bf16.msra.mxu0 %v366
      %442 = vmatprep.subr.bf16.mxu0 0
      %443 = vmatpush1.bf16.msra.mxu0 %v369
      %444 = vmatprep.subr.bf16.mxu0 0
      %445 = vmatpush1.bf16.msra.mxu0 %v372
      %446 = vmatprep.subr.bf16.mxu0 0
      %447 = vmatpush1.bf16.msra.mxu0 %v395
      %448 = vmatprep.subr.bf16.mxu0 0
      %449 = vmatpush1.bf16.msra.mxu0 0
      %450 = vmatprep.subr.bf16.mxu0 0
      %451 = vmatpush1.bf16.msra.mxu0 0
      %452 = vmatprep.subr.bf16.mxu0 0
      %453 = vmatpush1.bf16.msra.mxu0 0
      %454 = vmatprep.subr.bf16.mxu0 0
      %455 = vmatpush1.bf16.msra.mxu0 0
      %456 = vmatprep.subr.bf16.mxu0 0
      %457 = vmatpush1.bf16.msra.mxu0 0
      %458 = vmatprep.subr.bf16.mxu0 0
      %459 = vmatpush1.bf16.msra.mxu0 0
      %460 = vmatprep.subr.bf16.mxu0 0
      %461 = vmatpush1.bf16.msra.mxu0 0
      %462 = vmatprep.subr.bf16.mxu0 0
      %463 = vmatpush1.bf16.msra.mxu0 0
      %464 = vmatprep.subr.bf16.mxu0 0
      %465 = vmatpush1.bf16.msra.mxu0 0
      %466 = vmatprep.subr.bf16.mxu0 0
      %467 = vmatpush1.bf16.msra.mxu0 0
      %468 = vmatprep.subr.bf16.mxu0 0
      %469 = vmatpush1.bf16.msra.mxu0 0
      %470 = vmatprep.mubr.bf16.mxu0 0
      %471 = vmatmul.mubr.bf16.gmra.mrb[0].mxu0 %v385
      %v472 = vpop.f32.mrb[0].mxu0
      %v473 = vadd.f32 %v381, %v472
      %v474 = vpop.f32.mrb[0].mxu0
      %v475 = vpop.f32.mrb[0].mxu0
      %v476 = vpop.f32.mrb[0].mxu0
      %477 = vdwg.mxu0
      %v479 = vlaneseq
      %v480 = vshrl.u32 %v479, 7
      %v481 = vsub.s32 0, %v480
      %v482 = vrot.slane %v253, %v481
      %v483 = vlaneseq
      %v484 = vshrl.u32 %v483, 7
      %v485 = vsub.s32 1, %v484
      %v486 = vrot.slane %v253, %v485
      %v487 = vlaneseq
      %v488 = vshrl.u32 %v487, 7
      %v489 = vsub.s32 2, %v488
      %v490 = vrot.slane %v253, %v489
      %v494 = vmul.f32 %v432, %v482
      %v495 = vmul.f32 %v434, %v486
      %v496 = vmul.f32 %v473, %v490
      %v497 = vmul.f32 %v494, %v432
      %v498 = vmul.f32 %v495, %v434
      %v499 = vmul.f32 %v496, %v473
      %v500 = vadd.f32 %v494, %v495
      %vm501 = vcmask 244736
      %v502 = vsel %vm501, %v496, 0.0
      %v503 = vadd.f32 %v500, %v502
      %504 = vadd.xlane.f32.xlu0 %v503
      %v505 = vpop.xlane.xlu0 %504
      %v506 = vadd.f32 %v497, %v498
      %v507 = vsel %vm501, %v499, 0.0
      %v508 = vadd.f32 %v506, %v507
      %509 = vadd.xlane.f32.xlu0 %v508
      %v510 = vpop.xlane.xlu0 %509
      %v511 = vmul.f32 %v505, 0.00390625
      %v512 = vmul.f32 %v510, 0.00390625
      %v513 = vmul.f32 %v511, %v511
      %v514 = vsub.f32 %v512, %v513
      %v515 = vmax.f32 %v514, 0.0
      %v516 = vsub.f32 %v432, %v511
      %v517 = vsub.f32 %v434, %v511
      %v518 = vsub.f32 %v473, %v511
      %v519 = vadd.f32 %v515, 1e-05
      %v520 = vrsqrt.pop %v519
      %v521 = vmul.f32 %v516, %v520
      %v522 = vmul.f32 %v517, %v520
      %v523 = vmul.f32 %v518, %v520
      %524 = vset.pattern.permute.xlu0 1
      %525 = vperm.xlu0 %524, %v376
      %v526 = vpop.permute.xlu0 %525
      %v528 = vmul.f32 %v521, %v526
      %v529 = vmul.f32 %v522, %v526
      %v530 = vmul.f32 %v523, %v526
      %531 = vset.pattern.permute.xlu0 2
      %532 = vperm.xlu0 %531, %v376
      %v533 = vpop.permute.xlu0 %532
      %v535 = vadd.f32 %v528, %v533
      %v536 = vadd.f32 %v529, %v533
      %v537 = vadd.f32 %v530, %v533
      %vm538 = vcmp.ge.f32.partialorder %v535, 0.0
      %vm539 = vcmp.ge.f32.partialorder %v536, 0.0
      %vm540 = vcmp.ge.f32.partialorder %v537, 0.0
      %v541 = vmul.f32 %v535, 0.01
      %v542 = vmul.f32 %v536, 0.01
      %v543 = vmul.f32 %v537, 0.01
      %v544 = vsel %vm538, %v535, %v541
      %v545 = vsel %vm539, %v536, %v542
      %v546 = vsel %vm540, %v537, %v543
      %v547 = vmul.f32 %v544, %v482
      %v548 = vmul.f32 %v545, %v486
      %v549 = vmul.f32 %v546, %v490
      %553 = vrot.lane.b32.xlu0 %v547, 19
      %v554 = vpop.permute.xlu0 %553
      %555 = vrot.lane.b32.xlu0 %v548, 19
      %v556 = vpop.permute.xlu0 %555
      %557 = vrot.lane.b32.xlu0 %v549, 19
      %v558 = vpop.permute.xlu0 %557
      %vm559 = vcmask 154624
      %v560 = vsel %vm559, %v554, %v556
      %v561 = vsel %vm559, %v556, %v558
      %vm565 = vcmask 1047704
      %566 = vst.msk [vmem:[#allocation2] sm:$0xff] %vm565, %v554
      %567 = vst [vmem:[#allocation2 + $0x8] sm:$0xff] %v560
      %vm568 = vcmask 400384
      %569 = vst.msk [vmem:[#allocation2 + $0x10] sm:$0xff] %vm568, %v561
      %v570 = vld [vmem:[#allocation2] sm:$0xff]
      %v571 = vld [vmem:[#allocation2 + $0x8] sm:$0xff]
      %v572 = vld [vmem:[#allocation2 + $0x10] sm:$0xff]
      %576 = vrot.lane.b32.xlu0 %v570, 127
      %v577 = vpop.permute.xlu0 %576
      %578 = vrot.lane.b32.xlu0 %v571, 127
      %v579 = vpop.permute.xlu0 %578
      %580 = vrot.lane.b32.xlu0 %v572, 127
      %v581 = vpop.permute.xlu0 %580
      %v582 = vsel %vm271, %v577, %v579
      %v583 = vsel %vm271, %v579, %v581
      %587 = vrot.lane.b32.xlu0 %v570, 126
      %v588 = vpop.permute.xlu0 %587
      %589 = vrot.lane.b32.xlu0 %v571, 126
      %v590 = vpop.permute.xlu0 %589
      %591 = vrot.lane.b32.xlu0 %v572, 126
      %v592 = vpop.permute.xlu0 %591
      %v593 = vsel %vm283, %v588, %v590
      %v594 = vsel %vm283, %v590, %v592
      %598 = vrot.lane.b32.xlu0 %v570, 110
      %v599 = vpop.permute.xlu0 %598
      %600 = vrot.lane.b32.xlu0 %v571, 110
      %v601 = vpop.permute.xlu0 %600
      %602 = vrot.lane.b32.xlu0 %v572, 110
      %v603 = vpop.permute.xlu0 %602
      %v604 = vsel %vm295, %v599, %v601
      %v605 = vsel %vm295, %v601, %v603
      %609 = vrot.lane.b32.xlu0 %v570, 109
      %v610 = vpop.permute.xlu0 %609
      %611 = vrot.lane.b32.xlu0 %v571, 109
      %v612 = vpop.permute.xlu0 %611
      %613 = vrot.lane.b32.xlu0 %v572, 109
      %v614 = vpop.permute.xlu0 %613
      %v615 = vsel %vm307, %v610, %v612
      %v616 = vsel %vm307, %v612, %v614
      %620 = vrot.lane.b32.xlu0 %v570, 108
      %v621 = vpop.permute.xlu0 %620
      %622 = vrot.lane.b32.xlu0 %v571, 108
      %v623 = vpop.permute.xlu0 %622
      %624 = vrot.lane.b32.xlu0 %v572, 108
      %v625 = vpop.permute.xlu0 %624
      %v626 = vsel %vm319, %v621, %v623
      %v627 = vsel %vm319, %v623, %v625
      %631 = vrot.lane.b32.xlu0 %v570, 92
      %v632 = vpop.permute.xlu0 %631
      %633 = vrot.lane.b32.xlu0 %v571, 92
      %v634 = vpop.permute.xlu0 %633
      %635 = vrot.lane.b32.xlu0 %v572, 92
      %v636 = vpop.permute.xlu0 %635
      %v637 = vsel %vm331, %v632, %v634
      %v638 = vsel %vm331, %v634, %v636
      %642 = vrot.lane.b32.xlu0 %v570, 91
      %v643 = vpop.permute.xlu0 %642
      %644 = vrot.lane.b32.xlu0 %v571, 91
      %v645 = vpop.permute.xlu0 %644
      %646 = vrot.lane.b32.xlu0 %v572, 91
      %v647 = vpop.permute.xlu0 %646
      %v648 = vsel %vm343, %v643, %v645
      %v649 = vsel %vm343, %v645, %v647
      %653 = vrot.lane.b32.xlu0 %v570, 90
      %v654 = vpop.permute.xlu0 %653
      %655 = vrot.lane.b32.xlu0 %v571, 90
      %v656 = vpop.permute.xlu0 %655
      %657 = vrot.lane.b32.xlu0 %v572, 90
      %v658 = vpop.permute.xlu0 %657
      %v659 = vsel %vm355, %v654, %v656
      %v660 = vsel %vm355, %v656, %v658
      %v664 = vpack.c.bf16 %v582, %v570
      %v665 = vpack.c.bf16 %v583, %v571
      %v666 = vpack.c.bf16 %v581, %v572
      %v667 = vpack.c.bf16 %v604, %v593
      %v668 = vpack.c.bf16 %v605, %v594
      %v669 = vpack.c.bf16 %v603, %v592
      %v670 = vpack.c.bf16 %v626, %v615
      %v671 = vpack.c.bf16 %v627, %v616
      %v672 = vpack.c.bf16 %v625, %v614
      %v673 = vpack.c.bf16 %v648, %v637
      %v674 = vpack.c.bf16 %v649, %v638
      %v675 = vpack.c.bf16 %v647, %v636
      %v676 = vpack.c.bf16 %v659, %v659
      %v677 = vpack.c.bf16 %v660, %v660
      %v678 = vpack.c.bf16 %v658, %v658
      %v679 = vld [vmem:[%s5] sm:$0xff]
      %v680 = vld [vmem:[%s4] sm:$0xf]
      %682 = vset.pattern.permute.xlu0 0
      %683 = vperm.xlu0 %682, %v679
      %v684 = vpop.permute.xlu0 %683
      %v687 = vsel %vm383, %v680, 0
      %v690 = vsel %vm387, %v676, 0
      %v693 = vsel %vm387, %v677, 0
      %v696 = vsel %vm387, %v678, 0
      %698 = vmatprep.subr.bf16.mxu0 %v665
      %699 = vmatpush1.bf16.msra.mxu0 %v664
      %700 = vmatprep.subr.bf16.mxu0 %v668
      %701 = vmatpush1.bf16.msra.mxu0 %v667
      %702 = vmatprep.subr.bf16.mxu0 %v671
      %703 = vmatpush1.bf16.msra.mxu0 %v670
      %704 = vmatprep.subr.bf16.mxu0 %v674
      %705 = vmatpush1.bf16.msra.mxu0 %v673
      %706 = vmatprep.subr.bf16.mxu0 %v693
      %707 = vmatpush1.bf16.msra.mxu0 %v690
      %708 = vmatprep.subr.bf16.mxu0 0
      %709 = vmatpush1.bf16.msra.mxu0 0
      %710 = vmatprep.subr.bf16.mxu0 0
      %711 = vmatpush1.bf16.msra.mxu0 0
      %712 = vmatprep.subr.bf16.mxu0 0
      %713 = vmatpush1.bf16.msra.mxu0 0
      %714 = vmatprep.subr.bf16.mxu0 0
      %715 = vmatpush1.bf16.msra.mxu0 0
      %716 = vmatprep.subr.bf16.mxu0 0
      %717 = vmatpush1.bf16.msra.mxu0 0
      %718 = vmatprep.subr.bf16.mxu0 0
      %719 = vmatpush1.bf16.msra.mxu0 0
      %720 = vmatprep.subr.bf16.mxu0 0
      %721 = vmatpush1.bf16.msra.mxu0 0
      %722 = vmatprep.subr.bf16.mxu0 0
      %723 = vmatpush1.bf16.msra.mxu0 0
      %724 = vmatprep.subr.bf16.mxu0 0
      %725 = vmatpush1.bf16.msra.mxu0 0
      %726 = vmatprep.subr.bf16.mxu0 0
      %727 = vmatpush1.bf16.msra.mxu0 0
      %728 = vmatprep.subr.bf16.mxu0 0
      %729 = vmatpush1.bf16.msra.mxu0 0
      %730 = vmatprep.mubr.bf16.mxu0 0
      %731 = vmatmul.mubr.bf16.gmra.mrb[0].mxu0 %v687
      %v732 = vpop.f32.mrb[0].mxu0
      %v733 = vadd.f32 %v684, %v732
      %v734 = vpop.f32.mrb[0].mxu0
      %v735 = vadd.f32 %v684, %v734
      %v736 = vpop.f32.mrb[0].mxu0
      %v737 = vpop.f32.mrb[0].mxu0
      %738 = vdwg.mxu0
      %739 = vmatprep.subr.bf16.mxu0 0
      %740 = vmatpush1.bf16.msra.mxu0 %v666
      %741 = vmatprep.subr.bf16.mxu0 0
      %742 = vmatpush1.bf16.msra.mxu0 %v669
      %743 = vmatprep.subr.bf16.mxu0 0
      %744 = vmatpush1.bf16.msra.mxu0 %v672
      %745 = vmatprep.subr.bf16.mxu0 0
      %746 = vmatpush1.bf16.msra.mxu0 %v675
      %747 = vmatprep.subr.bf16.mxu0 0
      %748 = vmatpush1.bf16.msra.mxu0 %v696
      %749 = vmatprep.subr.bf16.mxu0 0
      %750 = vmatpush1.bf16.msra.mxu0 0
      %751 = vmatprep.subr.bf16.mxu0 0
      %752 = vmatpush1.bf16.msra.mxu0 0
      %753 = vmatprep.subr.bf16.mxu0 0
      %754 = vmatpush1.bf16.msra.mxu0 0
      %755 = vmatprep.subr.bf16.mxu0 0
      %756 = vmatpush1.bf16.msra.mxu0 0
      %757 = vmatprep.subr.bf16.mxu0 0
      %758 = vmatpush1.bf16.msra.mxu0 0
      %759 = vmatprep.subr.bf16.mxu0 0
      %760 = vmatpush1.bf16.msra.mxu0 0
      %761 = vmatprep.subr.bf16.mxu0 0
      %762 = vmatpush1.bf16.msra.mxu0 0
      %763 = vmatprep.subr.bf16.mxu0 0
      %764 = vmatpush1.bf16.msra.mxu0 0
      %765 = vmatprep.subr.bf16.mxu0 0
      %766 = vmatpush1.bf16.msra.mxu0 0
      %767 = vmatprep.subr.bf16.mxu0 0
      %768 = vmatpush1.bf16.msra.mxu0 0
      %769 = vmatprep.subr.bf16.mxu0 0
      %770 = vmatpush1.bf16.msra.mxu0 0
      %771 = vmatprep.mubr.bf16.mxu0 0
      %772 = vmatmul.mubr.bf16.gmra.mrb[0].mxu0 %v687
      %v773 = vpop.f32.mrb[0].mxu0
      %v774 = vadd.f32 %v684, %v773
      %v775 = vpop.f32.mrb[0].mxu0
      %v776 = vpop.f32.mrb[0].mxu0
      %v777 = vpop.f32.mrb[0].mxu0
      %778 = vdwg.mxu0
      %v779 = vmul.f32 %v733, %v482
      %v780 = vmul.f32 %v735, %v486
      %v781 = vmul.f32 %v774, %v490
      %v782 = vmul.f32 %v779, %v733
      %v783 = vmul.f32 %v780, %v735
      %v784 = vmul.f32 %v781, %v774
      %v785 = vadd.f32 %v779, %v780
      %v786 = vsel %vm501, %v781, 0.0
      %v787 = vadd.f32 %v785, %v786
      %788 = vadd.xlane.f32.xlu0 %v787
      %v789 = vpop.xlane.xlu0 %788
      %v790 = vadd.f32 %v782, %v783
      %v791 = vsel %vm501, %v784, 0.0
      %v792 = vadd.f32 %v790, %v791
      %793 = vadd.xlane.f32.xlu0 %v792
      %v794 = vpop.xlane.xlu0 %793
      %v795 = vmul.f32 %v789, 0.00390625
      %v796 = vmul.f32 %v794, 0.00390625
      %v797 = vmul.f32 %v795, %v795
      %v798 = vsub.f32 %v796, %v797
      %v799 = vmax.f32 %v798, 0.0
      %v800 = vsub.f32 %v733, %v795
      %v801 = vsub.f32 %v735, %v795
      %v802 = vsub.f32 %v774, %v795
      %v803 = vadd.f32 %v799, 1e-05
      %v804 = vrsqrt.pop %v803
      %v805 = vmul.f32 %v800, %v804
      %v806 = vmul.f32 %v801, %v804
      %v807 = vmul.f32 %v802, %v804
      %808 = vset.pattern.permute.xlu0 1
      %809 = vperm.xlu0 %808, %v679
      %v810 = vpop.permute.xlu0 %809
      %v812 = vmul.f32 %v805, %v810
      %v813 = vmul.f32 %v806, %v810
      %v814 = vmul.f32 %v807, %v810
      %815 = vset.pattern.permute.xlu0 2
      %816 = vperm.xlu0 %815, %v679
      %v817 = vpop.permute.xlu0 %816
      %v819 = vadd.f32 %v812, %v817
      %v820 = vadd.f32 %v813, %v817
      %v821 = vadd.f32 %v814, %v817
      %vm822 = vcmp.ge.f32.partialorder %v819, 0.0
      %vm823 = vcmp.ge.f32.partialorder %v820, 0.0
      %vm824 = vcmp.ge.f32.partialorder %v821, 0.0
      %v825 = vmul.f32 %v819, 0.01
      %v826 = vmul.f32 %v820, 0.01
      %v827 = vmul.f32 %v821, 0.01
      %v828 = vsel %vm822, %v819, %v825
      %v829 = vsel %vm823, %v820, %v826
      %v830 = vsel %vm824, %v821, %v827
      %v831 = vmul.f32 %v828, %v482
      %v832 = vmul.f32 %v829, %v486
      %v833 = vmul.f32 %v830, %v490
      %834 = vst [vmem:[%s251] sm:$0xff] 0
      %835 = vst [vmem:[%s251 + $0x8] sm:$0xf] 0
      %v836 = vpack.c.bf16 %v831, %v831
      %v837 = vpack.c.bf16 %v832, %v832
      %v838 = vpack.c.bf16 %v833, %v833
      %v842 = vunpack.c.l.b16 %v836
      %v843 = vunpack.c.l.b16 %v837
      %v844 = vunpack.c.l.b16 %v838
      %v845 = vpack.c.b16 %v843, %v842
      %v846 = vpack.c.b16 %v844, %v844
      %847 = vrot.lane.b32.xlu0 %v845, 19
      %v848 = vpop.permute.xlu0 %847
      %849 = vrot.lane.b32.xlu0 %v846, 19
      %v850 = vpop.permute.xlu0 %849
      %v851 = vrot.slane %v848, 4
      %vm852 = vcmask 154624
      %v853 = vsel %vm852, %v851, %v848
      %v854 = vsel %vm852, %v851, %v850
      %vm857 = vcmask 1043608
      %vm858 = vcmask 1047556
      %vm859 = vmor %vm858, %vm857
      %860 = vst.msk [vmem:[%s251] sm:$0xff] %vm859, %v853
      %vm861 = vcmask 396288
      %862 = vst.msk [vmem:[%s251 + $0x8] sm:$0xf] %vm861, %v854
      %p863 = scmp.lt.s32.totalorder %s17, 1
      %s864 = scalar_select %p863, %s17, 1
      %s865 = smul.addr %s864, 3
      %s866 = smul.addr %s865, 4
      %s867 = scalar_lea.vmem %s6, %s866
      // Predicated region
      $region45: #{autoencoder_forward.5} parent=43 // pred_check
        %p868 = pneg %p166
      $region46: #{autoencoder_forward.5} parent=43 // pred_check_branch
        %870 = sbr.rel (%p868) target = $region48
      $region47: #{autoencoder_forward.5} parent=43 // pred_region
        _
      $region48: #{autoencoder_forward.5} parent=43 // pred_fallthru
        _
    $region44: #{autoencoder_forward.5} parent=5 // pred_fallthru
      _
    %p871 = scmp.le.s32.totalorder 2, %s12
    // Predicated region
    $region49: #{autoencoder_forward.5} parent=5 // pred_check
      %p872 = pneg %p871
    $region50: #{autoencoder_forward.5} parent=5 // pred_check_branch
      %874 = sbr.rel (%p872) target = $region52
    $region51: #{autoencoder_forward.5} parent=5 // pred_region
      %s875 = ssub.s32 %s12, 2
      // Predicated region
      $region53: #{autoencoder_forward.5} parent=51 // pred_check
        %p876 = pneg %p172
      $region54: #{autoencoder_forward.5} parent=51 // pred_check_branch
        %878 = sbr.rel (%p876) target = $region56
      $region55: #{autoencoder_forward.5} parent=51 // pred_region
        %p879 = scmp.lt.s32.totalorder %s18, 1
        %s880 = scalar_select %p879, %s18, 1
        %s881 = smul.addr %s880, 3
        %s882 = smul.addr %s881, 4
        %s883 = scalar_lea.vmem %s6, %s882
      $region56: #{autoencoder_forward.5} parent=51 // pred_fallthru
        _
    $region52: #{autoencoder_forward.5} parent=5 // pred_fallthru
      _
  $region6: #{autoencoder_forward.5} parent=0 // loop_footer
    %s16 = sadd.s32 1, %s12
  $region7: #{autoencoder_forward.5} parent=0 // loop_footer_branch
    %11 = sbr.rel target = $region3
  $region8: #{autoencoder_forward.5} parent=0 // loop_exit
    _

// kernel: autoencoder_forward.6
$region0: #{autoencoder_forward.6}
  #allocation0 [shape = 'u32[]', space=smem, size = 0x4, offset = 0x4, fixed_abs, tag = 'smem constant byte address 0x4 - core index']
  #allocation1 [shape = 'u32[144,128]{1,0:T(1,128)}', space=vmem, size = 0x12000, scoped, tag = 'internal scratch']
  #allocation2 [shape = 'f32[16,128]{1,0:T(8,128)}', space=vmem, size = 0x2000, scoped, tag = 'scratch operand']
  %s0 = inlined_call_operand.vmem [shape: f32[1,128], index: 0, kind: input, shape index: {}]
  %s1 = inlined_call_operand.vmem [shape: bf16[2,32,128], index: 1, kind: input, shape index: {}]
  %s2 = inlined_call_operand.vmem [shape: bf16[16,128], index: 2, kind: input, shape index: {}]
  %s3 = inlined_call_operand.vmem [shape: f32[16,3], index: 3, kind: input, shape index: {}]
  %s4 = inlined_call_operand.vmem [shape: bf16[16,144], index: 4, kind: input, shape index: {}]
  %s5 = inlined_call_operand.vmem [shape: f32[16,3], index: 5, kind: input, shape index: {}]
  %s6 = inlined_call_operand.vmem [shape: bf16[2,16,128], index: 6, kind: output, shape index: {}]
  %s7 = sld [smem:[#allocation0]]
  $region57: #{autoencoder_forward.6} parent=0
    _
  %s9 = ssub.s32 1, %s7
  %s10 = scalar_select 0, %s9, %s7
  loop: start=0, step=1, limit=4
  $region2: #{autoencoder_forward.6} parent=0 // loop_pre_header
    _
  $region3: #{autoencoder_forward.6} parent=0 // loop_header
    %s12 = sphi 0, %s16
    %p13 = scmp.ge.s32.totalorder %s12, 4
    %s20 = sphi 0, %s20
    %s22 = sphi 0, %s20
    %s23 = sphi 0, %s22
    %s37 = sphi 0, %s23
    %s43 = sphi 0, %s45
    %s46 = sphi 0, %s43
    %s47 = sphi 0, %s46
    %s63 = sphi 0, %s47
    %s67 = sphi 0, %s67
    %s69 = sphi 0, %s67
    %s70 = sphi 0, %s69
    %s84 = sphi 0, %s70
    %s88 = sphi 0, %s88
    %s90 = sphi 0, %s88
    %s91 = sphi 0, %s90
    %s105 = sphi 0, %s91
    %s109 = sphi 0, %s109
    %s111 = sphi 0, %s109
    %s112 = sphi 0, %s111
    %s126 = sphi 0, %s112
    %s130 = sphi 0, %s130
    %s132 = sphi 0, %s130
    %s133 = sphi 0, %s132
    %s147 = sphi 0, %s133
    %s153 = sphi 0, %s155
    %s156 = sphi 0, %s153
    %s157 = sphi 0, %s156
    %s173 = sphi 0, %s157
  $region4: #{autoencoder_forward.6} parent=0 // loop_header_branch
    %15 = sbr.rel (%p13) target = $region8
  $region5: #{autoencoder_forward.6} parent=0 // loop_body
    %s17 = ssub.s32 %s12, 1
    %s18 = ssub.s32 %s12, 2
    %s19 = sadd.s32 %s12, 1
    %s21 = sadd.s32 %s20, 1
    %p24 = scmp.eq.s32.totalorder %s12, 1
    %p25 = scmp.ne.s32.totalorder %s20, %s22
    %p26 = scmp.eq.s32.totalorder %s12, 0
    %p27 = por %p25, %p26
    %p28 = scmp.ne.s32.totalorder %s20, %s22
    %p29 = scmp.eq.s32.totalorder %s17, 1
    %p30 = por %p28, %p29
    %p31 = scmp.ne.s32.totalorder %s22, %s23
    %p32 = scmp.eq.s32.totalorder %s17, 0
    %p33 = por %p31, %p32
    %p34 = scmp.ne.s32.totalorder %s22, %s23
    %p35 = scmp.eq.s32.totalorder %s18, 1
    %p36 = por %p34, %p35
    %p38 = scmp.ne.s32.totalorder %s23, %s37
    %p39 = scmp.eq.s32.totalorder %s18, 0
    %p40 = por %p38, %p39
    %s41 = ssub.s32 %s12, %s19
    %p42 = scmp.eq.s32.totalorder %s41, 0
    %s44 = sadd.s32 %s43, 1
    %s45 = scalar_select %p42, %s43, %s44
    %p48 = pneg %p42
    %p49 = scmp.eq.s32.totalorder %s12, 1
    %p50 = por %p48, %p49
    %p51 = scmp.ne.s32.totalorder %s43, %s46
    %p52 = scmp.eq.s32.totalorder %s12, 0
    %p53 = por %p51, %p52
    %p54 = scmp.ne.s32.totalorder %s43, %s46
    %p55 = scmp.eq.s32.totalorder %s17, 1
    %p56 = por %p54, %p55
    %p57 = scmp.ne.s32.totalorder %s46, %s47
    %p58 = scmp.eq.s32.totalorder %s17, 0
    %p59 = por %p57, %p58
    %p60 = scmp.ne.s32.totalorder %s46, %s47
    %p61 = scmp.eq.s32.totalorder %s18, 1
    %p62 = por %p60, %p61
    %p64 = scmp.ne.s32.totalorder %s47, %s63
    %p65 = scmp.eq.s32.totalorder %s18, 0
    %p66 = por %p64, %p65
    %s68 = sadd.s32 %s67, 1
    %p71 = scmp.eq.s32.totalorder %s12, 1
    %p72 = scmp.ne.s32.totalorder %s67, %s69
    %p73 = scmp.eq.s32.totalorder %s12, 0
    %p74 = por %p72, %p73
    %p75 = scmp.ne.s32.totalorder %s67, %s69
    %p76 = scmp.eq.s32.totalorder %s17, 1
    %p77 = por %p75, %p76
    %p78 = scmp.ne.s32.totalorder %s69, %s70
    %p79 = scmp.eq.s32.totalorder %s17, 0
    %p80 = por %p78, %p79
    %p81 = scmp.ne.s32.totalorder %s69, %s70
    %p82 = scmp.eq.s32.totalorder %s18, 1
    %p83 = por %p81, %p82
    %p85 = scmp.ne.s32.totalorder %s70, %s84
    %p86 = scmp.eq.s32.totalorder %s18, 0
    %p87 = por %p85, %p86
    %s89 = sadd.s32 %s88, 1
    %p92 = scmp.eq.s32.totalorder %s12, 1
    %p93 = scmp.ne.s32.totalorder %s88, %s90
    %p94 = scmp.eq.s32.totalorder %s12, 0
    %p95 = por %p93, %p94
    %p96 = scmp.ne.s32.totalorder %s88, %s90
    %p97 = scmp.eq.s32.totalorder %s17, 1
    %p98 = por %p96, %p97
    %p99 = scmp.ne.s32.totalorder %s90, %s91
    %p100 = scmp.eq.s32.totalorder %s17, 0
    %p101 = por %p99, %p100
    %p102 = scmp.ne.s32.totalorder %s90, %s91
    %p103 = scmp.eq.s32.totalorder %s18, 1
    %p104 = por %p102, %p103
    %p106 = scmp.ne.s32.totalorder %s91, %s105
    %p107 = scmp.eq.s32.totalorder %s18, 0
    %p108 = por %p106, %p107
    %s110 = sadd.s32 %s109, 1
    %p113 = scmp.eq.s32.totalorder %s12, 1
    %p114 = scmp.ne.s32.totalorder %s109, %s111
    %p115 = scmp.eq.s32.totalorder %s12, 0
    %p116 = por %p114, %p115
    %p117 = scmp.ne.s32.totalorder %s109, %s111
    %p118 = scmp.eq.s32.totalorder %s17, 1
    %p119 = por %p117, %p118
    %p120 = scmp.ne.s32.totalorder %s111, %s112
    %p121 = scmp.eq.s32.totalorder %s17, 0
    %p122 = por %p120, %p121
    %p123 = scmp.ne.s32.totalorder %s111, %s112
    %p124 = scmp.eq.s32.totalorder %s18, 1
    %p125 = por %p123, %p124
    %p127 = scmp.ne.s32.totalorder %s112, %s126
    %p128 = scmp.eq.s32.totalorder %s18, 0
    %p129 = por %p127, %p128
    %s131 = sadd.s32 %s130, 1
    %p134 = scmp.eq.s32.totalorder %s12, 1
    %p135 = scmp.ne.s32.totalorder %s130, %s132
    %p136 = scmp.eq.s32.totalorder %s12, 0
    %p137 = por %p135, %p136
    %p138 = scmp.ne.s32.totalorder %s130, %s132
    %p139 = scmp.eq.s32.totalorder %s17, 1
    %p140 = por %p138, %p139
    %p141 = scmp.ne.s32.totalorder %s132, %s133
    %p142 = scmp.eq.s32.totalorder %s17, 0
    %p143 = por %p141, %p142
    %p144 = scmp.ne.s32.totalorder %s132, %s133
    %p145 = scmp.eq.s32.totalorder %s18, 1
    %p146 = por %p144, %p145
    %p148 = scmp.ne.s32.totalorder %s133, %s147
    %p149 = scmp.eq.s32.totalorder %s18, 0
    %p150 = por %p148, %p149
    %s151 = ssub.s32 %s12, %s19
    %p152 = scmp.eq.s32.totalorder %s151, 0
    %s154 = sadd.s32 %s153, 1
    %s155 = scalar_select %p152, %s153, %s154
    %p158 = pneg %p152
    %p159 = scmp.eq.s32.totalorder %s12, 1
    %p160 = por %p158, %p159
    %p161 = scmp.ne.s32.totalorder %s153, %s156
    %p162 = scmp.eq.s32.totalorder %s12, 0
    %p163 = por %p161, %p162
    %p164 = scmp.ne.s32.totalorder %s153, %s156
    %p165 = scmp.eq.s32.totalorder %s17, 1
    %p166 = por %p164, %p165
    %p167 = scmp.ne.s32.totalorder %s156, %s157
    %p168 = scmp.eq.s32.totalorder %s17, 0
    %p169 = por %p167, %p168
    %p170 = scmp.ne.s32.totalorder %s156, %s157
    %p171 = scmp.eq.s32.totalorder %s18, 1
    %p172 = por %p170, %p171
    %p174 = scmp.ne.s32.totalorder %s157, %s173
    %p175 = scmp.eq.s32.totalorder %s18, 0
    %p176 = por %p174, %p175
    %p177 = scmp.le.s32.totalorder 1, %s12
    %p178 = scmp.lt.s32.totalorder %s12, 3
    %p179 = pnand %p177, %p178
    %p180 = pneg %p179
    // Predicated region
    $region9: #{autoencoder_forward.6} parent=5 // pred_check
      _
    $region10: #{autoencoder_forward.6} parent=5 // pred_check_branch
      %182 = sbr.rel (%p179) target = $region12
    $region11: #{autoencoder_forward.6} parent=5 // pred_region
      %s183 = ssub.s32 %s12, 1
      // Predicated region
      $region13: #{autoencoder_forward.6} parent=11 // pred_check
        %p184 = pneg %p33
      $region14: #{autoencoder_forward.6} parent=11 // pred_check_branch
        %186 = sbr.rel (%p184) target = $region16
      $region15: #{autoencoder_forward.6} parent=11 // pred_region
        _
      $region16: #{autoencoder_forward.6} parent=11 // pred_fallthru
        _
      // Predicated region
      $region17: #{autoencoder_forward.6} parent=11 // pred_check
        %p187 = pneg %p80
      $region18: #{autoencoder_forward.6} parent=11 // pred_check_branch
        %189 = sbr.rel (%p187) target = $region20
      $region19: #{autoencoder_forward.6} parent=11 // pred_region
        _
      $region20: #{autoencoder_forward.6} parent=11 // pred_fallthru
        _
      // Predicated region
      $region21: #{autoencoder_forward.6} parent=11 // pred_check
        %p190 = pneg %p101
      $region22: #{autoencoder_forward.6} parent=11 // pred_check_branch
        %192 = sbr.rel (%p190) target = $region24
      $region23: #{autoencoder_forward.6} parent=11 // pred_region
        _
      $region24: #{autoencoder_forward.6} parent=11 // pred_fallthru
        _
      // Predicated region
      $region25: #{autoencoder_forward.6} parent=11 // pred_check
        %p193 = pneg %p122
      $region26: #{autoencoder_forward.6} parent=11 // pred_check_branch
        %195 = sbr.rel (%p193) target = $region28
      $region27: #{autoencoder_forward.6} parent=11 // pred_region
        _
      $region28: #{autoencoder_forward.6} parent=11 // pred_fallthru
        _
      // Predicated region
      $region29: #{autoencoder_forward.6} parent=11 // pred_check
        %p196 = pneg %p143
      $region30: #{autoencoder_forward.6} parent=11 // pred_check_branch
        %198 = sbr.rel (%p196) target = $region32
      $region31: #{autoencoder_forward.6} parent=11 // pred_region
        _
      $region32: #{autoencoder_forward.6} parent=11 // pred_fallthru
        _
    $region12: #{autoencoder_forward.6} parent=5 // pred_fallthru
      _
    %p199 = scmp.lt.s32.totalorder %s12, 2
    // Predicated region
    $region33: #{autoencoder_forward.6} parent=5 // pred_check
      %p200 = pneg %p199
    $region34: #{autoencoder_forward.6} parent=5 // pred_check_branch
      %202 = sbr.rel (%p200) target = $region36
    $region35: #{autoencoder_forward.6} parent=5 // pred_region
      // Predicated region
      $region37: #{autoencoder_forward.6} parent=35 // pred_check
        %p203 = pneg %p53
      $region38: #{autoencoder_forward.6} parent=35 // pred_check_branch
        %205 = sbr.rel (%p203) target = $region40
      $region39: #{autoencoder_forward.6} parent=35 // pred_region
        %p206 = scmp.lt.s32.totalorder %s12, 1
        %s207 = scalar_select %p206, %s12, 1
        %s208 = smul.addr %s207, 4
        %s209 = smul.addr %s208, 4
        %s210 = scalar_lea.vmem %s1, %s209
      $region40: #{autoencoder_forward.6} parent=35 // pred_fallthru
        _
    $region36: #{autoencoder_forward.6} parent=5 // pred_fallthru
      _
    %p211 = scmp.le.s32.totalorder 1, %s12
    %p212 = scmp.lt.s32.totalorder %s12, 3
    %p213 = pnand %p211, %p212
    %p214 = pneg %p213
    // Predicated region
    $region41: #{autoencoder_forward.6} parent=5 // pred_check
      _
    $region42: #{autoencoder_forward.6} parent=5 // pred_check_branch
      %216 = sbr.rel (%p213) target = $region44
    $region43: #{autoencoder_forward.6} parent=5 // pred_region
      %s217 = ssub.s32 %s12, 1
      %p218 = pneg %p33
      %p219 = pneg %p30
      %p220 = scmp.lt.s32.totalorder %s17, 1
      %s221 = scalar_select %p220, %s17, 1
      %s222 = smul.addr %s221, 4
      %s223 = smul.addr %s222, 4
      %s224 = scalar_lea.vmem %s1, %s223
      %p225 = pneg %p59
      %p226 = pneg %p56
      %p227 = pneg %p80
      %p228 = pneg %p77
      %p229 = pneg %p101
      %p230 = pneg %p98
      %p231 = pneg %p122
      %p232 = pneg %p119
      %p233 = pneg %p143
      %p234 = pneg %p140
      %p235 = pneg %p169
      %p236 = pneg %p166
      %p237 = scmp.lt.s32.totalorder %s17, 1
      %s238 = scalar_select %p237, %s17, 1
      %s239 = smul.addr %s238, 2
      %s240 = smul.addr %s239, 4
      %s241 = scalar_lea.vmem %s6, %s240
      %p242 = scmp.lt.s32.totalorder %s17, 1
      %s243 = scalar_select %p242, %s17, 1
      %s244 = smul.addr %s243, 4
      %s245 = smul.addr %s244, 4
      %s246 = scalar_lea.vmem %s1, %s245
      %p247 = scmp.lt.s32.totalorder %s17, 1
      %s248 = scalar_select %p247, %s17, 1
      %s249 = smul.addr %s248, 2
      %s250 = smul.addr %s249, 4
      %s251 = scalar_lea.vmem %s6, %s250
      %v253 = vld [vmem:[%s0] sm:$0x1]
      %254 = vst [vmem:[#allocation2] sm:$0xff] 0.0
      %255 = vst [vmem:[#allocation2 + $0x8] sm:$0xff] 0.0
      %v256 = vld [vmem:[%s246] sm:$0xf]
      %v257 = vld [vmem:[%s246 + $0x4] sm:$0xf]
      %v258 = vld [vmem:[%s246 + $0x8] sm:$0xf]
      %v259 = vld [vmem:[%s246 + $0xc] sm:$0xf]
      %v260 = vunpack.c.l.bf16 %v256
      %v261 = vunpack.c.l.bf16 %v257
      %v262 = vunpack.c.l.bf16 %v258
      %v263 = vunpack.c.l.bf16 %v259
      %268 = vrot.lane.b32.xlu0 %v260, 127
      %v269 = vpop.permute.xlu0 %268
      %270 = vrot.lane.b32.xlu0 %v261, 127
      %v271 = vpop.permute.xlu0 %270
      %272 = vrot.lane.b32.xlu0 %v262, 127
      %v273 = vpop.permute.xlu0 %272
      %274 = vrot.lane.b32.xlu0 %v263, 127
      %v275 = vpop.permute.xlu0 %274
      %280 = vrot.lane.b32.xlu0 %v260, 118
      %v281 = vpop.permute.xlu0 %280
      %282 = vrot.lane.b32.xlu0 %v261, 118
      %v283 = vpop.permute.xlu0 %282
      %284 = vrot.lane.b32.xlu0 %v262, 118
      %v285 = vpop.permute.xlu0 %284
      %286 = vrot.lane.b32.xlu0 %v263, 118
      %v287 = vpop.permute.xlu0 %286
      %292 = vrot.lane.b32.xlu0 %v260, 117
      %v293 = vpop.permute.xlu0 %292
      %294 = vrot.lane.b32.xlu0 %v261, 117
      %v295 = vpop.permute.xlu0 %294
      %296 = vrot.lane.b32.xlu0 %v262, 117
      %v297 = vpop.permute.xlu0 %296
      %298 = vrot.lane.b32.xlu0 %v263, 117
      %v299 = vpop.permute.xlu0 %298
      %v304 = vpack.c.bf16 %v261, %v260
      %v305 = vpack.c.bf16 %v263, %v262
      %v306 = vpack.c.bf16 %v271, %v269
      %v307 = vpack.c.bf16 %v275, %v273
      %v308 = vpack.c.bf16 %v283, %v281
      %v309 = vpack.c.bf16 %v287, %v285
      %v310 = vpack.c.bf16 %v295, %v293
      %v311 = vpack.c.bf16 %v299, %v297
      %v312 = vld [vmem:[%s3] sm:$0xff]
      %v313 = vld [vmem:[%s3 + $0x8] sm:$0xff]
      %v314 = vld [vmem:[%s2] sm:$0xf]
      %v315 = vld [vmem:[%s2 + $0x4] sm:$0xf]
      %317 = vset.pattern.permute.xlu0 0
      %318 = vperm.xlu0 %317, %v312
      %v319 = vpop.permute.xlu0 %318
      %322 = vset.pattern.permute.xlu0 0
      %323 = vperm.xlu0 %322, %v313
      %v324 = vpop.permute.xlu0 %323
      %v328 = vunpack.c.l.b16 %v314
      %v329 = vunpack.c.l.b16 %v315
      %v330 = vpack.c.b16 %v329, %v328
      %332 = vmatprep.subr.bf16.mxu0 0
      %333 = vmatpush1.bf16.msra.mxu0 %v304
      %334 = vmatprep.subr.bf16.mxu0 0
      %335 = vmatpush1.bf16.msra.mxu0 %v305
      %336 = vmatprep.subr.bf16.mxu0 0
      %337 = vmatpush1.bf16.msra.mxu0 %v306
      %338 = vmatprep.subr.bf16.mxu0 0
      %339 = vmatpush1.bf16.msra.mxu0 %v307
      %340 = vmatprep.subr.bf16.mxu0 0
      %341 = vmatpush1.bf16.msra.mxu0 %v308
      %342 = vmatprep.subr.bf16.mxu0 0
      %343 = vmatpush1.bf16.msra.mxu0 %v309
      %344 = vmatprep.subr.bf16.mxu0 0
      %345 = vmatpush1.bf16.msra.mxu0 %v310
      %346 = vmatprep.subr.bf16.mxu0 0
      %347 = vmatpush1.bf16.msra.mxu0 %v311
      %348 = vmatprep.subr.bf16.mxu0 0
      %349 = vmatpush1.bf16.msra.mxu0 0
      %350 = vmatprep.subr.bf16.mxu0 0
      %351 = vmatpush1.bf16.msra.mxu0 0
      %352 = vmatprep.subr.bf16.mxu0 0
      %353 = vmatpush1.bf16.msra.mxu0 0
      %354 = vmatprep.subr.bf16.mxu0 0
      %355 = vmatpush1.bf16.msra.mxu0 0
      %356 = vmatprep.subr.bf16.mxu0 0
      %357 = vmatpush1.bf16.msra.mxu0 0
      %358 = vmatprep.subr.bf16.mxu0 0
      %359 = vmatpush1.bf16.msra.mxu0 0
      %360 = vmatprep.subr.bf16.mxu0 0
      %361 = vmatpush1.bf16.msra.mxu0 0
      %362 = vmatprep.subr.bf16.mxu0 0
      %363 = vmatpush1.bf16.msra.mxu0 0
      %364 = vmatprep.mubr.bf16.mxu0 0
      %365 = vmatmul.mubr.bf16.gmra.mrb[0].mxu0 %v330
      %v366 = vpop.f32.mrb[0].mxu0
      %v367 = vadd.f32 %v319, %v366
      %v368 = vpop.f32.mrb[0].mxu0
      %v369 = vpop.f32.mrb[0].mxu0
      %v370 = vadd.f32 %v324, %v369
      %v371 = vpop.f32.mrb[0].mxu0
      %372 = vdwg.mxu0
      %v374 = vlaneseq
      %v375 = vshrl.u32 %v374, 7
      %v376 = vsub.s32 0, %v375
      %v377 = vrot.slane %v253, %v376
      %v379 = vmul.f32 %v367, %v377
      %v380 = vmul.f32 %v370, %v377
      %v381 = vmul.f32 %v379, %v367
      %v382 = vmul.f32 %v380, %v370
      %vm383 = vcmask 728064
      %v384 = vsel %vm383, %v379, 0.0
      %385 = vadd.xlane.f32.xlu0 %v384
      %v386 = vpop.xlane.xlu0 %385
      %v387 = vsel %vm383, %v380, 0.0
      %388 = vadd.xlane.f32.xlu0 %v387
      %v389 = vpop.xlane.xlu0 %388
      %v390 = vsel %vm383, %v381, 0.0
      %391 = vadd.xlane.f32.xlu0 %v390
      %v392 = vpop.xlane.xlu0 %391
      %v393 = vsel %vm383, %v382, 0.0
      %394 = vadd.xlane.f32.xlu0 %v393
      %v395 = vpop.xlane.xlu0 %394
      %v396 = vmul.f32 %v386, 0.015625
      %v397 = vmul.f32 %v389, 0.015625
      %v398 = vmul.f32 %v392, 0.015625
      %v399 = vmul.f32 %v395, 0.015625
      %v400 = vmul.f32 %v396, %v396
      %v401 = vmul.f32 %v397, %v397
      %v402 = vsub.f32 %v398, %v400
      %v403 = vsub.f32 %v399, %v401
      %v404 = vmax.f32 %v402, 0.0
      %v405 = vmax.f32 %v403, 0.0
      %v406 = vsub.f32 %v367, %v396
      %v407 = vsub.f32 %v370, %v397
      %v408 = vadd.f32 %v404, 1e-05
      %v409 = vadd.f32 %v405, 1e-05
      %v410 = vrsqrt.pop %v408
      %v411 = vrsqrt.pop %v409
      %v412 = vmul.f32 %v406, %v410
      %v413 = vmul.f32 %v407, %v411
      %414 = vset.pattern.permute.xlu0 1
      %415 = vperm.xlu0 %414, %v312
      %v416 = vpop.permute.xlu0 %415
      %418 = vset.pattern.permute.xlu0 1
      %419 = vperm.xlu0 %418, %v313
      %v420 = vpop.permute.xlu0 %419
      %v422 = vmul.f32 %v412, %v416
      %v423 = vmul.f32 %v413, %v420
      %424 = vset.pattern.permute.xlu0 2
      %425 = vperm.xlu0 %424, %v312
      %v426 = vpop.permute.xlu0 %425
      %428 = vset.pattern.permute.xlu0 2
      %429 = vperm.xlu0 %428, %v313
      %v430 = vpop.permute.xlu0 %429
      %v432 = vadd.f32 %v422, %v426
      %v433 = vadd.f32 %v423, %v430
      %vm434 = vcmp.ge.f32.partialorder %v432, 0.0
      %vm435 = vcmp.ge.f32.partialorder %v433, 0.0
      %v436 = vmul.f32 %v432, 0.01
      %v437 = vmul.f32 %v433, 0.01
      %v438 = vsel %vm434, %v432, %v436
      %v439 = vsel %vm435, %v433, %v437
      %v440 = vmul.f32 %v438, %v377
      %v441 = vmul.f32 %v439, %v377
      %444 = vrot.lane.b32.xlu0 %v440, 11
      %v445 = vpop.permute.xlu0 %444
      %446 = vrot.lane.b32.xlu0 %v441, 11
      %v447 = vpop.permute.xlu0 %446
      %vm450 = vcmask 818264
      %451 = vst.msk [vmem:[#allocation2] sm:$0xff] %vm450, %v445
      %452 = vst.msk [vmem:[#allocation2 + $0x8] sm:$0xff] %vm450, %v447
      %v453 = vld [vmem:[#allocation2] sm:$0xff]
      %v454 = vld [vmem:[#allocation2 + $0x8] sm:$0xff]
      %457 = vrot.lane.b32.xlu0 %v453, 127
      %v458 = vpop.permute.xlu0 %457
      %459 = vrot.lane.b32.xlu0 %v454, 127
      %v460 = vpop.permute.xlu0 %459
      %463 = vrot.lane.b32.xlu0 %v453, 126
      %v464 = vpop.permute.xlu0 %463
      %465 = vrot.lane.b32.xlu0 %v454, 126
      %v466 = vpop.permute.xlu0 %465
      %469 = vrot.lane.b32.xlu0 %v453, 118
      %v470 = vpop.permute.xlu0 %469
      %471 = vrot.lane.b32.xlu0 %v454, 118
      %v472 = vpop.permute.xlu0 %471
      %475 = vrot.lane.b32.xlu0 %v453, 117
      %v476 = vpop.permute.xlu0 %475
      %477 = vrot.lane.b32.xlu0 %v454, 117
      %v478 = vpop.permute.xlu0 %477
      %481 = vrot.lane.b32.xlu0 %v453, 116
      %v482 = vpop.permute.xlu0 %481
      %483 = vrot.lane.b32.xlu0 %v454, 116
      %v484 = vpop.permute.xlu0 %483
      %487 = vrot.lane.b32.xlu0 %v453, 108
      %v488 = vpop.permute.xlu0 %487
      %489 = vrot.lane.b32.xlu0 %v454, 108
      %v490 = vpop.permute.xlu0 %489
      %493 = vrot.lane.b32.xlu0 %v453, 107
      %v494 = vpop.permute.xlu0 %493
      %495 = vrot.lane.b32.xlu0 %v454, 107
      %v496 = vpop.permute.xlu0 %495
      %499 = vrot.lane.b32.xlu0 %v453, 106
      %v500 = vpop.permute.xlu0 %499
      %501 = vrot.lane.b32.xlu0 %v454, 106
      %v502 = vpop.permute.xlu0 %501
      %v505 = vpack.c.bf16 %v454, %v453
      %v506 = vpack.c.bf16 %v460, %v458
      %v507 = vpack.c.bf16 %v466, %v464
      %v508 = vpack.c.bf16 %v472, %v470
      %v509 = vpack.c.bf16 %v478, %v476
      %v510 = vpack.c.bf16 %v484, %v482
      %v511 = vpack.c.bf16 %v490, %v488
      %v512 = vpack.c.bf16 %v496, %v494
      %v513 = vpack.c.bf16 %v502, %v500
      %v514 = vld [vmem:[%s5] sm:$0xff]
      %v515 = vld [vmem:[%s5 + $0x8] sm:$0xff]
      %v516 = vld [vmem:[%s4] sm:$0xff]
      %v517 = vld [vmem:[%s4 + $0x8] sm:$0xff]
      %519 = vset.pattern.permute.xlu0 0
      %520 = vperm.xlu0 %519, %v514
      %v521 = vpop.permute.xlu0 %520
      %524 = vset.pattern.permute.xlu0 0
      %525 = vperm.xlu0 %524, %v515
      %v526 = vpop.permute.xlu0 %525
      %v530 = vunpack.c.l.b16 %v516
      %v531 = vunpack.c.h.b16 %v516
      %v532 = vunpack.c.l.b16 %v517
      %v533 = vunpack.c.h.b16 %v517
      %v534 = vpack.c.b16 %v532, %v530
      %v535 = vpack.c.b16 %v533, %v531
      %vm537 = vcmask 130048
      %v539 = vsel %vm537, %v535, 0
      %541 = vmatprep.subr.bf16.mxu0 0
      %542 = vmatpush1.bf16.msra.mxu0 %v505
      %543 = vmatprep.subr.bf16.mxu0 0
      %544 = vmatpush1.bf16.msra.mxu0 %v506
      %545 = vmatprep.subr.bf16.mxu0 0
      %546 = vmatpush1.bf16.msra.mxu0 %v507
      %547 = vmatprep.subr.bf16.mxu0 0
      %548 = vmatpush1.bf16.msra.mxu0 %v508
      %549 = vmatprep.subr.bf16.mxu0 0
      %550 = vmatpush1.bf16.msra.mxu0 %v509
      %551 = vmatprep.subr.bf16.mxu0 0
      %552 = vmatpush1.bf16.msra.mxu0 %v510
      %553 = vmatprep.subr.bf16.mxu0 0
      %554 = vmatpush1.bf16.msra.mxu0 %v511
      %555 = vmatprep.subr.bf16.mxu0 0
      %556 = vmatpush1.bf16.msra.mxu0 %v512
      %557 = vmatprep.subr.bf16.mxu0 0
      %558 = vmatpush1.bf16.msra.mxu0 %v513
      %559 = vmatprep.subr.bf16.mxu0 0
      %560 = vmatpush1.bf16.msra.mxu0 0
      %561 = vmatprep.subr.bf16.mxu0 0
      %562 = vmatpush1.bf16.msra.mxu0 0
      %563 = vmatprep.subr.bf16.mxu0 0
      %564 = vmatpush1.bf16.msra.mxu0 0
      %565 = vmatprep.subr.bf16.mxu0 0
      %566 = vmatpush1.bf16.msra.mxu0 0
      %567 = vmatprep.subr.bf16.mxu0 0
      %568 = vmatpush1.bf16.msra.mxu0 0
      %569 = vmatprep.subr.bf16.mxu0 0
      %570 = vmatpush1.bf16.msra.mxu0 0
      %571 = vmatprep.subr.bf16.mxu0 0
      %572 = vmatpush1.bf16.msra.mxu0 0
      %573 = vmatprep.mubr.bf16.mxu0 %v539
      %574 = vmatmul.mubr.bf16.gmra.mrb[0].mxu0 %v534
      %v575 = vpop.f32.mrb[0].mxu0
      %v576 = vadd.f32 %v521, %v575
      %v577 = vpop.f32.mrb[0].mxu0
      %v578 = vpop.f32.mrb[0].mxu0
      %v579 = vadd.f32 %v526, %v578
      %v580 = vpop.f32.mrb[0].mxu0
      %581 = vdwg.mxu0
      %v582 = vmul.f32 %v576, %v377
      %v583 = vmul.f32 %v579, %v377
      %v584 = vmul.f32 %v582, %v576
      %v585 = vmul.f32 %v583, %v579
      %vm586 = vcmask 637952
      %v587 = vsel %vm586, %v582, 0.0
      %588 = vadd.xlane.f32.xlu0 %v587
      %v589 = vpop.xlane.xlu0 %588
      %v590 = vsel %vm586, %v583, 0.0
      %591 = vadd.xlane.f32.xlu0 %v590
      %v592 = vpop.xlane.xlu0 %591
      %v593 = vsel %vm586, %v584, 0.0
      %594 = vadd.xlane.f32.xlu0 %v593
      %v595 = vpop.xlane.xlu0 %594
      %v596 = vsel %vm586, %v585, 0.0
      %597 = vadd.xlane.f32.xlu0 %v596
      %v598 = vpop.xlane.xlu0 %597
      %v599 = vmul.f32 %v589, 0.015625
      %v600 = vmul.f32 %v592, 0.015625
      %v601 = vmul.f32 %v595, 0.015625
      %v602 = vmul.f32 %v598, 0.015625
      %v603 = vmul.f32 %v599, %v599
      %v604 = vmul.f32 %v600, %v600
      %v605 = vsub.f32 %v601, %v603
      %v606 = vsub.f32 %v602, %v604
      %v607 = vmax.f32 %v605, 0.0
      %v608 = vmax.f32 %v606, 0.0
      %v609 = vsub.f32 %v576, %v599
      %v610 = vsub.f32 %v579, %v600
      %v611 = vadd.f32 %v607, 1e-05
      %v612 = vadd.f32 %v608, 1e-05
      %v613 = vrsqrt.pop %v611
      %v614 = vrsqrt.pop %v612
      %v615 = vmul.f32 %v609, %v613
      %v616 = vmul.f32 %v610, %v614
      %617 = vset.pattern.permute.xlu0 1
      %618 = vperm.xlu0 %617, %v514
      %v619 = vpop.permute.xlu0 %618
      %621 = vset.pattern.permute.xlu0 1
      %622 = vperm.xlu0 %621, %v515
      %v623 = vpop.permute.xlu0 %622
      %v625 = vmul.f32 %v615, %v619
      %v626 = vmul.f32 %v616, %v623
      %627 = vset.pattern.permute.xlu0 2
      %628 = vperm.xlu0 %627, %v514
      %v629 = vpop.permute.xlu0 %628
      %631 = vset.pattern.permute.xlu0 2
      %632 = vperm.xlu0 %631, %v515
      %v633 = vpop.permute.xlu0 %632
      %v635 = vadd.f32 %v625, %v629
      %v636 = vadd.f32 %v626, %v633
      %vm637 = vcmp.ge.f32.partialorder %v635, 0.0
      %vm638 = vcmp.ge.f32.partialorder %v636, 0.0
      %v639 = vmul.f32 %v635, 0.01
      %v640 = vmul.f32 %v636, 0.01
      %v641 = vsel %vm637, %v635, %v639
      %v642 = vsel %vm638, %v636, %v640
      %v643 = vmul.f32 %v641, %v377
      %v644 = vmul.f32 %v642, %v377
      %645 = vst [vmem:[%s251] sm:$0xf] 0
      %646 = vst [vmem:[%s251 + $0x4] sm:$0xf] 0
      %v647 = vpack.c.bf16 %v644, %v643
      %v649 = vunpack.c.l.b16 %v647
      %v650 = vunpack.c.h.b16 %v647
      %v651 = vpack.c.b16 %v649, %v649
      %v652 = vpack.c.b16 %v650, %v650
      %653 = vrot.lane.b32.xlu0 %v651, 11
      %v654 = vpop.permute.xlu0 %653
      %655 = vrot.lane.b32.xlu0 %v652, 11
      %v656 = vpop.permute.xlu0 %655
      %vm659 = vcmask 724056
      %660 = vst.msk [vmem:[%s251] sm:$0xf] %vm659, %v654
      %661 = vst.msk [vmem:[%s251 + $0x4] sm:$0xf] %vm659, %v656
      %p662 = scmp.lt.s32.totalorder %s17, 1
      %s663 = scalar_select %p662, %s17, 1
      %s664 = smul.addr %s663, 2
      %s665 = smul.addr %s664, 4
      %s666 = scalar_lea.vmem %s6, %s665
      // Predicated region
      $region45: #{autoencoder_forward.6} parent=43 // pred_check
        %p667 = pneg %p166
      $region46: #{autoencoder_forward.6} parent=43 // pred_check_branch
        %669 = sbr.rel (%p667) target = $region48
      $region47: #{autoencoder_forward.6} parent=43 // pred_region
        _
      $region48: #{autoencoder_forward.6} parent=43 // pred_fallthru
        _
    $region44: #{autoencoder_forward.6} parent=5 // pred_fallthru
      _
    %p670 = scmp.le.s32.totalorder 2, %s12
    // Predicated region
    $region49: #{autoencoder_forward.6} parent=5 // pred_check
      %p671 = pneg %p670
    $region50: #{autoencoder_forward.6} parent=5 // pred_check_branch
      %673 = sbr.rel (%p671) target = $region52
    $region51: #{autoencoder_forward.6} parent=5 // pred_region
      %s674 = ssub.s32 %s12, 2
      // Predicated region
      $region53: #{autoencoder_forward.6} parent=51 // pred_check
        %p675 = pneg %p172
      $region54: #{autoencoder_forward.6} parent=51 // pred_check_branch
        %677 = sbr.rel (%p675) target = $region56
      $region55: #{autoencoder_forward.6} parent=51 // pred_region
        %p678 = scmp.lt.s32.totalorder %s18, 1
        %s679 = scalar_select %p678, %s18, 1
        %s680 = smul.addr %s679, 2
        %s681 = smul.addr %s680, 4
        %s682 = scalar_lea.vmem %s6, %s681
      $region56: #{autoencoder_forward.6} parent=51 // pred_fallthru
        _
    $region52: #{autoencoder_forward.6} parent=5 // pred_fallthru
      _
  $region6: #{autoencoder_forward.6} parent=0 // loop_footer
    %s16 = sadd.s32 1, %s12
  $region7: #{autoencoder_forward.6} parent=0 // loop_footer_branch
    %11 = sbr.rel target = $region3
  $region8: #{autoencoder_forward.6} parent=0 // loop_exit
    _

// kernel: autoencoder_forward.7
$region0: #{autoencoder_forward.7}
  #allocation0 [shape = 'u32[]', space=smem, size = 0x4, offset = 0x4, fixed_abs, tag = 'smem constant byte address 0x4 - core index']
  #allocation1 [shape = 'u32[144,128]{1,0:T(1,128)}', space=vmem, size = 0x12000, scoped, tag = 'internal scratch']
  #allocation2 [shape = 'f32[32,128]{1,0:T(8,128)}', space=vmem, size = 0x4000, scoped, tag = 'scratch operand']
  %s0 = inlined_call_operand.vmem [shape: f32[1,128], index: 0, kind: input, shape index: {}]
  %s1 = inlined_call_operand.vmem [shape: bf16[2,64,128], index: 1, kind: input, shape index: {}]
  %s2 = inlined_call_operand.vmem [shape: bf16[32,256], index: 2, kind: input, shape index: {}]
  %s3 = inlined_call_operand.vmem [shape: f32[32,3], index: 3, kind: input, shape index: {}]
  %s4 = inlined_call_operand.vmem [shape: bf16[32,288], index: 4, kind: input, shape index: {}]
  %s5 = inlined_call_operand.vmem [shape: f32[32,3], index: 5, kind: input, shape index: {}]
  %s6 = inlined_call_operand.vmem [shape: bf16[2,32,128], index: 6, kind: output, shape index: {}]
  %s7 = sld [smem:[#allocation0]]
  $region57: #{autoencoder_forward.7} parent=0
    _
  %s9 = ssub.s32 1, %s7
  %s10 = scalar_select 0, %s9, %s7
  loop: start=0, step=1, limit=4
  $region2: #{autoencoder_forward.7} parent=0 // loop_pre_header
    _
  $region3: #{autoencoder_forward.7} parent=0 // loop_header
    %s12 = sphi 0, %s16
    %p13 = scmp.ge.s32.totalorder %s12, 4
    %s20 = sphi 0, %s20
    %s22 = sphi 0, %s20
    %s23 = sphi 0, %s22
    %s37 = sphi 0, %s23
    %s43 = sphi 0, %s45
    %s46 = sphi 0, %s43
    %s47 = sphi 0, %s46
    %s63 = sphi 0, %s47
    %s67 = sphi 0, %s67
    %s69 = sphi 0, %s67
    %s70 = sphi 0, %s69
    %s84 = sphi 0, %s70
    %s88 = sphi 0, %s88
    %s90 = sphi 0, %s88
    %s91 = sphi 0, %s90
    %s105 = sphi 0, %s91
    %s109 = sphi 0, %s109
    %s111 = sphi 0, %s109
    %s112 = sphi 0, %s111
    %s126 = sphi 0, %s112
    %s130 = sphi 0, %s130
    %s132 = sphi 0, %s130
    %s133 = sphi 0, %s132
    %s147 = sphi 0, %s133
    %s153 = sphi 0, %s155
    %s156 = sphi 0, %s153
    %s157 = sphi 0, %s156
    %s173 = sphi 0, %s157
  $region4: #{autoencoder_forward.7} parent=0 // loop_header_branch
    %15 = sbr.rel (%p13) target = $region8
  $region5: #{autoencoder_forward.7} parent=0 // loop_body
    %s17 = ssub.s32 %s12, 1
    %s18 = ssub.s32 %s12, 2
    %s19 = sadd.s32 %s12, 1
    %s21 = sadd.s32 %s20, 1
    %p24 = scmp.eq.s32.totalorder %s12, 1
    %p25 = scmp.ne.s32.totalorder %s20, %s22
    %p26 = scmp.eq.s32.totalorder %s12, 0
    %p27 = por %p25, %p26
    %p28 = scmp.ne.s32.totalorder %s20, %s22
    %p29 = scmp.eq.s32.totalorder %s17, 1
    %p30 = por %p28, %p29
    %p31 = scmp.ne.s32.totalorder %s22, %s23
    %p32 = scmp.eq.s32.totalorder %s17, 0
    %p33 = por %p31, %p32
    %p34 = scmp.ne.s32.totalorder %s22, %s23
    %p35 = scmp.eq.s32.totalorder %s18, 1
    %p36 = por %p34, %p35
    %p38 = scmp.ne.s32.totalorder %s23, %s37
    %p39 = scmp.eq.s32.totalorder %s18, 0
    %p40 = por %p38, %p39
    %s41 = ssub.s32 %s12, %s19
    %p42 = scmp.eq.s32.totalorder %s41, 0
    %s44 = sadd.s32 %s43, 1
    %s45 = scalar_select %p42, %s43, %s44
    %p48 = pneg %p42
    %p49 = scmp.eq.s32.totalorder %s12, 1
    %p50 = por %p48, %p49
    %p51 = scmp.ne.s32.totalorder %s43, %s46
    %p52 = scmp.eq.s32.totalorder %s12, 0
    %p53 = por %p51, %p52
    %p54 = scmp.ne.s32.totalorder %s43, %s46
    %p55 = scmp.eq.s32.totalorder %s17, 1
    %p56 = por %p54, %p55
    %p57 = scmp.ne.s32.totalorder %s46, %s47
    %p58 = scmp.eq.s32.totalorder %s17, 0
    %p59 = por %p57, %p58
    %p60 = scmp.ne.s32.totalorder %s46, %s47
    %p61 = scmp.eq.s32.totalorder %s18, 1
    %p62 = por %p60, %p61
    %p64 = scmp.ne.s32.totalorder %s47, %s63
    %p65 = scmp.eq.s32.totalorder %s18, 0
    %p66 = por %p64, %p65
    %s68 = sadd.s32 %s67, 1
    %p71 = scmp.eq.s32.totalorder %s12, 1
    %p72 = scmp.ne.s32.totalorder %s67, %s69
    %p73 = scmp.eq.s32.totalorder %s12, 0
    %p74 = por %p72, %p73
    %p75 = scmp.ne.s32.totalorder %s67, %s69
    %p76 = scmp.eq.s32.totalorder %s17, 1
    %p77 = por %p75, %p76
    %p78 = scmp.ne.s32.totalorder %s69, %s70
    %p79 = scmp.eq.s32.totalorder %s17, 0
    %p80 = por %p78, %p79
    %p81 = scmp.ne.s32.totalorder %s69, %s70
    %p82 = scmp.eq.s32.totalorder %s18, 1
    %p83 = por %p81, %p82
    %p85 = scmp.ne.s32.totalorder %s70, %s84
    %p86 = scmp.eq.s32.totalorder %s18, 0
    %p87 = por %p85, %p86
    %s89 = sadd.s32 %s88, 1
    %p92 = scmp.eq.s32.totalorder %s12, 1
    %p93 = scmp.ne.s32.totalorder %s88, %s90
    %p94 = scmp.eq.s32.totalorder %s12, 0
    %p95 = por %p93, %p94
    %p96 = scmp.ne.s32.totalorder %s88, %s90
    %p97 = scmp.eq.s32.totalorder %s17, 1
    %p98 = por %p96, %p97
    %p99 = scmp.ne.s32.totalorder %s90, %s91
    %p100 = scmp.eq.s32.totalorder %s17, 0
    %p101 = por %p99, %p100
    %p102 = scmp.ne.s32.totalorder %s90, %s91
    %p103 = scmp.eq.s32.totalorder %s18, 1
    %p104 = por %p102, %p103
    %p106 = scmp.ne.s32.totalorder %s91, %s105
    %p107 = scmp.eq.s32.totalorder %s18, 0
    %p108 = por %p106, %p107
    %s110 = sadd.s32 %s109, 1
    %p113 = scmp.eq.s32.totalorder %s12, 1
    %p114 = scmp.ne.s32.totalorder %s109, %s111
    %p115 = scmp.eq.s32.totalorder %s12, 0
    %p116 = por %p114, %p115
    %p117 = scmp.ne.s32.totalorder %s109, %s111
    %p118 = scmp.eq.s32.totalorder %s17, 1
    %p119 = por %p117, %p118
    %p120 = scmp.ne.s32.totalorder %s111, %s112
    %p121 = scmp.eq.s32.totalorder %s17, 0
    %p122 = por %p120, %p121
    %p123 = scmp.ne.s32.totalorder %s111, %s112
    %p124 = scmp.eq.s32.totalorder %s18, 1
    %p125 = por %p123, %p124
    %p127 = scmp.ne.s32.totalorder %s112, %s126
    %p128 = scmp.eq.s32.totalorder %s18, 0
    %p129 = por %p127, %p128
    %s131 = sadd.s32 %s130, 1
    %p134 = scmp.eq.s32.totalorder %s12, 1
    %p135 = scmp.ne.s32.totalorder %s130, %s132
    %p136 = scmp.eq.s32.totalorder %s12, 0
    %p137 = por %p135, %p136
    %p138 = scmp.ne.s32.totalorder %s130, %s132
    %p139 = scmp.eq.s32.totalorder %s17, 1
    %p140 = por %p138, %p139
    %p141 = scmp.ne.s32.totalorder %s132, %s133
    %p142 = scmp.eq.s32.totalorder %s17, 0
    %p143 = por %p141, %p142
    %p144 = scmp.ne.s32.totalorder %s132, %s133
    %p145 = scmp.eq.s32.totalorder %s18, 1
    %p146 = por %p144, %p145
    %p148 = scmp.ne.s32.totalorder %s133, %s147
    %p149 = scmp.eq.s32.totalorder %s18, 0
    %p150 = por %p148, %p149
    %s151 = ssub.s32 %s12, %s19
    %p152 = scmp.eq.s32.totalorder %s151, 0
    %s154 = sadd.s32 %s153, 1
    %s155 = scalar_select %p152, %s153, %s154
    %p158 = pneg %p152
    %p159 = scmp.eq.s32.totalorder %s12, 1
    %p160 = por %p158, %p159
    %p161 = scmp.ne.s32.totalorder %s153, %s156
    %p162 = scmp.eq.s32.totalorder %s12, 0
    %p163 = por %p161, %p162
    %p164 = scmp.ne.s32.totalorder %s153, %s156
    %p165 = scmp.eq.s32.totalorder %s17, 1
    %p166 = por %p164, %p165
    %p167 = scmp.ne.s32.totalorder %s156, %s157
    %p168 = scmp.eq.s32.totalorder %s17, 0
    %p169 = por %p167, %p168
    %p170 = scmp.ne.s32.totalorder %s156, %s157
    %p171 = scmp.eq.s32.totalorder %s18, 1
    %p172 = por %p170, %p171
    %p174 = scmp.ne.s32.totalorder %s157, %s173
    %p175 = scmp.eq.s32.totalorder %s18, 0
    %p176 = por %p174, %p175
    %p177 = scmp.le.s32.totalorder 1, %s12
    %p178 = scmp.lt.s32.totalorder %s12, 3
    %p179 = pnand %p177, %p178
    %p180 = pneg %p179
    // Predicated region
    $region9: #{autoencoder_forward.7} parent=5 // pred_check
      _
    $region10: #{autoencoder_forward.7} parent=5 // pred_check_branch
      %182 = sbr.rel (%p179) target = $region12
    $region11: #{autoencoder_forward.7} parent=5 // pred_region
      %s183 = ssub.s32 %s12, 1
      // Predicated region
      $region13: #{autoencoder_forward.7} parent=11 // pred_check
        %p184 = pneg %p33
      $region14: #{autoencoder_forward.7} parent=11 // pred_check_branch
        %186 = sbr.rel (%p184) target = $region16
      $region15: #{autoencoder_forward.7} parent=11 // pred_region
        _
      $region16: #{autoencoder_forward.7} parent=11 // pred_fallthru
        _
      // Predicated region
      $region17: #{autoencoder_forward.7} parent=11 // pred_check
        %p187 = pneg %p80
      $region18: #{autoencoder_forward.7} parent=11 // pred_check_branch
        %189 = sbr.rel (%p187) target = $region20
      $region19: #{autoencoder_forward.7} parent=11 // pred_region
        _
      $region20: #{autoencoder_forward.7} parent=11 // pred_fallthru
        _
      // Predicated region
      $region21: #{autoencoder_forward.7} parent=11 // pred_check
        %p190 = pneg %p101
      $region22: #{autoencoder_forward.7} parent=11 // pred_check_branch
        %192 = sbr.rel (%p190) target = $region24
      $region23: #{autoencoder_forward.7} parent=11 // pred_region
        _
      $region24: #{autoencoder_forward.7} parent=11 // pred_fallthru
        _
      // Predicated region
      $region25: #{autoencoder_forward.7} parent=11 // pred_check
        %p193 = pneg %p122
      $region26: #{autoencoder_forward.7} parent=11 // pred_check_branch
        %195 = sbr.rel (%p193) target = $region28
      $region27: #{autoencoder_forward.7} parent=11 // pred_region
        _
      $region28: #{autoencoder_forward.7} parent=11 // pred_fallthru
        _
      // Predicated region
      $region29: #{autoencoder_forward.7} parent=11 // pred_check
        %p196 = pneg %p143
      $region30: #{autoencoder_forward.7} parent=11 // pred_check_branch
        %198 = sbr.rel (%p196) target = $region32
      $region31: #{autoencoder_forward.7} parent=11 // pred_region
        _
      $region32: #{autoencoder_forward.7} parent=11 // pred_fallthru
        _
    $region12: #{autoencoder_forward.7} parent=5 // pred_fallthru
      _
    %p199 = scmp.lt.s32.totalorder %s12, 2
    // Predicated region
    $region33: #{autoencoder_forward.7} parent=5 // pred_check
      %p200 = pneg %p199
    $region34: #{autoencoder_forward.7} parent=5 // pred_check_branch
      %202 = sbr.rel (%p200) target = $region36
    $region35: #{autoencoder_forward.7} parent=5 // pred_region
      // Predicated region
      $region37: #{autoencoder_forward.7} parent=35 // pred_check
        %p203 = pneg %p53
      $region38: #{autoencoder_forward.7} parent=35 // pred_check_branch
        %205 = sbr.rel (%p203) target = $region40
      $region39: #{autoencoder_forward.7} parent=35 // pred_region
        %p206 = scmp.lt.s32.totalorder %s12, 1
        %s207 = scalar_select %p206, %s12, 1
        %s208 = smul.addr %s207, 8
        %s209 = smul.addr %s208, 4
        %s210 = scalar_lea.vmem %s1, %s209
      $region40: #{autoencoder_forward.7} parent=35 // pred_fallthru
        _
    $region36: #{autoencoder_forward.7} parent=5 // pred_fallthru
      _
    %p211 = scmp.le.s32.totalorder 1, %s12
    %p212 = scmp.lt.s32.totalorder %s12, 3
    %p213 = pnand %p211, %p212
    %p214 = pneg %p213
    // Predicated region
    $region41: #{autoencoder_forward.7} parent=5 // pred_check
      _
    $region42: #{autoencoder_forward.7} parent=5 // pred_check_branch
      %216 = sbr.rel (%p213) target = $region44
    $region43: #{autoencoder_forward.7} parent=5 // pred_region
      %s217 = ssub.s32 %s12, 1
      %p218 = pneg %p33
      %p219 = pneg %p30
      %p220 = scmp.lt.s32.totalorder %s17, 1
      %s221 = scalar_select %p220, %s17, 1
      %s222 = smul.addr %s221, 8
      %s223 = smul.addr %s222, 4
      %s224 = scalar_lea.vmem %s1, %s223
      %p225 = pneg %p59
      %p226 = pneg %p56
      %p227 = pneg %p80
      %p228 = pneg %p77
      %p229 = pneg %p101
      %p230 = pneg %p98
      %p231 = pneg %p122
      %p232 = pneg %p119
      %p233 = pneg %p143
      %p234 = pneg %p140
      %p235 = pneg %p169
      %p236 = pneg %p166
      %p237 = scmp.lt.s32.totalorder %s17, 1
      %s238 = scalar_select %p237, %s17, 1
      %s239 = smul.addr %s238, 4
      %s240 = smul.addr %s239, 4
      %s241 = scalar_lea.vmem %s6, %s240
      %p242 = scmp.lt.s32.totalorder %s17, 1
      %s243 = scalar_select %p242, %s17, 1
      %s244 = smul.addr %s243, 8
      %s245 = smul.addr %s244, 4
      %s246 = scalar_lea.vmem %s1, %s245
      %p247 = scmp.lt.s32.totalorder %s17, 1
      %s248 = scalar_select %p247, %s17, 1
      %s249 = smul.addr %s248, 4
      %s250 = smul.addr %s249, 4
      %s251 = scalar_lea.vmem %s6, %s250
      %v253 = vld [vmem:[%s0] sm:$0x1]
      %254 = vst [vmem:[#allocation2] sm:$0xff] 0.0
      %255 = vst [vmem:[#allocation2 + $0x8] sm:$0xff] 0.0
      %256 = vst [vmem:[#allocation2 + $0x10] sm:$0xff] 0.0
      %257 = vst [vmem:[#allocation2 + $0x18] sm:$0xff] 0.0
      %v258 = vld [vmem:[%s246] sm:$0xf]
      %v259 = vld [vmem:[%s246 + $0x4] sm:$0xf]
      %v260 = vld [vmem:[%s246 + $0x8] sm:$0xf]
      %v261 = vld [vmem:[%s246 + $0xc] sm:$0xf]
      %v262 = vld [vmem:[%s246 + $0x10] sm:$0xf]
      %v263 = vld [vmem:[%s246 + $0x14] sm:$0xf]
      %v264 = vld [vmem:[%s246 + $0x18] sm:$0xf]
      %v265 = vld [vmem:[%s246 + $0x1c] sm:$0xf]
      %v266 = vunpack.c.l.bf16 %v258
      %v267 = vunpack.c.l.bf16 %v259
      %v268 = vunpack.c.l.bf16 %v260
      %v269 = vunpack.c.l.bf16 %v261
      %v270 = vunpack.c.l.bf16 %v262
      %v271 = vunpack.c.l.bf16 %v263
      %v272 = vunpack.c.l.bf16 %v264
      %v273 = vunpack.c.l.bf16 %v265
      %282 = vrot.lane.b32.xlu0 %v266, 127
      %v283 = vpop.permute.xlu0 %282
      %284 = vrot.lane.b32.xlu0 %v267, 127
      %v285 = vpop.permute.xlu0 %284
      %286 = vrot.lane.b32.xlu0 %v268, 127
      %v287 = vpop.permute.xlu0 %286
      %288 = vrot.lane.b32.xlu0 %v269, 127
      %v289 = vpop.permute.xlu0 %288
      %290 = vrot.lane.b32.xlu0 %v270, 127
      %v291 = vpop.permute.xlu0 %290
      %292 = vrot.lane.b32.xlu0 %v271, 127
      %v293 = vpop.permute.xlu0 %292
      %294 = vrot.lane.b32.xlu0 %v272, 127
      %v295 = vpop.permute.xlu0 %294
      %296 = vrot.lane.b32.xlu0 %v273, 127
      %v297 = vpop.permute.xlu0 %296
      %306 = vrot.lane.b32.xlu0 %v266, 122
      %v307 = vpop.permute.xlu0 %306
      %308 = vrot.lane.b32.xlu0 %v267, 122
      %v309 = vpop.permute.xlu0 %308
      %310 = vrot.lane.b32.xlu0 %v268, 122
      %v311 = vpop.permute.xlu0 %310
      %312 = vrot.lane.b32.xlu0 %v269, 122
      %v313 = vpop.permute.xlu0 %312
      %314 = vrot.lane.b32.xlu0 %v270, 122
      %v315 = vpop.permute.xlu0 %314
      %316 = vrot.lane.b32.xlu0 %v271, 122
      %v317 = vpop.permute.xlu0 %316
      %318 = vrot.lane.b32.xlu0 %v272, 122
      %v319 = vpop.permute.xlu0 %318
      %320 = vrot.lane.b32.xlu0 %v273, 122
      %v321 = vpop.permute.xlu0 %320
      %330 = vrot.lane.b32.xlu0 %v266, 121
      %v331 = vpop.permute.xlu0 %330
      %332 = vrot.lane.b32.xlu0 %v267, 121
      %v333 = vpop.permute.xlu0 %332
      %334 = vrot.lane.b32.xlu0 %v268, 121
      %v335 = vpop.permute.xlu0 %334
      %336 = vrot.lane.b32.xlu0 %v269, 121
      %v337 = vpop.permute.xlu0 %336
      %338 = vrot.lane.b32.xlu0 %v270, 121
      %v339 = vpop.permute.xlu0 %338
      %340 = vrot.lane.b32.xlu0 %v271, 121
      %v341 = vpop.permute.xlu0 %340
      %342 = vrot.lane.b32.xlu0 %v272, 121
      %v343 = vpop.permute.xlu0 %342
      %344 = vrot.lane.b32.xlu0 %v273, 121
      %v345 = vpop.permute.xlu0 %344
      %v354 = vpack.c.bf16 %v267, %v266
      %v355 = vpack.c.bf16 %v269, %v268
      %v356 = vpack.c.bf16 %v271, %v270
      %v357 = vpack.c.bf16 %v273, %v272
      %v358 = vpack.c.bf16 %v285, %v283
      %v359 = vpack.c.bf16 %v289, %v287
      %v360 = vpack.c.bf16 %v293, %v291
      %v361 = vpack.c.bf16 %v297, %v295
      %v362 = vpack.c.bf16 %v309, %v307
      %v363 = vpack.c.bf16 %v313, %v311
      %v364 = vpack.c.bf16 %v317, %v315
      %v365 = vpack.c.bf16 %v321, %v319
      %v366 = vpack.c.bf16 %v333, %v331
      %v367 = vpack.c.bf16 %v337, %v335
      %v368 = vpack.c.bf16 %v341, %v339
      %v369 = vpack.c.bf16 %v345, %v343
      %v370 = vld [vmem:[%s3] sm:$0xff]
      %v371 = vld [vmem:[%s3 + $0x8] sm:$0xff]
      %v372 = vld [vmem:[%s3 + $0x10] sm:$0xff]
      %v373 = vld [vmem:[%s3 + $0x18] sm:$0xff]
      %v374 = vld [vmem:[%s2] sm:$0xff]
      %v375 = vld [vmem:[%s2 + $0x8] sm:$0xff]
      %v376 = vld [vmem:[%s2 + $0x10] sm:$0xff]
      %v377 = vld [vmem:[%s2 + $0x18] sm:$0xff]
      %379 = vset.pattern.permute.xlu0 0
      %380 = vperm.xlu0 %379, %v370
      %v381 = vpop.permute.xlu0 %380
      %384 = vset.pattern.permute.xlu0 0
      %385 = vperm.xlu0 %384, %v371
      %v386 = vpop.permute.xlu0 %385
      %389 = vset.pattern.permute.xlu0 0
      %390 = vperm.xlu0 %389, %v372
      %v391 = vpop.permute.xlu0 %390
      %394 = vset.pattern.permute.xlu0 0
      %395 = vperm.xlu0 %394, %v373
      %v396 = vpop.permute.xlu0 %395
      %v402 = vunpack.c.l.b16 %v374
      %v403 = vunpack.c.h.b16 %v374
      %v404 = vunpack.c.l.b16 %v375
      %v405 = vunpack.c.h.b16 %v375
      %v406 = vunpack.c.l.b16 %v376
      %v407 = vunpack.c.h.b16 %v376
      %v408 = vunpack.c.l.b16 %v377
      %v409 = vunpack.c.h.b16 %v377
      %v410 = vpack.c.b16 %v404, %v402
      %v411 = vpack.c.b16 %v405, %v403
      %v412 = vpack.c.b16 %v408, %v406
      %v413 = vpack.c.b16 %v409, %v407
      %418 = vmatprep.subr.bf16.mxu0 0
      %419 = vmatpush1.bf16.msra.mxu0 %v354
      %420 = vmatprep.subr.bf16.mxu0 0
      %421 = vmatpush1.bf16.msra.mxu0 %v355
      %422 = vmatprep.subr.bf16.mxu0 0
      %423 = vmatpush1.bf16.msra.mxu0 %v356
      %424 = vmatprep.subr.bf16.mxu0 0
      %425 = vmatpush1.bf16.msra.mxu0 %v357
      %426 = vmatprep.subr.bf16.mxu0 0
      %427 = vmatpush1.bf16.msra.mxu0 %v358
      %428 = vmatprep.subr.bf16.mxu0 0
      %429 = vmatpush1.bf16.msra.mxu0 %v359
      %430 = vmatprep.subr.bf16.mxu0 0
      %431 = vmatpush1.bf16.msra.mxu0 %v360
      %432 = vmatprep.subr.bf16.mxu0 0
      %433 = vmatpush1.bf16.msra.mxu0 %v361
      %434 = vmatprep.subr.bf16.mxu0 0
      %435 = vmatpush1.bf16.msra.mxu0 %v362
      %436 = vmatprep.subr.bf16.mxu0 0
      %437 = vmatpush1.bf16.msra.mxu0 %v363
      %438 = vmatprep.subr.bf16.mxu0 0
      %439 = vmatpush1.bf16.msra.mxu0 %v364
      %440 = vmatprep.subr.bf16.mxu0 0
      %441 = vmatpush1.bf16.msra.mxu0 %v365
      %442 = vmatprep.subr.bf16.mxu0 0
      %443 = vmatpush1.bf16.msra.mxu0 %v366
      %444 = vmatprep.subr.bf16.mxu0 0
      %445 = vmatpush1.bf16.msra.mxu0 %v367
      %446 = vmatprep.subr.bf16.mxu0 0
      %447 = vmatpush1.bf16.msra.mxu0 %v368
      %448 = vmatprep.subr.bf16.mxu0 0
      %449 = vmatpush1.bf16.msra.mxu0 %v369
      %450 = vmatprep.mubr.bf16.mxu0 %v411
      %451 = vmatmul.mubr.bf16.gmra.mrb[0].mxu0 %v410
      %v452 = vpop.f32.mrb[0].mxu0
      %v453 = vadd.f32 %v381, %v452
      %v454 = vpop.f32.mrb[0].mxu0
      %v455 = vpop.f32.mrb[0].mxu0
      %v456 = vadd.f32 %v386, %v455
      %v457 = vpop.f32.mrb[0].mxu0
      %458 = vmatprep.mubr.bf16.mxu0 %v413
      %459 = vmatmul.mubr.bf16.gmra.mrb[0].mxu0 %v412
      %v460 = vpop.f32.mrb[0].mxu0
      %v461 = vadd.f32 %v391, %v460
      %v462 = vpop.f32.mrb[0].mxu0
      %v463 = vpop.f32.mrb[0].mxu0
      %v464 = vadd.f32 %v396, %v463
      %v465 = vpop.f32.mrb[0].mxu0
      %466 = vdwg.mxu0
      %v468 = vlaneseq
      %v469 = vshrl.u32 %v468, 7
      %v470 = vsub.s32 0, %v469
      %v471 = vrot.slane %v253, %v470
      %v473 = vmul.f32 %v453, %v471
      %v474 = vmul.f32 %v456, %v471
      %v475 = vmul.f32 %v461, %v471
      %v476 = vmul.f32 %v464, %v471
      %v477 = vmul.f32 %v473, %v453
      %v478 = vmul.f32 %v474, %v456
      %v479 = vmul.f32 %v475, %v461
      %v480 = vmul.f32 %v476, %v464
      %vm481 = vcmask 236544
      %v482 = vsel %vm481, %v473, 0.0
      %483 = vadd.xlane.f32.xlu0 %v482
      %v484 = vpop.xlane.xlu0 %483
      %v485 = vsel %vm481, %v474, 0.0
      %486 = vadd.xlane.f32.xlu0 %v485
      %v487 = vpop.xlane.xlu0 %486
      %v488 = vsel %vm481, %v475, 0.0
      %489 = vadd.xlane.f32.xlu0 %v488
      %v490 = vpop.xlane.xlu0 %489
      %v491 = vsel %vm481, %v476, 0.0
      %492 = vadd.xlane.f32.xlu0 %v491
      %v493 = vpop.xlane.xlu0 %492
      %v494 = vsel %vm481, %v477, 0.0
      %495 = vadd.xlane.f32.xlu0 %v494
      %v496 = vpop.xlane.xlu0 %495
      %v497 = vsel %vm481, %v478, 0.0
      %498 = vadd.xlane.f32.xlu0 %v497
      %v499 = vpop.xlane.xlu0 %498
      %v500 = vsel %vm481, %v479, 0.0
      %501 = vadd.xlane.f32.xlu0 %v500
      %v502 = vpop.xlane.xlu0 %501
      %v503 = vsel %vm481, %v480, 0.0
      %504 = vadd.xlane.f32.xlu0 %v503
      %v505 = vpop.xlane.xlu0 %504
      %v506 = vmul.f32 %v484, 0.0625
      %v507 = vmul.f32 %v487, 0.0625
      %v508 = vmul.f32 %v490, 0.0625
      %v509 = vmul.f32 %v493, 0.0625
      %v510 = vmul.f32 %v496, 0.0625
      %v511 = vmul.f32 %v499, 0.0625
      %v512 = vmul.f32 %v502, 0.0625
      %v513 = vmul.f32 %v505, 0.0625
      %v514 = vmul.f32 %v506, %v506
      %v515 = vmul.f32 %v507, %v507
      %v516 = vmul.f32 %v508, %v508
      %v517 = vmul.f32 %v509, %v509
      %v518 = vsub.f32 %v510, %v514
      %v519 = vsub.f32 %v511, %v515
      %v520 = vsub.f32 %v512, %v516
      %v521 = vsub.f32 %v513, %v517
      %v522 = vmax.f32 %v518, 0.0
      %v523 = vmax.f32 %v519, 0.0
      %v524 = vmax.f32 %v520, 0.0
      %v525 = vmax.f32 %v521, 0.0
      %v526 = vsub.f32 %v453, %v506
      %v527 = vsub.f32 %v456, %v507
      %v528 = vsub.f32 %v461, %v508
      %v529 = vsub.f32 %v464, %v509
      %v530 = vadd.f32 %v522, 1e-05
      %v531 = vadd.f32 %v523, 1e-05
      %v532 = vadd.f32 %v524, 1e-05
      %v533 = vadd.f32 %v525, 1e-05
      %v534 = vrsqrt.pop %v530
      %v535 = vrsqrt.pop %v531
      %v536 = vrsqrt.pop %v532
      %v537 = vrsqrt.pop %v533
      %v538 = vmul.f32 %v526, %v534
      %v539 = vmul.f32 %v527, %v535
      %v540 = vmul.f32 %v528, %v536
      %v541 = vmul.f32 %v529, %v537
      %542 = vset.pattern.permute.xlu0 1
      %543 = vperm.xlu0 %542, %v370
      %v544 = vpop.permute.xlu0 %543
      %546 = vset.pattern.permute.xlu0 1
      %547 = vperm.xlu0 %546, %v371
      %v548 = vpop.permute.xlu0 %547
      %550 = vset.pattern.permute.xlu0 1
      %551 = vperm.xlu0 %550, %v372
      %v552 = vpop.permute.xlu0 %551
      %554 = vset.pattern.permute.xlu0 1
      %555 = vperm.xlu0 %554, %v373
      %v556 = vpop.permute.xlu0 %555
      %v558 = vmul.f32 %v538, %v544
      %v559 = vmul.f32 %v539, %v548
      %v560 = vmul.f32 %v540, %v552
      %v561 = vmul.f32 %v541, %v556
      %562 = vset.pattern.permute.xlu0 2
      %563 = vperm.xlu0 %562, %v370
      %v564 = vpop.permute.xlu0 %563
      %566 = vset.pattern.permute.xlu0 2
      %567 = vperm.xlu0 %566, %v371
      %v568 = vpop.permute.xlu0 %567
      %570 = vset.pattern.permute.xlu0 2
      %571 = vperm.xlu0 %570, %v372
      %v572 = vpop.permute.xlu0 %571
      %574 = vset.pattern.permute.xlu0 2
      %575 = vperm.xlu0 %574, %v373
      %v576 = vpop.permute.xlu0 %575
      %v578 = vadd.f32 %v558, %v564
      %v579 = vadd.f32 %v559, %v568
      %v580 = vadd.f32 %v560, %v572
      %v581 = vadd.f32 %v561, %v576
      %vm582 = vcmp.ge.f32.partialorder %v578, 0.0
      %vm583 = vcmp.ge.f32.partialorder %v579, 0.0
      %vm584 = vcmp.ge.f32.partialorder %v580, 0.0
      %vm585 = vcmp.ge.f32.partialorder %v581, 0.0
      %v586 = vmul.f32 %v578, 0.01
      %v587 = vmul.f32 %v579, 0.01
      %v588 = vmul.f32 %v580, 0.01
      %v589 = vmul.f32 %v581, 0.01
      %v590 = vsel %vm582, %v578, %v586
      %v591 = vsel %vm583, %v579, %v587
      %v592 = vsel %vm584, %v580, %v588
      %v593 = vsel %vm585, %v581, %v589
      %v594 = vmul.f32 %v590, %v471
      %v595 = vmul.f32 %v591, %v471
      %v596 = vmul.f32 %v592, %v471
      %v597 = vmul.f32 %v593, %v471
      %602 = vrot.lane.b32.xlu0 %v594, 7
      %v603 = vpop.permute.xlu0 %602
      %604 = vrot.lane.b32.xlu0 %v595, 7
      %v605 = vpop.permute.xlu0 %604
      %606 = vrot.lane.b32.xlu0 %v596, 7
      %v607 = vpop.permute.xlu0 %606
      %608 = vrot.lane.b32.xlu0 %v597, 7
      %v609 = vpop.permute.xlu0 %608
      %vm614 = vcmask 293944
      %615 = vst.msk [vmem:[#allocation2] sm:$0xff] %vm614, %v603
      %616 = vst.msk [vmem:[#allocation2 + $0x8] sm:$0xff] %vm614, %v605
      %617 = vst.msk [vmem:[#allocation2 + $0x10] sm:$0xff] %vm614, %v607
      %618 = vst.msk [vmem:[#allocation2 + $0x18] sm:$0xff] %vm614, %v609
      %v619 = vld [vmem:[#allocation2] sm:$0xff]
      %v620 = vld [vmem:[#allocation2 + $0x8] sm:$0xff]
      %v621 = vld [vmem:[#allocation2 + $0x10] sm:$0xff]
      %v622 = vld [vmem:[#allocation2 + $0x18] sm:$0xff]
      %627 = vrot.lane.b32.xlu0 %v619, 127
      %v628 = vpop.permute.xlu0 %627
      %629 = vrot.lane.b32.xlu0 %v620, 127
      %v630 = vpop.permute.xlu0 %629
      %631 = vrot.lane.b32.xlu0 %v621, 127
      %v632 = vpop.permute.xlu0 %631
      %633 = vrot.lane.b32.xlu0 %v622, 127
      %v634 = vpop.permute.xlu0 %633
      %639 = vrot.lane.b32.xlu0 %v619, 126
      %v640 = vpop.permute.xlu0 %639
      %641 = vrot.lane.b32.xlu0 %v620, 126
      %v642 = vpop.permute.xlu0 %641
      %643 = vrot.lane.b32.xlu0 %v621, 126
      %v644 = vpop.permute.xlu0 %643
      %645 = vrot.lane.b32.xlu0 %v622, 126
      %v646 = vpop.permute.xlu0 %645
      %651 = vrot.lane.b32.xlu0 %v619, 122
      %v652 = vpop.permute.xlu0 %651
      %653 = vrot.lane.b32.xlu0 %v620, 122
      %v654 = vpop.permute.xlu0 %653
      %655 = vrot.lane.b32.xlu0 %v621, 122
      %v656 = vpop.permute.xlu0 %655
      %657 = vrot.lane.b32.xlu0 %v622, 122
      %v658 = vpop.permute.xlu0 %657
      %663 = vrot.lane.b32.xlu0 %v619, 121
      %v664 = vpop.permute.xlu0 %663
      %665 = vrot.lane.b32.xlu0 %v620, 121
      %v666 = vpop.permute.xlu0 %665
      %667 = vrot.lane.b32.xlu0 %v621, 121
      %v668 = vpop.permute.xlu0 %667
      %669 = vrot.lane.b32.xlu0 %v622, 121
      %v670 = vpop.permute.xlu0 %669
      %675 = vrot.lane.b32.xlu0 %v619, 120
      %v676 = vpop.permute.xlu0 %675
      %677 = vrot.lane.b32.xlu0 %v620, 120
      %v678 = vpop.permute.xlu0 %677
      %679 = vrot.lane.b32.xlu0 %v621, 120
      %v680 = vpop.permute.xlu0 %679
      %681 = vrot.lane.b32.xlu0 %v622, 120
      %v682 = vpop.permute.xlu0 %681
      %687 = vrot.lane.b32.xlu0 %v619, 116
      %v688 = vpop.permute.xlu0 %687
      %689 = vrot.lane.b32.xlu0 %v620, 116
      %v690 = vpop.permute.xlu0 %689
      %691 = vrot.lane.b32.xlu0 %v621, 116
      %v692 = vpop.permute.xlu0 %691
      %693 = vrot.lane.b32.xlu0 %v622, 116
      %v694 = vpop.permute.xlu0 %693
      %699 = vrot.lane.b32.xlu0 %v619, 115
      %v700 = vpop.permute.xlu0 %699
      %701 = vrot.lane.b32.xlu0 %v620, 115
      %v702 = vpop.permute.xlu0 %701
      %703 = vrot.lane.b32.xlu0 %v621, 115
      %v704 = vpop.permute.xlu0 %703
      %705 = vrot.lane.b32.xlu0 %v622, 115
      %v706 = vpop.permute.xlu0 %705
      %711 = vrot.lane.b32.xlu0 %v619, 114
      %v712 = vpop.permute.xlu0 %711
      %713 = vrot.lane.b32.xlu0 %v620, 114
      %v714 = vpop.permute.xlu0 %713
      %715 = vrot.lane.b32.xlu0 %v621, 114
      %v716 = vpop.permute.xlu0 %715
      %717 = vrot.lane.b32.xlu0 %v622, 114
      %v718 = vpop.permute.xlu0 %717
      %v723 = vpack.c.bf16 %v620, %v619
      %v724 = vpack.c.bf16 %v622, %v621
      %v725 = vpack.c.bf16 %v630, %v628
      %v726 = vpack.c.bf16 %v634, %v632
      %v727 = vpack.c.bf16 %v642, %v640
      %v728 = vpack.c.bf16 %v646, %v644
      %v729 = vpack.c.bf16 %v654, %v652
      %v730 = vpack.c.bf16 %v658, %v656
      %v731 = vpack.c.bf16 %v666, %v664
      %v732 = vpack.c.bf16 %v670, %v668
      %v733 = vpack.c.bf16 %v678, %v676
      %v734 = vpack.c.bf16 %v682, %v680
      %v735 = vpack.c.bf16 %v690, %v688
      %v736 = vpack.c.bf16 %v694, %v692
      %v737 = vpack.c.bf16 %v702, %v700
      %v738 = vpack.c.bf16 %v706, %v704
      %v739 = vpack.c.bf16 %v714, %v712
      %v740 = vpack.c.bf16 %v718, %v716
      %v741 = vld [vmem:[%s5] sm:$0xff]
      %v742 = vld [vmem:[%s5 + $0x8] sm:$0xff]
      %v743 = vld [vmem:[%s5 + $0x10] sm:$0xff]
      %v744 = vld [vmem:[%s5 + $0x18] sm:$0xff]
      %v745 = vld [vmem:[%s4] sm:$0xff]
      %v746 = vld [vmem:[%s4 + $0x8] sm:$0xf]
      %v747 = vld [vmem:[%s4 + $0xc] sm:$0xff]
      %v748 = vld [vmem:[%s4 + $0x14] sm:$0xf]
      %v749 = vld [vmem:[%s4 + $0x18] sm:$0xff]
      %v750 = vld [vmem:[%s4 + $0x20] sm:$0xf]
      %v751 = vld [vmem:[%s4 + $0x24] sm:$0xff]
      %v752 = vld [vmem:[%s4 + $0x2c] sm:$0xf]
      %754 = vset.pattern.permute.xlu0 0
      %755 = vperm.xlu0 %754, %v741
      %v756 = vpop.permute.xlu0 %755
      %759 = vset.pattern.permute.xlu0 0
      %760 = vperm.xlu0 %759, %v742
      %v761 = vpop.permute.xlu0 %760
      %764 = vset.pattern.permute.xlu0 0
      %765 = vperm.xlu0 %764, %v743
      %v766 = vpop.permute.xlu0 %765
      %769 = vset.pattern.permute.xlu0 0
      %770 = vperm.xlu0 %769, %v744
      %v771 = vpop.permute.xlu0 %770
      %v781 = vunpack.c.l.b16 %v745
      %v782 = vunpack.c.h.b16 %v745
      %v783 = vunpack.c.l.b16 %v746
      %v784 = vunpack.c.l.b16 %v747
      %v785 = vunpack.c.h.b16 %v747
      %v786 = vunpack.c.l.b16 %v748
      %v787 = vunpack.c.l.b16 %v749
      %v788 = vunpack.c.h.b16 %v749
      %v789 = vunpack.c.l.b16 %v750
      %v790 = vunpack.c.l.b16 %v751
      %v791 = vunpack.c.h.b16 %v751
      %v792 = vunpack.c.l.b16 %v752
      %v793 = vpack.c.b16 %v784, %v781
      %v794 = vpack.c.b16 %v785, %v782
      %v795 = vpack.c.b16 %v786, %v783
      %v796 = vpack.c.b16 %v790, %v787
      %v797 = vpack.c.b16 %v791, %v788
      %v798 = vpack.c.b16 %v792, %v789
      %vm803 = vcmask 261120
      %v805 = vsel %vm803, %v795, 0
      %v808 = vsel %vm803, %v798, 0
      %810 = vmatprep.subr.bf16.mxu0 0
      %811 = vmatpush1.bf16.msra.mxu0 %v723
      %812 = vmatprep.subr.bf16.mxu0 0
      %813 = vmatpush1.bf16.msra.mxu0 %v724
      %814 = vmatprep.subr.bf16.mxu0 0
      %815 = vmatpush1.bf16.msra.mxu0 %v725
      %816 = vmatprep.subr.bf16.mxu0 0
      %817 = vmatpush1.bf16.msra.mxu0 %v726
      %818 = vmatprep.subr.bf16.mxu0 0
      %819 = vmatpush1.bf16.msra.mxu0 %v727
      %820 = vmatprep.subr.bf16.mxu0 0
      %821 = vmatpush1.bf16.msra.mxu0 %v728
      %822 = vmatprep.subr.bf16.mxu0 0
      %823 = vmatpush1.bf16.msra.mxu0 %v729
      %824 = vmatprep.subr.bf16.mxu0 0
      %825 = vmatpush1.bf16.msra.mxu0 %v730
      %826 = vmatprep.subr.bf16.mxu0 0
      %827 = vmatpush1.bf16.msra.mxu0 %v731
      %828 = vmatprep.subr.bf16.mxu0 0
      %829 = vmatpush1.bf16.msra.mxu0 %v732
      %830 = vmatprep.subr.bf16.mxu0 0
      %831 = vmatpush1.bf16.msra.mxu0 %v733
      %832 = vmatprep.subr.bf16.mxu0 0
      %833 = vmatpush1.bf16.msra.mxu0 %v734
      %834 = vmatprep.subr.bf16.mxu0 0
      %835 = vmatpush1.bf16.msra.mxu0 %v735
      %836 = vmatprep.subr.bf16.mxu0 0
      %837 = vmatpush1.bf16.msra.mxu0 %v736
      %838 = vmatprep.subr.bf16.mxu0 0
      %839 = vmatpush1.bf16.msra.mxu0 %v737
      %840 = vmatprep.subr.bf16.mxu0 0
      %841 = vmatpush1.bf16.msra.mxu0 %v738
      %842 = vmatprep.mubr.bf16.mxu0 %v794
      %843 = vmatmul.mubr.bf16.gmra.mrb[0].mxu0 %v793
      %v844 = vpop.f32.mrb[0].mxu0
      %v845 = vadd.f32 %v756, %v844
      %v846 = vpop.f32.mrb[0].mxu0
      %v847 = vpop.f32.mrb[0].mxu0
      %v848 = vadd.f32 %v761, %v847
      %v849 = vpop.f32.mrb[0].mxu0
      %850 = vmatprep.mubr.bf16.mxu0 %v797
      %851 = vmatmul.mubr.bf16.gmra.mrb[0].mxu0 %v796
      %v852 = vpop.f32.mrb[0].mxu0
      %v853 = vadd.f32 %v766, %v852
      %v854 = vpop.f32.mrb[0].mxu0
      %v855 = vpop.f32.mrb[0].mxu0
      %v856 = vadd.f32 %v771, %v855
      %v857 = vpop.f32.mrb[0].mxu0
      %858 = vdwg.mxu0
      %859 = vmatprep.subr.bf16.mxu0 0
      %860 = vmatpush1.bf16.msra.mxu0 %v739
      %861 = vmatprep.subr.bf16.mxu0 0
      %862 = vmatpush1.bf16.msra.mxu0 %v740
      %863 = vmatprep.subr.bf16.mxu0 0
      %864 = vmatpush1.bf16.msra.mxu0 0
      %865 = vmatprep.subr.bf16.mxu0 0
      %866 = vmatpush1.bf16.msra.mxu0 0
      %867 = vmatprep.subr.bf16.mxu0 0
      %868 = vmatpush1.bf16.msra.mxu0 0
      %869 = vmatprep.subr.bf16.mxu0 0
      %870 = vmatpush1.bf16.msra.mxu0 0
      %871 = vmatprep.subr.bf16.mxu0 0
      %872 = vmatpush1.bf16.msra.mxu0 0
      %873 = vmatprep.subr.bf16.mxu0 0
      %874 = vmatpush1.bf16.msra.mxu0 0
      %875 = vmatprep.subr.bf16.mxu0 0
      %876 = vmatpush1.bf16.msra.mxu0 0
      %877 = vmatprep.subr.bf16.mxu0 0
      %878 = vmatpush1.bf16.msra.mxu0 0
      %879 = vmatprep.subr.bf16.mxu0 0
      %880 = vmatpush1.bf16.msra.mxu0 0
      %881 = vmatprep.subr.bf16.mxu0 0
      %882 = vmatpush1.bf16.msra.mxu0 0
      %883 = vmatprep.subr.bf16.mxu0 0
      %884 = vmatpush1.bf16.msra.mxu0 0
      %885 = vmatprep.subr.bf16.mxu0 0
      %886 = vmatpush1.bf16.msra.mxu0 0
      %887 = vmatprep.subr.bf16.mxu0 0
      %888 = vmatpush1.bf16.msra.mxu0 0
      %889 = vmatprep.subr.bf16.mxu0 0
      %890 = vmatpush1.bf16.msra.mxu0 0
      %891 = vmatprep.mubr.bf16.mxu0 0
      %892 = vmatmul.mubr.bf16.gmra.mrb[0].mxu0 %v805
      %v893 = vpop.f32.mrb[0].mxu0
      %v894 = vadd.f32 %v845, %v893
      %v895 = vpop.f32.mrb[0].mxu0
      %v896 = vpop.f32.mrb[0].mxu0
      %v897 = vadd.f32 %v848, %v896
      %v898 = vpop.f32.mrb[0].mxu0
      %899 = vmatprep.mubr.bf16.mxu0 0
      %900 = vmatmul.mubr.bf16.gmra.mrb[0].mxu0 %v808
      %v901 = vpop.f32.mrb[0].mxu0
      %v902 = vadd.f32 %v853, %v901
      %v903 = vpop.f32.mrb[0].mxu0
      %v904 = vpop.f32.mrb[0].mxu0
      %v905 = vadd.f32 %v856, %v904
      %v906 = vpop.f32.mrb[0].mxu0
      %907 = vdwg.mxu0
      %v908 = vmul.f32 %v894, %v471
      %v909 = vmul.f32 %v897, %v471
      %v910 = vmul.f32 %v902, %v471
      %v911 = vmul.f32 %v905, %v471
      %v912 = vmul.f32 %v908, %v894
      %v913 = vmul.f32 %v909, %v897
      %v914 = vmul.f32 %v910, %v902
      %v915 = vmul.f32 %v911, %v905
      %vm916 = vcmask 179200
      %v917 = vsel %vm916, %v908, 0.0
      %918 = vadd.xlane.f32.xlu0 %v917
      %v919 = vpop.xlane.xlu0 %918
      %v920 = vsel %vm916, %v909, 0.0
      %921 = vadd.xlane.f32.xlu0 %v920
      %v922 = vpop.xlane.xlu0 %921
      %v923 = vsel %vm916, %v910, 0.0
      %924 = vadd.xlane.f32.xlu0 %v923
      %v925 = vpop.xlane.xlu0 %924
      %v926 = vsel %vm916, %v911, 0.0
      %927 = vadd.xlane.f32.xlu0 %v926
      %v928 = vpop.xlane.xlu0 %927
      %v929 = vsel %vm916, %v912, 0.0
      %930 = vadd.xlane.f32.xlu0 %v929
      %v931 = vpop.xlane.xlu0 %930
      %v932 = vsel %vm916, %v913, 0.0
      %933 = vadd.xlane.f32.xlu0 %v932
      %v934 = vpop.xlane.xlu0 %933
      %v935 = vsel %vm916, %v914, 0.0
      %936 = vadd.xlane.f32.xlu0 %v935
      %v937 = vpop.xlane.xlu0 %936
      %v938 = vsel %vm916, %v915, 0.0
      %939 = vadd.xlane.f32.xlu0 %v938
      %v940 = vpop.xlane.xlu0 %939
      %v941 = vmul.f32 %v919, 0.0625
      %v942 = vmul.f32 %v922, 0.0625
      %v943 = vmul.f32 %v925, 0.0625
      %v944 = vmul.f32 %v928, 0.0625
      %v945 = vmul.f32 %v931, 0.0625
      %v946 = vmul.f32 %v934, 0.0625
      %v947 = vmul.f32 %v937, 0.0625
      %v948 = vmul.f32 %v940, 0.0625
      %v949 = vmul.f32 %v941, %v941
      %v950 = vmul.f32 %v942, %v942
      %v951 = vmul.f32 %v943, %v943
      %v952 = vmul.f32 %v944, %v944
      %v953 = vsub.f32 %v945, %v949
      %v954 = vsub.f32 %v946, %v950
      %v955 = vsub.f32 %v947, %v951
      %v956 = vsub.f32 %v948, %v952
      %v957 = vmax.f32 %v953, 0.0
      %v958 = vmax.f32 %v954, 0.0
      %v959 = vmax.f32 %v955, 0.0
      %v960 = vmax.f32 %v956, 0.0
      %v961 = vsub.f32 %v894, %v941
      %v962 = vsub.f32 %v897, %v942
      %v963 = vsub.f32 %v902, %v943
      %v964 = vsub.f32 %v905, %v944
      %v965 = vadd.f32 %v957, 1e-05
      %v966 = vadd.f32 %v958, 1e-05
      %v967 = vadd.f32 %v959, 1e-05
      %v968 = vadd.f32 %v960, 1e-05
      %v969 = vrsqrt.pop %v965
      %v970 = vrsqrt.pop %v966
      %v971 = vrsqrt.pop %v967
      %v972 = vrsqrt.pop %v968
      %v973 = vmul.f32 %v961, %v969
      %v974 = vmul.f32 %v962, %v970
      %v975 = vmul.f32 %v963, %v971
      %v976 = vmul.f32 %v964, %v972
      %977 = vset.pattern.permute.xlu0 1
      %978 = vperm.xlu0 %977, %v741
      %v979 = vpop.permute.xlu0 %978
      %981 = vset.pattern.permute.xlu0 1
      %982 = vperm.xlu0 %981, %v742
      %v983 = vpop.permute.xlu0 %982
      %985 = vset.pattern.permute.xlu0 1
      %986 = vperm.xlu0 %985, %v743
      %v987 = vpop.permute.xlu0 %986
      %989 = vset.pattern.permute.xlu0 1
      %990 = vperm.xlu0 %989, %v744
      %v991 = vpop.permute.xlu0 %990
      %v993 = vmul.f32 %v973, %v979
      %v994 = vmul.f32 %v974, %v983
      %v995 = vmul.f32 %v975, %v987
      %v996 = vmul.f32 %v976, %v991
      %997 = vset.pattern.permute.xlu0 2
      %998 = vperm.xlu0 %997, %v741
      %v999 = vpop.permute.xlu0 %998
      %1001 = vset.pattern.permute.xlu0 2
      %1002 = vperm.xlu0 %1001, %v742
      %v1003 = vpop.permute.xlu0 %1002
      %1005 = vset.pattern.permute.xlu0 2
      %1006 = vperm.xlu0 %1005, %v743
      %v1007 = vpop.permute.xlu0 %1006
      %1009 = vset.pattern.permute.xlu0 2
      %1010 = vperm.xlu0 %1009, %v744
      %v1011 = vpop.permute.xlu0 %1010
      %v1013 = vadd.f32 %v993, %v999
      %v1014 = vadd.f32 %v994, %v1003
      %v1015 = vadd.f32 %v995, %v1007
      %v1016 = vadd.f32 %v996, %v1011
      %vm1017 = vcmp.ge.f32.partialorder %v1013, 0.0
      %vm1018 = vcmp.ge.f32.partialorder %v1014, 0.0
      %vm1019 = vcmp.ge.f32.partialorder %v1015, 0.0
      %vm1020 = vcmp.ge.f32.partialorder %v1016, 0.0
      %v1021 = vmul.f32 %v1013, 0.01
      %v1022 = vmul.f32 %v1014, 0.01
      %v1023 = vmul.f32 %v1015, 0.01
      %v1024 = vmul.f32 %v1016, 0.01
      %v1025 = vsel %vm1017, %v1013, %v1021
      %v1026 = vsel %vm1018, %v1014, %v1022
      %v1027 = vsel %vm1019, %v1015, %v1023
      %v1028 = vsel %vm1020, %v1016, %v1024
      %v1029 = vmul.f32 %v1025, %v471
      %v1030 = vmul.f32 %v1026, %v471
      %v1031 = vmul.f32 %v1027, %v471
      %v1032 = vmul.f32 %v1028, %v471
      %1033 = vst [vmem:[%s251] sm:$0xf] 0
      %1034 = vst [vmem:[%s251 + $0x4] sm:$0xf] 0
      %1035 = vst [vmem:[%s251 + $0x8] sm:$0xf] 0
      %1036 = vst [vmem:[%s251 + $0xc] sm:$0xf] 0
      %v1037 = vpack.c.bf16 %v1030, %v1029
      %v1038 = vpack.c.bf16 %v1032, %v1031
      %v1041 = vunpack.c.l.b16 %v1037
      %v1042 = vunpack.c.h.b16 %v1037
      %v1043 = vunpack.c.l.b16 %v1038
      %v1044 = vunpack.c.h.b16 %v1038
      %v1045 = vpack.c.b16 %v1041, %v1041
      %v1046 = vpack.c.b16 %v1042, %v1042
      %v1047 = vpack.c.b16 %v1043, %v1043
      %v1048 = vpack.c.b16 %v1044, %v1044
      %1049 = vrot.lane.b32.xlu0 %v1045, 7
      %v1050 = vpop.permute.xlu0 %1049
      %1051 = vrot.lane.b32.xlu0 %v1046, 7
      %v1052 = vpop.permute.xlu0 %1051
      %1053 = vrot.lane.b32.xlu0 %v1047, 7
      %v1054 = vpop.permute.xlu0 %1053
      %1055 = vrot.lane.b32.xlu0 %v1048, 7
      %v1056 = vpop.permute.xlu0 %1055
      %vm1061 = vcmask 232504
      %1062 = vst.msk [vmem:[%s251] sm:$0xf] %vm1061, %v1050
      %1063 = vst.msk [vmem:[%s251 + $0x4] sm:$0xf] %vm1061, %v1052
      %1064 = vst.msk [vmem:[%s251 + $0x8] sm:$0xf] %vm1061, %v1054
      %1065 = vst.msk [vmem:[%s251 + $0xc] sm:$0xf] %vm1061, %v1056
      %p1066 = scmp.lt.s32.totalorder %s17, 1
      %s1067 = scalar_select %p1066, %s17, 1
      %s1068 = smul.addr %s1067, 4
      %s1069 = smul.addr %s1068, 4
      %s1070 = scalar_lea.vmem %s6, %s1069
      // Predicated region
      $region45: #{autoencoder_forward.7} parent=43 // pred_check
        %p1071 = pneg %p166
      $region46: #{autoencoder_forward.7} parent=43 // pred_check_branch
        %1073 = sbr.rel (%p1071) target = $region48
      $region47: #{autoencoder_forward.7} parent=43 // pred_region
        _
      $region48: #{autoencoder_forward.7} parent=43 // pred_fallthru
        _
    $region44: #{autoencoder_forward.7} parent=5 // pred_fallthru
      _
    %p1074 = scmp.le.s32.totalorder 2, %s12
    // Predicated region
    $region49: #{autoencoder_forward.7} parent=5 // pred_check
      %p1075 = pneg %p1074
    $region50: #{autoencoder_forward.7} parent=5 // pred_check_branch
      %1077 = sbr.rel (%p1075) target = $region52
    $region51: #{autoencoder_forward.7} parent=5 // pred_region
      %s1078 = ssub.s32 %s12, 2
      // Predicated region
      $region53: #{autoencoder_forward.7} parent=51 // pred_check
        %p1079 = pneg %p172
      $region54: #{autoencoder_forward.7} parent=51 // pred_check_branch
        %1081 = sbr.rel (%p1079) target = $region56
      $region55: #{autoencoder_forward.7} parent=51 // pred_region
        %p1082 = scmp.lt.s32.totalorder %s18, 1
        %s1083 = scalar_select %p1082, %s18, 1
        %s1084 = smul.addr %s1083, 4
        %s1085 = smul.addr %s1084, 4
        %s1086 = scalar_lea.vmem %s6, %s1085
      $region56: #{autoencoder_forward.7} parent=51 // pred_fallthru
        _
    $region52: #{autoencoder_forward.7} parent=5 // pred_fallthru
      _
  $region6: #{autoencoder_forward.7} parent=0 // loop_footer
    %s16 = sadd.s32 1, %s12
  $region7: #{autoencoder_forward.7} parent=0 // loop_footer_branch
    %11 = sbr.rel target = $region3
  $region8: #{autoencoder_forward.7} parent=0 // loop_exit
    _

// kernel: autoencoder_forward.8
$region0: #{autoencoder_forward.8}
  #allocation0 [shape = 'u32[]', space=smem, size = 0x4, offset = 0x4, fixed_abs, tag = 'smem constant byte address 0x4 - core index']
  #allocation1 [shape = 'u32[144,128]{1,0:T(1,128)}', space=vmem, size = 0x12000, scoped, tag = 'internal scratch']
  #allocation2 [shape = 'f32[16,128]{1,0:T(8,128)}', space=vmem, size = 0x2000, scoped, tag = 'scratch operand']
  %s0 = inlined_call_operand.vmem [shape: f32[1,128], index: 0, kind: input, shape index: {}]
  %s1 = inlined_call_operand.vmem [shape: bf16[2,32,128], index: 1, kind: input, shape index: {}]
  %s2 = inlined_call_operand.vmem [shape: bf16[2,16,128], index: 2, kind: input, shape index: {}]
  %s3 = inlined_call_operand.vmem [shape: bf16[16,432], index: 3, kind: input, shape index: {}]
  %s4 = inlined_call_operand.vmem [shape: f32[16,3], index: 4, kind: input, shape index: {}]
  %s5 = inlined_call_operand.vmem [shape: bf16[16,144], index: 5, kind: input, shape index: {}]
  %s6 = inlined_call_operand.vmem [shape: f32[16,3], index: 6, kind: input, shape index: {}]
  %s7 = inlined_call_operand.vmem [shape: bf16[2,16,128], index: 7, kind: output, shape index: {}]
  %s8 = sld [smem:[#allocation0]]
  $region61: #{autoencoder_forward.8} parent=0
    _
  %s10 = ssub.s32 1, %s8
  %s11 = scalar_select 0, %s10, %s8
  loop: start=0, step=1, limit=4
  $region2: #{autoencoder_forward.8} parent=0 // loop_pre_header
    _
  $region3: #{autoencoder_forward.8} parent=0 // loop_header
    %s13 = sphi 0, %s17
    %p14 = scmp.ge.s32.totalorder %s13, 4
    %s21 = sphi 0, %s21
    %s23 = sphi 0, %s21
    %s24 = sphi 0, %s23
    %s38 = sphi 0, %s24
    %s44 = sphi 0, %s46
    %s47 = sphi 0, %s44
    %s48 = sphi 0, %s47
    %s64 = sphi 0, %s48
    %s70 = sphi 0, %s72
    %s73 = sphi 0, %s70
    %s74 = sphi 0, %s73
    %s90 = sphi 0, %s74
    %s94 = sphi 0, %s94
    %s96 = sphi 0, %s94
    %s97 = sphi 0, %s96
    %s111 = sphi 0, %s97
    %s115 = sphi 0, %s115
    %s117 = sphi 0, %s115
    %s118 = sphi 0, %s117
    %s132 = sphi 0, %s118
    %s136 = sphi 0, %s136
    %s138 = sphi 0, %s136
    %s139 = sphi 0, %s138
    %s153 = sphi 0, %s139
    %s157 = sphi 0, %s157
    %s159 = sphi 0, %s157
    %s160 = sphi 0, %s159
    %s174 = sphi 0, %s160
    %s180 = sphi 0, %s182
    %s183 = sphi 0, %s180
    %s184 = sphi 0, %s183
    %s200 = sphi 0, %s184
  $region4: #{autoencoder_forward.8} parent=0 // loop_header_branch
    %16 = sbr.rel (%p14) target = $region8
  $region5: #{autoencoder_forward.8} parent=0 // loop_body
    %s18 = ssub.s32 %s13, 1
    %s19 = ssub.s32 %s13, 2
    %s20 = sadd.s32 %s13, 1
    %s22 = sadd.s32 %s21, 1
    %p25 = scmp.eq.s32.totalorder %s13, 1
    %p26 = scmp.ne.s32.totalorder %s21, %s23
    %p27 = scmp.eq.s32.totalorder %s13, 0
    %p28 = por %p26, %p27
    %p29 = scmp.ne.s32.totalorder %s21, %s23
    %p30 = scmp.eq.s32.totalorder %s18, 1
    %p31 = por %p29, %p30
    %p32 = scmp.ne.s32.totalorder %s23, %s24
    %p33 = scmp.eq.s32.totalorder %s18, 0
    %p34 = por %p32, %p33
    %p35 = scmp.ne.s32.totalorder %s23, %s24
    %p36 = scmp.eq.s32.totalorder %s19, 1
    %p37 = por %p35, %p36
    %p39 = scmp.ne.s32.totalorder %s24, %s38
    %p40 = scmp.eq.s32.totalorder %s19, 0
    %p41 = por %p39, %p40
    %s42 = ssub.s32 %s13, %s20
    %p43 = scmp.eq.s32.totalorder %s42, 0
    %s45 = sadd.s32 %s44, 1
    %s46 = scalar_select %p43, %s44, %s45
    %p49 = pneg %p43
    %p50 = scmp.eq.s32.totalorder %s13, 1
    %p51 = por %p49, %p50
    %p52 = scmp.ne.s32.totalorder %s44, %s47
    %p53 = scmp.eq.s32.totalorder %s13, 0
    %p54 = por %p52, %p53
    %p55 = scmp.ne.s32.totalorder %s44, %s47
    %p56 = scmp.eq.s32.totalorder %s18, 1
    %p57 = por %p55, %p56
    %p58 = scmp.ne.s32.totalorder %s47, %s48
    %p59 = scmp.eq.s32.totalorder %s18, 0
    %p60 = por %p58, %p59
    %p61 = scmp.ne.s32.totalorder %s47, %s48
    %p62 = scmp.eq.s32.totalorder %s19, 1
    %p63 = por %p61, %p62
    %p65 = scmp.ne.s32.totalorder %s48, %s64
    %p66 = scmp.eq.s32.totalorder %s19, 0
    %p67 = por %p65, %p66
    %s68 = ssub.s32 %s13, %s20
    %p69 = scmp.eq.s32.totalorder %s68, 0
    %s71 = sadd.s32 %s70, 1
    %s72 = scalar_select %p69, %s70, %s71
    %p75 = pneg %p69
    %p76 = scmp.eq.s32.totalorder %s13, 1
    %p77 = por %p75, %p76
    %p78 = scmp.ne.s32.totalorder %s70, %s73
    %p79 = scmp.eq.s32.totalorder %s13, 0
    %p80 = por %p78, %p79
    %p81 = scmp.ne.s32.totalorder %s70, %s73
    %p82 = scmp.eq.s32.totalorder %s18, 1
    %p83 = por %p81, %p82
    %p84 = scmp.ne.s32.totalorder %s73, %s74
    %p85 = scmp.eq.s32.totalorder %s18, 0
    %p86 = por %p84, %p85
    %p87 = scmp.ne.s32.totalorder %s73, %s74
    %p88 = scmp.eq.s32.totalorder %s19, 1
    %p89 = por %p87, %p88
    %p91 = scmp.ne.s32.totalorder %s74, %s90
    %p92 = scmp.eq.s32.totalorder %s19, 0
    %p93 = por %p91, %p92
    %s95 = sadd.s32 %s94, 1
    %p98 = scmp.eq.s32.totalorder %s13, 1
    %p99 = scmp.ne.s32.totalorder %s94, %s96
    %p100 = scmp.eq.s32.totalorder %s13, 0
    %p101 = por %p99, %p100
    %p102 = scmp.ne.s32.totalorder %s94, %s96
    %p103 = scmp.eq.s32.totalorder %s18, 1
    %p104 = por %p102, %p103
    %p105 = scmp.ne.s32.totalorder %s96, %s97
    %p106 = scmp.eq.s32.totalorder %s18, 0
    %p107 = por %p105, %p106
    %p108 = scmp.ne.s32.totalorder %s96, %s97
    %p109 = scmp.eq.s32.totalorder %s19, 1
    %p110 = por %p108, %p109
    %p112 = scmp.ne.s32.totalorder %s97, %s111
    %p113 = scmp.eq.s32.totalorder %s19, 0
    %p114 = por %p112, %p113
    %s116 = sadd.s32 %s115, 1
    %p119 = scmp.eq.s32.totalorder %s13, 1
    %p120 = scmp.ne.s32.totalorder %s115, %s117
    %p121 = scmp.eq.s32.totalorder %s13, 0
    %p122 = por %p120, %p121
    %p123 = scmp.ne.s32.totalorder %s115, %s117
    %p124 = scmp.eq.s32.totalorder %s18, 1
    %p125 = por %p123, %p124
    %p126 = scmp.ne.s32.totalorder %s117, %s118
    %p127 = scmp.eq.s32.totalorder %s18, 0
    %p128 = por %p126, %p127
    %p129 = scmp.ne.s32.totalorder %s117, %s118
    %p130 = scmp.eq.s32.totalorder %s19, 1
    %p131 = por %p129, %p130
    %p133 = scmp.ne.s32.totalorder %s118, %s132
    %p134 = scmp.eq.s32.totalorder %s19, 0
    %p135 = por %p133, %p134
    %s137 = sadd.s32 %s136, 1
    %p140 = scmp.eq.s32.totalorder %s13, 1
    %p141 = scmp.ne.s32.totalorder %s136, %s138
    %p142 = scmp.eq.s32.totalorder %s13, 0
    %p143 = por %p141, %p142
    %p144 = scmp.ne.s32.totalorder %s136, %s138
    %p145 = scmp.eq.s32.totalorder %s18, 1
    %p146 = por %p144, %p145
    %p147 = scmp.ne.s32.totalorder %s138, %s139
    %p148 = scmp.eq.s32.totalorder %s18, 0
    %p149 = por %p147, %p148
    %p150 = scmp.ne.s32.totalorder %s138, %s139
    %p151 = scmp.eq.s32.totalorder %s19, 1
    %p152 = por %p150, %p151
    %p154 = scmp.ne.s32.totalorder %s139, %s153
    %p155 = scmp.eq.s32.totalorder %s19, 0
    %p156 = por %p154, %p155
    %s158 = sadd.s32 %s157, 1
    %p161 = scmp.eq.s32.totalorder %s13, 1
    %p162 = scmp.ne.s32.totalorder %s157, %s159
    %p163 = scmp.eq.s32.totalorder %s13, 0
    %p164 = por %p162, %p163
    %p165 = scmp.ne.s32.totalorder %s157, %s159
    %p166 = scmp.eq.s32.totalorder %s18, 1
    %p167 = por %p165, %p166
    %p168 = scmp.ne.s32.totalorder %s159, %s160
    %p169 = scmp.eq.s32.totalorder %s18, 0
    %p170 = por %p168, %p169
    %p171 = scmp.ne.s32.totalorder %s159, %s160
    %p172 = scmp.eq.s32.totalorder %s19, 1
    %p173 = por %p171, %p172
    %p175 = scmp.ne.s32.totalorder %s160, %s174
    %p176 = scmp.eq.s32.totalorder %s19, 0
    %p177 = por %p175, %p176
    %s178 = ssub.s32 %s13, %s20
    %p179 = scmp.eq.s32.totalorder %s178, 0
    %s181 = sadd.s32 %s180, 1
    %s182 = scalar_select %p179, %s180, %s181
    %p185 = pneg %p179
    %p186 = scmp.eq.s32.totalorder %s13, 1
    %p187 = por %p185, %p186
    %p188 = scmp.ne.s32.totalorder %s180, %s183
    %p189 = scmp.eq.s32.totalorder %s13, 0
    %p190 = por %p188, %p189
    %p191 = scmp.ne.s32.totalorder %s180, %s183
    %p192 = scmp.eq.s32.totalorder %s18, 1
    %p193 = por %p191, %p192
    %p194 = scmp.ne.s32.totalorder %s183, %s184
    %p195 = scmp.eq.s32.totalorder %s18, 0
    %p196 = por %p194, %p195
    %p197 = scmp.ne.s32.totalorder %s183, %s184
    %p198 = scmp.eq.s32.totalorder %s19, 1
    %p199 = por %p197, %p198
    %p201 = scmp.ne.s32.totalorder %s184, %s200
    %p202 = scmp.eq.s32.totalorder %s19, 0
    %p203 = por %p201, %p202
    %p204 = scmp.le.s32.totalorder 1, %s13
    %p205 = scmp.lt.s32.totalorder %s13, 3
    %p206 = pnand %p204, %p205
    %p207 = pneg %p206
    // Predicated region
    $region9: #{autoencoder_forward.8} parent=5 // pred_check
      _
    $region10: #{autoencoder_forward.8} parent=5 // pred_check_branch
      %209 = sbr.rel (%p206) target = $region12
    $region11: #{autoencoder_forward.8} parent=5 // pred_region
      %s210 = ssub.s32 %s13, 1
      // Predicated region
      $region13: #{autoencoder_forward.8} parent=11 // pred_check
        %p211 = pneg %p34
      $region14: #{autoencoder_forward.8} parent=11 // pred_check_branch
        %213 = sbr.rel (%p211) target = $region16
      $region15: #{autoencoder_forward.8} parent=11 // pred_region
        _
      $region16: #{autoencoder_forward.8} parent=11 // pred_fallthru
        _
      // Predicated region
      $region17: #{autoencoder_forward.8} parent=11 // pred_check
        %p214 = pneg %p107
      $region18: #{autoencoder_forward.8} parent=11 // pred_check_branch
        %216 = sbr.rel (%p214) target = $region20
      $region19: #{autoencoder_forward.8} parent=11 // pred_region
        _
      $region20: #{autoencoder_forward.8} parent=11 // pred_fallthru
        _
      // Predicated region
      $region21: #{autoencoder_forward.8} parent=11 // pred_check
        %p217 = pneg %p128
      $region22: #{autoencoder_forward.8} parent=11 // pred_check_branch
        %219 = sbr.rel (%p217) target = $region24
      $region23: #{autoencoder_forward.8} parent=11 // pred_region
        _
      $region24: #{autoencoder_forward.8} parent=11 // pred_fallthru
        _
      // Predicated region
      $region25: #{autoencoder_forward.8} parent=11 // pred_check
        %p220 = pneg %p149
      $region26: #{autoencoder_forward.8} parent=11 // pred_check_branch
        %222 = sbr.rel (%p220) target = $region28
      $region27: #{autoencoder_forward.8} parent=11 // pred_region
        _
      $region28: #{autoencoder_forward.8} parent=11 // pred_fallthru
        _
      // Predicated region
      $region29: #{autoencoder_forward.8} parent=11 // pred_check
        %p223 = pneg %p170
      $region30: #{autoencoder_forward.8} parent=11 // pred_check_branch
        %225 = sbr.rel (%p223) target = $region32
      $region31: #{autoencoder_forward.8} parent=11 // pred_region
        _
      $region32: #{autoencoder_forward.8} parent=11 // pred_fallthru
        _
    $region12: #{autoencoder_forward.8} parent=5 // pred_fallthru
      _
    %p226 = scmp.lt.s32.totalorder %s13, 2
    // Predicated region
    $region33: #{autoencoder_forward.8} parent=5 // pred_check
      %p227 = pneg %p226
    $region34: #{autoencoder_forward.8} parent=5 // pred_check_branch
      %229 = sbr.rel (%p227) target = $region36
    $region35: #{autoencoder_forward.8} parent=5 // pred_region
      // Predicated region
      $region37: #{autoencoder_forward.8} parent=35 // pred_check
        %p230 = pneg %p54
      $region38: #{autoencoder_forward.8} parent=35 // pred_check_branch
        %232 = sbr.rel (%p230) target = $region40
      $region39: #{autoencoder_forward.8} parent=35 // pred_region
        %p233 = scmp.lt.s32.totalorder %s13, 1
        %s234 = scalar_select %p233, %s13, 1
        %s235 = smul.addr %s234, 4
        %s236 = smul.addr %s235, 4
        %s237 = scalar_lea.vmem %s1, %s236
      $region40: #{autoencoder_forward.8} parent=35 // pred_fallthru
        _
      // Predicated region
      $region41: #{autoencoder_forward.8} parent=35 // pred_check
        %p238 = pneg %p80
      $region42: #{autoencoder_forward.8} parent=35 // pred_check_branch
        %240 = sbr.rel (%p238) target = $region44
      $region43: #{autoencoder_forward.8} parent=35 // pred_region
        %p241 = scmp.lt.s32.totalorder %s13, 1
        %s242 = scalar_select %p241, %s13, 1
        %s243 = smul.addr %s242, 2
        %s244 = smul.addr %s243, 4
        %s245 = scalar_lea.vmem %s2, %s244
      $region44: #{autoencoder_forward.8} parent=35 // pred_fallthru
        _
    $region36: #{autoencoder_forward.8} parent=5 // pred_fallthru
      _
    %p246 = scmp.le.s32.totalorder 1, %s13
    %p247 = scmp.lt.s32.totalorder %s13, 3
    %p248 = pnand %p246, %p247
    %p249 = pneg %p248
    // Predicated region
    $region45: #{autoencoder_forward.8} parent=5 // pred_check
      _
    $region46: #{autoencoder_forward.8} parent=5 // pred_check_branch
      %251 = sbr.rel (%p248) target = $region48
    $region47: #{autoencoder_forward.8} parent=5 // pred_region
      %s252 = ssub.s32 %s13, 1
      %p253 = pneg %p34
      %p254 = pneg %p31
      %p255 = scmp.lt.s32.totalorder %s18, 1
      %s256 = scalar_select %p255, %s18, 1
      %s257 = smul.addr %s256, 4
      %s258 = smul.addr %s257, 4
      %s259 = scalar_lea.vmem %s1, %s258
      %p260 = pneg %p60
      %p261 = pneg %p57
      %p262 = scmp.lt.s32.totalorder %s18, 1
      %s263 = scalar_select %p262, %s18, 1
      %s264 = smul.addr %s263, 2
      %s265 = smul.addr %s264, 4
      %s266 = scalar_lea.vmem %s2, %s265
      %p267 = pneg %p86
      %p268 = pneg %p83
      %p269 = pneg %p107
      %p270 = pneg %p104
      %p271 = pneg %p128
      %p272 = pneg %p125
      %p273 = pneg %p149
      %p274 = pneg %p146
      %p275 = pneg %p170
      %p276 = pneg %p167
      %p277 = pneg %p196
      %p278 = pneg %p193
      %p279 = scmp.lt.s32.totalorder %s18, 1
      %s280 = scalar_select %p279, %s18, 1
      %s281 = smul.addr %s280, 2
      %s282 = smul.addr %s281, 4
      %s283 = scalar_lea.vmem %s7, %s282
      %p284 = scmp.lt.s32.totalorder %s18, 1
      %s285 = scalar_select %p284, %s18, 1
      %s286 = smul.addr %s285, 4
      %s287 = smul.addr %s286, 4
      %s288 = scalar_lea.vmem %s1, %s287
      %p289 = scmp.lt.s32.totalorder %s18, 1
      %s290 = scalar_select %p289, %s18, 1
      %s291 = smul.addr %s290, 2
      %s292 = smul.addr %s291, 4
      %s293 = scalar_lea.vmem %s2, %s292
      %p294 = scmp.lt.s32.totalorder %s18, 1
      %s295 = scalar_select %p294, %s18, 1
      %s296 = smul.addr %s295, 2
      %s297 = smul.addr %s296, 4
      %s298 = scalar_lea.vmem %s7, %s297
      %v300 = vld [vmem:[%s0] sm:$0x1]
      %301 = vst [vmem:[#allocation2] sm:$0xff] 0.0
      %302 = vst [vmem:[#allocation2 + $0x8] sm:$0xff] 0.0
      %v303 = vld [vmem:[%s288] sm:$0xf]
      %v304 = vld [vmem:[%s288 + $0x4] sm:$0xf]
      %v305 = vld [vmem:[%s288 + $0x8] sm:$0xf]
      %v306 = vld [vmem:[%s288 + $0xc] sm:$0xf]
      %v307 = vunpack.c.l.bf16 %v303
      %v308 = vunpack.c.l.bf16 %v304
      %v309 = vunpack.c.l.bf16 %v305
      %v310 = vunpack.c.l.bf16 %v306
      %v311 = vld [vmem:[%s293] sm:$0xf]
      %v312 = vld [vmem:[%s293 + $0x4] sm:$0xf]
      %v313 = vunpack.c.l.bf16 %v311
      %v314 = vunpack.c.l.bf16 %v312
      %319 = vrot.lane.b32.xlu0 %v307, 127
      %v320 = vpop.permute.xlu0 %319
      %321 = vrot.lane.b32.xlu0 %v308, 127
      %v322 = vpop.permute.xlu0 %321
      %323 = vrot.lane.b32.xlu0 %v309, 127
      %v324 = vpop.permute.xlu0 %323
      %325 = vrot.lane.b32.xlu0 %v310, 127
      %v326 = vpop.permute.xlu0 %325
      %333 = vrot.lane.b32.xlu0 %v313, 127
      %v334 = vpop.permute.xlu0 %333
      %335 = vrot.lane.b32.xlu0 %v314, 127
      %v336 = vpop.permute.xlu0 %335
      %339 = vrot.lane.b32.xlu0 %v307, 126
      %v340 = vpop.permute.xlu0 %339
      %341 = vrot.lane.b32.xlu0 %v308, 126
      %v342 = vpop.permute.xlu0 %341
      %343 = vrot.lane.b32.xlu0 %v309, 126
      %v344 = vpop.permute.xlu0 %343
      %345 = vrot.lane.b32.xlu0 %v310, 126
      %v346 = vpop.permute.xlu0 %345
      %351 = vrot.lane.b32.xlu0 %v313, 126
      %v352 = vpop.permute.xlu0 %351
      %353 = vrot.lane.b32.xlu0 %v314, 126
      %v354 = vpop.permute.xlu0 %353
      %357 = vrot.lane.b32.xlu0 %v307, 118
      %v358 = vpop.permute.xlu0 %357
      %359 = vrot.lane.b32.xlu0 %v308, 118
      %v360 = vpop.permute.xlu0 %359
      %361 = vrot.lane.b32.xlu0 %v309, 118
      %v362 = vpop.permute.xlu0 %361
      %363 = vrot.lane.b32.xlu0 %v310, 118
      %v364 = vpop.permute.xlu0 %363
      %369 = vrot.lane.b32.xlu0 %v313, 118
      %v370 = vpop.permute.xlu0 %369
      %371 = vrot.lane.b32.xlu0 %v314, 118
      %v372 = vpop.permute.xlu0 %371
      %375 = vrot.lane.b32.xlu0 %v307, 117
      %v376 = vpop.permute.xlu0 %375
      %377 = vrot.lane.b32.xlu0 %v308, 117
      %v378 = vpop.permute.xlu0 %377
      %379 = vrot.lane.b32.xlu0 %v309, 117
      %v380 = vpop.permute.xlu0 %379
      %381 = vrot.lane.b32.xlu0 %v310, 117
      %v382 = vpop.permute.xlu0 %381
      %387 = vrot.lane.b32.xlu0 %v313, 117
      %v388 = vpop.permute.xlu0 %387
      %389 = vrot.lane.b32.xlu0 %v314, 117
      %v390 = vpop.permute.xlu0 %389
      %393 = vrot.lane.b32.xlu0 %v307, 116
      %v394 = vpop.permute.xlu0 %393
      %395 = vrot.lane.b32.xlu0 %v308, 116
      %v396 = vpop.permute.xlu0 %395
      %397 = vrot.lane.b32.xlu0 %v309, 116
      %v398 = vpop.permute.xlu0 %397
      %399 = vrot.lane.b32.xlu0 %v310, 116
      %v400 = vpop.permute.xlu0 %399
      %405 = vrot.lane.b32.xlu0 %v313, 116
      %v406 = vpop.permute.xlu0 %405
      %407 = vrot.lane.b32.xlu0 %v314, 116
      %v408 = vpop.permute.xlu0 %407
      %411 = vrot.lane.b32.xlu0 %v307, 108
      %v412 = vpop.permute.xlu0 %411
      %413 = vrot.lane.b32.xlu0 %v308, 108
      %v414 = vpop.permute.xlu0 %413
      %415 = vrot.lane.b32.xlu0 %v309, 108
      %v416 = vpop.permute.xlu0 %415
      %417 = vrot.lane.b32.xlu0 %v310, 108
      %v418 = vpop.permute.xlu0 %417
      %423 = vrot.lane.b32.xlu0 %v313, 108
      %v424 = vpop.permute.xlu0 %423
      %425 = vrot.lane.b32.xlu0 %v314, 108
      %v426 = vpop.permute.xlu0 %425
      %429 = vrot.lane.b32.xlu0 %v307, 107
      %v430 = vpop.permute.xlu0 %429
      %431 = vrot.lane.b32.xlu0 %v308, 107
      %v432 = vpop.permute.xlu0 %431
      %433 = vrot.lane.b32.xlu0 %v309, 107
      %v434 = vpop.permute.xlu0 %433
      %435 = vrot.lane.b32.xlu0 %v310, 107
      %v436 = vpop.permute.xlu0 %435
      %441 = vrot.lane.b32.xlu0 %v313, 107
      %v442 = vpop.permute.xlu0 %441
      %443 = vrot.lane.b32.xlu0 %v314, 107
      %v444 = vpop.permute.xlu0 %443
      %447 = vrot.lane.b32.xlu0 %v307, 106
      %v448 = vpop.permute.xlu0 %447
      %449 = vrot.lane.b32.xlu0 %v308, 106
      %v450 = vpop.permute.xlu0 %449
      %451 = vrot.lane.b32.xlu0 %v309, 106
      %v452 = vpop.permute.xlu0 %451
      %453 = vrot.lane.b32.xlu0 %v310, 106
      %v454 = vpop.permute.xlu0 %453
      %455 = vrot.lane.b32.xlu0 %v313, 106
      %v456 = vpop.permute.xlu0 %455
      %457 = vrot.lane.b32.xlu0 %v314, 106
      %v458 = vpop.permute.xlu0 %457
      %v465 = vpack.c.bf16 %v308, %v307
      %v466 = vpack.c.bf16 %v310, %v309
      %v467 = vpack.c.bf16 %v314, %v313
      %v468 = vpack.c.bf16 %v322, %v320
      %v469 = vpack.c.bf16 %v326, %v324
      %v470 = vpack.c.bf16 %v336, %v334
      %v471 = vpack.c.bf16 %v342, %v340
      %v472 = vpack.c.bf16 %v346, %v344
      %v473 = vpack.c.bf16 %v354, %v352
      %v474 = vpack.c.bf16 %v360, %v358
      %v475 = vpack.c.bf16 %v364, %v362
      %v476 = vpack.c.bf16 %v372, %v370
      %v477 = vpack.c.bf16 %v378, %v376
      %v478 = vpack.c.bf16 %v382, %v380
      %v479 = vpack.c.bf16 %v390, %v388
      %v480 = vpack.c.bf16 %v396, %v394
      %v481 = vpack.c.bf16 %v400, %v398
      %v482 = vpack.c.bf16 %v408, %v406
      %v483 = vpack.c.bf16 %v414, %v412
      %v484 = vpack.c.bf16 %v418, %v416
      %v485 = vpack.c.bf16 %v426, %v424
      %v486 = vpack.c.bf16 %v432, %v430
      %v487 = vpack.c.bf16 %v436, %v434
      %v488 = vpack.c.bf16 %v444, %v442
      %v489 = vpack.c.bf16 %v450, %v448
      %v490 = vpack.c.bf16 %v454, %v452
      %v491 = vpack.c.bf16 %v458, %v456
      %v492 = vld [vmem:[%s4] sm:$0xff]
      %v493 = vld [vmem:[%s4 + $0x8] sm:$0xff]
      %v494 = vld [vmem:[%s3] sm:$0xff]
      %v495 = vld [vmem:[%s3 + $0x8] sm:$0xff]
      %v496 = vld [vmem:[%s3 + $0x10] sm:$0xff]
      %v497 = vld [vmem:[%s3 + $0x18] sm:$0xff]
      %499 = vset.pattern.permute.xlu0 0
      %500 = vperm.xlu0 %499, %v492
      %v501 = vpop.permute.xlu0 %500
      %504 = vset.pattern.permute.xlu0 0
      %505 = vperm.xlu0 %504, %v493
      %v506 = vpop.permute.xlu0 %505
      %v512 = vunpack.c.l.b16 %v494
      %v513 = vunpack.c.h.b16 %v494
      %v514 = vunpack.c.l.b16 %v495
      %v515 = vunpack.c.h.b16 %v495
      %v516 = vunpack.c.l.b16 %v496
      %v517 = vunpack.c.h.b16 %v496
      %v518 = vunpack.c.l.b16 %v497
      %v519 = vunpack.c.h.b16 %v497
      %v520 = vpack.c.b16 %v516, %v512
      %v521 = vpack.c.b16 %v517, %v513
      %v522 = vpack.c.b16 %v518, %v514
      %v523 = vpack.c.b16 %v519, %v515
      %vm527 = vcmask 392192
      %v529 = vsel %vm527, %v523, 0
      %531 = vmatprep.subr.bf16.mxu0 0
      %532 = vmatpush1.bf16.msra.mxu0 %v465
      %533 = vmatprep.subr.bf16.mxu0 0
      %534 = vmatpush1.bf16.msra.mxu0 %v466
      %535 = vmatprep.subr.bf16.mxu0 0
      %536 = vmatpush1.bf16.msra.mxu0 %v467
      %537 = vmatprep.subr.bf16.mxu0 0
      %538 = vmatpush1.bf16.msra.mxu0 %v468
      %539 = vmatprep.subr.bf16.mxu0 0
      %540 = vmatpush1.bf16.msra.mxu0 %v469
      %541 = vmatprep.subr.bf16.mxu0 0
      %542 = vmatpush1.bf16.msra.mxu0 %v470
      %543 = vmatprep.subr.bf16.mxu0 0
      %544 = vmatpush1.bf16.msra.mxu0 %v471
      %545 = vmatprep.subr.bf16.mxu0 0
      %546 = vmatpush1.bf16.msra.mxu0 %v472
      %547 = vmatprep.subr.bf16.mxu0 0
      %548 = vmatpush1.bf16.msra.mxu0 %v473
      %549 = vmatprep.subr.bf16.mxu0 0
      %550 = vmatpush1.bf16.msra.mxu0 %v474
      %551 = vmatprep.subr.bf16.mxu0 0
      %552 = vmatpush1.bf16.msra.mxu0 %v475
      %553 = vmatprep.subr.bf16.mxu0 0
      %554 = vmatpush1.bf16.msra.mxu0 %v476
      %555 = vmatprep.subr.bf16.mxu0 0
      %556 = vmatpush1.bf16.msra.mxu0 %v477
      %557 = vmatprep.subr.bf16.mxu0 0
      %558 = vmatpush1.bf16.msra.mxu0 %v478
      %559 = vmatprep.subr.bf16.mxu0 0
      %560 = vmatpush1.bf16.msra.mxu0 %v479
      %561 = vmatprep.subr.bf16.mxu0 0
      %562 = vmatpush1.bf16.msra.mxu0 %v480
      %563 = vmatprep.mubr.bf16.mxu0 %v521
      %564 = vmatmul.mubr.bf16.gmra.mrb[0].mxu0 %v520
      %v565 = vpop.f32.mrb[0].mxu0
      %v566 = vadd.f32 %v501, %v565
      %v567 = vpop.f32.mrb[0].mxu0
      %v568 = vpop.f32.mrb[0].mxu0
      %v569 = vadd.f32 %v506, %v568
      %v570 = vpop.f32.mrb[0].mxu0
      %571 = vdwg.mxu0
      %572 = vmatprep.subr.bf16.mxu0 0
      %573 = vmatpush1.bf16.msra.mxu0 %v481
      %574 = vmatprep.subr.bf16.mxu0 0
      %575 = vmatpush1.bf16.msra.mxu0 %v482
      %576 = vmatprep.subr.bf16.mxu0 0
      %577 = vmatpush1.bf16.msra.mxu0 %v483
      %578 = vmatprep.subr.bf16.mxu0 0
      %579 = vmatpush1.bf16.msra.mxu0 %v484
      %580 = vmatprep.subr.bf16.mxu0 0
      %581 = vmatpush1.bf16.msra.mxu0 %v485
      %582 = vmatprep.subr.bf16.mxu0 0
      %583 = vmatpush1.bf16.msra.mxu0 %v486
      %584 = vmatprep.subr.bf16.mxu0 0
      %585 = vmatpush1.bf16.msra.mxu0 %v487
      %586 = vmatprep.subr.bf16.mxu0 0
      %587 = vmatpush1.bf16.msra.mxu0 %v488
      %588 = vmatprep.subr.bf16.mxu0 0
      %589 = vmatpush1.bf16.msra.mxu0 %v489
      %590 = vmatprep.subr.bf16.mxu0 0
      %591 = vmatpush1.bf16.msra.mxu0 %v490
      %592 = vmatprep.subr.bf16.mxu0 0
      %593 = vmatpush1.bf16.msra.mxu0 %v491
      %594 = vmatprep.subr.bf16.mxu0 0
      %595 = vmatpush1.bf16.msra.mxu0 0
      %596 = vmatprep.subr.bf16.mxu0 0
      %597 = vmatpush1.bf16.msra.mxu0 0
      %598 = vmatprep.subr.bf16.mxu0 0
      %599 = vmatpush1.bf16.msra.mxu0 0
      %600 = vmatprep.subr.bf16.mxu0 0
      %601 = vmatpush1.bf16.msra.mxu0 0
      %602 = vmatprep.subr.bf16.mxu0 0
      %603 = vmatpush1.bf16.msra.mxu0 0
      %604 = vmatprep.mubr.bf16.mxu0 %v529
      %605 = vmatmul.mubr.bf16.gmra.mrb[0].mxu0 %v522
      %v606 = vpop.f32.mrb[0].mxu0
      %v607 = vadd.f32 %v566, %v606
      %v608 = vpop.f32.mrb[0].mxu0
      %v609 = vpop.f32.mrb[0].mxu0
      %v610 = vadd.f32 %v569, %v609
      %v611 = vpop.f32.mrb[0].mxu0
      %612 = vdwg.mxu0
      %v614 = vlaneseq
      %v615 = vshrl.u32 %v614, 7
      %v616 = vsub.s32 0, %v615
      %v617 = vrot.slane %v300, %v616
      %v619 = vmul.f32 %v607, %v617
      %v620 = vmul.f32 %v610, %v617
      %v621 = vmul.f32 %v619, %v607
      %v622 = vmul.f32 %v620, %v610
      %vm623 = vcmask 637952
      %v624 = vsel %vm623, %v619, 0.0
      %625 = vadd.xlane.f32.xlu0 %v624
      %v626 = vpop.xlane.xlu0 %625
      %v627 = vsel %vm623, %v620, 0.0
      %628 = vadd.xlane.f32.xlu0 %v627
      %v629 = vpop.xlane.xlu0 %628
      %v630 = vsel %vm623, %v621, 0.0
      %631 = vadd.xlane.f32.xlu0 %v630
      %v632 = vpop.xlane.xlu0 %631
      %v633 = vsel %vm623, %v622, 0.0
      %634 = vadd.xlane.f32.xlu0 %v633
      %v635 = vpop.xlane.xlu0 %634
      %v636 = vmul.f32 %v626, 0.015625
      %v637 = vmul.f32 %v629, 0.015625
      %v638 = vmul.f32 %v632, 0.015625
      %v639 = vmul.f32 %v635, 0.015625
      %v640 = vmul.f32 %v636, %v636
      %v641 = vmul.f32 %v637, %v637
      %v642 = vsub.f32 %v638, %v640
      %v643 = vsub.f32 %v639, %v641
      %v644 = vmax.f32 %v642, 0.0
      %v645 = vmax.f32 %v643, 0.0
      %v646 = vsub.f32 %v607, %v636
      %v647 = vsub.f32 %v610, %v637
      %v648 = vadd.f32 %v644, 1e-05
      %v649 = vadd.f32 %v645, 1e-05
      %v650 = vrsqrt.pop %v648
      %v651 = vrsqrt.pop %v649
      %v652 = vmul.f32 %v646, %v650
      %v653 = vmul.f32 %v647, %v651
      %654 = vset.pattern.permute.xlu0 1
      %655 = vperm.xlu0 %654, %v492
      %v656 = vpop.permute.xlu0 %655
      %658 = vset.pattern.permute.xlu0 1
      %659 = vperm.xlu0 %658, %v493
      %v660 = vpop.permute.xlu0 %659
      %v662 = vmul.f32 %v652, %v656
      %v663 = vmul.f32 %v653, %v660
      %664 = vset.pattern.permute.xlu0 2
      %665 = vperm.xlu0 %664, %v492
      %v666 = vpop.permute.xlu0 %665
      %668 = vset.pattern.permute.xlu0 2
      %669 = vperm.xlu0 %668, %v493
      %v670 = vpop.permute.xlu0 %669
      %v672 = vadd.f32 %v662, %v666
      %v673 = vadd.f32 %v663, %v670
      %vm674 = vcmp.ge.f32.partialorder %v672, 0.0
      %vm675 = vcmp.ge.f32.partialorder %v673, 0.0
      %v676 = vmul.f32 %v672, 0.01
      %v677 = vmul.f32 %v673, 0.01
      %v678 = vsel %vm674, %v672, %v676
      %v679 = vsel %vm675, %v673, %v677
      %v680 = vmul.f32 %v678, %v617
      %v681 = vmul.f32 %v679, %v617
      %684 = vrot.lane.b32.xlu0 %v680, 11
      %v685 = vpop.permute.xlu0 %684
      %686 = vrot.lane.b32.xlu0 %v681, 11
      %v687 = vpop.permute.xlu0 %686
      %vm690 = vcmask 728152
      %691 = vst.msk [vmem:[#allocation2] sm:$0xff] %vm690, %v685
      %692 = vst.msk [vmem:[#allocation2 + $0x8] sm:$0xff] %vm690, %v687
      %v693 = vld [vmem:[#allocation2] sm:$0xff]
      %v694 = vld [vmem:[#allocation2 + $0x8] sm:$0xff]
      %697 = vrot.lane.b32.xlu0 %v693, 127
      %v698 = vpop.permute.xlu0 %697
      %699 = vrot.lane.b32.xlu0 %v694, 127
      %v700 = vpop.permute.xlu0 %699
      %703 = vrot.lane.b32.xlu0 %v693, 126
      %v704 = vpop.permute.xlu0 %703
      %705 = vrot.lane.b32.xlu0 %v694, 126
      %v706 = vpop.permute.xlu0 %705
      %709 = vrot.lane.b32.xlu0 %v693, 118
      %v710 = vpop.permute.xlu0 %709
      %711 = vrot.lane.b32.xlu0 %v694, 118
      %v712 = vpop.permute.xlu0 %711
      %715 = vrot.lane.b32.xlu0 %v693, 117
      %v716 = vpop.permute.xlu0 %715
      %717 = vrot.lane.b32.xlu0 %v694, 117
      %v718 = vpop.permute.xlu0 %717
      %721 = vrot.lane.b32.xlu0 %v693, 116
      %v722 = vpop.permute.xlu0 %721
      %723 = vrot.lane.b32.xlu0 %v694, 116
      %v724 = vpop.permute.xlu0 %723
      %727 = vrot.lane.b32.xlu0 %v693, 108
      %v728 = vpop.permute.xlu0 %727
      %729 = vrot.lane.b32.xlu0 %v694, 108
      %v730 = vpop.permute.xlu0 %729
      %733 = vrot.lane.b32.xlu0 %v693, 107
      %v734 = vpop.permute.xlu0 %733
      %735 = vrot.lane.b32.xlu0 %v694, 107
      %v736 = vpop.permute.xlu0 %735
      %739 = vrot.lane.b32.xlu0 %v693, 106
      %v740 = vpop.permute.xlu0 %739
      %741 = vrot.lane.b32.xlu0 %v694, 106
      %v742 = vpop.permute.xlu0 %741
      %v745 = vpack.c.bf16 %v694, %v693
      %v746 = vpack.c.bf16 %v700, %v698
      %v747 = vpack.c.bf16 %v706, %v704
      %v748 = vpack.c.bf16 %v712, %v710
      %v749 = vpack.c.bf16 %v718, %v716
      %v750 = vpack.c.bf16 %v724, %v722
      %v751 = vpack.c.bf16 %v730, %v728
      %v752 = vpack.c.bf16 %v736, %v734
      %v753 = vpack.c.bf16 %v742, %v740
      %v754 = vld [vmem:[%s6] sm:$0xff]
      %v755 = vld [vmem:[%s6 + $0x8] sm:$0xff]
      %v756 = vld [vmem:[%s5] sm:$0xff]
      %v757 = vld [vmem:[%s5 + $0x8] sm:$0xff]
      %759 = vset.pattern.permute.xlu0 0
      %760 = vperm.xlu0 %759, %v754
      %v761 = vpop.permute.xlu0 %760
      %764 = vset.pattern.permute.xlu0 0
      %765 = vperm.xlu0 %764, %v755
      %v766 = vpop.permute.xlu0 %765
      %v770 = vunpack.c.l.b16 %v756
      %v771 = vunpack.c.h.b16 %v756
      %v772 = vunpack.c.l.b16 %v757
      %v773 = vunpack.c.h.b16 %v757
      %v774 = vpack.c.b16 %v772, %v770
      %v775 = vpack.c.b16 %v773, %v771
      %vm777 = vcmask 130048
      %v779 = vsel %vm777, %v775, 0
      %781 = vmatprep.subr.bf16.mxu0 0
      %782 = vmatpush1.bf16.msra.mxu0 %v745
      %783 = vmatprep.subr.bf16.mxu0 0
      %784 = vmatpush1.bf16.msra.mxu0 %v746
      %785 = vmatprep.subr.bf16.mxu0 0
      %786 = vmatpush1.bf16.msra.mxu0 %v747
      %787 = vmatprep.subr.bf16.mxu0 0
      %788 = vmatpush1.bf16.msra.mxu0 %v748
      %789 = vmatprep.subr.bf16.mxu0 0
      %790 = vmatpush1.bf16.msra.mxu0 %v749
      %791 = vmatprep.subr.bf16.mxu0 0
      %792 = vmatpush1.bf16.msra.mxu0 %v750
      %793 = vmatprep.subr.bf16.mxu0 0
      %794 = vmatpush1.bf16.msra.mxu0 %v751
      %795 = vmatprep.subr.bf16.mxu0 0
      %796 = vmatpush1.bf16.msra.mxu0 %v752
      %797 = vmatprep.subr.bf16.mxu0 0
      %798 = vmatpush1.bf16.msra.mxu0 %v753
      %799 = vmatprep.subr.bf16.mxu0 0
      %800 = vmatpush1.bf16.msra.mxu0 0
      %801 = vmatprep.subr.bf16.mxu0 0
      %802 = vmatpush1.bf16.msra.mxu0 0
      %803 = vmatprep.subr.bf16.mxu0 0
      %804 = vmatpush1.bf16.msra.mxu0 0
      %805 = vmatprep.subr.bf16.mxu0 0
      %806 = vmatpush1.bf16.msra.mxu0 0
      %807 = vmatprep.subr.bf16.mxu0 0
      %808 = vmatpush1.bf16.msra.mxu0 0
      %809 = vmatprep.subr.bf16.mxu0 0
      %810 = vmatpush1.bf16.msra.mxu0 0
      %811 = vmatprep.subr.bf16.mxu0 0
      %812 = vmatpush1.bf16.msra.mxu0 0
      %813 = vmatprep.mubr.bf16.mxu0 %v779
      %814 = vmatmul.mubr.bf16.gmra.mrb[0].mxu0 %v774
      %v815 = vpop.f32.mrb[0].mxu0
      %v816 = vadd.f32 %v761, %v815
      %v817 = vpop.f32.mrb[0].mxu0
      %v818 = vpop.f32.mrb[0].mxu0
      %v819 = vadd.f32 %v766, %v818
      %v820 = vpop.f32.mrb[0].mxu0
      %821 = vdwg.mxu0
      %v822 = vmul.f32 %v816, %v617
      %v823 = vmul.f32 %v819, %v617
      %v824 = vmul.f32 %v822, %v816
      %v825 = vmul.f32 %v823, %v819
      %v826 = vsel %vm623, %v822, 0.0
      %827 = vadd.xlane.f32.xlu0 %v826
      %v828 = vpop.xlane.xlu0 %827
      %v829 = vsel %vm623, %v823, 0.0
      %830 = vadd.xlane.f32.xlu0 %v829
      %v831 = vpop.xlane.xlu0 %830
      %v832 = vsel %vm623, %v824, 0.0
      %833 = vadd.xlane.f32.xlu0 %v832
      %v834 = vpop.xlane.xlu0 %833
      %v835 = vsel %vm623, %v825, 0.0
      %836 = vadd.xlane.f32.xlu0 %v835
      %v837 = vpop.xlane.xlu0 %836
      %v838 = vmul.f32 %v828, 0.015625
      %v839 = vmul.f32 %v831, 0.015625
      %v840 = vmul.f32 %v834, 0.015625
      %v841 = vmul.f32 %v837, 0.015625
      %v842 = vmul.f32 %v838, %v838
      %v843 = vmul.f32 %v839, %v839
      %v844 = vsub.f32 %v840, %v842
      %v845 = vsub.f32 %v841, %v843
      %v846 = vmax.f32 %v844, 0.0
      %v847 = vmax.f32 %v845, 0.0
      %v848 = vsub.f32 %v816, %v838
      %v849 = vsub.f32 %v819, %v839
      %v850 = vadd.f32 %v846, 1e-05
      %v851 = vadd.f32 %v847, 1e-05
      %v852 = vrsqrt.pop %v850
      %v853 = vrsqrt.pop %v851
      %v854 = vmul.f32 %v848, %v852
      %v855 = vmul.f32 %v849, %v853
      %856 = vset.pattern.permute.xlu0 1
      %857 = vperm.xlu0 %856, %v754
      %v858 = vpop.permute.xlu0 %857
      %860 = vset.pattern.permute.xlu0 1
      %861 = vperm.xlu0 %860, %v755
      %v862 = vpop.permute.xlu0 %861
      %v864 = vmul.f32 %v854, %v858
      %v865 = vmul.f32 %v855, %v862
      %866 = vset.pattern.permute.xlu0 2
      %867 = vperm.xlu0 %866, %v754
      %v868 = vpop.permute.xlu0 %867
      %870 = vset.pattern.permute.xlu0 2
      %871 = vperm.xlu0 %870, %v755
      %v872 = vpop.permute.xlu0 %871
      %v874 = vadd.f32 %v864, %v868
      %v875 = vadd.f32 %v865, %v872
      %vm876 = vcmp.ge.f32.partialorder %v874, 0.0
      %vm877 = vcmp.ge.f32.partialorder %v875, 0.0
      %v878 = vmul.f32 %v874, 0.01
      %v879 = vmul.f32 %v875, 0.01
      %v880 = vsel %vm876, %v874, %v878
      %v881 = vsel %vm877, %v875, %v879
      %v882 = vmul.f32 %v880, %v617
      %v883 = vmul.f32 %v881, %v617
      %884 = vst [vmem:[%s298] sm:$0xf] 0
      %885 = vst [vmem:[%s298 + $0x4] sm:$0xf] 0
      %v886 = vpack.c.bf16 %v883, %v882
      %v888 = vunpack.c.l.b16 %v886
      %v889 = vunpack.c.h.b16 %v886
      %v890 = vpack.c.b16 %v888, %v888
      %v891 = vpack.c.b16 %v889, %v889
      %892 = vrot.lane.b32.xlu0 %v890, 11
      %v893 = vpop.permute.xlu0 %892
      %894 = vrot.lane.b32.xlu0 %v891, 11
      %v895 = vpop.permute.xlu0 %894
      %vm898 = vcmask 724056
      %899 = vst.msk [vmem:[%s298] sm:$0xf] %vm898, %v893
      %900 = vst.msk [vmem:[%s298 + $0x4] sm:$0xf] %vm898, %v895
      %p901 = scmp.lt.s32.totalorder %s18, 1
      %s902 = scalar_select %p901, %s18, 1
      %s903 = smul.addr %s902, 2
      %s904 = smul.addr %s903, 4
      %s905 = scalar_lea.vmem %s7, %s904
      // Predicated region
      $region49: #{autoencoder_forward.8} parent=47 // pred_check
        %p906 = pneg %p193
      $region50: #{autoencoder_forward.8} parent=47 // pred_check_branch
        %908 = sbr.rel (%p906) target = $region52
      $region51: #{autoencoder_forward.8} parent=47 // pred_region
        _
      $region52: #{autoencoder_forward.8} parent=47 // pred_fallthru
        _
    $region48: #{autoencoder_forward.8} parent=5 // pred_fallthru
      _
    %p909 = scmp.le.s32.totalorder 2, %s13
    // Predicated region
    $region53: #{autoencoder_forward.8} parent=5 // pred_check
      %p910 = pneg %p909
    $region54: #{autoencoder_forward.8} parent=5 // pred_check_branch
      %912 = sbr.rel (%p910) target = $region56
    $region55: #{autoencoder_forward.8} parent=5 // pred_region
      %s913 = ssub.s32 %s13, 2
      // Predicated region
      $region57: #{autoencoder_forward.8} parent=55 // pred_check
        %p914 = pneg %p199
      $region58: #{autoencoder_forward.8} parent=55 // pred_check_branch
        %916 = sbr.rel (%p914) target = $region60
      $region59: #{autoencoder_forward.8} parent=55 // pred_region
        %p917 = scmp.lt.s32.totalorder %s19, 1
        %s918 = scalar_select %p917, %s19, 1
        %s919 = smul.addr %s918, 2
        %s920 = smul.addr %s919, 4
        %s921 = scalar_lea.vmem %s7, %s920
      $region60: #{autoencoder_forward.8} parent=55 // pred_fallthru
        _
    $region56: #{autoencoder_forward.8} parent=5 // pred_fallthru
      _
  $region6: #{autoencoder_forward.8} parent=0 // loop_footer
    %s17 = sadd.s32 1, %s13
  $region7: #{autoencoder_forward.8} parent=0 // loop_footer_branch
    %12 = sbr.rel target = $region3
  $region8: #{autoencoder_forward.8} parent=0 // loop_exit
    _

// kernel: autoencoder_forward.9
$region0: #{autoencoder_forward.9}
  #allocation0 [shape = 'u32[]', space=smem, size = 0x4, offset = 0x4, fixed_abs, tag = 'smem constant byte address 0x4 - core index']
  #allocation1 [shape = 'u32[144,128]{1,0:T(1,128)}', space=vmem, size = 0x12000, scoped, tag = 'internal scratch']
  #allocation2 [shape = 'f32[8,384]{1,0:T(8,128)}', space=vmem, size = 0x3000, scoped, tag = 'scratch operand']
  %s0 = inlined_call_operand.vmem [shape: f32[1,384], index: 0, kind: input, shape index: {}]
  %s1 = inlined_call_operand.vmem [shape: bf16[2,16,384], index: 1, kind: input, shape index: {}]
  %s2 = inlined_call_operand.vmem [shape: bf16[2,8,384], index: 2, kind: input, shape index: {}]
  %s3 = inlined_call_operand.vmem [shape: bf16[8,216], index: 3, kind: input, shape index: {}]
  %s4 = inlined_call_operand.vmem [shape: f32[8,3], index: 4, kind: input, shape index: {}]
  %s5 = inlined_call_operand.vmem [shape: bf16[8,72], index: 5, kind: input, shape index: {}]
  %s6 = inlined_call_operand.vmem [shape: f32[8,3], index: 6, kind: input, shape index: {}]
  %s7 = inlined_call_operand.vmem [shape: bf16[3,72], index: 7, kind: input, shape index: {}]
  %s8 = inlined_call_operand.vmem [shape: f32[3,3], index: 8, kind: input, shape index: {}]
  %s9 = inlined_call_operand.vmem [shape: f32[2,3,384], index: 9, kind: output, shape index: {}]
  %s10 = sld [smem:[#allocation0]]
  $region69: #{autoencoder_forward.9} parent=0
    _
  %s12 = ssub.s32 1, %s10
  %s13 = scalar_select 0, %s12, %s10
  loop: start=0, step=1, limit=4
  $region2: #{autoencoder_forward.9} parent=0 // loop_pre_header
    _
  $region3: #{autoencoder_forward.9} parent=0 // loop_header
    %s15 = sphi 0, %s19
    %p16 = scmp.ge.s32.totalorder %s15, 4
    %s23 = sphi 0, %s23
    %s25 = sphi 0, %s23
    %s26 = sphi 0, %s25
    %s40 = sphi 0, %s26
    %s46 = sphi 0, %s48
    %s49 = sphi 0, %s46
    %s50 = sphi 0, %s49
    %s66 = sphi 0, %s50
    %s72 = sphi 0, %s74
    %s75 = sphi 0, %s72
    %s76 = sphi 0, %s75
    %s92 = sphi 0, %s76
    %s96 = sphi 0, %s96
    %s98 = sphi 0, %s96
    %s99 = sphi 0, %s98
    %s113 = sphi 0, %s99
    %s117 = sphi 0, %s117
    %s119 = sphi 0, %s117
    %s120 = sphi 0, %s119
    %s134 = sphi 0, %s120
    %s138 = sphi 0, %s138
    %s140 = sphi 0, %s138
    %s141 = sphi 0, %s140
    %s155 = sphi 0, %s141
    %s159 = sphi 0, %s159
    %s161 = sphi 0, %s159
    %s162 = sphi 0, %s161
    %s176 = sphi 0, %s162
    %s180 = sphi 0, %s180
    %s182 = sphi 0, %s180
    %s183 = sphi 0, %s182
    %s197 = sphi 0, %s183
    %s201 = sphi 0, %s201
    %s203 = sphi 0, %s201
    %s204 = sphi 0, %s203
    %s218 = sphi 0, %s204
    %s224 = sphi 0, %s226
    %s227 = sphi 0, %s224
    %s228 = sphi 0, %s227
    %s244 = sphi 0, %s228
  $region4: #{autoencoder_forward.9} parent=0 // loop_header_branch
    %18 = sbr.rel (%p16) target = $region8
  $region5: #{autoencoder_forward.9} parent=0 // loop_body
    %s20 = ssub.s32 %s15, 1
    %s21 = ssub.s32 %s15, 2
    %s22 = sadd.s32 %s15, 1
    %s24 = sadd.s32 %s23, 1
    %p27 = scmp.eq.s32.totalorder %s15, 1
    %p28 = scmp.ne.s32.totalorder %s23, %s25
    %p29 = scmp.eq.s32.totalorder %s15, 0
    %p30 = por %p28, %p29
    %p31 = scmp.ne.s32.totalorder %s23, %s25
    %p32 = scmp.eq.s32.totalorder %s20, 1
    %p33 = por %p31, %p32
    %p34 = scmp.ne.s32.totalorder %s25, %s26
    %p35 = scmp.eq.s32.totalorder %s20, 0
    %p36 = por %p34, %p35
    %p37 = scmp.ne.s32.totalorder %s25, %s26
    %p38 = scmp.eq.s32.totalorder %s21, 1
    %p39 = por %p37, %p38
    %p41 = scmp.ne.s32.totalorder %s26, %s40
    %p42 = scmp.eq.s32.totalorder %s21, 0
    %p43 = por %p41, %p42
    %s44 = ssub.s32 %s15, %s22
    %p45 = scmp.eq.s32.totalorder %s44, 0
    %s47 = sadd.s32 %s46, 1
    %s48 = scalar_select %p45, %s46, %s47
    %p51 = pneg %p45
    %p52 = scmp.eq.s32.totalorder %s15, 1
    %p53 = por %p51, %p52
    %p54 = scmp.ne.s32.totalorder %s46, %s49
    %p55 = scmp.eq.s32.totalorder %s15, 0
    %p56 = por %p54, %p55
    %p57 = scmp.ne.s32.totalorder %s46, %s49
    %p58 = scmp.eq.s32.totalorder %s20, 1
    %p59 = por %p57, %p58
    %p60 = scmp.ne.s32.totalorder %s49, %s50
    %p61 = scmp.eq.s32.totalorder %s20, 0
    %p62 = por %p60, %p61
    %p63 = scmp.ne.s32.totalorder %s49, %s50
    %p64 = scmp.eq.s32.totalorder %s21, 1
    %p65 = por %p63, %p64
    %p67 = scmp.ne.s32.totalorder %s50, %s66
    %p68 = scmp.eq.s32.totalorder %s21, 0
    %p69 = por %p67, %p68
    %s70 = ssub.s32 %s15, %s22
    %p71 = scmp.eq.s32.totalorder %s70, 0
    %s73 = sadd.s32 %s72, 1
    %s74 = scalar_select %p71, %s72, %s73
    %p77 = pneg %p71
    %p78 = scmp.eq.s32.totalorder %s15, 1
    %p79 = por %p77, %p78
    %p80 = scmp.ne.s32.totalorder %s72, %s75
    %p81 = scmp.eq.s32.totalorder %s15, 0
    %p82 = por %p80, %p81
    %p83 = scmp.ne.s32.totalorder %s72, %s75
    %p84 = scmp.eq.s32.totalorder %s20, 1
    %p85 = por %p83, %p84
    %p86 = scmp.ne.s32.totalorder %s75, %s76
    %p87 = scmp.eq.s32.totalorder %s20, 0
    %p88 = por %p86, %p87
    %p89 = scmp.ne.s32.totalorder %s75, %s76
    %p90 = scmp.eq.s32.totalorder %s21, 1
    %p91 = por %p89, %p90
    %p93 = scmp.ne.s32.totalorder %s76, %s92
    %p94 = scmp.eq.s32.totalorder %s21, 0
    %p95 = por %p93, %p94
    %s97 = sadd.s32 %s96, 1
    %p100 = scmp.eq.s32.totalorder %s15, 1
    %p101 = scmp.ne.s32.totalorder %s96, %s98
    %p102 = scmp.eq.s32.totalorder %s15, 0
    %p103 = por %p101, %p102
    %p104 = scmp.ne.s32.totalorder %s96, %s98
    %p105 = scmp.eq.s32.totalorder %s20, 1
    %p106 = por %p104, %p105
    %p107 = scmp.ne.s32.totalorder %s98, %s99
    %p108 = scmp.eq.s32.totalorder %s20, 0
    %p109 = por %p107, %p108
    %p110 = scmp.ne.s32.totalorder %s98, %s99
    %p111 = scmp.eq.s32.totalorder %s21, 1
    %p112 = por %p110, %p111
    %p114 = scmp.ne.s32.totalorder %s99, %s113
    %p115 = scmp.eq.s32.totalorder %s21, 0
    %p116 = por %p114, %p115
    %s118 = sadd.s32 %s117, 1
    %p121 = scmp.eq.s32.totalorder %s15, 1
    %p122 = scmp.ne.s32.totalorder %s117, %s119
    %p123 = scmp.eq.s32.totalorder %s15, 0
    %p124 = por %p122, %p123
    %p125 = scmp.ne.s32.totalorder %s117, %s119
    %p126 = scmp.eq.s32.totalorder %s20, 1
    %p127 = por %p125, %p126
    %p128 = scmp.ne.s32.totalorder %s119, %s120
    %p129 = scmp.eq.s32.totalorder %s20, 0
    %p130 = por %p128, %p129
    %p131 = scmp.ne.s32.totalorder %s119, %s120
    %p132 = scmp.eq.s32.totalorder %s21, 1
    %p133 = por %p131, %p132
    %p135 = scmp.ne.s32.totalorder %s120, %s134
    %p136 = scmp.eq.s32.totalorder %s21, 0
    %p137 = por %p135, %p136
    %s139 = sadd.s32 %s138, 1
    %p142 = scmp.eq.s32.totalorder %s15, 1
    %p143 = scmp.ne.s32.totalorder %s138, %s140
    %p144 = scmp.eq.s32.totalorder %s15, 0
    %p145 = por %p143, %p144
    %p146 = scmp.ne.s32.totalorder %s138, %s140
    %p147 = scmp.eq.s32.totalorder %s20, 1
    %p148 = por %p146, %p147
    %p149 = scmp.ne.s32.totalorder %s140, %s141
    %p150 = scmp.eq.s32.totalorder %s20, 0
    %p151 = por %p149, %p150
    %p152 = scmp.ne.s32.totalorder %s140, %s141
    %p153 = scmp.eq.s32.totalorder %s21, 1
    %p154 = por %p152, %p153
    %p156 = scmp.ne.s32.totalorder %s141, %s155
    %p157 = scmp.eq.s32.totalorder %s21, 0
    %p158 = por %p156, %p157
    %s160 = sadd.s32 %s159, 1
    %p163 = scmp.eq.s32.totalorder %s15, 1
    %p164 = scmp.ne.s32.totalorder %s159, %s161
    %p165 = scmp.eq.s32.totalorder %s15, 0
    %p166 = por %p164, %p165
    %p167 = scmp.ne.s32.totalorder %s159, %s161
    %p168 = scmp.eq.s32.totalorder %s20, 1
    %p169 = por %p167, %p168
    %p170 = scmp.ne.s32.totalorder %s161, %s162
    %p171 = scmp.eq.s32.totalorder %s20, 0
    %p172 = por %p170, %p171
    %p173 = scmp.ne.s32.totalorder %s161, %s162
    %p174 = scmp.eq.s32.totalorder %s21, 1
    %p175 = por %p173, %p174
    %p177 = scmp.ne.s32.totalorder %s162, %s176
    %p178 = scmp.eq.s32.totalorder %s21, 0
    %p179 = por %p177, %p178
    %s181 = sadd.s32 %s180, 1
    %p184 = scmp.eq.s32.totalorder %s15, 1
    %p185 = scmp.ne.s32.totalorder %s180, %s182
    %p186 = scmp.eq.s32.totalorder %s15, 0
    %p187 = por %p185, %p186
    %p188 = scmp.ne.s32.totalorder %s180, %s182
    %p189 = scmp.eq.s32.totalorder %s20, 1
    %p190 = por %p188, %p189
    %p191 = scmp.ne.s32.totalorder %s182, %s183
    %p192 = scmp.eq.s32.totalorder %s20, 0
    %p193 = por %p191, %p192
    %p194 = scmp.ne.s32.totalorder %s182, %s183
    %p195 = scmp.eq.s32.totalorder %s21, 1
    %p196 = por %p194, %p195
    %p198 = scmp.ne.s32.totalorder %s183, %s197
    %p199 = scmp.eq.s32.totalorder %s21, 0
    %p200 = por %p198, %p199
    %s202 = sadd.s32 %s201, 1
    %p205 = scmp.eq.s32.totalorder %s15, 1
    %p206 = scmp.ne.s32.totalorder %s201, %s203
    %p207 = scmp.eq.s32.totalorder %s15, 0
    %p208 = por %p206, %p207
    %p209 = scmp.ne.s32.totalorder %s201, %s203
    %p210 = scmp.eq.s32.totalorder %s20, 1
    %p211 = por %p209, %p210
    %p212 = scmp.ne.s32.totalorder %s203, %s204
    %p213 = scmp.eq.s32.totalorder %s20, 0
    %p214 = por %p212, %p213
    %p215 = scmp.ne.s32.totalorder %s203, %s204
    %p216 = scmp.eq.s32.totalorder %s21, 1
    %p217 = por %p215, %p216
    %p219 = scmp.ne.s32.totalorder %s204, %s218
    %p220 = scmp.eq.s32.totalorder %s21, 0
    %p221 = por %p219, %p220
    %s222 = ssub.s32 %s15, %s22
    %p223 = scmp.eq.s32.totalorder %s222, 0
    %s225 = sadd.s32 %s224, 1
    %s226 = scalar_select %p223, %s224, %s225
    %p229 = pneg %p223
    %p230 = scmp.eq.s32.totalorder %s15, 1
    %p231 = por %p229, %p230
    %p232 = scmp.ne.s32.totalorder %s224, %s227
    %p233 = scmp.eq.s32.totalorder %s15, 0
    %p234 = por %p232, %p233
    %p235 = scmp.ne.s32.totalorder %s224, %s227
    %p236 = scmp.eq.s32.totalorder %s20, 1
    %p237 = por %p235, %p236
    %p238 = scmp.ne.s32.totalorder %s227, %s228
    %p239 = scmp.eq.s32.totalorder %s20, 0
    %p240 = por %p238, %p239
    %p241 = scmp.ne.s32.totalorder %s227, %s228
    %p242 = scmp.eq.s32.totalorder %s21, 1
    %p243 = por %p241, %p242
    %p245 = scmp.ne.s32.totalorder %s228, %s244
    %p246 = scmp.eq.s32.totalorder %s21, 0
    %p247 = por %p245, %p246
    %p248 = scmp.le.s32.totalorder 1, %s15
    %p249 = scmp.lt.s32.totalorder %s15, 3
    %p250 = pnand %p248, %p249
    %p251 = pneg %p250
    // Predicated region
    $region9: #{autoencoder_forward.9} parent=5 // pred_check
      _
    $region10: #{autoencoder_forward.9} parent=5 // pred_check_branch
      %253 = sbr.rel (%p250) target = $region12
    $region11: #{autoencoder_forward.9} parent=5 // pred_region
      %s254 = ssub.s32 %s15, 1
      // Predicated region
      $region13: #{autoencoder_forward.9} parent=11 // pred_check
        %p255 = pneg %p36
      $region14: #{autoencoder_forward.9} parent=11 // pred_check_branch
        %257 = sbr.rel (%p255) target = $region16
      $region15: #{autoencoder_forward.9} parent=11 // pred_region
        _
      $region16: #{autoencoder_forward.9} parent=11 // pred_fallthru
        _
      // Predicated region
      $region17: #{autoencoder_forward.9} parent=11 // pred_check
        %p258 = pneg %p109
      $region18: #{autoencoder_forward.9} parent=11 // pred_check_branch
        %260 = sbr.rel (%p258) target = $region20
      $region19: #{autoencoder_forward.9} parent=11 // pred_region
        _
      $region20: #{autoencoder_forward.9} parent=11 // pred_fallthru
        _
      // Predicated region
      $region21: #{autoencoder_forward.9} parent=11 // pred_check
        %p261 = pneg %p130
      $region22: #{autoencoder_forward.9} parent=11 // pred_check_branch
        %263 = sbr.rel (%p261) target = $region24
      $region23: #{autoencoder_forward.9} parent=11 // pred_region
        _
      $region24: #{autoencoder_forward.9} parent=11 // pred_fallthru
        _
      // Predicated region
      $region25: #{autoencoder_forward.9} parent=11 // pred_check
        %p264 = pneg %p151
      $region26: #{autoencoder_forward.9} parent=11 // pred_check_branch
        %266 = sbr.rel (%p264) target = $region28
      $region27: #{autoencoder_forward.9} parent=11 // pred_region
        _
      $region28: #{autoencoder_forward.9} parent=11 // pred_fallthru
        _
      // Predicated region
      $region29: #{autoencoder_forward.9} parent=11 // pred_check
        %p267 = pneg %p172
      $region30: #{autoencoder_forward.9} parent=11 // pred_check_branch
        %269 = sbr.rel (%p267) target = $region32
      $region31: #{autoencoder_forward.9} parent=11 // pred_region
        _
      $region32: #{autoencoder_forward.9} parent=11 // pred_fallthru
        _
      // Predicated region
      $region33: #{autoencoder_forward.9} parent=11 // pred_check
        %p270 = pneg %p193
      $region34: #{autoencoder_forward.9} parent=11 // pred_check_branch
        %272 = sbr.rel (%p270) target = $region36
      $region35: #{autoencoder_forward.9} parent=11 // pred_region
        _
      $region36: #{autoencoder_forward.9} parent=11 // pred_fallthru
        _
      // Predicated region
      $region37: #{autoencoder_forward.9} parent=11 // pred_check
        %p273 = pneg %p214
      $region38: #{autoencoder_forward.9} parent=11 // pred_check_branch
        %275 = sbr.rel (%p273) target = $region40
      $region39: #{autoencoder_forward.9} parent=11 // pred_region
        _
      $region40: #{autoencoder_forward.9} parent=11 // pred_fallthru
        _
    $region12: #{autoencoder_forward.9} parent=5 // pred_fallthru
      _
    %p276 = scmp.lt.s32.totalorder %s15, 2
    // Predicated region
    $region41: #{autoencoder_forward.9} parent=5 // pred_check
      %p277 = pneg %p276
    $region42: #{autoencoder_forward.9} parent=5 // pred_check_branch
      %279 = sbr.rel (%p277) target = $region44
    $region43: #{autoencoder_forward.9} parent=5 // pred_region
      // Predicated region
      $region45: #{autoencoder_forward.9} parent=43 // pred_check
        %p280 = pneg %p56
      $region46: #{autoencoder_forward.9} parent=43 // pred_check_branch
        %282 = sbr.rel (%p280) target = $region48
      $region47: #{autoencoder_forward.9} parent=43 // pred_region
        %p283 = scmp.lt.s32.totalorder %s15, 1
        %s284 = scalar_select %p283, %s15, 1
        %s285 = smul.addr %s284, 6
        %s286 = smul.addr %s285, 4
        %s287 = scalar_lea.vmem %s1, %s286
      $region48: #{autoencoder_forward.9} parent=43 // pred_fallthru
        _
      // Predicated region
      $region49: #{autoencoder_forward.9} parent=43 // pred_check
        %p288 = pneg %p82
      $region50: #{autoencoder_forward.9} parent=43 // pred_check_branch
        %290 = sbr.rel (%p288) target = $region52
      $region51: #{autoencoder_forward.9} parent=43 // pred_region
        %p291 = scmp.lt.s32.totalorder %s15, 1
        %s292 = scalar_select %p291, %s15, 1
        %s293 = smul.addr %s292, 3
        %s294 = smul.addr %s293, 4
        %s295 = scalar_lea.vmem %s2, %s294
      $region52: #{autoencoder_forward.9} parent=43 // pred_fallthru
        _
    $region44: #{autoencoder_forward.9} parent=5 // pred_fallthru
      _
    %p296 = scmp.le.s32.totalorder 1, %s15
    %p297 = scmp.lt.s32.totalorder %s15, 3
    %p298 = pnand %p296, %p297
    %p299 = pneg %p298
    // Predicated region
    $region53: #{autoencoder_forward.9} parent=5 // pred_check
      _
    $region54: #{autoencoder_forward.9} parent=5 // pred_check_branch
      %301 = sbr.rel (%p298) target = $region56
    $region55: #{autoencoder_forward.9} parent=5 // pred_region
      %s302 = ssub.s32 %s15, 1
      %p303 = pneg %p36
      %p304 = pneg %p33
      %p305 = scmp.lt.s32.totalorder %s20, 1
      %s306 = scalar_select %p305, %s20, 1
      %s307 = smul.addr %s306, 6
      %s308 = smul.addr %s307, 4
      %s309 = scalar_lea.vmem %s1, %s308
      %p310 = pneg %p62
      %p311 = pneg %p59
      %p312 = scmp.lt.s32.totalorder %s20, 1
      %s313 = scalar_select %p312, %s20, 1
      %s314 = smul.addr %s313, 3
      %s315 = smul.addr %s314, 4
      %s316 = scalar_lea.vmem %s2, %s315
      %p317 = pneg %p88
      %p318 = pneg %p85
      %p319 = pneg %p109
      %p320 = pneg %p106
      %p321 = pneg %p130
      %p322 = pneg %p127
      %p323 = pneg %p151
      %p324 = pneg %p148
      %p325 = pneg %p172
      %p326 = pneg %p169
      %p327 = pneg %p193
      %p328 = pneg %p190
      %p329 = pneg %p214
      %p330 = pneg %p211
      %p331 = pneg %p240
      %p332 = pneg %p237
      %p333 = scmp.lt.s32.totalorder %s20, 1
      %s334 = scalar_select %p333, %s20, 1
      %s335 = smul.addr %s334, 3
      %s336 = smul.addr %s335, 4
      %s337 = scalar_lea.vmem %s9, %s336
      %p338 = scmp.lt.s32.totalorder %s20, 1
      %s339 = scalar_select %p338, %s20, 1
      %s340 = smul.addr %s339, 6
      %s341 = smul.addr %s340, 4
      %s342 = scalar_lea.vmem %s1, %s341
      %p343 = scmp.lt.s32.totalorder %s20, 1
      %s344 = scalar_select %p343, %s20, 1
      %s345 = smul.addr %s344, 3
      %s346 = smul.addr %s345, 4
      %s347 = scalar_lea.vmem %s2, %s346
      %p348 = scmp.lt.s32.totalorder %s20, 1
      %s349 = scalar_select %p348, %s20, 1
      %s350 = smul.addr %s349, 3
      %s351 = smul.addr %s350, 4
      %s352 = scalar_lea.vmem %s9, %s351
      %v354 = vld [vmem:[%s0] sm:$0x7]
      %355 = vst [vmem:[#allocation2] sm:$0xff] 0.0
      %356 = vst [vmem:[#allocation2 + $0x8] sm:$0xff] 0.0
      %357 = vst [vmem:[#allocation2 + $0x10] sm:$0xff] 0.0
      %v358 = vld [vmem:[%s342] sm:$0xff]
      %v359 = vld [vmem:[%s342 + $0x8] sm:$0xf]
      %v360 = vld [vmem:[%s342 + $0xc] sm:$0xff]
      %v361 = vld [vmem:[%s342 + $0x14] sm:$0xf]
      %v362 = vunpack.c.l.bf16 %v358
      %v363 = vunpack.c.h.bf16 %v358
      %v364 = vunpack.c.l.bf16 %v359
      %v365 = vunpack.c.l.bf16 %v360
      %v366 = vunpack.c.h.bf16 %v360
      %v367 = vunpack.c.l.bf16 %v361
      %v368 = vld [vmem:[%s347] sm:$0xff]
      %v369 = vld [vmem:[%s347 + $0x8] sm:$0xf]
      %v370 = vunpack.c.l.bf16 %v368
      %v371 = vunpack.c.h.bf16 %v368
      %v372 = vunpack.c.l.bf16 %v369
      %379 = vrot.lane.b32.xlu0 %v362, 127
      %v380 = vpop.permute.xlu0 %379
      %381 = vrot.lane.b32.xlu0 %v363, 127
      %v382 = vpop.permute.xlu0 %381
      %383 = vrot.lane.b32.xlu0 %v364, 127
      %v384 = vpop.permute.xlu0 %383
      %385 = vrot.lane.b32.xlu0 %v365, 127
      %v386 = vpop.permute.xlu0 %385
      %387 = vrot.lane.b32.xlu0 %v366, 127
      %v388 = vpop.permute.xlu0 %387
      %389 = vrot.lane.b32.xlu0 %v367, 127
      %v390 = vpop.permute.xlu0 %389
      %vm391 = vcmask 1039360
      %v392 = vsel %vm391, %v380, %v382
      %v393 = vsel %vm391, %v382, %v384
      %v394 = vsel %vm391, %v386, %v388
      %v395 = vsel %vm391, %v388, %v390
      %405 = vrot.lane.b32.xlu0 %v370, 127
      %v406 = vpop.permute.xlu0 %405
      %407 = vrot.lane.b32.xlu0 %v371, 127
      %v408 = vpop.permute.xlu0 %407
      %409 = vrot.lane.b32.xlu0 %v372, 127
      %v410 = vpop.permute.xlu0 %409
      %v411 = vsel %vm391, %v406, %v408
      %v412 = vsel %vm391, %v408, %v410
      %416 = vrot.lane.b32.xlu0 %v362, 126
      %v417 = vpop.permute.xlu0 %416
      %418 = vrot.lane.b32.xlu0 %v363, 126
      %v419 = vpop.permute.xlu0 %418
      %420 = vrot.lane.b32.xlu0 %v364, 126
      %v421 = vpop.permute.xlu0 %420
      %422 = vrot.lane.b32.xlu0 %v365, 126
      %v423 = vpop.permute.xlu0 %422
      %424 = vrot.lane.b32.xlu0 %v366, 126
      %v425 = vpop.permute.xlu0 %424
      %426 = vrot.lane.b32.xlu0 %v367, 126
      %v427 = vpop.permute.xlu0 %426
      %vm428 = vcmask 1031168
      %v429 = vsel %vm428, %v417, %v419
      %v430 = vsel %vm428, %v419, %v421
      %v431 = vsel %vm428, %v423, %v425
      %v432 = vsel %vm428, %v425, %v427
      %439 = vrot.lane.b32.xlu0 %v370, 126
      %v440 = vpop.permute.xlu0 %439
      %441 = vrot.lane.b32.xlu0 %v371, 126
      %v442 = vpop.permute.xlu0 %441
      %443 = vrot.lane.b32.xlu0 %v372, 126
      %v444 = vpop.permute.xlu0 %443
      %v445 = vsel %vm428, %v440, %v442
      %v446 = vsel %vm428, %v442, %v444
      %450 = vrot.lane.b32.xlu0 %v362, 110
      %v451 = vpop.permute.xlu0 %450
      %452 = vrot.lane.b32.xlu0 %v363, 110
      %v453 = vpop.permute.xlu0 %452
      %454 = vrot.lane.b32.xlu0 %v364, 110
      %v455 = vpop.permute.xlu0 %454
      %456 = vrot.lane.b32.xlu0 %v365, 110
      %v457 = vpop.permute.xlu0 %456
      %458 = vrot.lane.b32.xlu0 %v366, 110
      %v459 = vpop.permute.xlu0 %458
      %460 = vrot.lane.b32.xlu0 %v367, 110
      %v461 = vpop.permute.xlu0 %460
      %vm462 = vcmask 900096
      %v463 = vsel %vm462, %v451, %v453
      %v464 = vsel %vm462, %v453, %v455
      %v465 = vsel %vm462, %v457, %v459
      %v466 = vsel %vm462, %v459, %v461
      %473 = vrot.lane.b32.xlu0 %v370, 110
      %v474 = vpop.permute.xlu0 %473
      %475 = vrot.lane.b32.xlu0 %v371, 110
      %v476 = vpop.permute.xlu0 %475
      %477 = vrot.lane.b32.xlu0 %v372, 110
      %v478 = vpop.permute.xlu0 %477
      %v479 = vsel %vm462, %v474, %v476
      %v480 = vsel %vm462, %v476, %v478
      %484 = vrot.lane.b32.xlu0 %v362, 109
      %v485 = vpop.permute.xlu0 %484
      %486 = vrot.lane.b32.xlu0 %v363, 109
      %v487 = vpop.permute.xlu0 %486
      %488 = vrot.lane.b32.xlu0 %v364, 109
      %v489 = vpop.permute.xlu0 %488
      %490 = vrot.lane.b32.xlu0 %v365, 109
      %v491 = vpop.permute.xlu0 %490
      %492 = vrot.lane.b32.xlu0 %v366, 109
      %v493 = vpop.permute.xlu0 %492
      %494 = vrot.lane.b32.xlu0 %v367, 109
      %v495 = vpop.permute.xlu0 %494
      %vm496 = vcmask 891904
      %v497 = vsel %vm496, %v485, %v487
      %v498 = vsel %vm496, %v487, %v489
      %v499 = vsel %vm496, %v491, %v493
      %v500 = vsel %vm496, %v493, %v495
      %507 = vrot.lane.b32.xlu0 %v370, 109
      %v508 = vpop.permute.xlu0 %507
      %509 = vrot.lane.b32.xlu0 %v371, 109
      %v510 = vpop.permute.xlu0 %509
      %511 = vrot.lane.b32.xlu0 %v372, 109
      %v512 = vpop.permute.xlu0 %511
      %v513 = vsel %vm496, %v508, %v510
      %v514 = vsel %vm496, %v510, %v512
      %518 = vrot.lane.b32.xlu0 %v362, 108
      %v519 = vpop.permute.xlu0 %518
      %520 = vrot.lane.b32.xlu0 %v363, 108
      %v521 = vpop.permute.xlu0 %520
      %522 = vrot.lane.b32.xlu0 %v364, 108
      %v523 = vpop.permute.xlu0 %522
      %524 = vrot.lane.b32.xlu0 %v365, 108
      %v525 = vpop.permute.xlu0 %524
      %526 = vrot.lane.b32.xlu0 %v366, 108
      %v527 = vpop.permute.xlu0 %526
      %528 = vrot.lane.b32.xlu0 %v367, 108
      %v529 = vpop.permute.xlu0 %528
      %vm530 = vcmask 883712
      %v531 = vsel %vm530, %v519, %v521
      %v532 = vsel %vm530, %v521, %v523
      %v533 = vsel %vm530, %v525, %v527
      %v534 = vsel %vm530, %v527, %v529
      %541 = vrot.lane.b32.xlu0 %v370, 108
      %v542 = vpop.permute.xlu0 %541
      %543 = vrot.lane.b32.xlu0 %v371, 108
      %v544 = vpop.permute.xlu0 %543
      %545 = vrot.lane.b32.xlu0 %v372, 108
      %v546 = vpop.permute.xlu0 %545
      %v547 = vsel %vm530, %v542, %v544
      %v548 = vsel %vm530, %v544, %v546
      %552 = vrot.lane.b32.xlu0 %v362, 92
      %v553 = vpop.permute.xlu0 %552
      %554 = vrot.lane.b32.xlu0 %v363, 92
      %v555 = vpop.permute.xlu0 %554
      %556 = vrot.lane.b32.xlu0 %v364, 92
      %v557 = vpop.permute.xlu0 %556
      %558 = vrot.lane.b32.xlu0 %v365, 92
      %v559 = vpop.permute.xlu0 %558
      %560 = vrot.lane.b32.xlu0 %v366, 92
      %v561 = vpop.permute.xlu0 %560
      %562 = vrot.lane.b32.xlu0 %v367, 92
      %v563 = vpop.permute.xlu0 %562
      %vm564 = vcmask 752640
      %v565 = vsel %vm564, %v553, %v555
      %v566 = vsel %vm564, %v555, %v557
      %v567 = vsel %vm564, %v559, %v561
      %v568 = vsel %vm564, %v561, %v563
      %575 = vrot.lane.b32.xlu0 %v370, 92
      %v576 = vpop.permute.xlu0 %575
      %577 = vrot.lane.b32.xlu0 %v371, 92
      %v578 = vpop.permute.xlu0 %577
      %579 = vrot.lane.b32.xlu0 %v372, 92
      %v580 = vpop.permute.xlu0 %579
      %v581 = vsel %vm564, %v576, %v578
      %v582 = vsel %vm564, %v578, %v580
      %586 = vrot.lane.b32.xlu0 %v362, 91
      %v587 = vpop.permute.xlu0 %586
      %588 = vrot.lane.b32.xlu0 %v363, 91
      %v589 = vpop.permute.xlu0 %588
      %590 = vrot.lane.b32.xlu0 %v364, 91
      %v591 = vpop.permute.xlu0 %590
      %592 = vrot.lane.b32.xlu0 %v365, 91
      %v593 = vpop.permute.xlu0 %592
      %594 = vrot.lane.b32.xlu0 %v366, 91
      %v595 = vpop.permute.xlu0 %594
      %596 = vrot.lane.b32.xlu0 %v367, 91
      %v597 = vpop.permute.xlu0 %596
      %vm598 = vcmask 744448
      %v599 = vsel %vm598, %v587, %v589
      %v600 = vsel %vm598, %v589, %v591
      %v601 = vsel %vm598, %v593, %v595
      %v602 = vsel %vm598, %v595, %v597
      %609 = vrot.lane.b32.xlu0 %v370, 91
      %v610 = vpop.permute.xlu0 %609
      %611 = vrot.lane.b32.xlu0 %v371, 91
      %v612 = vpop.permute.xlu0 %611
      %613 = vrot.lane.b32.xlu0 %v372, 91
      %v614 = vpop.permute.xlu0 %613
      %v615 = vsel %vm598, %v610, %v612
      %v616 = vsel %vm598, %v612, %v614
      %620 = vrot.lane.b32.xlu0 %v362, 90
      %v621 = vpop.permute.xlu0 %620
      %622 = vrot.lane.b32.xlu0 %v363, 90
      %v623 = vpop.permute.xlu0 %622
      %624 = vrot.lane.b32.xlu0 %v364, 90
      %v625 = vpop.permute.xlu0 %624
      %626 = vrot.lane.b32.xlu0 %v365, 90
      %v627 = vpop.permute.xlu0 %626
      %628 = vrot.lane.b32.xlu0 %v366, 90
      %v629 = vpop.permute.xlu0 %628
      %630 = vrot.lane.b32.xlu0 %v367, 90
      %v631 = vpop.permute.xlu0 %630
      %632 = vrot.lane.b32.xlu0 %v370, 90
      %v633 = vpop.permute.xlu0 %632
      %634 = vrot.lane.b32.xlu0 %v371, 90
      %v635 = vpop.permute.xlu0 %634
      %636 = vrot.lane.b32.xlu0 %v372, 90
      %v637 = vpop.permute.xlu0 %636
      %vm638 = vcmask 736256
      %v639 = vsel %vm638, %v621, %v623
      %v640 = vsel %vm638, %v623, %v625
      %v641 = vsel %vm638, %v627, %v629
      %v642 = vsel %vm638, %v629, %v631
      %v643 = vsel %vm638, %v633, %v635
      %v644 = vsel %vm638, %v635, %v637
      %v654 = vpack.c.bf16 %v365, %v362
      %v655 = vpack.c.bf16 %v366, %v363
      %v656 = vpack.c.bf16 %v367, %v364
      %v657 = vpack.c.bf16 %v392, %v370
      %v658 = vpack.c.bf16 %v393, %v371
      %v659 = vpack.c.bf16 %v384, %v372
      %v660 = vpack.c.bf16 %v411, %v394
      %v661 = vpack.c.bf16 %v412, %v395
      %v662 = vpack.c.bf16 %v410, %v390
      %v663 = vpack.c.bf16 %v431, %v429
      %v664 = vpack.c.bf16 %v432, %v430
      %v665 = vpack.c.bf16 %v427, %v421
      %v666 = vpack.c.bf16 %v463, %v445
      %v667 = vpack.c.bf16 %v464, %v446
      %v668 = vpack.c.bf16 %v455, %v444
      %v669 = vpack.c.bf16 %v479, %v465
      %v670 = vpack.c.bf16 %v480, %v466
      %v671 = vpack.c.bf16 %v478, %v461
      %v672 = vpack.c.bf16 %v499, %v497
      %v673 = vpack.c.bf16 %v500, %v498
      %v674 = vpack.c.bf16 %v495, %v489
      %v675 = vpack.c.bf16 %v531, %v513
      %v676 = vpack.c.bf16 %v532, %v514
      %v677 = vpack.c.bf16 %v523, %v512
      %v678 = vpack.c.bf16 %v547, %v533
      %v679 = vpack.c.bf16 %v548, %v534
      %v680 = vpack.c.bf16 %v546, %v529
      %v681 = vpack.c.bf16 %v567, %v565
      %v682 = vpack.c.bf16 %v568, %v566
      %v683 = vpack.c.bf16 %v563, %v557
      %v684 = vpack.c.bf16 %v599, %v581
      %v685 = vpack.c.bf16 %v600, %v582
      %v686 = vpack.c.bf16 %v591, %v580
      %v687 = vpack.c.bf16 %v615, %v601
      %v688 = vpack.c.bf16 %v616, %v602
      %v689 = vpack.c.bf16 %v614, %v597
      %v690 = vpack.c.bf16 %v641, %v639
      %v691 = vpack.c.bf16 %v642, %v640
      %v692 = vpack.c.bf16 %v631, %v625
      %v693 = vpack.c.bf16 %v643, %v643
      %v694 = vpack.c.bf16 %v644, %v644
      %v695 = vpack.c.bf16 %v637, %v637
      %v696 = vld [vmem:[%s4] sm:$0xff]
      %v697 = vld [vmem:[%s3] sm:$0xff]
      %699 = vset.pattern.permute.xlu0 0
      %700 = vperm.xlu0 %699, %v696
      %v701 = vpop.permute.xlu0 %700
      %v704 = vunpack.c.l.b16 %v697
      %v705 = vunpack.c.h.b16 %v697
      %v706 = vpack.c.b16 %v704, %v704
      %v707 = vpack.c.b16 %v705, %v705
      %vm709 = vcmask 719872
      %v711 = vsel %vm709, %v707, 0
      %vm713 = vcmask 1043456
      %v715 = vsel %vm713, %v693, 0
      %v718 = vsel %vm713, %v694, 0
      %v721 = vsel %vm713, %v695, 0
      %723 = vmatprep.subr.bf16.mxu0 %v655
      %724 = vmatpush1.bf16.msra.mxu0 %v654
      %725 = vmatprep.subr.bf16.mxu0 %v658
      %726 = vmatpush1.bf16.msra.mxu0 %v657
      %727 = vmatprep.subr.bf16.mxu0 %v661
      %728 = vmatpush1.bf16.msra.mxu0 %v660
      %729 = vmatprep.subr.bf16.mxu0 %v664
      %730 = vmatpush1.bf16.msra.mxu0 %v663
      %731 = vmatprep.subr.bf16.mxu0 %v667
      %732 = vmatpush1.bf16.msra.mxu0 %v666
      %733 = vmatprep.subr.bf16.mxu0 %v670
      %734 = vmatpush1.bf16.msra.mxu0 %v669
      %735 = vmatprep.subr.bf16.mxu0 %v673
      %736 = vmatpush1.bf16.msra.mxu0 %v672
      %737 = vmatprep.subr.bf16.mxu0 %v676
      %738 = vmatpush1.bf16.msra.mxu0 %v675
      %739 = vmatprep.subr.bf16.mxu0 %v679
      %740 = vmatpush1.bf16.msra.mxu0 %v678
      %741 = vmatprep.subr.bf16.mxu0 %v682
      %742 = vmatpush1.bf16.msra.mxu0 %v681
      %743 = vmatprep.subr.bf16.mxu0 %v685
      %744 = vmatpush1.bf16.msra.mxu0 %v684
      %745 = vmatprep.subr.bf16.mxu0 %v688
      %746 = vmatpush1.bf16.msra.mxu0 %v687
      %747 = vmatprep.subr.bf16.mxu0 %v691
      %748 = vmatpush1.bf16.msra.mxu0 %v690
      %749 = vmatprep.subr.bf16.mxu0 %v718
      %750 = vmatpush1.bf16.msra.mxu0 %v715
      %751 = vmatprep.subr.bf16.mxu0 0
      %752 = vmatpush1.bf16.msra.mxu0 0
      %753 = vmatprep.subr.bf16.mxu0 0
      %754 = vmatpush1.bf16.msra.mxu0 0
      %755 = vmatprep.mubr.bf16.mxu0 %v711
      %756 = vmatmul.mubr.bf16.gmra.mrb[0].mxu0 %v706
      %v757 = vpop.f32.mrb[0].mxu0
      %v758 = vadd.f32 %v701, %v757
      %v759 = vpop.f32.mrb[0].mxu0
      %v760 = vadd.f32 %v701, %v759
      %v761 = vpop.f32.mrb[0].mxu0
      %v762 = vpop.f32.mrb[0].mxu0
      %763 = vdwg.mxu0
      %764 = vmatprep.subr.bf16.mxu0 0
      %765 = vmatpush1.bf16.msra.mxu0 %v656
      %766 = vmatprep.subr.bf16.mxu0 0
      %767 = vmatpush1.bf16.msra.mxu0 %v659
      %768 = vmatprep.subr.bf16.mxu0 0
      %769 = vmatpush1.bf16.msra.mxu0 %v662
      %770 = vmatprep.subr.bf16.mxu0 0
      %771 = vmatpush1.bf16.msra.mxu0 %v665
      %772 = vmatprep.subr.bf16.mxu0 0
      %773 = vmatpush1.bf16.msra.mxu0 %v668
      %774 = vmatprep.subr.bf16.mxu0 0
      %775 = vmatpush1.bf16.msra.mxu0 %v671
      %776 = vmatprep.subr.bf16.mxu0 0
      %777 = vmatpush1.bf16.msra.mxu0 %v674
      %778 = vmatprep.subr.bf16.mxu0 0
      %779 = vmatpush1.bf16.msra.mxu0 %v677
      %780 = vmatprep.subr.bf16.mxu0 0
      %781 = vmatpush1.bf16.msra.mxu0 %v680
      %782 = vmatprep.subr.bf16.mxu0 0
      %783 = vmatpush1.bf16.msra.mxu0 %v683
      %784 = vmatprep.subr.bf16.mxu0 0
      %785 = vmatpush1.bf16.msra.mxu0 %v686
      %786 = vmatprep.subr.bf16.mxu0 0
      %787 = vmatpush1.bf16.msra.mxu0 %v689
      %788 = vmatprep.subr.bf16.mxu0 0
      %789 = vmatpush1.bf16.msra.mxu0 %v692
      %790 = vmatprep.subr.bf16.mxu0 0
      %791 = vmatpush1.bf16.msra.mxu0 %v721
      %792 = vmatprep.subr.bf16.mxu0 0
      %793 = vmatpush1.bf16.msra.mxu0 0
      %794 = vmatprep.subr.bf16.mxu0 0
      %795 = vmatpush1.bf16.msra.mxu0 0
      %796 = vmatprep.mubr.bf16.mxu0 %v711
      %797 = vmatmul.mubr.bf16.gmra.mrb[0].mxu0 %v706
      %v798 = vpop.f32.mrb[0].mxu0
      %v799 = vadd.f32 %v701, %v798
      %v800 = vpop.f32.mrb[0].mxu0
      %v801 = vpop.f32.mrb[0].mxu0
      %v802 = vpop.f32.mrb[0].mxu0
      %803 = vdwg.mxu0
      %v805 = vlaneseq
      %v806 = vshrl.u32 %v805, 7
      %v807 = vsub.s32 0, %v806
      %v808 = vrot.slane %v354, %v807
      %v809 = vlaneseq
      %v810 = vshrl.u32 %v809, 7
      %v811 = vsub.s32 1, %v810
      %v812 = vrot.slane %v354, %v811
      %v813 = vlaneseq
      %v814 = vshrl.u32 %v813, 7
      %v815 = vsub.s32 2, %v814
      %v816 = vrot.slane %v354, %v815
      %v820 = vmul.f32 %v758, %v808
      %v821 = vmul.f32 %v760, %v812
      %v822 = vmul.f32 %v799, %v816
      %v823 = vmul.f32 %v820, %v758
      %v824 = vmul.f32 %v821, %v760
      %v825 = vmul.f32 %v822, %v799
      %v826 = vadd.f32 %v820, %v821
      %vm827 = vcmask 244736
      %v828 = vsel %vm827, %v822, 0.0
      %v829 = vadd.f32 %v826, %v828
      %830 = vadd.xlane.f32.xlu0 %v829
      %v831 = vpop.xlane.xlu0 %830
      %v832 = vadd.f32 %v823, %v824
      %v833 = vsel %vm827, %v825, 0.0
      %v834 = vadd.f32 %v832, %v833
      %835 = vadd.xlane.f32.xlu0 %v834
      %v836 = vpop.xlane.xlu0 %835
      %v837 = vmul.f32 %v831, 0.00390625
      %v838 = vmul.f32 %v836, 0.00390625
      %v839 = vmul.f32 %v837, %v837
      %v840 = vsub.f32 %v838, %v839
      %v841 = vmax.f32 %v840, 0.0
      %v842 = vsub.f32 %v758, %v837
      %v843 = vsub.f32 %v760, %v837
      %v844 = vsub.f32 %v799, %v837
      %v845 = vadd.f32 %v841, 1e-05
      %v846 = vrsqrt.pop %v845
      %v847 = vmul.f32 %v842, %v846
      %v848 = vmul.f32 %v843, %v846
      %v849 = vmul.f32 %v844, %v846
      %850 = vset.pattern.permute.xlu0 1
      %851 = vperm.xlu0 %850, %v696
      %v852 = vpop.permute.xlu0 %851
      %v854 = vmul.f32 %v847, %v852
      %v855 = vmul.f32 %v848, %v852
      %v856 = vmul.f32 %v849, %v852
      %857 = vset.pattern.permute.xlu0 2
      %858 = vperm.xlu0 %857, %v696
      %v859 = vpop.permute.xlu0 %858
      %v861 = vadd.f32 %v854, %v859
      %v862 = vadd.f32 %v855, %v859
      %v863 = vadd.f32 %v856, %v859
      %vm864 = vcmp.ge.f32.partialorder %v861, 0.0
      %vm865 = vcmp.ge.f32.partialorder %v862, 0.0
      %vm866 = vcmp.ge.f32.partialorder %v863, 0.0
      %v867 = vmul.f32 %v861, 0.01
      %v868 = vmul.f32 %v862, 0.01
      %v869 = vmul.f32 %v863, 0.01
      %v870 = vsel %vm864, %v861, %v867
      %v871 = vsel %vm865, %v862, %v868
      %v872 = vsel %vm866, %v863, %v869
      %v873 = vmul.f32 %v870, %v808
      %v874 = vmul.f32 %v871, %v812
      %v875 = vmul.f32 %v872, %v816
      %879 = vrot.lane.b32.xlu0 %v873, 19
      %v880 = vpop.permute.xlu0 %879
      %881 = vrot.lane.b32.xlu0 %v874, 19
      %v882 = vpop.permute.xlu0 %881
      %883 = vrot.lane.b32.xlu0 %v875, 19
      %v884 = vpop.permute.xlu0 %883
      %vm885 = vcmask 154624
      %v886 = vsel %vm885, %v880, %v882
      %v887 = vsel %vm885, %v882, %v884
      %vm891 = vcmask 1047704
      %892 = vst.msk [vmem:[#allocation2] sm:$0xff] %vm891, %v880
      %893 = vst [vmem:[#allocation2 + $0x8] sm:$0xff] %v886
      %vm894 = vcmask 400384
      %895 = vst.msk [vmem:[#allocation2 + $0x10] sm:$0xff] %vm894, %v887
      %v896 = vld [vmem:[#allocation2] sm:$0xff]
      %v897 = vld [vmem:[#allocation2 + $0x8] sm:$0xff]
      %v898 = vld [vmem:[#allocation2 + $0x10] sm:$0xff]
      %902 = vrot.lane.b32.xlu0 %v896, 127
      %v903 = vpop.permute.xlu0 %902
      %904 = vrot.lane.b32.xlu0 %v897, 127
      %v905 = vpop.permute.xlu0 %904
      %906 = vrot.lane.b32.xlu0 %v898, 127
      %v907 = vpop.permute.xlu0 %906
      %v908 = vsel %vm391, %v903, %v905
      %v909 = vsel %vm391, %v905, %v907
      %913 = vrot.lane.b32.xlu0 %v896, 126
      %v914 = vpop.permute.xlu0 %913
      %915 = vrot.lane.b32.xlu0 %v897, 126
      %v916 = vpop.permute.xlu0 %915
      %917 = vrot.lane.b32.xlu0 %v898, 126
      %v918 = vpop.permute.xlu0 %917
      %v919 = vsel %vm428, %v914, %v916
      %v920 = vsel %vm428, %v916, %v918
      %924 = vrot.lane.b32.xlu0 %v896, 110
      %v925 = vpop.permute.xlu0 %924
      %926 = vrot.lane.b32.xlu0 %v897, 110
      %v927 = vpop.permute.xlu0 %926
      %928 = vrot.lane.b32.xlu0 %v898, 110
      %v929 = vpop.permute.xlu0 %928
      %v930 = vsel %vm462, %v925, %v927
      %v931 = vsel %vm462, %v927, %v929
      %935 = vrot.lane.b32.xlu0 %v896, 109
      %v936 = vpop.permute.xlu0 %935
      %937 = vrot.lane.b32.xlu0 %v897, 109
      %v938 = vpop.permute.xlu0 %937
      %939 = vrot.lane.b32.xlu0 %v898, 109
      %v940 = vpop.permute.xlu0 %939
      %v941 = vsel %vm496, %v936, %v938
      %v942 = vsel %vm496, %v938, %v940
      %946 = vrot.lane.b32.xlu0 %v896, 108
      %v947 = vpop.permute.xlu0 %946
      %948 = vrot.lane.b32.xlu0 %v897, 108
      %v949 = vpop.permute.xlu0 %948
      %950 = vrot.lane.b32.xlu0 %v898, 108
      %v951 = vpop.permute.xlu0 %950
      %v952 = vsel %vm530, %v947, %v949
      %v953 = vsel %vm530, %v949, %v951
      %957 = vrot.lane.b32.xlu0 %v896, 92
      %v958 = vpop.permute.xlu0 %957
      %959 = vrot.lane.b32.xlu0 %v897, 92
      %v960 = vpop.permute.xlu0 %959
      %961 = vrot.lane.b32.xlu0 %v898, 92
      %v962 = vpop.permute.xlu0 %961
      %v963 = vsel %vm564, %v958, %v960
      %v964 = vsel %vm564, %v960, %v962
      %968 = vrot.lane.b32.xlu0 %v896, 91
      %v969 = vpop.permute.xlu0 %968
      %970 = vrot.lane.b32.xlu0 %v897, 91
      %v971 = vpop.permute.xlu0 %970
      %972 = vrot.lane.b32.xlu0 %v898, 91
      %v973 = vpop.permute.xlu0 %972
      %v974 = vsel %vm598, %v969, %v971
      %v975 = vsel %vm598, %v971, %v973
      %979 = vrot.lane.b32.xlu0 %v896, 90
      %v980 = vpop.permute.xlu0 %979
      %981 = vrot.lane.b32.xlu0 %v897, 90
      %v982 = vpop.permute.xlu0 %981
      %983 = vrot.lane.b32.xlu0 %v898, 90
      %v984 = vpop.permute.xlu0 %983
      %v985 = vsel %vm638, %v980, %v982
      %v986 = vsel %vm638, %v982, %v984
      %v990 = vpack.c.bf16 %v908, %v896
      %v991 = vpack.c.bf16 %v909, %v897
      %v992 = vpack.c.bf16 %v907, %v898
      %v993 = vpack.c.bf16 %v930, %v919
      %v994 = vpack.c.bf16 %v931, %v920
      %v995 = vpack.c.bf16 %v929, %v918
      %v996 = vpack.c.bf16 %v952, %v941
      %v997 = vpack.c.bf16 %v953, %v942
      %v998 = vpack.c.bf16 %v951, %v940
      %v999 = vpack.c.bf16 %v974, %v963
      %v1000 = vpack.c.bf16 %v975, %v964
      %v1001 = vpack.c.bf16 %v973, %v962
      %v1002 = vpack.c.bf16 %v985, %v985
      %v1003 = vpack.c.bf16 %v986, %v986
      %v1004 = vpack.c.bf16 %v984, %v984
      %v1005 = vld [vmem:[%s6] sm:$0xff]
      %v1006 = vld [vmem:[%s5] sm:$0xf]
      %1008 = vset.pattern.permute.xlu0 0
      %1009 = vperm.xlu0 %1008, %v1005
      %v1010 = vpop.permute.xlu0 %1009
      %vm1012 = vcmask 588800
      %v1014 = vsel %vm1012, %v1006, 0
      %v1017 = vsel %vm713, %v1002, 0
      %v1020 = vsel %vm713, %v1003, 0
      %v1023 = vsel %vm713, %v1004, 0
      %1025 = vmatprep.subr.bf16.mxu0 %v991
      %1026 = vmatpush1.bf16.msra.mxu0 %v990
      %1027 = vmatprep.subr.bf16.mxu0 %v994
      %1028 = vmatpush1.bf16.msra.mxu0 %v993
      %1029 = vmatprep.subr.bf16.mxu0 %v997
      %1030 = vmatpush1.bf16.msra.mxu0 %v996
      %1031 = vmatprep.subr.bf16.mxu0 %v1000
      %1032 = vmatpush1.bf16.msra.mxu0 %v999
      %1033 = vmatprep.subr.bf16.mxu0 %v1020
      %1034 = vmatpush1.bf16.msra.mxu0 %v1017
      %1035 = vmatprep.subr.bf16.mxu0 0
      %1036 = vmatpush1.bf16.msra.mxu0 0
      %1037 = vmatprep.subr.bf16.mxu0 0
      %1038 = vmatpush1.bf16.msra.mxu0 0
      %1039 = vmatprep.subr.bf16.mxu0 0
      %1040 = vmatpush1.bf16.msra.mxu0 0
      %1041 = vmatprep.subr.bf16.mxu0 0
      %1042 = vmatpush1.bf16.msra.mxu0 0
      %1043 = vmatprep.subr.bf16.mxu0 0
      %1044 = vmatpush1.bf16.msra.mxu0 0
      %1045 = vmatprep.subr.bf16.mxu0 0
      %1046 = vmatpush1.bf16.msra.mxu0 0
      %1047 = vmatprep.subr.bf16.mxu0 0
      %1048 = vmatpush1.bf16.msra.mxu0 0
      %1049 = vmatprep.subr.bf16.mxu0 0
      %1050 = vmatpush1.bf16.msra.mxu0 0
      %1051 = vmatprep.subr.bf16.mxu0 0
      %1052 = vmatpush1.bf16.msra.mxu0 0
      %1053 = vmatprep.subr.bf16.mxu0 0
      %1054 = vmatpush1.bf16.msra.mxu0 0
      %1055 = vmatprep.subr.bf16.mxu0 0
      %1056 = vmatpush1.bf16.msra.mxu0 0
      %1057 = vmatprep.mubr.bf16.mxu0 0
      %1058 = vmatmul.mubr.bf16.gmra.mrb[0].mxu0 %v1014
      %v1059 = vpop.f32.mrb[0].mxu0
      %v1060 = vadd.f32 %v1010, %v1059
      %v1061 = vpop.f32.mrb[0].mxu0
      %v1062 = vadd.f32 %v1010, %v1061
      %v1063 = vpop.f32.mrb[0].mxu0
      %v1064 = vpop.f32.mrb[0].mxu0
      %1065 = vdwg.mxu0
      %1066 = vmatprep.subr.bf16.mxu0 0
      %1067 = vmatpush1.bf16.msra.mxu0 %v992
      %1068 = vmatprep.subr.bf16.mxu0 0
      %1069 = vmatpush1.bf16.msra.mxu0 %v995
      %1070 = vmatprep.subr.bf16.mxu0 0
      %1071 = vmatpush1.bf16.msra.mxu0 %v998
      %1072 = vmatprep.subr.bf16.mxu0 0
      %1073 = vmatpush1.bf16.msra.mxu0 %v1001
      %1074 = vmatprep.subr.bf16.mxu0 0
      %1075 = vmatpush1.bf16.msra.mxu0 %v1023
      %1076 = vmatprep.subr.bf16.mxu0 0
      %1077 = vmatpush1.bf16.msra.mxu0 0
      %1078 = vmatprep.subr.bf16.mxu0 0
      %1079 = vmatpush1.bf16.msra.mxu0 0
      %1080 = vmatprep.subr.bf16.mxu0 0
      %1081 = vmatpush1.bf16.msra.mxu0 0
      %1082 = vmatprep.subr.bf16.mxu0 0
      %1083 = vmatpush1.bf16.msra.mxu0 0
      %1084 = vmatprep.subr.bf16.mxu0 0
      %1085 = vmatpush1.bf16.msra.mxu0 0
      %1086 = vmatprep.subr.bf16.mxu0 0
      %1087 = vmatpush1.bf16.msra.mxu0 0
      %1088 = vmatprep.subr.bf16.mxu0 0
      %1089 = vmatpush1.bf16.msra.mxu0 0
      %1090 = vmatprep.subr.bf16.mxu0 0
      %1091 = vmatpush1.bf16.msra.mxu0 0
      %1092 = vmatprep.subr.bf16.mxu0 0
      %1093 = vmatpush1.bf16.msra.mxu0 0
      %1094 = vmatprep.subr.bf16.mxu0 0
      %1095 = vmatpush1.bf16.msra.mxu0 0
      %1096 = vmatprep.subr.bf16.mxu0 0
      %1097 = vmatpush1.bf16.msra.mxu0 0
      %1098 = vmatprep.mubr.bf16.mxu0 0
      %1099 = vmatmul.mubr.bf16.gmra.mrb[0].mxu0 %v1014
      %v1100 = vpop.f32.mrb[0].mxu0
      %v1101 = vadd.f32 %v1010, %v1100
      %v1102 = vpop.f32.mrb[0].mxu0
      %v1103 = vpop.f32.mrb[0].mxu0
      %v1104 = vpop.f32.mrb[0].mxu0
      %1105 = vdwg.mxu0
      %v1106 = vmul.f32 %v1060, %v808
      %v1107 = vmul.f32 %v1062, %v812
      %v1108 = vmul.f32 %v1101, %v816
      %v1109 = vmul.f32 %v1106, %v1060
      %v1110 = vmul.f32 %v1107, %v1062
      %v1111 = vmul.f32 %v1108, %v1101
      %v1112 = vadd.f32 %v1106, %v1107
      %v1113 = vsel %vm827, %v1108, 0.0
      %v1114 = vadd.f32 %v1112, %v1113
      %1115 = vadd.xlane.f32.xlu0 %v1114
      %v1116 = vpop.xlane.xlu0 %1115
      %v1117 = vadd.f32 %v1109, %v1110
      %v1118 = vsel %vm827, %v1111, 0.0
      %v1119 = vadd.f32 %v1117, %v1118
      %1120 = vadd.xlane.f32.xlu0 %v1119
      %v1121 = vpop.xlane.xlu0 %1120
      %v1122 = vmul.f32 %v1116, 0.00390625
      %v1123 = vmul.f32 %v1121, 0.00390625
      %v1124 = vmul.f32 %v1122, %v1122
      %v1125 = vsub.f32 %v1123, %v1124
      %v1126 = vmax.f32 %v1125, 0.0
      %v1127 = vsub.f32 %v1060, %v1122
      %v1128 = vsub.f32 %v1062, %v1122
      %v1129 = vsub.f32 %v1101, %v1122
      %v1130 = vadd.f32 %v1126, 1e-05
      %v1131 = vrsqrt.pop %v1130
      %v1132 = vmul.f32 %v1127, %v1131
      %v1133 = vmul.f32 %v1128, %v1131
      %v1134 = vmul.f32 %v1129, %v1131
      %1135 = vset.pattern.permute.xlu0 1
      %1136 = vperm.xlu0 %1135, %v1005
      %v1137 = vpop.permute.xlu0 %1136
      %v1139 = vmul.f32 %v1132, %v1137
      %v1140 = vmul.f32 %v1133, %v1137
      %v1141 = vmul.f32 %v1134, %v1137
      %1142 = vset.pattern.permute.xlu0 2
      %1143 = vperm.xlu0 %1142, %v1005
      %v1144 = vpop.permute.xlu0 %1143
      %v1146 = vadd.f32 %v1139, %v1144
      %v1147 = vadd.f32 %v1140, %v1144
      %v1148 = vadd.f32 %v1141, %v1144
      %vm1149 = vcmp.ge.f32.partialorder %v1146, 0.0
      %vm1150 = vcmp.ge.f32.partialorder %v1147, 0.0
      %vm1151 = vcmp.ge.f32.partialorder %v1148, 0.0
      %v1152 = vmul.f32 %v1146, 0.01
      %v1153 = vmul.f32 %v1147, 0.01
      %v1154 = vmul.f32 %v1148, 0.01
      %v1155 = vsel %vm1149, %v1146, %v1152
      %v1156 = vsel %vm1150, %v1147, %v1153
      %v1157 = vsel %vm1151, %v1148, %v1154
      %v1158 = vmul.f32 %v1155, %v808
      %v1159 = vmul.f32 %v1156, %v812
      %v1160 = vmul.f32 %v1157, %v816
      %1164 = vrot.lane.b32.xlu0 %v1158, 19
      %v1165 = vpop.permute.xlu0 %1164
      %1166 = vrot.lane.b32.xlu0 %v1159, 19
      %v1167 = vpop.permute.xlu0 %1166
      %1168 = vrot.lane.b32.xlu0 %v1160, 19
      %v1169 = vpop.permute.xlu0 %1168
      %v1170 = vsel %vm885, %v1165, %v1167
      %v1171 = vsel %vm885, %v1167, %v1169
      %1175 = vst.msk [vmem:[#allocation2] sm:$0xff] %vm891, %v1165
      %1176 = vst [vmem:[#allocation2 + $0x8] sm:$0xff] %v1170
      %1177 = vst.msk [vmem:[#allocation2 + $0x10] sm:$0xff] %vm894, %v1171
      %v1178 = vld [vmem:[#allocation2] sm:$0xff]
      %v1179 = vld [vmem:[#allocation2 + $0x8] sm:$0xff]
      %v1180 = vld [vmem:[#allocation2 + $0x10] sm:$0xff]
      %1184 = vrot.lane.b32.xlu0 %v1178, 127
      %v1185 = vpop.permute.xlu0 %1184
      %1186 = vrot.lane.b32.xlu0 %v1179, 127
      %v1187 = vpop.permute.xlu0 %1186
      %1188 = vrot.lane.b32.xlu0 %v1180, 127
      %v1189 = vpop.permute.xlu0 %1188
      %v1190 = vsel %vm391, %v1185, %v1187
      %v1191 = vsel %vm391, %v1187, %v1189
      %1195 = vrot.lane.b32.xlu0 %v1178, 126
      %v1196 = vpop.permute.xlu0 %1195
      %1197 = vrot.lane.b32.xlu0 %v1179, 126
      %v1198 = vpop.permute.xlu0 %1197
      %1199 = vrot.lane.b32.xlu0 %v1180, 126
      %v1200 = vpop.permute.xlu0 %1199
      %v1201 = vsel %vm428, %v1196, %v1198
      %v1202 = vsel %vm428, %v1198, %v1200
      %1206 = vrot.lane.b32.xlu0 %v1178, 110
      %v1207 = vpop.permute.xlu0 %1206
      %1208 = vrot.lane.b32.xlu0 %v1179, 110
      %v1209 = vpop.permute.xlu0 %1208
      %1210 = vrot.lane.b32.xlu0 %v1180, 110
      %v1211 = vpop.permute.xlu0 %1210
      %v1212 = vsel %vm462, %v1207, %v1209
      %v1213 = vsel %vm462, %v1209, %v1211
      %1217 = vrot.lane.b32.xlu0 %v1178, 109
      %v1218 = vpop.permute.xlu0 %1217
      %1219 = vrot.lane.b32.xlu0 %v1179, 109
      %v1220 = vpop.permute.xlu0 %1219
      %1221 = vrot.lane.b32.xlu0 %v1180, 109
      %v1222 = vpop.permute.xlu0 %1221
      %v1223 = vsel %vm496, %v1218, %v1220
      %v1224 = vsel %vm496, %v1220, %v1222
      %1228 = vrot.lane.b32.xlu0 %v1178, 108
      %v1229 = vpop.permute.xlu0 %1228
      %1230 = vrot.lane.b32.xlu0 %v1179, 108
      %v1231 = vpop.permute.xlu0 %1230
      %1232 = vrot.lane.b32.xlu0 %v1180, 108
      %v1233 = vpop.permute.xlu0 %1232
      %v1234 = vsel %vm530, %v1229, %v1231
      %v1235 = vsel %vm530, %v1231, %v1233
      %1239 = vrot.lane.b32.xlu0 %v1178, 92
      %v1240 = vpop.permute.xlu0 %1239
      %1241 = vrot.lane.b32.xlu0 %v1179, 92
      %v1242 = vpop.permute.xlu0 %1241
      %1243 = vrot.lane.b32.xlu0 %v1180, 92
      %v1244 = vpop.permute.xlu0 %1243
      %v1245 = vsel %vm564, %v1240, %v1242
      %v1246 = vsel %vm564, %v1242, %v1244
      %1250 = vrot.lane.b32.xlu0 %v1178, 91
      %v1251 = vpop.permute.xlu0 %1250
      %1252 = vrot.lane.b32.xlu0 %v1179, 91
      %v1253 = vpop.permute.xlu0 %1252
      %1254 = vrot.lane.b32.xlu0 %v1180, 91
      %v1255 = vpop.permute.xlu0 %1254
      %v1256 = vsel %vm598, %v1251, %v1253
      %v1257 = vsel %vm598, %v1253, %v1255
      %1261 = vrot.lane.b32.xlu0 %v1178, 90
      %v1262 = vpop.permute.xlu0 %1261
      %1263 = vrot.lane.b32.xlu0 %v1179, 90
      %v1264 = vpop.permute.xlu0 %1263
      %1265 = vrot.lane.b32.xlu0 %v1180, 90
      %v1266 = vpop.permute.xlu0 %1265
      %v1267 = vsel %vm638, %v1262, %v1264
      %v1268 = vsel %vm638, %v1264, %v1266
      %v1272 = vpack.c.bf16 %v1190, %v1178
      %v1273 = vpack.c.bf16 %v1191, %v1179
      %v1274 = vpack.c.bf16 %v1189, %v1180
      %v1275 = vpack.c.bf16 %v1212, %v1201
      %v1276 = vpack.c.bf16 %v1213, %v1202
      %v1277 = vpack.c.bf16 %v1211, %v1200
      %v1278 = vpack.c.bf16 %v1234, %v1223
      %v1279 = vpack.c.bf16 %v1235, %v1224
      %v1280 = vpack.c.bf16 %v1233, %v1222
      %v1281 = vpack.c.bf16 %v1256, %v1245
      %v1282 = vpack.c.bf16 %v1257, %v1246
      %v1283 = vpack.c.bf16 %v1255, %v1244
      %v1284 = vpack.c.bf16 %v1267, %v1267
      %v1285 = vpack.c.bf16 %v1268, %v1268
      %v1286 = vpack.c.bf16 %v1266, %v1266
      %v1287 = vld [vmem:[%s8] sm:$0x7]
      %v1288 = vld [vmem:[%s7] sm:$0x3]
      %1290 = vset.pattern.permute.xlu0 0
      %1291 = vperm.xlu0 %1290, %v1287
      %v1292 = vpop.permute.xlu0 %1291
      %v1295 = vsel %vm1012, %v1288, 0
      %v1298 = vsel %vm713, %v1284, 0
      %v1301 = vsel %vm713, %v1285, 0
      %v1304 = vsel %vm713, %v1286, 0
      %1306 = vmatprep.subr.bf16.mxu0 %v1273
      %1307 = vmatpush1.bf16.msra.mxu0 %v1272
      %1308 = vmatprep.subr.bf16.mxu0 %v1276
      %1309 = vmatpush1.bf16.msra.mxu0 %v1275
      %1310 = vmatprep.subr.bf16.mxu0 %v1279
      %1311 = vmatpush1.bf16.msra.mxu0 %v1278
      %1312 = vmatprep.subr.bf16.mxu0 %v1282
      %1313 = vmatpush1.bf16.msra.mxu0 %v1281
      %1314 = vmatprep.subr.bf16.mxu0 %v1301
      %1315 = vmatpush1.bf16.msra.mxu0 %v1298
      %1316 = vmatprep.subr.bf16.mxu0 0
      %1317 = vmatpush1.bf16.msra.mxu0 0
      %1318 = vmatprep.subr.bf16.mxu0 0
      %1319 = vmatpush1.bf16.msra.mxu0 0
      %1320 = vmatprep.subr.bf16.mxu0 0
      %1321 = vmatpush1.bf16.msra.mxu0 0
      %1322 = vmatprep.subr.bf16.mxu0 0
      %1323 = vmatpush1.bf16.msra.mxu0 0
      %1324 = vmatprep.subr.bf16.mxu0 0
      %1325 = vmatpush1.bf16.msra.mxu0 0
      %1326 = vmatprep.subr.bf16.mxu0 0
      %1327 = vmatpush1.bf16.msra.mxu0 0
      %1328 = vmatprep.subr.bf16.mxu0 0
      %1329 = vmatpush1.bf16.msra.mxu0 0
      %1330 = vmatprep.subr.bf16.mxu0 0
      %1331 = vmatpush1.bf16.msra.mxu0 0
      %1332 = vmatprep.subr.bf16.mxu0 0
      %1333 = vmatpush1.bf16.msra.mxu0 0
      %1334 = vmatprep.subr.bf16.mxu0 0
      %1335 = vmatpush1.bf16.msra.mxu0 0
      %1336 = vmatprep.subr.bf16.mxu0 0
      %1337 = vmatpush1.bf16.msra.mxu0 0
      %1338 = vmatprep.mubr.bf16.mxu0 0
      %1339 = vmatmul.mubr.bf16.gmra.mrb[0].mxu0 %v1295
      %v1340 = vpop.f32.mrb[0].mxu0
      %v1341 = vadd.f32 %v1292, %v1340
      %v1342 = vpop.f32.mrb[0].mxu0
      %v1343 = vadd.f32 %v1292, %v1342
      %v1344 = vpop.f32.mrb[0].mxu0
      %v1345 = vpop.f32.mrb[0].mxu0
      %1346 = vdwg.mxu0
      %1347 = vmatprep.subr.bf16.mxu0 0
      %1348 = vmatpush1.bf16.msra.mxu0 %v1274
      %1349 = vmatprep.subr.bf16.mxu0 0
      %1350 = vmatpush1.bf16.msra.mxu0 %v1277
      %1351 = vmatprep.subr.bf16.mxu0 0
      %1352 = vmatpush1.bf16.msra.mxu0 %v1280
      %1353 = vmatprep.subr.bf16.mxu0 0
      %1354 = vmatpush1.bf16.msra.mxu0 %v1283
      %1355 = vmatprep.subr.bf16.mxu0 0
      %1356 = vmatpush1.bf16.msra.mxu0 %v1304
      %1357 = vmatprep.subr.bf16.mxu0 0
      %1358 = vmatpush1.bf16.msra.mxu0 0
      %1359 = vmatprep.subr.bf16.mxu0 0
      %1360 = vmatpush1.bf16.msra.mxu0 0
      %1361 = vmatprep.subr.bf16.mxu0 0
      %1362 = vmatpush1.bf16.msra.mxu0 0
      %1363 = vmatprep.subr.bf16.mxu0 0
      %1364 = vmatpush1.bf16.msra.mxu0 0
      %1365 = vmatprep.subr.bf16.mxu0 0
      %1366 = vmatpush1.bf16.msra.mxu0 0
      %1367 = vmatprep.subr.bf16.mxu0 0
      %1368 = vmatpush1.bf16.msra.mxu0 0
      %1369 = vmatprep.subr.bf16.mxu0 0
      %1370 = vmatpush1.bf16.msra.mxu0 0
      %1371 = vmatprep.subr.bf16.mxu0 0
      %1372 = vmatpush1.bf16.msra.mxu0 0
      %1373 = vmatprep.subr.bf16.mxu0 0
      %1374 = vmatpush1.bf16.msra.mxu0 0
      %1375 = vmatprep.subr.bf16.mxu0 0
      %1376 = vmatpush1.bf16.msra.mxu0 0
      %1377 = vmatprep.subr.bf16.mxu0 0
      %1378 = vmatpush1.bf16.msra.mxu0 0
      %1379 = vmatprep.mubr.bf16.mxu0 0
      %1380 = vmatmul.mubr.bf16.gmra.mrb[0].mxu0 %v1295
      %v1381 = vpop.f32.mrb[0].mxu0
      %v1382 = vadd.f32 %v1292, %v1381
      %v1383 = vpop.f32.mrb[0].mxu0
      %v1384 = vpop.f32.mrb[0].mxu0
      %v1385 = vpop.f32.mrb[0].mxu0
      %1386 = vdwg.mxu0
      %v1387 = vxor.u32 %v1341, 2147483648
      %v1388 = vxor.u32 %v1343, 2147483648
      %v1389 = vxor.u32 %v1382, 2147483648
      %v1390 = vmul.f32 %v1387, 1.442695
      %v1391 = vpow.pop %v1390
      %v1392 = vmul.f32 %v1388, 1.442695
      %v1393 = vpow.pop %v1392
      %v1394 = vmul.f32 %v1389, 1.442695
      %v1395 = vpow.pop %v1394
      %v1396 = vadd.f32 %v1391, 1.0
      %v1397 = vadd.f32 %v1393, 1.0
      %v1398 = vadd.f32 %v1395, 1.0
      %v1399 = vrcp.pop %v1396
      %v1400 = vmul.f32 1.0, %v1399
      %v1401 = vrcp.pop %v1397
      %v1402 = vmul.f32 1.0, %v1401
      %v1403 = vrcp.pop %v1398
      %v1404 = vmul.f32 1.0, %v1403
      %v1405 = vmul.f32 %v1400, %v808
      %v1406 = vmul.f32 %v1402, %v812
      %v1407 = vmul.f32 %v1404, %v816
      %1408 = vst [vmem:[%s352] sm:$0x77] 0.0
      %1409 = vst [vmem:[%s352 + $0x8] sm:$0x7] 0.0
      %v1413 = vcombine.low %v1405, %v1406
      %1414 = vrot.lane.b32.xlu0 %v1413, 19
      %v1415 = vpop.permute.xlu0 %1414
      %1416 = vrot.lane.b32.xlu0 %v1407, 19
      %v1417 = vpop.permute.xlu0 %1416
      %v1418 = vrot.slane %v1415, 4
      %v1419 = vsel %vm885, %v1418, %v1415
      %v1420 = vsel %vm885, %v1418, %v1417
      %vm1423 = vcmask 1042584
      %vm1424 = vcmask 1046532
      %vm1425 = vmor %vm1424, %vm1423
      %1426 = vst.msk [vmem:[%s352] sm:$0x77] %vm1425, %v1419
      %vm1427 = vcmask 395264
      %1428 = vst.msk [vmem:[%s352 + $0x8] sm:$0x7] %vm1427, %v1420
      %p1429 = scmp.lt.s32.totalorder %s20, 1
      %s1430 = scalar_select %p1429, %s20, 1
      %s1431 = smul.addr %s1430, 3
      %s1432 = smul.addr %s1431, 4
      %s1433 = scalar_lea.vmem %s9, %s1432
      // Predicated region
      $region57: #{autoencoder_forward.9} parent=55 // pred_check
        %p1434 = pneg %p237
      $region58: #{autoencoder_forward.9} parent=55 // pred_check_branch
        %1436 = sbr.rel (%p1434) target = $region60
      $region59: #{autoencoder_forward.9} parent=55 // pred_region
        _
      $region60: #{autoencoder_forward.9} parent=55 // pred_fallthru
        _
    $region56: #{autoencoder_forward.9} parent=5 // pred_fallthru
      _
    %p1437 = scmp.le.s32.totalorder 2, %s15
    // Predicated region
    $region61: #{autoencoder_forward.9} parent=5 // pred_check
      %p1438 = pneg %p1437
    $region62: #{autoencoder_forward.9} parent=5 // pred_check_branch
      %1440 = sbr.rel (%p1438) target = $region64
    $region63: #{autoencoder_forward.9} parent=5 // pred_region
      %s1441 = ssub.s32 %s15, 2
      // Predicated region
      $region65: #{autoencoder_forward.9} parent=63 // pred_check
        %p1442 = pneg %p243
      $region66: #{autoencoder_forward.9} parent=63 // pred_check_branch
        %1444 = sbr.rel (%p1442) target = $region68
      $region67: #{autoencoder_forward.9} parent=63 // pred_region
        %p1445 = scmp.lt.s32.totalorder %s21, 1
        %s1446 = scalar_select %p1445, %s21, 1
        %s1447 = smul.addr %s1446, 3
        %s1448 = smul.addr %s1447, 4
        %s1449 = scalar_lea.vmem %s9, %s1448
      $region68: #{autoencoder_forward.9} parent=63 // pred_fallthru
        _
    $region64: #{autoencoder_forward.9} parent=5 // pred_fallthru
      _
  $region6: #{autoencoder_forward.9} parent=0 // loop_footer
    %s19 = sadd.s32 1, %s15
  $region7: #{autoencoder_forward.9} parent=0 // loop_footer_branch
    %14 = sbr.rel target = $region3
  $region8: #{autoencoder_forward.9} parent=0 // loop_exit
    _

</llo_original>
